<compile_context>
chip_gen: v7x
topology: tpu7x:2x2x1
jax: 0.10.0
libtpu: 0.0.40
codegen_flags: <defaults>
</compile_context>

<pallas_src>
import jax
import jax.numpy as jnp
from jax.experimental import pallas as pl
from jax.experimental.pallas import tpu as pltpu


# ----------------------------- Pallas kernels ------------------------------ #

def _matmul_bias_relu_kernel(x_ref, w_ref, b_ref, o_ref):
    """o = relu(x @ w + b), single K pass, M tiled over the grid."""
    out = jnp.dot(x_ref[...], w_ref[...].astype(jnp.float32),
                  preferred_element_type=jnp.float32) + b_ref[...]
    o_ref[...] = jnp.maximum(out, 0.0).astype(o_ref.dtype)


def matmul_bias_relu(x, w, b, *, tm=512):
    """x: (M, K) f32, w: (K, N) bf16, b: (N,) f32 -> relu(x @ w + b) f32."""
    M, K = x.shape
    _, N = w.shape
    tm = min(tm, M)
    pad_m = (-M) % tm
    if pad_m:
        x = jnp.pad(x, ((0, pad_m), (0, 0)))
    Mp = M + pad_m
    b2 = b.reshape(1, N).astype(jnp.float32)
    out = pl.pallas_call(
        _matmul_bias_relu_kernel,
        out_shape=jax.ShapeDtypeStruct((Mp, N), jnp.float32),
        grid_spec=pltpu.PrefetchScalarGridSpec(
            num_scalar_prefetch=0,
            grid=(Mp // tm,),
            in_specs=[
                pl.BlockSpec((tm, K), lambda i: (i, 0)),
                pl.BlockSpec((K, N), lambda i: (0, 0)),
                pl.BlockSpec((1, N), lambda i: (0, 0)),
            ],
            out_specs=pl.BlockSpec((tm, N), lambda i: (i, 0)),
        ),
        compiler_params=pltpu.CompilerParams(
            dimension_semantics=("parallel",)),
    )(x, w, b2)
    return out[:M] if pad_m else out


def _fused_mlp_kernel(x_ref, w1_ref, b1_ref, w2_ref, b2_ref,
                      logits_ref, proba_ref, acc_ref):
    """h1 = relu(x @ w1 + b1); logits = h1 @ w2 + b2; proba = softmax(logits).

    K (of the x @ w1 product) is tiled over the grid; the accumulator is
    initialized with the first partial product + bias (no zero pass)."""
    k = pl.program_id(0)
    partial = jnp.dot(x_ref[...], w1_ref[...].astype(jnp.float32),
                      preferred_element_type=jnp.float32)

    @pl.when(k == 0)
    def _():
        acc_ref[...] = partial + b1_ref[...]

    @pl.when(k > 0)
    def _():
        acc_ref[...] += partial

    @pl.when(k == pl.num_programs(0) - 1)
    def _():
        h1 = jnp.maximum(acc_ref[...], 0.0)
        logits = jnp.dot(h1, w2_ref[...].astype(jnp.float32),
                         preferred_element_type=jnp.float32) + b2_ref[...]
        logits_ref[...] = logits.astype(logits_ref.dtype)
        m = jnp.max(logits, axis=1, keepdims=True)
        e = jnp.exp(logits - m)
        inv = pl.reciprocal(jnp.sum(e, axis=1, keepdims=True), approx=True)
        proba_ref[...] = (e * inv).astype(proba_ref.dtype)


def fused_mlp(x, w1, b1, w2, b2, *, tk=4096):
    """x: (M, K) f32, w1: (K, H) bf16, w2: (H, N) bf16 -> (logits, proba)."""
    M, K = x.shape
    _, H = w1.shape
    _, N = w2.shape
    tk = min(tk, K)
    pad_k = (-K) % tk
    if pad_k:                       # never fall back to a single (K, H) block
        x = jnp.pad(x, ((0, 0), (0, pad_k)))
        w1 = jnp.pad(w1, ((0, pad_k), (0, 0)))
    Kp = K + pad_k
    b1 = b1.reshape(1, H).astype(jnp.float32)
    b2 = b2.reshape(1, N).astype(jnp.float32)
    return pl.pallas_call(
        _fused_mlp_kernel,
        out_shape=(jax.ShapeDtypeStruct((M, N), jnp.float32),
                   jax.ShapeDtypeStruct((M, N), jnp.float32)),
        grid_spec=pltpu.PrefetchScalarGridSpec(
            num_scalar_prefetch=0,
            grid=(Kp // tk,),
            in_specs=[
                pl.BlockSpec((M, tk), lambda k: (0, k)),
                pl.BlockSpec((tk, H), lambda k: (k, 0)),
                pl.BlockSpec((1, H), lambda k: (0, 0)),
                pl.BlockSpec((H, N), lambda k: (0, 0)),
                pl.BlockSpec((1, N), lambda k: (0, 0)),
            ],
            out_specs=[
                pl.BlockSpec((M, N), lambda k: (0, 0)),
                pl.BlockSpec((M, N), lambda k: (0, 0)),
            ],
            scratch_shapes=[pltpu.VMEM((M, H), jnp.float32)],
        ),
        compiler_params=pltpu.CompilerParams(
            dimension_semantics=("arbitrary",)),
    )(x, w1, b1, w2, b2)


# ------------------------------ JAX-side glue ------------------------------ #

def _im2col_5x5_same(x):
    """x: (B, Cin, H, W) -> patches (B*H*W, 25*Cin), feature order (kh, kw, cin)."""
    B, Cin, H, W = x.shape
    xp = jnp.pad(x, ((0, 0), (0, 0), (2, 2), (2, 2)))
    cols = [xp[:, :, kh:kh + H, kw:kw + W] for kh in range(5) for kw in range(5)]
    patches = jnp.stack(cols, axis=1)                 # (B, 25, Cin, H, W)
    patches = patches.transpose(0, 3, 4, 1, 2)        # (B, H, W, 25, Cin)
    return patches.reshape(B * H * W, 25 * Cin)


def conv5x5_same_relu_nhwc(x, wmat_bf16, b):
    """Conv as an im2col matmul; output rows flatten (row-major) to per-batch
    (h, w, c) order.  Two pixels are packed per row so the last dim is >= 128."""
    B, Cin, H, W = x.shape
    Kp, Cout = wmat_bf16.shape                        # Kp is already a 128-multiple
    patches = _im2col_5x5_same(x)                     # (M, 25*Cin) f32
    M = patches.shape[0]
    patches = jnp.pad(patches, ((0, 0), (0, Kp - 25 * Cin)))
    pack = 2 if (M % 2 == 0 and Cout < 128) else 1
    if pack == 2:
        patches = patches.reshape(M // 2, 2 * Kp)     # free row-major reshape
        w = jnp.zeros((2 * Kp, 2 * Cout), wmat_bf16.dtype)
        w = w.at[:Kp, :Cout].set(wmat_bf16)
        w = w.at[Kp:, Cout:].set(wmat_bf16)
        bb = jnp.concatenate([b, b])
    else:
        w, bb = wmat_bf16, b
    return matmul_bias_relu(patches, w, bb)           # (M // pack, pack * Cout)


def animal_network_forward(x, kparams):
    """Mirrors AnimalNetwork.forward: returns (logits, proba)."""
    B = x.shape[0]
    conv = conv5x5_same_relu_nhwc(x, kparams["conv1_wmat"], kparams["conv1_b"])
    flat = conv.reshape(B, -1)                        # (B, H*W*64), (h, w, c) order
    logits, proba = fused_mlp(flat, kparams["fc1_w"], kparams["fc1_b"],
                              kparams["fc_out_w"], kparams["fc_out_b"], tk=4096)
    return logits, proba


# ------------------------------- parameters -------------------------------- #

def _bf16_round(a):
    return a.astype(jnp.bfloat16).astype(jnp.float32)


def init_params(key, input_channels, n_classes, H, W):
    """PyTorch-layout parameters (weights pre-rounded to bf16 values)."""
    conv_out, hidden = 64, 512
    flat_dim = conv_out * H * W
    ks = jax.random.split(key, 6)
    return {
        "conv1_w": _bf16_round(
            jax.random.normal(ks[0], (conv_out, input_channels, 5, 5), jnp.float32)
            / jnp.sqrt(25.0 * input_channels)),
        "conv1_b": 0.01 * jax.random.normal(ks[1], (conv_out,), jnp.float32),
        "fc1_w": _bf16_round(
            jax.random.normal(ks[2], (hidden, flat_dim), jnp.float32)
            / jnp.sqrt(float(flat_dim))),
        "fc1_b": 0.01 * jax.random.normal(ks[3], (hidden,), jnp.float32),
        "fc_out_w": _bf16_round(
            jax.random.normal(ks[4], (n_classes, hidden), jnp.float32)
            / jnp.sqrt(float(hidden))),
        "fc_out_b": 0.01 * jax.random.normal(ks[5], (n_classes,), jnp.float32),
    }


def prepare_params(params, H, W):
    """One-time host-side layout/precision prep: bf16 weight streams, im2col
    conv weight (K padded to 128), fc1 columns permuted to NHWC-flat order."""
    Cout, Cin, KH, KW = params["conv1_w"].shape
    hidden, flat_dim = params["fc1_w"].shape
    n_classes = params["fc_out_w"].shape[0]
    K = KH * KW * Cin
    Kp = ((K + 127) // 128) * 128
    wmat = params["conv1_w"].transpose(2, 3, 1, 0).reshape(K, Cout)
    wmat = jnp.pad(wmat, ((0, Kp - K), (0, 0))).astype(jnp.bfloat16)
    fc1_w = (params["fc1_w"].reshape(hidden, Cout, H, W)
             .transpose(0, 2, 3, 1).reshape(hidden, flat_dim).T).astype(jnp.bfloat16)
    return {
        "conv1_wmat": wmat,                                   # (Kp, 64) bf16
        "conv1_b": params["conv1_b"].astype(jnp.float32),
        "fc1_w": fc1_w,                                       # (flat_dim, 512) bf16
        "fc1_b": params["fc1_b"].astype(jnp.float32),
        "fc_out_w": params["fc_out_w"].T.astype(jnp.bfloat16),  # (512, n_classes)
        "fc_out_b": params["fc_out_b"].astype(jnp.float32),
    }


def reference_forward(x, params):
    """Plain-JAX reference (PyTorch NCHW flatten order) for a sanity check."""
    conv = jax.lax.conv_general_dilated(
        x, params["conv1_w"], window_strides=(1, 1), padding=((2, 2), (2, 2)),
        dimension_numbers=("NCHW", "OIHW", "NCHW"),
        precision=jax.lax.Precision.HIGHEST)
    conv = jnp.maximum(conv + params["conv1_b"][None, :, None, None], 0.0)
    h = conv.reshape(x.shape[0], -1)
    h1 = jnp.maximum(
        jnp.dot(h, params["fc1_w"].T, precision=jax.lax.Precision.HIGHEST)
        + params["fc1_b"], 0.0)
    logits = jnp.dot(h1, params["fc_out_w"].T,
                     precision=jax.lax.Precision.HIGHEST) + params["fc_out_b"]
    return logits, jax.nn.softmax(logits, axis=1)


if __name__ == "__main__":
    B, Cin, H, W = 2, 4, 16, 16
    n_classes = 10

    key = jax.random.PRNGKey(0)
    kx, kp = jax.random.split(key)
    x = jax.random.normal(kx, (B, Cin, H, W), jnp.float32)
    params = init_params(kp, Cin, n_classes, H, W)
    kparams = prepare_params(params, H, W)

    fwd = jax.jit(animal_network_forward)
    logits, proba = fwd(x, kparams)
    jax.block_until_ready((logits, proba))

    ref_logits, ref_proba = reference_forward(x, params)
    assert logits.shape == (B, n_classes) and proba.shape == (B, n_classes)
    assert jnp.allclose(logits, ref_logits, rtol=2e-2, atol=2e-2)
    assert jnp.allclose(proba, ref_proba, rtol=2e-2, atol=2e-2)
    assert jnp.allclose(jnp.sum(proba, axis=1), 1.0, atol=2e-3)

    print("KERNEL_OK")
</pallas_src>

<mosaic_0001>
module attributes {stable_mosaic.version = 11 : i64} {
  func.func @_matmul_bias_relu_kernel(%arg0: i32, %arg1: memref<256x256xf32, #tpu.memory_space<vmem>>, %arg2: memref<256x128xbf16, #tpu.memory_space<vmem>>, %arg3: memref<1x128xf32, #tpu.memory_space<vmem>>, %arg4: memref<256x128xf32, #tpu.memory_space<vmem>>) attributes {dimension_semantics = [#tpu.dimension_semantics<parallel>], iteration_bounds = array<i64: 1>, scalar_prefetch = 0 : i64, scratch_operands = 0 : i64, tpu.core_type = #tpu.core_type<tc>, window_params = [{transform_indices = @transform_0, window_bounds = array<i64: 256, 256>}, {pipeline_mode = #tpu.pipeline_mode<synchronous>, transform_indices = @transform_1, window_bounds = array<i64: 256, 128>}, {pipeline_mode = #tpu.pipeline_mode<synchronous>, transform_indices = @transform_2, window_bounds = array<i64: 1, 128>}, {transform_indices = @transform_3, window_bounds = array<i64: 256, 128>}]} {
    %c0 = arith.constant 0 : index
    %c0_0 = arith.constant 0 : index
    %0 = vector.load %arg1[%c0, %c0_0] : memref<256x256xf32, #tpu.memory_space<vmem>>, vector<256x256xf32>
    %c0_1 = arith.constant 0 : index
    %c0_2 = arith.constant 0 : index
    %1 = vector.load %arg2[%c0_1, %c0_2] : memref<256x128xbf16, #tpu.memory_space<vmem>>, vector<256x128xbf16>
    %2 = arith.extf %1 : vector<256x128xbf16> to vector<256x128xf32>
    %cst = arith.constant dense<0.000000e+00> : vector<256x128xf32>
    %3 = tpu.matmul %0, %2, %cst {dimension_numbers = #tpu.dot_dimension_numbers<[1], [0], [0], [1], [0, 0, 1, 1], [], []>} : vector<256x256xf32>, vector<256x128xf32>, vector<256x128xf32> -> vector<256x128xf32>
    %c0_3 = arith.constant 0 : index
    %c0_4 = arith.constant 0 : index
    %4 = vector.load %arg3[%c0_3, %c0_4] : memref<1x128xf32, #tpu.memory_space<vmem>>, vector<1x128xf32>
    %5 = vector.broadcast %4 : vector<1x128xf32> to vector<256x128xf32>
    %6 = arith.addf %3, %5 : vector<256x128xf32>
    %cst_5 = arith.constant 0.000000e+00 : f32
    %7 = vector.broadcast %cst_5 : f32 to vector<256x128xf32>
    %8 = arith.maximumf %6, %7 : vector<256x128xf32>
    %c0_6 = arith.constant 0 : index
    %c0_7 = arith.constant 0 : index
    %9 = vector.load %arg4[%c0_6, %c0_7] : memref<256x128xf32, #tpu.memory_space<vmem>>, vector<256x128xf32>
    tpu.vector_store %arg4[%c0_6, %c0_7], %8 {strides = array<i32>} : memref<256x128xf32, #tpu.memory_space<vmem>>, vector<256x128xf32>,
    return
  }
  func.func @transform_0(%arg0: i32) -> (i32, i32) {
    %c0_i32 = arith.constant 0 : i32
    %c0_i32_0 = arith.constant 0 : i32
    return %arg0, %c0_i32 : i32, i32
  }
  func.func @transform_1(%arg0: i32) -> (i32, i32) {
    %c0_i32 = arith.constant 0 : i32
    %c0_i32_0 = arith.constant 0 : i32
    %c0_i32_1 = arith.constant 0 : i32
    return %c0_i32, %c0_i32_0 : i32, i32
  }
  func.func @transform_2(%arg0: i32) -> (i32, i32) {
    %c0_i32 = arith.constant 0 : i32
    %c0_i32_0 = arith.constant 0 : i32
    %c0_i32_1 = arith.constant 0 : i32
    return %c0_i32, %c0_i32_0 : i32, i32
  }
  func.func @transform_3(%arg0: i32) -> (i32, i32) {
    %c0_i32 = arith.constant 0 : i32
    %c0_i32_0 = arith.constant 0 : i32
    return %arg0, %c0_i32 : i32, i32
  }
}

module attributes {stable_mosaic.version = 11 : i64} {
  func.func @_fused_mlp_kernel(%arg0: i32, %arg1: memref<2x4096xf32, #tpu.memory_space<vmem>>, %arg2: memref<4096x512xbf16, #tpu.memory_space<vmem>>, %arg3: memref<1x512xf32, #tpu.memory_space<vmem>>, %arg4: memref<512x10xbf16, #tpu.memory_space<vmem>>, %arg5: memref<1x10xf32, #tpu.memory_space<vmem>>, %arg6: memref<2x10xf32, #tpu.memory_space<vmem>>, %arg7: memref<2x10xf32, #tpu.memory_space<vmem>>, %arg8: memref<2x512xf32, #tpu.memory_space<vmem>>) attributes {dimension_semantics = [#tpu.dimension_semantics<arbitrary>], iteration_bounds = array<i64: 4>, scalar_prefetch = 0 : i64, scratch_operands = 1 : i64, tpu.core_type = #tpu.core_type<tc>, window_params = [{transform_indices = @transform_0, window_bounds = array<i64: 2, 4096>}, {transform_indices = @transform_1, window_bounds = array<i64: 4096, 512>}, {pipeline_mode = #tpu.pipeline_mode<synchronous>, transform_indices = @transform_2, window_bounds = array<i64: 1, 512>}, {pipeline_mode = #tpu.pipeline_mode<synchronous>, transform_indices = @transform_3, window_bounds = array<i64: 512, 10>}, {pipeline_mode = #tpu.pipeline_mode<synchronous>, transform_indices = @transform_4, window_bounds = array<i64: 1, 10>}, {pipeline_mode = #tpu.pipeline_mode<synchronous>, transform_indices = @transform_5, window_bounds = array<i64: 2, 10>}, {pipeline_mode = #tpu.pipeline_mode<synchronous>, transform_indices = @transform_6, window_bounds = array<i64: 2, 10>}]} {
    %c0 = arith.constant 0 : index
    %c0_0 = arith.constant 0 : index
    %0 = vector.load %arg1[%c0, %c0_0] : memref<2x4096xf32, #tpu.memory_space<vmem>>, vector<2x4096xf32>
    %c0_1 = arith.constant 0 : index
    %c0_2 = arith.constant 0 : index
    %1 = vector.load %arg2[%c0_1, %c0_2] : memref<4096x512xbf16, #tpu.memory_space<vmem>>, vector<4096x512xbf16>
    %2 = arith.extf %1 : vector<4096x512xbf16> to vector<4096x512xf32>
    %cst = arith.constant dense<0.000000e+00> : vector<2x512xf32>
    %3 = tpu.matmul %0, %2, %cst {dimension_numbers = #tpu.dot_dimension_numbers<[1], [0], [0], [1], [0, 0, 1, 1], [], []>} : vector<2x4096xf32>, vector<4096x512xf32>, vector<2x512xf32> -> vector<2x512xf32>
    %c0_i32 = arith.constant 0 : i32
    %4 = arith.cmpi eq, %arg0, %c0_i32 : i32
    %5 = arith.extui %4 : i1 to i32
    %c0_i32_3 = arith.constant 0 : i32
    %6 = arith.cmpi ne, %5, %c0_i32_3 : i32
    scf.if %6 {
      %c0_7 = arith.constant 0 : index
      %c0_8 = arith.constant 0 : index
      %13 = vector.load %arg3[%c0_7, %c0_8] : memref<1x512xf32, #tpu.memory_space<vmem>>, vector<1x512xf32>
      %14 = vector.broadcast %13 : vector<1x512xf32> to vector<2x512xf32>
      %15 = arith.addf %3, %14 : vector<2x512xf32>
      %c0_9 = arith.constant 0 : index
      %c0_10 = arith.constant 0 : index
      %16 = vector.load %arg8[%c0_9, %c0_10] : memref<2x512xf32, #tpu.memory_space<vmem>>, vector<2x512xf32>
      tpu.vector_store %arg8[%c0_9, %c0_10], %15 {strides = array<i32>} : memref<2x512xf32, #tpu.memory_space<vmem>>, vector<2x512xf32>,
    } else {
    }
    %c0_i32_4 = arith.constant 0 : i32
    %7 = arith.cmpi sgt, %arg0, %c0_i32_4 : i32
    %8 = arith.extui %7 : i1 to i32
    %c0_i32_5 = arith.constant 0 : i32
    %9 = arith.cmpi ne, %8, %c0_i32_5 : i32
    scf.if %9 {
      %c0_7 = arith.constant 0 : index
      %c0_8 = arith.constant 0 : index
      %13 = vector.load %arg8[%c0_7, %c0_8] : memref<2x512xf32, #tpu.memory_space<vmem>>, vector<2x512xf32>
      %14 = arith.addf %13, %3 : vector<2x512xf32>
      %c0_9 = arith.constant 0 : index
      %c0_10 = arith.constant 0 : index
      %15 = vector.load %arg8[%c0_9, %c0_10] : memref<2x512xf32, #tpu.memory_space<vmem>>, vector<2x512xf32>
      tpu.vector_store %arg8[%c0_9, %c0_10], %14 {strides = array<i32>} : memref<2x512xf32, #tpu.memory_space<vmem>>, vector<2x512xf32>,
    } else {
    }
    %c3_i32 = arith.constant 3 : i32
    %10 = arith.cmpi eq, %arg0, %c3_i32 : i32
    %11 = arith.extui %10 : i1 to i32
    %c0_i32_6 = arith.constant 0 : i32
    %12 = arith.cmpi ne, %11, %c0_i32_6 : i32
    scf.if %12 {
      %c0_7 = arith.constant 0 : index
      %c0_8 = arith.constant 0 : index
      %13 = vector.load %arg8[%c0_7, %c0_8] : memref<2x512xf32, #tpu.memory_space<vmem>>, vector<2x512xf32>
      %cst_9 = arith.constant 0.000000e+00 : f32
      %14 = vector.broadcast %cst_9 : f32 to vector<2x512xf32>
      %15 = arith.maximumf %13, %14 : vector<2x512xf32>
      %c0_10 = arith.constant 0 : index
      %c0_11 = arith.constant 0 : index
      %16 = vector.load %arg4[%c0_10, %c0_11] : memref<512x10xbf16, #tpu.memory_space<vmem>>, vector<512x10xbf16>
      %17 = arith.extf %16 : vector<512x10xbf16> to vector<512x10xf32>
      %cst_12 = arith.constant dense<0.000000e+00> : vector<2x10xf32>
      %18 = tpu.matmul %15, %17, %cst_12 {dimension_numbers = #tpu.dot_dimension_numbers<[1], [0], [0], [1], [0, 0, 1, 1], [], []>} : vector<2x512xf32>, vector<512x10xf32>, vector<2x10xf32> -> vector<2x10xf32>
      %c0_13 = arith.constant 0 : index
      %c0_14 = arith.constant 0 : index
      %19 = vector.load %arg5[%c0_13, %c0_14] : memref<1x10xf32, #tpu.memory_space<vmem>>, vector<1x10xf32>
      %20 = vector.broadcast %19 : vector<1x10xf32> to vector<2x10xf32>
      %21 = arith.addf %18, %20 : vector<2x10xf32>
      %c0_15 = arith.constant 0 : index
      %c0_16 = arith.constant 0 : index
      %22 = vector.load %arg6[%c0_15, %c0_16] : memref<2x10xf32, #tpu.memory_space<vmem>>, vector<2x10xf32>
      tpu.vector_store %arg6[%c0_15, %c0_16], %21 {strides = array<i32>} : memref<2x10xf32, #tpu.memory_space<vmem>>, vector<2x10xf32>,
      %cst_17 = arith.constant dense<0xFF800000> : vector<2xf32>
      %23 = vector.multi_reduction <maximumf>, %21, %cst_17 [1] : vector<2x10xf32> to vector<2xf32>
      %24 = vector.shape_cast %23 : vector<2xf32> to vector<2x1xf32>
      %25 = vector.broadcast %24 : vector<2x1xf32> to vector<2x10xf32>
      %26 = arith.subf %21, %25 : vector<2x10xf32>
      %27 = math.exp %26 : vector<2x10xf32>
      %cst_18 = arith.constant dense<0.000000e+00> : vector<2xf32>
      %28 = vector.multi_reduction <add>, %27, %cst_18 [1] : vector<2x10xf32> to vector<2xf32>
      %29 = vector.shape_cast %28 : vector<2xf32> to vector<2x1xf32>
      %30 = tpu.reciprocal %29 {approx = true} : vector<2x1xf32> -> vector<2x1xf32>
      %31 = vector.broadcast %30 : vector<2x1xf32> to vector<2x10xf32>
      %32 = arith.mulf %27, %31 : vector<2x10xf32>
      %c0_19 = arith.constant 0 : index
      %c0_20 = arith.constant 0 : index
      %33 = vector.load %arg7[%c0_19, %c0_20] : memref<2x10xf32, #tpu.memory_space<vmem>>, vector<2x10xf32>
      tpu.vector_store %arg7[%c0_19, %c0_20], %32 {strides = array<i32>} : memref<2x10xf32, #tpu.memory_space<vmem>>, vector<2x10xf32>,
    } else {
    }
    return
  }
  func.func @transform_0(%arg0: i32) -> (i32, i32) {
    %c0_i32 = arith.constant 0 : i32
    %c0_i32_0 = arith.constant 0 : i32
    return %c0_i32, %arg0 : i32, i32
  }
  func.func @transform_1(%arg0: i32) -> (i32, i32) {
    %c0_i32 = arith.constant 0 : i32
    %c0_i32_0 = arith.constant 0 : i32
    return %arg0, %c0_i32 : i32, i32
  }
  func.func @transform_2(%arg0: i32) -> (i32, i32) {
    %c0_i32 = arith.constant 0 : i32
    %c0_i32_0 = arith.constant 0 : i32
    %c0_i32_1 = arith.constant 0 : i32
    return %c0_i32, %c0_i32_0 : i32, i32
  }
  func.func @transform_3(%arg0: i32) -> (i32, i32) {
    %c0_i32 = arith.constant 0 : i32
    %c0_i32_0 = arith.constant 0 : i32
    %c0_i32_1 = arith.constant 0 : i32
    return %c0_i32, %c0_i32_0 : i32, i32
  }
  func.func @transform_4(%arg0: i32) -> (i32, i32) {
    %c0_i32 = arith.constant 0 : i32
    %c0_i32_0 = arith.constant 0 : i32
    %c0_i32_1 = arith.constant 0 : i32
    return %c0_i32, %c0_i32_0 : i32, i32
  }
  func.func @transform_5(%arg0: i32) -> (i32, i32) {
    %c0_i32 = arith.constant 0 : i32
    %c0_i32_0 = arith.constant 0 : i32
    %c0_i32_1 = arith.constant 0 : i32
    return %c0_i32, %c0_i32_0 : i32, i32
  }
  func.func @transform_6(%arg0: i32) -> (i32, i32) {
    %c0_i32 = arith.constant 0 : i32
    %c0_i32_0 = arith.constant 0 : i32
    %c0_i32_1 = arith.constant 0 : i32
    return %c0_i32, %c0_i32_0 : i32, i32
  }
}

</mosaic_0001>

<llo_original>
// kernel: animal_network_forward.2
$region0: #{animal_network_forward.2}
  #allocation0 [shape = 'u32[]', space=smem, size = 0x4, offset = 0x4, fixed_abs, tag = 'smem constant byte address 0x4 - core index']
  #allocation1 [shape = 'u32[144,128]{1,0:T(1,128)}', space=vmem, size = 0x12000, scoped, tag = 'internal scratch']
  %s0 = inlined_call_operand.vmem [shape: f32[256,256], index: 0, kind: input, shape index: {}]
  %s1 = inlined_call_operand.vmem [shape: bf16[256,128], index: 1, kind: input, shape index: {}]
  %s2 = inlined_call_operand.vmem [shape: f32[1,128], index: 2, kind: input, shape index: {}]
  %s3 = inlined_call_operand.vmem [shape: f32[256,128], index: 3, kind: output, shape index: {}]
  %s4 = sld [smem:[#allocation0]]
  $region22: #{animal_network_forward.2} parent=0
    _
  %s6 = ssub.s32 1, %s4
  %s7 = scalar_select 0, %s6, %s4
  // Predicated region
  $region2: #{animal_network_forward.2} parent=0 // pred_check
    _
  $region3: #{animal_network_forward.2} parent=0 // pred_check_branch
    %9 = sbr.rel (0) target = $region5
  $region4: #{animal_network_forward.2} parent=0 // pred_region
    _
  $region5: #{animal_network_forward.2} parent=0 // pred_fallthru
    _
  // Predicated region
  $region6: #{animal_network_forward.2} parent=0 // pred_check
    _
  $region7: #{animal_network_forward.2} parent=0 // pred_check_branch
    %11 = sbr.rel (0) target = $region9
  $region8: #{animal_network_forward.2} parent=0 // pred_region
    _
  $region9: #{animal_network_forward.2} parent=0 // pred_fallthru
    _
  // Predicated region
  $region10: #{animal_network_forward.2} parent=0 // pred_check
    _
  $region11: #{animal_network_forward.2} parent=0 // pred_check_branch
    %13 = sbr.rel (0) target = $region13
  $region12: #{animal_network_forward.2} parent=0 // pred_region
    _
  $region13: #{animal_network_forward.2} parent=0 // pred_fallthru
    _
  %v14 = vld [vmem:[%s0] sm:$0xff]
  %v15 = vld [vmem:[%s0 + $0x8] sm:$0xff]
  %v16 = vld [vmem:[%s0 + $0x10] sm:$0xff]
  %v17 = vld [vmem:[%s0 + $0x18] sm:$0xff]
  %v18 = vld [vmem:[%s0 + $0x20] sm:$0xff]
  %v19 = vld [vmem:[%s0 + $0x28] sm:$0xff]
  %v20 = vld [vmem:[%s0 + $0x30] sm:$0xff]
  %v21 = vld [vmem:[%s0 + $0x38] sm:$0xff]
  %v22 = vld [vmem:[%s0 + $0x40] sm:$0xff]
  %v23 = vld [vmem:[%s0 + $0x48] sm:$0xff]
  %v24 = vld [vmem:[%s0 + $0x50] sm:$0xff]
  %v25 = vld [vmem:[%s0 + $0x58] sm:$0xff]
  %v26 = vld [vmem:[%s0 + $0x60] sm:$0xff]
  %v27 = vld [vmem:[%s0 + $0x68] sm:$0xff]
  %v28 = vld [vmem:[%s0 + $0x70] sm:$0xff]
  %v29 = vld [vmem:[%s0 + $0x78] sm:$0xff]
  %v30 = vld [vmem:[%s0 + $0x80] sm:$0xff]
  %v31 = vld [vmem:[%s0 + $0x88] sm:$0xff]
  %v32 = vld [vmem:[%s0 + $0x90] sm:$0xff]
  %v33 = vld [vmem:[%s0 + $0x98] sm:$0xff]
  %v34 = vld [vmem:[%s0 + $0xa0] sm:$0xff]
  %v35 = vld [vmem:[%s0 + $0xa8] sm:$0xff]
  %v36 = vld [vmem:[%s0 + $0xb0] sm:$0xff]
  %v37 = vld [vmem:[%s0 + $0xb8] sm:$0xff]
  %v38 = vld [vmem:[%s0 + $0xc0] sm:$0xff]
  %v39 = vld [vmem:[%s0 + $0xc8] sm:$0xff]
  %v40 = vld [vmem:[%s0 + $0xd0] sm:$0xff]
  %v41 = vld [vmem:[%s0 + $0xd8] sm:$0xff]
  %v42 = vld [vmem:[%s0 + $0xe0] sm:$0xff]
  %v43 = vld [vmem:[%s0 + $0xe8] sm:$0xff]
  %v44 = vld [vmem:[%s0 + $0xf0] sm:$0xff]
  %v45 = vld [vmem:[%s0 + $0xf8] sm:$0xff]
  %v46 = vld [vmem:[%s0 + $0x100] sm:$0xff]
  %v47 = vld [vmem:[%s0 + $0x108] sm:$0xff]
  %v48 = vld [vmem:[%s0 + $0x110] sm:$0xff]
  %v49 = vld [vmem:[%s0 + $0x118] sm:$0xff]
  %v50 = vld [vmem:[%s0 + $0x120] sm:$0xff]
  %v51 = vld [vmem:[%s0 + $0x128] sm:$0xff]
  %v52 = vld [vmem:[%s0 + $0x130] sm:$0xff]
  %v53 = vld [vmem:[%s0 + $0x138] sm:$0xff]
  %v54 = vld [vmem:[%s0 + $0x140] sm:$0xff]
  %v55 = vld [vmem:[%s0 + $0x148] sm:$0xff]
  %v56 = vld [vmem:[%s0 + $0x150] sm:$0xff]
  %v57 = vld [vmem:[%s0 + $0x158] sm:$0xff]
  %v58 = vld [vmem:[%s0 + $0x160] sm:$0xff]
  %v59 = vld [vmem:[%s0 + $0x168] sm:$0xff]
  %v60 = vld [vmem:[%s0 + $0x170] sm:$0xff]
  %v61 = vld [vmem:[%s0 + $0x178] sm:$0xff]
  %v62 = vld [vmem:[%s0 + $0x180] sm:$0xff]
  %v63 = vld [vmem:[%s0 + $0x188] sm:$0xff]
  %v64 = vld [vmem:[%s0 + $0x190] sm:$0xff]
  %v65 = vld [vmem:[%s0 + $0x198] sm:$0xff]
  %v66 = vld [vmem:[%s0 + $0x1a0] sm:$0xff]
  %v67 = vld [vmem:[%s0 + $0x1a8] sm:$0xff]
  %v68 = vld [vmem:[%s0 + $0x1b0] sm:$0xff]
  %v69 = vld [vmem:[%s0 + $0x1b8] sm:$0xff]
  %v70 = vld [vmem:[%s0 + $0x1c0] sm:$0xff]
  %v71 = vld [vmem:[%s0 + $0x1c8] sm:$0xff]
  %v72 = vld [vmem:[%s0 + $0x1d0] sm:$0xff]
  %v73 = vld [vmem:[%s0 + $0x1d8] sm:$0xff]
  %v74 = vld [vmem:[%s0 + $0x1e0] sm:$0xff]
  %v75 = vld [vmem:[%s0 + $0x1e8] sm:$0xff]
  %v76 = vld [vmem:[%s0 + $0x1f0] sm:$0xff]
  %v77 = vld [vmem:[%s0 + $0x1f8] sm:$0xff]
  %v78 = vld [vmem:[%s1] sm:$0xf]
  %v79 = vld [vmem:[%s1 + $0x4] sm:$0xf]
  %v80 = vld [vmem:[%s1 + $0x8] sm:$0xf]
  %v81 = vld [vmem:[%s1 + $0xc] sm:$0xf]
  %v82 = vld [vmem:[%s1 + $0x10] sm:$0xf]
  %v83 = vld [vmem:[%s1 + $0x14] sm:$0xf]
  %v84 = vld [vmem:[%s1 + $0x18] sm:$0xf]
  %v85 = vld [vmem:[%s1 + $0x1c] sm:$0xf]
  %v86 = vld [vmem:[%s1 + $0x20] sm:$0xf]
  %v87 = vld [vmem:[%s1 + $0x24] sm:$0xf]
  %v88 = vld [vmem:[%s1 + $0x28] sm:$0xf]
  %v89 = vld [vmem:[%s1 + $0x2c] sm:$0xf]
  %v90 = vld [vmem:[%s1 + $0x30] sm:$0xf]
  %v91 = vld [vmem:[%s1 + $0x34] sm:$0xf]
  %v92 = vld [vmem:[%s1 + $0x38] sm:$0xf]
  %v93 = vld [vmem:[%s1 + $0x3c] sm:$0xf]
  %v94 = vld [vmem:[%s1 + $0x40] sm:$0xf]
  %v95 = vld [vmem:[%s1 + $0x44] sm:$0xf]
  %v96 = vld [vmem:[%s1 + $0x48] sm:$0xf]
  %v97 = vld [vmem:[%s1 + $0x4c] sm:$0xf]
  %v98 = vld [vmem:[%s1 + $0x50] sm:$0xf]
  %v99 = vld [vmem:[%s1 + $0x54] sm:$0xf]
  %v100 = vld [vmem:[%s1 + $0x58] sm:$0xf]
  %v101 = vld [vmem:[%s1 + $0x5c] sm:$0xf]
  %v102 = vld [vmem:[%s1 + $0x60] sm:$0xf]
  %v103 = vld [vmem:[%s1 + $0x64] sm:$0xf]
  %v104 = vld [vmem:[%s1 + $0x68] sm:$0xf]
  %v105 = vld [vmem:[%s1 + $0x6c] sm:$0xf]
  %v106 = vld [vmem:[%s1 + $0x70] sm:$0xf]
  %v107 = vld [vmem:[%s1 + $0x74] sm:$0xf]
  %v108 = vld [vmem:[%s1 + $0x78] sm:$0xf]
  %v109 = vld [vmem:[%s1 + $0x7c] sm:$0xf]
  %v110 = vunpack.c.l.bf16 %v78
  %v111 = vunpack.c.l.bf16 %v79
  %v112 = vunpack.c.l.bf16 %v80
  %v113 = vunpack.c.l.bf16 %v81
  %v114 = vunpack.c.l.bf16 %v82
  %v115 = vunpack.c.l.bf16 %v83
  %v116 = vunpack.c.l.bf16 %v84
  %v117 = vunpack.c.l.bf16 %v85
  %v118 = vunpack.c.l.bf16 %v86
  %v119 = vunpack.c.l.bf16 %v87
  %v120 = vunpack.c.l.bf16 %v88
  %v121 = vunpack.c.l.bf16 %v89
  %v122 = vunpack.c.l.bf16 %v90
  %v123 = vunpack.c.l.bf16 %v91
  %v124 = vunpack.c.l.bf16 %v92
  %v125 = vunpack.c.l.bf16 %v93
  %v126 = vunpack.c.l.bf16 %v94
  %v127 = vunpack.c.l.bf16 %v95
  %v128 = vunpack.c.l.bf16 %v96
  %v129 = vunpack.c.l.bf16 %v97
  %v130 = vunpack.c.l.bf16 %v98
  %v131 = vunpack.c.l.bf16 %v99
  %v132 = vunpack.c.l.bf16 %v100
  %v133 = vunpack.c.l.bf16 %v101
  %v134 = vunpack.c.l.bf16 %v102
  %v135 = vunpack.c.l.bf16 %v103
  %v136 = vunpack.c.l.bf16 %v104
  %v137 = vunpack.c.l.bf16 %v105
  %v138 = vunpack.c.l.bf16 %v106
  %v139 = vunpack.c.l.bf16 %v107
  %v140 = vunpack.c.l.bf16 %v108
  %v141 = vunpack.c.l.bf16 %v109
  %v142 = vld [vmem:[%s2] sm:$0x1]
  %v144 = vlaneseq
  %v145 = vshrl.u32 %v144, 7
  %v146 = vsub.s32 0, %v145
  %v147 = vrot.slane %v142, %v146
  %149 = vmatprep.subr.mxu0 0.0
  %150 = vmatpush1.msra.mxu0 %v110
  %151 = vmatprep.subr.mxu0 0.0
  %152 = vmatpush1.msra.mxu0 %v111
  %153 = vmatprep.subr.mxu0 0.0
  %154 = vmatpush1.msra.mxu0 %v112
  %155 = vmatprep.subr.mxu0 0.0
  %156 = vmatpush1.msra.mxu0 %v113
  %157 = vmatprep.subr.mxu0 0.0
  %158 = vmatpush1.msra.mxu0 %v114
  %159 = vmatprep.subr.mxu0 0.0
  %160 = vmatpush1.msra.mxu0 %v115
  %161 = vmatprep.subr.mxu0 0.0
  %162 = vmatpush1.msra.mxu0 %v116
  %163 = vmatprep.subr.mxu0 0.0
  %164 = vmatpush1.msra.mxu0 %v117
  %165 = vmatprep.subr.mxu0 0.0
  %166 = vmatpush1.msra.mxu0 %v118
  %167 = vmatprep.subr.mxu0 0.0
  %168 = vmatpush1.msra.mxu0 %v119
  %169 = vmatprep.subr.mxu0 0.0
  %170 = vmatpush1.msra.mxu0 %v120
  %171 = vmatprep.subr.mxu0 0.0
  %172 = vmatpush1.msra.mxu0 %v121
  %173 = vmatprep.subr.mxu0 0.0
  %174 = vmatpush1.msra.mxu0 %v122
  %175 = vmatprep.subr.mxu0 0.0
  %176 = vmatpush1.msra.mxu0 %v123
  %177 = vmatprep.subr.mxu0 0.0
  %178 = vmatpush1.msra.mxu0 %v124
  %179 = vmatprep.subr.mxu0 0.0
  %180 = vmatpush1.msra.mxu0 %v125
  %181 = vmatprep.subr.mxu0 0.0
  %182 = vmatpush1.msra.mxu0 %v126
  %183 = vmatprep.subr.mxu0 0.0
  %184 = vmatpush1.msra.mxu0 %v127
  %185 = vmatprep.subr.mxu0 0.0
  %186 = vmatpush1.msra.mxu0 %v128
  %187 = vmatprep.subr.mxu0 0.0
  %188 = vmatpush1.msra.mxu0 %v129
  %189 = vmatprep.subr.mxu0 0.0
  %190 = vmatpush1.msra.mxu0 %v130
  %191 = vmatprep.subr.mxu0 0.0
  %192 = vmatpush1.msra.mxu0 %v131
  %193 = vmatprep.subr.mxu0 0.0
  %194 = vmatpush1.msra.mxu0 %v132
  %195 = vmatprep.subr.mxu0 0.0
  %196 = vmatpush1.msra.mxu0 %v133
  %197 = vmatprep.subr.mxu0 0.0
  %198 = vmatpush1.msra.mxu0 %v134
  %199 = vmatprep.subr.mxu0 0.0
  %200 = vmatpush1.msra.mxu0 %v135
  %201 = vmatprep.subr.mxu0 0.0
  %202 = vmatpush1.msra.mxu0 %v136
  %203 = vmatprep.subr.mxu0 0.0
  %204 = vmatpush1.msra.mxu0 %v137
  %205 = vmatprep.subr.mxu0 0.0
  %206 = vmatpush1.msra.mxu0 %v138
  %207 = vmatprep.subr.mxu0 0.0
  %208 = vmatpush1.msra.mxu0 %v139
  %209 = vmatprep.subr.mxu0 0.0
  %210 = vmatpush1.msra.mxu0 %v140
  %211 = vmatprep.subr.mxu0 0.0
  %212 = vmatpush1.msra.mxu0 %v141
  %213 = vmatprep.mubr.f32.mxu0 %v15
  %214 = vmatmul.mubr.f32.gmra.mrb[0].mxu0 %v14
  %v215 = vpop.f32.mrb[0].mxu0
  %v216 = vadd.f32 %v147, %v215
  %v217 = vpop.f32.mrb[0].mxu0
  %218 = vmatprep.mubr.f32.mxu0 %v17
  %219 = vmatmul.mubr.f32.gmra.mrb[0].mxu0 %v16
  %v220 = vpop.f32.mrb[0].mxu0
  %v221 = vadd.f32 %v147, %v220
  %v222 = vpop.f32.mrb[0].mxu0
  %223 = vmatprep.mubr.f32.mxu0 %v19
  %224 = vmatmul.mubr.f32.gmra.mrb[0].mxu0 %v18
  %v225 = vpop.f32.mrb[0].mxu0
  %v226 = vadd.f32 %v147, %v225
  %v227 = vpop.f32.mrb[0].mxu0
  %228 = vmatprep.mubr.f32.mxu0 %v21
  %229 = vmatmul.mubr.f32.gmra.mrb[0].mxu0 %v20
  %v230 = vpop.f32.mrb[0].mxu0
  %v231 = vadd.f32 %v147, %v230
  %v232 = vpop.f32.mrb[0].mxu0
  %233 = vmatprep.mubr.f32.mxu0 %v23
  %234 = vmatmul.mubr.f32.gmra.mrb[0].mxu0 %v22
  %v235 = vpop.f32.mrb[0].mxu0
  %v236 = vadd.f32 %v147, %v235
  %v237 = vpop.f32.mrb[0].mxu0
  %238 = vmatprep.mubr.f32.mxu0 %v25
  %239 = vmatmul.mubr.f32.gmra.mrb[0].mxu0 %v24
  %v240 = vpop.f32.mrb[0].mxu0
  %v241 = vadd.f32 %v147, %v240
  %v242 = vpop.f32.mrb[0].mxu0
  %243 = vmatprep.mubr.f32.mxu0 %v27
  %244 = vmatmul.mubr.f32.gmra.mrb[0].mxu0 %v26
  %v245 = vpop.f32.mrb[0].mxu0
  %v246 = vadd.f32 %v147, %v245
  %v247 = vpop.f32.mrb[0].mxu0
  %248 = vmatprep.mubr.f32.mxu0 %v29
  %249 = vmatmul.mubr.f32.gmra.mrb[0].mxu0 %v28
  %v250 = vpop.f32.mrb[0].mxu0
  %v251 = vadd.f32 %v147, %v250
  %v252 = vpop.f32.mrb[0].mxu0
  %253 = vmatprep.mubr.f32.mxu0 %v31
  %254 = vmatmul.mubr.f32.gmra.mrb[0].mxu0 %v30
  %v255 = vpop.f32.mrb[0].mxu0
  %v256 = vadd.f32 %v147, %v255
  %v257 = vpop.f32.mrb[0].mxu0
  %258 = vmatprep.mubr.f32.mxu0 %v33
  %259 = vmatmul.mubr.f32.gmra.mrb[0].mxu0 %v32
  %v260 = vpop.f32.mrb[0].mxu0
  %v261 = vadd.f32 %v147, %v260
  %v262 = vpop.f32.mrb[0].mxu0
  %263 = vmatprep.mubr.f32.mxu0 %v35
  %264 = vmatmul.mubr.f32.gmra.mrb[0].mxu0 %v34
  %v265 = vpop.f32.mrb[0].mxu0
  %v266 = vadd.f32 %v147, %v265
  %v267 = vpop.f32.mrb[0].mxu0
  %268 = vmatprep.mubr.f32.mxu0 %v37
  %269 = vmatmul.mubr.f32.gmra.mrb[0].mxu0 %v36
  %v270 = vpop.f32.mrb[0].mxu0
  %v271 = vadd.f32 %v147, %v270
  %v272 = vpop.f32.mrb[0].mxu0
  %273 = vmatprep.mubr.f32.mxu0 %v39
  %274 = vmatmul.mubr.f32.gmra.mrb[0].mxu0 %v38
  %v275 = vpop.f32.mrb[0].mxu0
  %v276 = vadd.f32 %v147, %v275
  %v277 = vpop.f32.mrb[0].mxu0
  %278 = vmatprep.mubr.f32.mxu0 %v41
  %279 = vmatmul.mubr.f32.gmra.mrb[0].mxu0 %v40
  %v280 = vpop.f32.mrb[0].mxu0
  %v281 = vadd.f32 %v147, %v280
  %v282 = vpop.f32.mrb[0].mxu0
  %283 = vmatprep.mubr.f32.mxu0 %v43
  %284 = vmatmul.mubr.f32.gmra.mrb[0].mxu0 %v42
  %v285 = vpop.f32.mrb[0].mxu0
  %v286 = vadd.f32 %v147, %v285
  %v287 = vpop.f32.mrb[0].mxu0
  %288 = vmatprep.mubr.f32.mxu0 %v45
  %289 = vmatmul.mubr.f32.gmra.mrb[0].mxu0 %v44
  %v290 = vpop.f32.mrb[0].mxu0
  %v291 = vadd.f32 %v147, %v290
  %v292 = vpop.f32.mrb[0].mxu0
  %293 = vmatprep.mubr.f32.mxu0 %v47
  %294 = vmatmul.mubr.f32.gmra.mrb[0].mxu0 %v46
  %v295 = vpop.f32.mrb[0].mxu0
  %v296 = vadd.f32 %v147, %v295
  %v297 = vpop.f32.mrb[0].mxu0
  %298 = vmatprep.mubr.f32.mxu0 %v49
  %299 = vmatmul.mubr.f32.gmra.mrb[0].mxu0 %v48
  %v300 = vpop.f32.mrb[0].mxu0
  %v301 = vadd.f32 %v147, %v300
  %v302 = vpop.f32.mrb[0].mxu0
  %303 = vmatprep.mubr.f32.mxu0 %v51
  %304 = vmatmul.mubr.f32.gmra.mrb[0].mxu0 %v50
  %v305 = vpop.f32.mrb[0].mxu0
  %v306 = vadd.f32 %v147, %v305
  %v307 = vpop.f32.mrb[0].mxu0
  %308 = vmatprep.mubr.f32.mxu0 %v53
  %309 = vmatmul.mubr.f32.gmra.mrb[0].mxu0 %v52
  %v310 = vpop.f32.mrb[0].mxu0
  %v311 = vadd.f32 %v147, %v310
  %v312 = vpop.f32.mrb[0].mxu0
  %313 = vmatprep.mubr.f32.mxu0 %v55
  %314 = vmatmul.mubr.f32.gmra.mrb[0].mxu0 %v54
  %v315 = vpop.f32.mrb[0].mxu0
  %v316 = vadd.f32 %v147, %v315
  %v317 = vpop.f32.mrb[0].mxu0
  %318 = vmatprep.mubr.f32.mxu0 %v57
  %319 = vmatmul.mubr.f32.gmra.mrb[0].mxu0 %v56
  %v320 = vpop.f32.mrb[0].mxu0
  %v321 = vadd.f32 %v147, %v320
  %v322 = vpop.f32.mrb[0].mxu0
  %323 = vmatprep.mubr.f32.mxu0 %v59
  %324 = vmatmul.mubr.f32.gmra.mrb[0].mxu0 %v58
  %v325 = vpop.f32.mrb[0].mxu0
  %v326 = vadd.f32 %v147, %v325
  %v327 = vpop.f32.mrb[0].mxu0
  %328 = vmatprep.mubr.f32.mxu0 %v61
  %329 = vmatmul.mubr.f32.gmra.mrb[0].mxu0 %v60
  %v330 = vpop.f32.mrb[0].mxu0
  %v331 = vadd.f32 %v147, %v330
  %v332 = vpop.f32.mrb[0].mxu0
  %333 = vmatprep.mubr.f32.mxu0 %v63
  %334 = vmatmul.mubr.f32.gmra.mrb[0].mxu0 %v62
  %v335 = vpop.f32.mrb[0].mxu0
  %v336 = vadd.f32 %v147, %v335
  %v337 = vpop.f32.mrb[0].mxu0
  %338 = vmatprep.mubr.f32.mxu0 %v65
  %339 = vmatmul.mubr.f32.gmra.mrb[0].mxu0 %v64
  %v340 = vpop.f32.mrb[0].mxu0
  %v341 = vadd.f32 %v147, %v340
  %v342 = vpop.f32.mrb[0].mxu0
  %343 = vmatprep.mubr.f32.mxu0 %v67
  %344 = vmatmul.mubr.f32.gmra.mrb[0].mxu0 %v66
  %v345 = vpop.f32.mrb[0].mxu0
  %v346 = vadd.f32 %v147, %v345
  %v347 = vpop.f32.mrb[0].mxu0
  %348 = vmatprep.mubr.f32.mxu0 %v69
  %349 = vmatmul.mubr.f32.gmra.mrb[0].mxu0 %v68
  %v350 = vpop.f32.mrb[0].mxu0
  %v351 = vadd.f32 %v147, %v350
  %v352 = vpop.f32.mrb[0].mxu0
  %353 = vmatprep.mubr.f32.mxu0 %v71
  %354 = vmatmul.mubr.f32.gmra.mrb[0].mxu0 %v70
  %v355 = vpop.f32.mrb[0].mxu0
  %v356 = vadd.f32 %v147, %v355
  %v357 = vpop.f32.mrb[0].mxu0
  %358 = vmatprep.mubr.f32.mxu0 %v73
  %359 = vmatmul.mubr.f32.gmra.mrb[0].mxu0 %v72
  %v360 = vpop.f32.mrb[0].mxu0
  %v361 = vadd.f32 %v147, %v360
  %v362 = vpop.f32.mrb[0].mxu0
  %363 = vmatprep.mubr.f32.mxu0 %v75
  %364 = vmatmul.mubr.f32.gmra.mrb[0].mxu0 %v74
  %v365 = vpop.f32.mrb[0].mxu0
  %v366 = vadd.f32 %v147, %v365
  %v367 = vpop.f32.mrb[0].mxu0
  %368 = vmatprep.mubr.f32.mxu0 %v77
  %369 = vmatmul.mubr.f32.gmra.mrb[0].mxu0 %v76
  %v370 = vpop.f32.mrb[0].mxu0
  %v371 = vadd.f32 %v147, %v370
  %v372 = vpop.f32.mrb[0].mxu0
  %373 = vdwg.mxu0
  %v374 = vmax.f32 %v216, 0.0
  %v375 = vmax.f32 %v221, 0.0
  %v376 = vmax.f32 %v226, 0.0
  %v377 = vmax.f32 %v231, 0.0
  %v378 = vmax.f32 %v236, 0.0
  %v379 = vmax.f32 %v241, 0.0
  %v380 = vmax.f32 %v246, 0.0
  %v381 = vmax.f32 %v251, 0.0
  %v382 = vmax.f32 %v256, 0.0
  %v383 = vmax.f32 %v261, 0.0
  %v384 = vmax.f32 %v266, 0.0
  %v385 = vmax.f32 %v271, 0.0
  %v386 = vmax.f32 %v276, 0.0
  %v387 = vmax.f32 %v281, 0.0
  %v388 = vmax.f32 %v286, 0.0
  %v389 = vmax.f32 %v291, 0.0
  %v390 = vmax.f32 %v296, 0.0
  %v391 = vmax.f32 %v301, 0.0
  %v392 = vmax.f32 %v306, 0.0
  %v393 = vmax.f32 %v311, 0.0
  %v394 = vmax.f32 %v316, 0.0
  %v395 = vmax.f32 %v321, 0.0
  %v396 = vmax.f32 %v326, 0.0
  %v397 = vmax.f32 %v331, 0.0
  %v398 = vmax.f32 %v336, 0.0
  %v399 = vmax.f32 %v341, 0.0
  %v400 = vmax.f32 %v346, 0.0
  %v401 = vmax.f32 %v351, 0.0
  %v402 = vmax.f32 %v356, 0.0
  %v403 = vmax.f32 %v361, 0.0
  %v404 = vmax.f32 %v366, 0.0
  %v405 = vmax.f32 %v371, 0.0
  %406 = vst [vmem:[%s3] sm:$0xff] %v374
  %407 = vst [vmem:[%s3 + $0x8] sm:$0xff] %v375
  %408 = vst [vmem:[%s3 + $0x10] sm:$0xff] %v376
  %409 = vst [vmem:[%s3 + $0x18] sm:$0xff] %v377
  %410 = vst [vmem:[%s3 + $0x20] sm:$0xff] %v378
  %411 = vst [vmem:[%s3 + $0x28] sm:$0xff] %v379
  %412 = vst [vmem:[%s3 + $0x30] sm:$0xff] %v380
  %413 = vst [vmem:[%s3 + $0x38] sm:$0xff] %v381
  %414 = vst [vmem:[%s3 + $0x40] sm:$0xff] %v382
  %415 = vst [vmem:[%s3 + $0x48] sm:$0xff] %v383
  %416 = vst [vmem:[%s3 + $0x50] sm:$0xff] %v384
  %417 = vst [vmem:[%s3 + $0x58] sm:$0xff] %v385
  %418 = vst [vmem:[%s3 + $0x60] sm:$0xff] %v386
  %419 = vst [vmem:[%s3 + $0x68] sm:$0xff] %v387
  %420 = vst [vmem:[%s3 + $0x70] sm:$0xff] %v388
  %421 = vst [vmem:[%s3 + $0x78] sm:$0xff] %v389
  %422 = vst [vmem:[%s3 + $0x80] sm:$0xff] %v390
  %423 = vst [vmem:[%s3 + $0x88] sm:$0xff] %v391
  %424 = vst [vmem:[%s3 + $0x90] sm:$0xff] %v392
  %425 = vst [vmem:[%s3 + $0x98] sm:$0xff] %v393
  %426 = vst [vmem:[%s3 + $0xa0] sm:$0xff] %v394
  %427 = vst [vmem:[%s3 + $0xa8] sm:$0xff] %v395
  %428 = vst [vmem:[%s3 + $0xb0] sm:$0xff] %v396
  %429 = vst [vmem:[%s3 + $0xb8] sm:$0xff] %v397
  %430 = vst [vmem:[%s3 + $0xc0] sm:$0xff] %v398
  %431 = vst [vmem:[%s3 + $0xc8] sm:$0xff] %v399
  %432 = vst [vmem:[%s3 + $0xd0] sm:$0xff] %v400
  %433 = vst [vmem:[%s3 + $0xd8] sm:$0xff] %v401
  %434 = vst [vmem:[%s3 + $0xe0] sm:$0xff] %v402
  %435 = vst [vmem:[%s3 + $0xe8] sm:$0xff] %v403
  %436 = vst [vmem:[%s3 + $0xf0] sm:$0xff] %v404
  %437 = vst [vmem:[%s3 + $0xf8] sm:$0xff] %v405
  // Predicated region
  $region14: #{animal_network_forward.2} parent=0 // pred_check
    _
  $region15: #{animal_network_forward.2} parent=0 // pred_check_branch
    %439 = sbr.rel (0) target = $region17
  $region16: #{animal_network_forward.2} parent=0 // pred_region
    _
  $region17: #{animal_network_forward.2} parent=0 // pred_fallthru
    _
  // Predicated region
  $region18: #{animal_network_forward.2} parent=0 // pred_check
    _
  $region19: #{animal_network_forward.2} parent=0 // pred_check_branch
    %441 = sbr.rel (0) target = $region21
  $region20: #{animal_network_forward.2} parent=0 // pred_region
    _
  $region21: #{animal_network_forward.2} parent=0 // pred_fallthru
    _

// kernel: animal_network_forward.3
$region0: #{animal_network_forward.3}
  #allocation0 [shape = 'u32[]', space=smem, size = 0x4, offset = 0x4, fixed_abs, tag = 'smem constant byte address 0x4 - core index']
  #allocation1 [shape = 'u32[144,128]{1,0:T(1,128)}', space=vmem, size = 0x12000, scoped, tag = 'internal scratch']
  #allocation2 [shape = 'f32[2,512]{1,0:T(2,128)}', space=vmem, size = 0x1000, scoped, tag = 'scratch operand']
  %s0 = inlined_call_operand.vmem [shape: f32[2,16384], index: 0, kind: input, shape index: {}]
  %s1 = inlined_call_operand.hbm [shape: bf16[16384,512], index: 1, kind: input, shape index: {}]
  %s2 = inlined_call_operand.vmem [shape: f32[1,512], index: 2, kind: input, shape index: {}]
  %s3 = inlined_call_operand.vmem [shape: bf16[512,10], index: 3, kind: input, shape index: {}]
  %s4 = inlined_call_operand.vmem [shape: f32[1,10], index: 4, kind: input, shape index: {}]
  %s5 = inlined_call_operand.hbm [shape: f32[2,10], index: 5, kind: output, shape index: {0}]
  %s6 = inlined_call_operand.hbm [shape: f32[2,10], index: 6, kind: output, shape index: {1}]
  %7 = xla_tuple %s5, %s6
  %s8 = sld [smem:[#allocation0]]
  $region77: #{animal_network_forward.3} parent=0
    _
  %s10 = ssub.s32 1, %s8
  %s11 = scalar_select 0, %s10, %s8
  $region1: #{animal_network_forward.3} parent=0
    #allocation3 [shape = 'u8[8388608]{0}', space=vmem, size = 0x800000, scoped, tag = 'input window, operand 1']
    #allocation4 [shape = 's32[2]{0}', space=sflag, size = 0x8, scoped, tag = 'scoped memory for animal_network_forward.3']
    #allocation5 [shape = 's32[2]{0}', space=sflag, size = 0x8, scoped, tag = 'scoped memory for animal_network_forward.3']
    #allocation6 [shape = 'u8[1024]{0}', space=vmem, size = 0x400, scoped, tag = 'output window, operand 0, single buffered']
    #allocation7 [shape = 'u8[1024]{0}', space=vmem, size = 0x400, scoped, tag = 'output window, operand 1, single buffered']
    #allocation8 [shape = 's32[1]{0}', space=sflag, size = 0x4, scoped, tag = 'scoped memory for animal_network_forward.3']
    %12 = vsyncpa [#allocation4], 0
    %s13 = scalar_lea.sflag [#allocation4], 1
    %14 = vsyncpa %s13, 0
    %15 = vsyncpa [#allocation5], 0
    %16 = vsyncpa [#allocation8], 0
    loop: start=0, step=1, limit=6
    $region2: #{animal_network_forward.3} parent=1 // loop_pre_header
      _
    $region3: #{animal_network_forward.3} parent=1 // loop_header
      %s18 = sphi 0, %s22
      %p19 = scmp.ge.s32.totalorder %s18, 6
      %s28 = sphi 0, %s30
      %s31 = sphi 0, %s28
      %s32 = sphi 0, %s31
      %s48 = sphi 0, %s32
      %s54 = sphi 0, %s56
      %s57 = sphi 0, %s54
      %s58 = sphi 0, %s57
      %s74 = sphi 0, %s58
      %s78 = sphi 0, %s78
      %s80 = sphi 0, %s78
      %s81 = sphi 0, %s80
      %s95 = sphi 0, %s81
      %s99 = sphi 0, %s99
      %s101 = sphi 0, %s99
      %s102 = sphi 0, %s101
      %s116 = sphi 0, %s102
      %s120 = sphi 0, %s120
      %s122 = sphi 0, %s120
      %s123 = sphi 0, %s122
      %s137 = sphi 0, %s123
      %s141 = sphi 0, %s141
      %s143 = sphi 0, %s141
      %s144 = sphi 0, %s143
      %s158 = sphi 0, %s144
      %s162 = sphi 0, %s162
      %s164 = sphi 0, %s162
      %s165 = sphi 0, %s164
      %s179 = sphi 0, %s165
    $region4: #{animal_network_forward.3} parent=1 // loop_header_branch
      %21 = sbr.rel (%p19) target = $region8
    $region5: #{animal_network_forward.3} parent=1 // loop_body
      %s23 = ssub.s32 %s18, 1
      %s24 = ssub.s32 %s18, 2
      %s25 = sadd.s32 %s18, 1
      %s26 = ssub.s32 %s18, %s25
      %p27 = scmp.eq.s32.totalorder %s26, 0
      %s29 = sadd.s32 %s28, 1
      %s30 = scalar_select %p27, %s28, %s29
      %p33 = pneg %p27
      %p34 = scmp.eq.s32.totalorder %s18, 3
      %p35 = por %p33, %p34
      %p36 = scmp.ne.s32.totalorder %s28, %s31
      %p37 = scmp.eq.s32.totalorder %s18, 0
      %p38 = por %p36, %p37
      %p39 = scmp.ne.s32.totalorder %s28, %s31
      %p40 = scmp.eq.s32.totalorder %s23, 3
      %p41 = por %p39, %p40
      %p42 = scmp.ne.s32.totalorder %s31, %s32
      %p43 = scmp.eq.s32.totalorder %s23, 0
      %p44 = por %p42, %p43
      %p45 = scmp.ne.s32.totalorder %s31, %s32
      %p46 = scmp.eq.s32.totalorder %s24, 3
      %p47 = por %p45, %p46
      %p49 = scmp.ne.s32.totalorder %s32, %s48
      %p50 = scmp.eq.s32.totalorder %s24, 0
      %p51 = por %p49, %p50
      %s52 = ssub.s32 %s18, %s25
      %p53 = scmp.eq.s32.totalorder %s52, 0
      %s55 = sadd.s32 %s54, 1
      %s56 = scalar_select %p53, %s54, %s55
      %p59 = pneg %p53
      %p60 = scmp.eq.s32.totalorder %s18, 3
      %p61 = por %p59, %p60
      %p62 = scmp.ne.s32.totalorder %s54, %s57
      %p63 = scmp.eq.s32.totalorder %s18, 0
      %p64 = por %p62, %p63
      %p65 = scmp.ne.s32.totalorder %s54, %s57
      %p66 = scmp.eq.s32.totalorder %s23, 3
      %p67 = por %p65, %p66
      %p68 = scmp.ne.s32.totalorder %s57, %s58
      %p69 = scmp.eq.s32.totalorder %s23, 0
      %p70 = por %p68, %p69
      %p71 = scmp.ne.s32.totalorder %s57, %s58
      %p72 = scmp.eq.s32.totalorder %s24, 3
      %p73 = por %p71, %p72
      %p75 = scmp.ne.s32.totalorder %s58, %s74
      %p76 = scmp.eq.s32.totalorder %s24, 0
      %p77 = por %p75, %p76
      %s79 = sadd.s32 %s78, 1
      %p82 = scmp.eq.s32.totalorder %s18, 3
      %p83 = scmp.ne.s32.totalorder %s78, %s80
      %p84 = scmp.eq.s32.totalorder %s18, 0
      %p85 = por %p83, %p84
      %p86 = scmp.ne.s32.totalorder %s78, %s80
      %p87 = scmp.eq.s32.totalorder %s23, 3
      %p88 = por %p86, %p87
      %p89 = scmp.ne.s32.totalorder %s80, %s81
      %p90 = scmp.eq.s32.totalorder %s23, 0
      %p91 = por %p89, %p90
      %p92 = scmp.ne.s32.totalorder %s80, %s81
      %p93 = scmp.eq.s32.totalorder %s24, 3
      %p94 = por %p92, %p93
      %p96 = scmp.ne.s32.totalorder %s81, %s95
      %p97 = scmp.eq.s32.totalorder %s24, 0
      %p98 = por %p96, %p97
      %s100 = sadd.s32 %s99, 1
      %p103 = scmp.eq.s32.totalorder %s18, 3
      %p104 = scmp.ne.s32.totalorder %s99, %s101
      %p105 = scmp.eq.s32.totalorder %s18, 0
      %p106 = por %p104, %p105
      %p107 = scmp.ne.s32.totalorder %s99, %s101
      %p108 = scmp.eq.s32.totalorder %s23, 3
      %p109 = por %p107, %p108
      %p110 = scmp.ne.s32.totalorder %s101, %s102
      %p111 = scmp.eq.s32.totalorder %s23, 0
      %p112 = por %p110, %p111
      %p113 = scmp.ne.s32.totalorder %s101, %s102
      %p114 = scmp.eq.s32.totalorder %s24, 3
      %p115 = por %p113, %p114
      %p117 = scmp.ne.s32.totalorder %s102, %s116
      %p118 = scmp.eq.s32.totalorder %s24, 0
      %p119 = por %p117, %p118
      %s121 = sadd.s32 %s120, 1
      %p124 = scmp.eq.s32.totalorder %s18, 3
      %p125 = scmp.ne.s32.totalorder %s120, %s122
      %p126 = scmp.eq.s32.totalorder %s18, 0
      %p127 = por %p125, %p126
      %p128 = scmp.ne.s32.totalorder %s120, %s122
      %p129 = scmp.eq.s32.totalorder %s23, 3
      %p130 = por %p128, %p129
      %p131 = scmp.ne.s32.totalorder %s122, %s123
      %p132 = scmp.eq.s32.totalorder %s23, 0
      %p133 = por %p131, %p132
      %p134 = scmp.ne.s32.totalorder %s122, %s123
      %p135 = scmp.eq.s32.totalorder %s24, 3
      %p136 = por %p134, %p135
      %p138 = scmp.ne.s32.totalorder %s123, %s137
      %p139 = scmp.eq.s32.totalorder %s24, 0
      %p140 = por %p138, %p139
      %s142 = sadd.s32 %s141, 1
      %p145 = scmp.eq.s32.totalorder %s18, 3
      %p146 = scmp.ne.s32.totalorder %s141, %s143
      %p147 = scmp.eq.s32.totalorder %s18, 0
      %p148 = por %p146, %p147
      %p149 = scmp.ne.s32.totalorder %s141, %s143
      %p150 = scmp.eq.s32.totalorder %s23, 3
      %p151 = por %p149, %p150
      %p152 = scmp.ne.s32.totalorder %s143, %s144
      %p153 = scmp.eq.s32.totalorder %s23, 0
      %p154 = por %p152, %p153
      %p155 = scmp.ne.s32.totalorder %s143, %s144
      %p156 = scmp.eq.s32.totalorder %s24, 3
      %p157 = por %p155, %p156
      %p159 = scmp.ne.s32.totalorder %s144, %s158
      %p160 = scmp.eq.s32.totalorder %s24, 0
      %p161 = por %p159, %p160
      %s163 = sadd.s32 %s162, 1
      %p166 = scmp.eq.s32.totalorder %s18, 3
      %p167 = scmp.ne.s32.totalorder %s162, %s164
      %p168 = scmp.eq.s32.totalorder %s18, 0
      %p169 = por %p167, %p168
      %p170 = scmp.ne.s32.totalorder %s162, %s164
      %p171 = scmp.eq.s32.totalorder %s23, 3
      %p172 = por %p170, %p171
      %p173 = scmp.ne.s32.totalorder %s164, %s165
      %p174 = scmp.eq.s32.totalorder %s23, 0
      %p175 = por %p173, %p174
      %p176 = scmp.ne.s32.totalorder %s164, %s165
      %p177 = scmp.eq.s32.totalorder %s24, 3
      %p178 = por %p176, %p177
      %p180 = scmp.ne.s32.totalorder %s165, %s179
      %p181 = scmp.eq.s32.totalorder %s24, 0
      %p182 = por %p180, %p181
      %p183 = scmp.le.s32.totalorder 1, %s18
      %p184 = scmp.lt.s32.totalorder %s18, 5
      %p185 = pnand %p183, %p184
      %p186 = pneg %p185
      // Predicated region
      $region9: #{animal_network_forward.3} parent=5 // pred_check
        _
      $region10: #{animal_network_forward.3} parent=5 // pred_check_branch
        %188 = sbr.rel (%p185) target = $region12
      $region11: #{animal_network_forward.3} parent=5 // pred_region
        %s189 = ssub.s32 %s18, 1
        // Predicated region
        $region13: #{animal_network_forward.3} parent=11 // pred_check
          %p190 = pneg %p91
        $region14: #{animal_network_forward.3} parent=11 // pred_check_branch
          %192 = sbr.rel (%p190) target = $region16
        $region15: #{animal_network_forward.3} parent=11 // pred_region
          _
        $region16: #{animal_network_forward.3} parent=11 // pred_fallthru
          _
        // Predicated region
        $region17: #{animal_network_forward.3} parent=11 // pred_check
          %p193 = pneg %p112
        $region18: #{animal_network_forward.3} parent=11 // pred_check_branch
          %195 = sbr.rel (%p193) target = $region20
        $region19: #{animal_network_forward.3} parent=11 // pred_region
          _
        $region20: #{animal_network_forward.3} parent=11 // pred_fallthru
          _
        // Predicated region
        $region21: #{animal_network_forward.3} parent=11 // pred_check
          %p196 = pneg %p133
        $region22: #{animal_network_forward.3} parent=11 // pred_check_branch
          %198 = sbr.rel (%p196) target = $region24
        $region23: #{animal_network_forward.3} parent=11 // pred_region
          _
        $region24: #{animal_network_forward.3} parent=11 // pred_fallthru
          _
      $region12: #{animal_network_forward.3} parent=5 // pred_fallthru
        _
      %p199 = scmp.lt.s32.totalorder %s18, 4
      // Predicated region
      $region25: #{animal_network_forward.3} parent=5 // pred_check
        %p200 = pneg %p199
      $region26: #{animal_network_forward.3} parent=5 // pred_check_branch
        %202 = sbr.rel (%p200) target = $region28
      $region27: #{animal_network_forward.3} parent=5 // pred_region
        // Predicated region
        $region29: #{animal_network_forward.3} parent=27 // pred_check
          %p203 = pneg %p38
        $region30: #{animal_network_forward.3} parent=27 // pred_check_branch
          %205 = sbr.rel (%p203) target = $region32
        $region31: #{animal_network_forward.3} parent=27 // pred_region
          %s206 = smul.u32 32, %s18
          %p207 = scmp.lt.s32.totalorder %s206, 127
          %s208 = scalar_select %p207, %s206, 127
          %s209 = smul.addr %s208, 2
          %s210 = scalar_lea.vmem %s0, %s209
          %s211 = smul.u32 32, %s18
        $region32: #{animal_network_forward.3} parent=27 // pred_fallthru
          _
        // Predicated region
        $region33: #{animal_network_forward.3} parent=27 // pred_check
          %p212 = pneg %p64
        $region34: #{animal_network_forward.3} parent=27 // pred_check_branch
          %214 = sbr.rel (%p212) target = $region36
        $region35: #{animal_network_forward.3} parent=27 // pred_region
          %s215 = sand.u32 %s54, 1
          %s216 = scalar_lea.sflag [#allocation4], %s215
          %s217 = sand.u32 %s54, 1
          %s218 = smul.addr %s217, 8192
          %s219 = scalar_lea.vmem [#allocation3], %s218
          %s220 = smul.u32 512, %s18
          %s222 = ssub.s32 131072, 131072
          %223 = vsyncadd %s216, %s222
          %s224 = smul.addr %s220, 4
          %s225 = smul.addr %s224, 64
          %s226 = scalar_lea.hbm %s1, %s225
          %s227 = sshll.u32 %s219, 4
          %s228 = int_to_ptr.vmem [resolvable:$true] %s227
          %233 = dma.hbm_to_vmem [thread:$0]  %s226, 131072, %s228, %s216, 256, 256, 16
        $region36: #{animal_network_forward.3} parent=27 // pred_fallthru
          _
      $region28: #{animal_network_forward.3} parent=5 // pred_fallthru
        _
      %p234 = scmp.le.s32.totalorder 1, %s18
      %p235 = scmp.lt.s32.totalorder %s18, 5
      %p236 = pnand %p234, %p235
      %p237 = pneg %p236
      // Predicated region
      $region37: #{animal_network_forward.3} parent=5 // pred_check
        _
      $region38: #{animal_network_forward.3} parent=5 // pred_check_branch
        %239 = sbr.rel (%p236) target = $region40
      $region39: #{animal_network_forward.3} parent=5 // pred_region
        %s240 = ssub.s32 %s18, 1
        %s241 = sand.u32 %s57, 1
        %s242 = scalar_lea.sflag [#allocation4], %s241
        %s243 = sand.u32 %s57, 1
        %s244 = smul.addr %s243, 8192
        %s245 = scalar_lea.vmem [#allocation3], %s244
        // Predicated region
        $region41: #{animal_network_forward.3} parent=39 // pred_check
          %p246 = pneg %p70
        $region42: #{animal_network_forward.3} parent=39 // pred_check_branch
          %248 = sbr.rel (%p246) target = $region44
        $region43: #{animal_network_forward.3} parent=39 // pred_region
          %249 = dma.done %s242, 131072
        $region44: #{animal_network_forward.3} parent=39 // pred_fallthru
          _
        %s250 = smul.u32 32, %s23
        %p251 = scmp.lt.s32.totalorder %s250, 127
        %s252 = scalar_select %p251, %s250, 127
        %s253 = smul.addr %s252, 2
        %s254 = scalar_lea.vmem %s0, %s253
        %p255 = pneg %p44
        %p256 = pneg %p41
        %s257 = sand.u32 %s57, 1
        %s258 = scalar_lea.sflag [#allocation4], %s257
        %s259 = sand.u32 %s57, 1
        %s260 = smul.addr %s259, 8192
        %s261 = scalar_lea.vmem [#allocation3], %s260
        %p262 = pneg %p70
        %p263 = pneg %p67
        %p264 = pneg %p91
        %p265 = pneg %p88
        %p266 = pneg %p112
        %p267 = pneg %p109
        %p268 = pneg %p133
        %p269 = pneg %p130
        %p270 = pneg %p154
        %p271 = pneg %p151
        %p272 = pneg %p175
        %p273 = pneg %p172
        %s274 = smul.u32 32, %s23
        %p275 = scmp.lt.s32.totalorder %s274, 127
        %s276 = scalar_select %p275, %s274, 127
        %s277 = smul.addr %s276, 2
        %s278 = scalar_lea.vmem %s0, %s277
        %s279 = smul.u32 32, %s23
        %s280 = smul.u32 512, %s23
        %v281 = vld [vmem:[%s278] sm:$0xff]
        %v282 = vld [vmem:[%s278 + $0x8] sm:$0xff]
        %v283 = vld [vmem:[%s278 + $0x10] sm:$0xff]
        %v284 = vld [vmem:[%s278 + $0x18] sm:$0xff]
        %v285 = vld [vmem:[%s278 + $0x20] sm:$0xff]
        %v286 = vld [vmem:[%s278 + $0x28] sm:$0xff]
        %v287 = vld [vmem:[%s278 + $0x30] sm:$0xff]
        %v288 = vld [vmem:[%s278 + $0x38] sm:$0xff]
        %v289 = vld [vmem:[%s245] sm:$0xff]
        %v290 = vld [vmem:[%s245 + $0x8] sm:$0xff]
        %v291 = vld [vmem:[%s245 + $0x10] sm:$0xff]
        %v292 = vld [vmem:[%s245 + $0x18] sm:$0xff]
        %v293 = vld [vmem:[%s245 + $0x20] sm:$0xff]
        %v294 = vld [vmem:[%s245 + $0x28] sm:$0xff]
        %v295 = vld [vmem:[%s245 + $0x30] sm:$0xff]
        %v296 = vld [vmem:[%s245 + $0x38] sm:$0xff]
        %v297 = vld [vmem:[%s245 + $0x40] sm:$0xff]
        %v298 = vld [vmem:[%s245 + $0x48] sm:$0xff]
        %v299 = vld [vmem:[%s245 + $0x50] sm:$0xff]
        %v300 = vld [vmem:[%s245 + $0x58] sm:$0xff]
        %v301 = vld [vmem:[%s245 + $0x60] sm:$0xff]
        %v302 = vld [vmem:[%s245 + $0x68] sm:$0xff]
        %v303 = vld [vmem:[%s245 + $0x70] sm:$0xff]
        %v304 = vld [vmem:[%s245 + $0x78] sm:$0xff]
        %v305 = vld [vmem:[%s245 + $0x80] sm:$0xff]
        %v306 = vld [vmem:[%s245 + $0x88] sm:$0xff]
        %v307 = vld [vmem:[%s245 + $0x90] sm:$0xff]
        %v308 = vld [vmem:[%s245 + $0x98] sm:$0xff]
        %v309 = vld [vmem:[%s245 + $0xa0] sm:$0xff]
        %v310 = vld [vmem:[%s245 + $0xa8] sm:$0xff]
        %v311 = vld [vmem:[%s245 + $0xb0] sm:$0xff]
        %v312 = vld [vmem:[%s245 + $0xb8] sm:$0xff]
        %v313 = vld [vmem:[%s245 + $0xc0] sm:$0xff]
        %v314 = vld [vmem:[%s245 + $0xc8] sm:$0xff]
        %v315 = vld [vmem:[%s245 + $0xd0] sm:$0xff]
        %v316 = vld [vmem:[%s245 + $0xd8] sm:$0xff]
        %v317 = vld [vmem:[%s245 + $0xe0] sm:$0xff]
        %v318 = vld [vmem:[%s245 + $0xe8] sm:$0xff]
        %v319 = vld [vmem:[%s245 + $0xf0] sm:$0xff]
        %v320 = vld [vmem:[%s245 + $0xf8] sm:$0xff]
        %v321 = vld [vmem:[%s245 + $0x100] sm:$0xff]
        %v322 = vld [vmem:[%s245 + $0x108] sm:$0xff]
        %v323 = vld [vmem:[%s245 + $0x110] sm:$0xff]
        %v324 = vld [vmem:[%s245 + $0x118] sm:$0xff]
        %v325 = vld [vmem:[%s245 + $0x120] sm:$0xff]
        %v326 = vld [vmem:[%s245 + $0x128] sm:$0xff]
        %v327 = vld [vmem:[%s245 + $0x130] sm:$0xff]
        %v328 = vld [vmem:[%s245 + $0x138] sm:$0xff]
        %v329 = vld [vmem:[%s245 + $0x140] sm:$0xff]
        %v330 = vld [vmem:[%s245 + $0x148] sm:$0xff]
        %v331 = vld [vmem:[%s245 + $0x150] sm:$0xff]
        %v332 = vld [vmem:[%s245 + $0x158] sm:$0xff]
        %v333 = vld [vmem:[%s245 + $0x160] sm:$0xff]
        %v334 = vld [vmem:[%s245 + $0x168] sm:$0xff]
        %v335 = vld [vmem:[%s245 + $0x170] sm:$0xff]
        %v336 = vld [vmem:[%s245 + $0x178] sm:$0xff]
        %v337 = vld [vmem:[%s245 + $0x180] sm:$0xff]
        %v338 = vld [vmem:[%s245 + $0x188] sm:$0xff]
        %v339 = vld [vmem:[%s245 + $0x190] sm:$0xff]
        %v340 = vld [vmem:[%s245 + $0x198] sm:$0xff]
        %v341 = vld [vmem:[%s245 + $0x1a0] sm:$0xff]
        %v342 = vld [vmem:[%s245 + $0x1a8] sm:$0xff]
        %v343 = vld [vmem:[%s245 + $0x1b0] sm:$0xff]
        %v344 = vld [vmem:[%s245 + $0x1b8] sm:$0xff]
        %v345 = vld [vmem:[%s245 + $0x1c0] sm:$0xff]
        %v346 = vld [vmem:[%s245 + $0x1c8] sm:$0xff]
        %v347 = vld [vmem:[%s245 + $0x1d0] sm:$0xff]
        %v348 = vld [vmem:[%s245 + $0x1d8] sm:$0xff]
        %v349 = vld [vmem:[%s245 + $0x1e0] sm:$0xff]
        %v350 = vld [vmem:[%s245 + $0x1e8] sm:$0xff]
        %v351 = vld [vmem:[%s245 + $0x1f0] sm:$0xff]
        %v352 = vld [vmem:[%s245 + $0x1f8] sm:$0xff]
        %v353 = vld [vmem:[%s245 + $0x200] sm:$0xff]
        %v354 = vld [vmem:[%s245 + $0x208] sm:$0xff]
        %v355 = vld [vmem:[%s245 + $0x210] sm:$0xff]
        %v356 = vld [vmem:[%s245 + $0x218] sm:$0xff]
        %v357 = vld [vmem:[%s245 + $0x220] sm:$0xff]
        %v358 = vld [vmem:[%s245 + $0x228] sm:$0xff]
        %v359 = vld [vmem:[%s245 + $0x230] sm:$0xff]
        %v360 = vld [vmem:[%s245 + $0x238] sm:$0xff]
        %v361 = vld [vmem:[%s245 + $0x240] sm:$0xff]
        %v362 = vld [vmem:[%s245 + $0x248] sm:$0xff]
        %v363 = vld [vmem:[%s245 + $0x250] sm:$0xff]
        %v364 = vld [vmem:[%s245 + $0x258] sm:$0xff]
        %v365 = vld [vmem:[%s245 + $0x260] sm:$0xff]
        %v366 = vld [vmem:[%s245 + $0x268] sm:$0xff]
        %v367 = vld [vmem:[%s245 + $0x270] sm:$0xff]
        %v368 = vld [vmem:[%s245 + $0x278] sm:$0xff]
        %v369 = vld [vmem:[%s245 + $0x280] sm:$0xff]
        %v370 = vld [vmem:[%s245 + $0x288] sm:$0xff]
        %v371 = vld [vmem:[%s245 + $0x290] sm:$0xff]
        %v372 = vld [vmem:[%s245 + $0x298] sm:$0xff]
        %v373 = vld [vmem:[%s245 + $0x2a0] sm:$0xff]
        %v374 = vld [vmem:[%s245 + $0x2a8] sm:$0xff]
        %v375 = vld [vmem:[%s245 + $0x2b0] sm:$0xff]
        %v376 = vld [vmem:[%s245 + $0x2b8] sm:$0xff]
        %v377 = vld [vmem:[%s245 + $0x2c0] sm:$0xff]
        %v378 = vld [vmem:[%s245 + $0x2c8] sm:$0xff]
        %v379 = vld [vmem:[%s245 + $0x2d0] sm:$0xff]
        %v380 = vld [vmem:[%s245 + $0x2d8] sm:$0xff]
        %v381 = vld [vmem:[%s245 + $0x2e0] sm:$0xff]
        %v382 = vld [vmem:[%s245 + $0x2e8] sm:$0xff]
        %v383 = vld [vmem:[%s245 + $0x2f0] sm:$0xff]
        %v384 = vld [vmem:[%s245 + $0x2f8] sm:$0xff]
        %v385 = vld [vmem:[%s245 + $0x300] sm:$0xff]
        %v386 = vld [vmem:[%s245 + $0x308] sm:$0xff]
        %v387 = vld [vmem:[%s245 + $0x310] sm:$0xff]
        %v388 = vld [vmem:[%s245 + $0x318] sm:$0xff]
        %v389 = vld [vmem:[%s245 + $0x320] sm:$0xff]
        %v390 = vld [vmem:[%s245 + $0x328] sm:$0xff]
        %v391 = vld [vmem:[%s245 + $0x330] sm:$0xff]
        %v392 = vld [vmem:[%s245 + $0x338] sm:$0xff]
        %v393 = vld [vmem:[%s245 + $0x340] sm:$0xff]
        %v394 = vld [vmem:[%s245 + $0x348] sm:$0xff]
        %v395 = vld [vmem:[%s245 + $0x350] sm:$0xff]
        %v396 = vld [vmem:[%s245 + $0x358] sm:$0xff]
        %v397 = vld [vmem:[%s245 + $0x360] sm:$0xff]
        %v398 = vld [vmem:[%s245 + $0x368] sm:$0xff]
        %v399 = vld [vmem:[%s245 + $0x370] sm:$0xff]
        %v400 = vld [vmem:[%s245 + $0x378] sm:$0xff]
        %v401 = vld [vmem:[%s245 + $0x380] sm:$0xff]
        %v402 = vld [vmem:[%s245 + $0x388] sm:$0xff]
        %v403 = vld [vmem:[%s245 + $0x390] sm:$0xff]
        %v404 = vld [vmem:[%s245 + $0x398] sm:$0xff]
        %v405 = vld [vmem:[%s245 + $0x3a0] sm:$0xff]
        %v406 = vld [vmem:[%s245 + $0x3a8] sm:$0xff]
        %v407 = vld [vmem:[%s245 + $0x3b0] sm:$0xff]
        %v408 = vld [vmem:[%s245 + $0x3b8] sm:$0xff]
        %v409 = vld [vmem:[%s245 + $0x3c0] sm:$0xff]
        %v410 = vld [vmem:[%s245 + $0x3c8] sm:$0xff]
        %v411 = vld [vmem:[%s245 + $0x3d0] sm:$0xff]
        %v412 = vld [vmem:[%s245 + $0x3d8] sm:$0xff]
        %v413 = vld [vmem:[%s245 + $0x3e0] sm:$0xff]
        %v414 = vld [vmem:[%s245 + $0x3e8] sm:$0xff]
        %v415 = vld [vmem:[%s245 + $0x3f0] sm:$0xff]
        %v416 = vld [vmem:[%s245 + $0x3f8] sm:$0xff]
        %v417 = vld [vmem:[%s245 + $0x400] sm:$0xff]
        %v418 = vld [vmem:[%s245 + $0x408] sm:$0xff]
        %v419 = vld [vmem:[%s245 + $0x410] sm:$0xff]
        %v420 = vld [vmem:[%s245 + $0x418] sm:$0xff]
        %v421 = vld [vmem:[%s245 + $0x420] sm:$0xff]
        %v422 = vld [vmem:[%s245 + $0x428] sm:$0xff]
        %v423 = vld [vmem:[%s245 + $0x430] sm:$0xff]
        %v424 = vld [vmem:[%s245 + $0x438] sm:$0xff]
        %v425 = vld [vmem:[%s245 + $0x440] sm:$0xff]
        %v426 = vld [vmem:[%s245 + $0x448] sm:$0xff]
        %v427 = vld [vmem:[%s245 + $0x450] sm:$0xff]
        %v428 = vld [vmem:[%s245 + $0x458] sm:$0xff]
        %v429 = vld [vmem:[%s245 + $0x460] sm:$0xff]
        %v430 = vld [vmem:[%s245 + $0x468] sm:$0xff]
        %v431 = vld [vmem:[%s245 + $0x470] sm:$0xff]
        %v432 = vld [vmem:[%s245 + $0x478] sm:$0xff]
        %v433 = vld [vmem:[%s245 + $0x480] sm:$0xff]
        %v434 = vld [vmem:[%s245 + $0x488] sm:$0xff]
        %v435 = vld [vmem:[%s245 + $0x490] sm:$0xff]
        %v436 = vld [vmem:[%s245 + $0x498] sm:$0xff]
        %v437 = vld [vmem:[%s245 + $0x4a0] sm:$0xff]
        %v438 = vld [vmem:[%s245 + $0x4a8] sm:$0xff]
        %v439 = vld [vmem:[%s245 + $0x4b0] sm:$0xff]
        %v440 = vld [vmem:[%s245 + $0x4b8] sm:$0xff]
        %v441 = vld [vmem:[%s245 + $0x4c0] sm:$0xff]
        %v442 = vld [vmem:[%s245 + $0x4c8] sm:$0xff]
        %v443 = vld [vmem:[%s245 + $0x4d0] sm:$0xff]
        %v444 = vld [vmem:[%s245 + $0x4d8] sm:$0xff]
        %v445 = vld [vmem:[%s245 + $0x4e0] sm:$0xff]
        %v446 = vld [vmem:[%s245 + $0x4e8] sm:$0xff]
        %v447 = vld [vmem:[%s245 + $0x4f0] sm:$0xff]
        %v448 = vld [vmem:[%s245 + $0x4f8] sm:$0xff]
        %v449 = vld [vmem:[%s245 + $0x500] sm:$0xff]
        %v450 = vld [vmem:[%s245 + $0x508] sm:$0xff]
        %v451 = vld [vmem:[%s245 + $0x510] sm:$0xff]
        %v452 = vld [vmem:[%s245 + $0x518] sm:$0xff]
        %v453 = vld [vmem:[%s245 + $0x520] sm:$0xff]
        %v454 = vld [vmem:[%s245 + $0x528] sm:$0xff]
        %v455 = vld [vmem:[%s245 + $0x530] sm:$0xff]
        %v456 = vld [vmem:[%s245 + $0x538] sm:$0xff]
        %v457 = vld [vmem:[%s245 + $0x540] sm:$0xff]
        %v458 = vld [vmem:[%s245 + $0x548] sm:$0xff]
        %v459 = vld [vmem:[%s245 + $0x550] sm:$0xff]
        %v460 = vld [vmem:[%s245 + $0x558] sm:$0xff]
        %v461 = vld [vmem:[%s245 + $0x560] sm:$0xff]
        %v462 = vld [vmem:[%s245 + $0x568] sm:$0xff]
        %v463 = vld [vmem:[%s245 + $0x570] sm:$0xff]
        %v464 = vld [vmem:[%s245 + $0x578] sm:$0xff]
        %v465 = vld [vmem:[%s245 + $0x580] sm:$0xff]
        %v466 = vld [vmem:[%s245 + $0x588] sm:$0xff]
        %v467 = vld [vmem:[%s245 + $0x590] sm:$0xff]
        %v468 = vld [vmem:[%s245 + $0x598] sm:$0xff]
        %v469 = vld [vmem:[%s245 + $0x5a0] sm:$0xff]
        %v470 = vld [vmem:[%s245 + $0x5a8] sm:$0xff]
        %v471 = vld [vmem:[%s245 + $0x5b0] sm:$0xff]
        %v472 = vld [vmem:[%s245 + $0x5b8] sm:$0xff]
        %v473 = vld [vmem:[%s245 + $0x5c0] sm:$0xff]
        %v474 = vld [vmem:[%s245 + $0x5c8] sm:$0xff]
        %v475 = vld [vmem:[%s245 + $0x5d0] sm:$0xff]
        %v476 = vld [vmem:[%s245 + $0x5d8] sm:$0xff]
        %v477 = vld [vmem:[%s245 + $0x5e0] sm:$0xff]
        %v478 = vld [vmem:[%s245 + $0x5e8] sm:$0xff]
        %v479 = vld [vmem:[%s245 + $0x5f0] sm:$0xff]
        %v480 = vld [vmem:[%s245 + $0x5f8] sm:$0xff]
        %v481 = vld [vmem:[%s245 + $0x600] sm:$0xff]
        %v482 = vld [vmem:[%s245 + $0x608] sm:$0xff]
        %v483 = vld [vmem:[%s245 + $0x610] sm:$0xff]
        %v484 = vld [vmem:[%s245 + $0x618] sm:$0xff]
        %v485 = vld [vmem:[%s245 + $0x620] sm:$0xff]
        %v486 = vld [vmem:[%s245 + $0x628] sm:$0xff]
        %v487 = vld [vmem:[%s245 + $0x630] sm:$0xff]
        %v488 = vld [vmem:[%s245 + $0x638] sm:$0xff]
        %v489 = vld [vmem:[%s245 + $0x640] sm:$0xff]
        %v490 = vld [vmem:[%s245 + $0x648] sm:$0xff]
        %v491 = vld [vmem:[%s245 + $0x650] sm:$0xff]
        %v492 = vld [vmem:[%s245 + $0x658] sm:$0xff]
        %v493 = vld [vmem:[%s245 + $0x660] sm:$0xff]
        %v494 = vld [vmem:[%s245 + $0x668] sm:$0xff]
        %v495 = vld [vmem:[%s245 + $0x670] sm:$0xff]
        %v496 = vld [vmem:[%s245 + $0x678] sm:$0xff]
        %v497 = vld [vmem:[%s245 + $0x680] sm:$0xff]
        %v498 = vld [vmem:[%s245 + $0x688] sm:$0xff]
        %v499 = vld [vmem:[%s245 + $0x690] sm:$0xff]
        %v500 = vld [vmem:[%s245 + $0x698] sm:$0xff]
        %v501 = vld [vmem:[%s245 + $0x6a0] sm:$0xff]
        %v502 = vld [vmem:[%s245 + $0x6a8] sm:$0xff]
        %v503 = vld [vmem:[%s245 + $0x6b0] sm:$0xff]
        %v504 = vld [vmem:[%s245 + $0x6b8] sm:$0xff]
        %v505 = vld [vmem:[%s245 + $0x6c0] sm:$0xff]
        %v506 = vld [vmem:[%s245 + $0x6c8] sm:$0xff]
        %v507 = vld [vmem:[%s245 + $0x6d0] sm:$0xff]
        %v508 = vld [vmem:[%s245 + $0x6d8] sm:$0xff]
        %v509 = vld [vmem:[%s245 + $0x6e0] sm:$0xff]
        %v510 = vld [vmem:[%s245 + $0x6e8] sm:$0xff]
        %v511 = vld [vmem:[%s245 + $0x6f0] sm:$0xff]
        %v512 = vld [vmem:[%s245 + $0x6f8] sm:$0xff]
        %v513 = vld [vmem:[%s245 + $0x700] sm:$0xff]
        %v514 = vld [vmem:[%s245 + $0x708] sm:$0xff]
        %v515 = vld [vmem:[%s245 + $0x710] sm:$0xff]
        %v516 = vld [vmem:[%s245 + $0x718] sm:$0xff]
        %v517 = vld [vmem:[%s245 + $0x720] sm:$0xff]
        %v518 = vld [vmem:[%s245 + $0x728] sm:$0xff]
        %v519 = vld [vmem:[%s245 + $0x730] sm:$0xff]
        %v520 = vld [vmem:[%s245 + $0x738] sm:$0xff]
        %v521 = vld [vmem:[%s245 + $0x740] sm:$0xff]
        %v522 = vld [vmem:[%s245 + $0x748] sm:$0xff]
        %v523 = vld [vmem:[%s245 + $0x750] sm:$0xff]
        %v524 = vld [vmem:[%s245 + $0x758] sm:$0xff]
        %v525 = vld [vmem:[%s245 + $0x760] sm:$0xff]
        %v526 = vld [vmem:[%s245 + $0x768] sm:$0xff]
        %v527 = vld [vmem:[%s245 + $0x770] sm:$0xff]
        %v528 = vld [vmem:[%s245 + $0x778] sm:$0xff]
        %v529 = vld [vmem:[%s245 + $0x780] sm:$0xff]
        %v530 = vld [vmem:[%s245 + $0x788] sm:$0xff]
        %v531 = vld [vmem:[%s245 + $0x790] sm:$0xff]
        %v532 = vld [vmem:[%s245 + $0x798] sm:$0xff]
        %v533 = vld [vmem:[%s245 + $0x7a0] sm:$0xff]
        %v534 = vld [vmem:[%s245 + $0x7a8] sm:$0xff]
        %v535 = vld [vmem:[%s245 + $0x7b0] sm:$0xff]
        %v536 = vld [vmem:[%s245 + $0x7b8] sm:$0xff]
        %v537 = vld [vmem:[%s245 + $0x7c0] sm:$0xff]
        %v538 = vld [vmem:[%s245 + $0x7c8] sm:$0xff]
        %v539 = vld [vmem:[%s245 + $0x7d0] sm:$0xff]
        %v540 = vld [vmem:[%s245 + $0x7d8] sm:$0xff]
        %v541 = vld [vmem:[%s245 + $0x7e0] sm:$0xff]
        %v542 = vld [vmem:[%s245 + $0x7e8] sm:$0xff]
        %v543 = vld [vmem:[%s245 + $0x7f0] sm:$0xff]
        %v544 = vld [vmem:[%s245 + $0x7f8] sm:$0xff]
        %v545 = vld [vmem:[%s245 + $0x800] sm:$0xff]
        %v546 = vld [vmem:[%s245 + $0x808] sm:$0xff]
        %v547 = vld [vmem:[%s245 + $0x810] sm:$0xff]
        %v548 = vld [vmem:[%s245 + $0x818] sm:$0xff]
        %v549 = vld [vmem:[%s245 + $0x820] sm:$0xff]
        %v550 = vld [vmem:[%s245 + $0x828] sm:$0xff]
        %v551 = vld [vmem:[%s245 + $0x830] sm:$0xff]
        %v552 = vld [vmem:[%s245 + $0x838] sm:$0xff]
        %v553 = vld [vmem:[%s245 + $0x840] sm:$0xff]
        %v554 = vld [vmem:[%s245 + $0x848] sm:$0xff]
        %v555 = vld [vmem:[%s245 + $0x850] sm:$0xff]
        %v556 = vld [vmem:[%s245 + $0x858] sm:$0xff]
        %v557 = vld [vmem:[%s245 + $0x860] sm:$0xff]
        %v558 = vld [vmem:[%s245 + $0x868] sm:$0xff]
        %v559 = vld [vmem:[%s245 + $0x870] sm:$0xff]
        %v560 = vld [vmem:[%s245 + $0x878] sm:$0xff]
        %v561 = vld [vmem:[%s245 + $0x880] sm:$0xff]
        %v562 = vld [vmem:[%s245 + $0x888] sm:$0xff]
        %v563 = vld [vmem:[%s245 + $0x890] sm:$0xff]
        %v564 = vld [vmem:[%s245 + $0x898] sm:$0xff]
        %v565 = vld [vmem:[%s245 + $0x8a0] sm:$0xff]
        %v566 = vld [vmem:[%s245 + $0x8a8] sm:$0xff]
        %v567 = vld [vmem:[%s245 + $0x8b0] sm:$0xff]
        %v568 = vld [vmem:[%s245 + $0x8b8] sm:$0xff]
        %v569 = vld [vmem:[%s245 + $0x8c0] sm:$0xff]
        %v570 = vld [vmem:[%s245 + $0x8c8] sm:$0xff]
        %v571 = vld [vmem:[%s245 + $0x8d0] sm:$0xff]
        %v572 = vld [vmem:[%s245 + $0x8d8] sm:$0xff]
        %v573 = vld [vmem:[%s245 + $0x8e0] sm:$0xff]
        %v574 = vld [vmem:[%s245 + $0x8e8] sm:$0xff]
        %v575 = vld [vmem:[%s245 + $0x8f0] sm:$0xff]
        %v576 = vld [vmem:[%s245 + $0x8f8] sm:$0xff]
        %v577 = vld [vmem:[%s245 + $0x900] sm:$0xff]
        %v578 = vld [vmem:[%s245 + $0x908] sm:$0xff]
        %v579 = vld [vmem:[%s245 + $0x910] sm:$0xff]
        %v580 = vld [vmem:[%s245 + $0x918] sm:$0xff]
        %v581 = vld [vmem:[%s245 + $0x920] sm:$0xff]
        %v582 = vld [vmem:[%s245 + $0x928] sm:$0xff]
        %v583 = vld [vmem:[%s245 + $0x930] sm:$0xff]
        %v584 = vld [vmem:[%s245 + $0x938] sm:$0xff]
        %v585 = vld [vmem:[%s245 + $0x940] sm:$0xff]
        %v586 = vld [vmem:[%s245 + $0x948] sm:$0xff]
        %v587 = vld [vmem:[%s245 + $0x950] sm:$0xff]
        %v588 = vld [vmem:[%s245 + $0x958] sm:$0xff]
        %v589 = vld [vmem:[%s245 + $0x960] sm:$0xff]
        %v590 = vld [vmem:[%s245 + $0x968] sm:$0xff]
        %v591 = vld [vmem:[%s245 + $0x970] sm:$0xff]
        %v592 = vld [vmem:[%s245 + $0x978] sm:$0xff]
        %v593 = vld [vmem:[%s245 + $0x980] sm:$0xff]
        %v594 = vld [vmem:[%s245 + $0x988] sm:$0xff]
        %v595 = vld [vmem:[%s245 + $0x990] sm:$0xff]
        %v596 = vld [vmem:[%s245 + $0x998] sm:$0xff]
        %v597 = vld [vmem:[%s245 + $0x9a0] sm:$0xff]
        %v598 = vld [vmem:[%s245 + $0x9a8] sm:$0xff]
        %v599 = vld [vmem:[%s245 + $0x9b0] sm:$0xff]
        %v600 = vld [vmem:[%s245 + $0x9b8] sm:$0xff]
        %v601 = vld [vmem:[%s245 + $0x9c0] sm:$0xff]
        %v602 = vld [vmem:[%s245 + $0x9c8] sm:$0xff]
        %v603 = vld [vmem:[%s245 + $0x9d0] sm:$0xff]
        %v604 = vld [vmem:[%s245 + $0x9d8] sm:$0xff]
        %v605 = vld [vmem:[%s245 + $0x9e0] sm:$0xff]
        %v606 = vld [vmem:[%s245 + $0x9e8] sm:$0xff]
        %v607 = vld [vmem:[%s245 + $0x9f0] sm:$0xff]
        %v608 = vld [vmem:[%s245 + $0x9f8] sm:$0xff]
        %v609 = vld [vmem:[%s245 + $0xa00] sm:$0xff]
        %v610 = vld [vmem:[%s245 + $0xa08] sm:$0xff]
        %v611 = vld [vmem:[%s245 + $0xa10] sm:$0xff]
        %v612 = vld [vmem:[%s245 + $0xa18] sm:$0xff]
        %v613 = vld [vmem:[%s245 + $0xa20] sm:$0xff]
        %v614 = vld [vmem:[%s245 + $0xa28] sm:$0xff]
        %v615 = vld [vmem:[%s245 + $0xa30] sm:$0xff]
        %v616 = vld [vmem:[%s245 + $0xa38] sm:$0xff]
        %v617 = vld [vmem:[%s245 + $0xa40] sm:$0xff]
        %v618 = vld [vmem:[%s245 + $0xa48] sm:$0xff]
        %v619 = vld [vmem:[%s245 + $0xa50] sm:$0xff]
        %v620 = vld [vmem:[%s245 + $0xa58] sm:$0xff]
        %v621 = vld [vmem:[%s245 + $0xa60] sm:$0xff]
        %v622 = vld [vmem:[%s245 + $0xa68] sm:$0xff]
        %v623 = vld [vmem:[%s245 + $0xa70] sm:$0xff]
        %v624 = vld [vmem:[%s245 + $0xa78] sm:$0xff]
        %v625 = vld [vmem:[%s245 + $0xa80] sm:$0xff]
        %v626 = vld [vmem:[%s245 + $0xa88] sm:$0xff]
        %v627 = vld [vmem:[%s245 + $0xa90] sm:$0xff]
        %v628 = vld [vmem:[%s245 + $0xa98] sm:$0xff]
        %v629 = vld [vmem:[%s245 + $0xaa0] sm:$0xff]
        %v630 = vld [vmem:[%s245 + $0xaa8] sm:$0xff]
        %v631 = vld [vmem:[%s245 + $0xab0] sm:$0xff]
        %v632 = vld [vmem:[%s245 + $0xab8] sm:$0xff]
        %v633 = vld [vmem:[%s245 + $0xac0] sm:$0xff]
        %v634 = vld [vmem:[%s245 + $0xac8] sm:$0xff]
        %v635 = vld [vmem:[%s245 + $0xad0] sm:$0xff]
        %v636 = vld [vmem:[%s245 + $0xad8] sm:$0xff]
        %v637 = vld [vmem:[%s245 + $0xae0] sm:$0xff]
        %v638 = vld [vmem:[%s245 + $0xae8] sm:$0xff]
        %v639 = vld [vmem:[%s245 + $0xaf0] sm:$0xff]
        %v640 = vld [vmem:[%s245 + $0xaf8] sm:$0xff]
        %v641 = vld [vmem:[%s245 + $0xb00] sm:$0xff]
        %v642 = vld [vmem:[%s245 + $0xb08] sm:$0xff]
        %v643 = vld [vmem:[%s245 + $0xb10] sm:$0xff]
        %v644 = vld [vmem:[%s245 + $0xb18] sm:$0xff]
        %v645 = vld [vmem:[%s245 + $0xb20] sm:$0xff]
        %v646 = vld [vmem:[%s245 + $0xb28] sm:$0xff]
        %v647 = vld [vmem:[%s245 + $0xb30] sm:$0xff]
        %v648 = vld [vmem:[%s245 + $0xb38] sm:$0xff]
        %v649 = vld [vmem:[%s245 + $0xb40] sm:$0xff]
        %v650 = vld [vmem:[%s245 + $0xb48] sm:$0xff]
        %v651 = vld [vmem:[%s245 + $0xb50] sm:$0xff]
        %v652 = vld [vmem:[%s245 + $0xb58] sm:$0xff]
        %v653 = vld [vmem:[%s245 + $0xb60] sm:$0xff]
        %v654 = vld [vmem:[%s245 + $0xb68] sm:$0xff]
        %v655 = vld [vmem:[%s245 + $0xb70] sm:$0xff]
        %v656 = vld [vmem:[%s245 + $0xb78] sm:$0xff]
        %v657 = vld [vmem:[%s245 + $0xb80] sm:$0xff]
        %v658 = vld [vmem:[%s245 + $0xb88] sm:$0xff]
        %v659 = vld [vmem:[%s245 + $0xb90] sm:$0xff]
        %v660 = vld [vmem:[%s245 + $0xb98] sm:$0xff]
        %v661 = vld [vmem:[%s245 + $0xba0] sm:$0xff]
        %v662 = vld [vmem:[%s245 + $0xba8] sm:$0xff]
        %v663 = vld [vmem:[%s245 + $0xbb0] sm:$0xff]
        %v664 = vld [vmem:[%s245 + $0xbb8] sm:$0xff]
        %v665 = vld [vmem:[%s245 + $0xbc0] sm:$0xff]
        %v666 = vld [vmem:[%s245 + $0xbc8] sm:$0xff]
        %v667 = vld [vmem:[%s245 + $0xbd0] sm:$0xff]
        %v668 = vld [vmem:[%s245 + $0xbd8] sm:$0xff]
        %v669 = vld [vmem:[%s245 + $0xbe0] sm:$0xff]
        %v670 = vld [vmem:[%s245 + $0xbe8] sm:$0xff]
        %v671 = vld [vmem:[%s245 + $0xbf0] sm:$0xff]
        %v672 = vld [vmem:[%s245 + $0xbf8] sm:$0xff]
        %v673 = vld [vmem:[%s245 + $0xc00] sm:$0xff]
        %v674 = vld [vmem:[%s245 + $0xc08] sm:$0xff]
        %v675 = vld [vmem:[%s245 + $0xc10] sm:$0xff]
        %v676 = vld [vmem:[%s245 + $0xc18] sm:$0xff]
        %v677 = vld [vmem:[%s245 + $0xc20] sm:$0xff]
        %v678 = vld [vmem:[%s245 + $0xc28] sm:$0xff]
        %v679 = vld [vmem:[%s245 + $0xc30] sm:$0xff]
        %v680 = vld [vmem:[%s245 + $0xc38] sm:$0xff]
        %v681 = vld [vmem:[%s245 + $0xc40] sm:$0xff]
        %v682 = vld [vmem:[%s245 + $0xc48] sm:$0xff]
        %v683 = vld [vmem:[%s245 + $0xc50] sm:$0xff]
        %v684 = vld [vmem:[%s245 + $0xc58] sm:$0xff]
        %v685 = vld [vmem:[%s245 + $0xc60] sm:$0xff]
        %v686 = vld [vmem:[%s245 + $0xc68] sm:$0xff]
        %v687 = vld [vmem:[%s245 + $0xc70] sm:$0xff]
        %v688 = vld [vmem:[%s245 + $0xc78] sm:$0xff]
        %v689 = vld [vmem:[%s245 + $0xc80] sm:$0xff]
        %v690 = vld [vmem:[%s245 + $0xc88] sm:$0xff]
        %v691 = vld [vmem:[%s245 + $0xc90] sm:$0xff]
        %v692 = vld [vmem:[%s245 + $0xc98] sm:$0xff]
        %v693 = vld [vmem:[%s245 + $0xca0] sm:$0xff]
        %v694 = vld [vmem:[%s245 + $0xca8] sm:$0xff]
        %v695 = vld [vmem:[%s245 + $0xcb0] sm:$0xff]
        %v696 = vld [vmem:[%s245 + $0xcb8] sm:$0xff]
        %v697 = vld [vmem:[%s245 + $0xcc0] sm:$0xff]
        %v698 = vld [vmem:[%s245 + $0xcc8] sm:$0xff]
        %v699 = vld [vmem:[%s245 + $0xcd0] sm:$0xff]
        %v700 = vld [vmem:[%s245 + $0xcd8] sm:$0xff]
        %v701 = vld [vmem:[%s245 + $0xce0] sm:$0xff]
        %v702 = vld [vmem:[%s245 + $0xce8] sm:$0xff]
        %v703 = vld [vmem:[%s245 + $0xcf0] sm:$0xff]
        %v704 = vld [vmem:[%s245 + $0xcf8] sm:$0xff]
        %v705 = vld [vmem:[%s245 + $0xd00] sm:$0xff]
        %v706 = vld [vmem:[%s245 + $0xd08] sm:$0xff]
        %v707 = vld [vmem:[%s245 + $0xd10] sm:$0xff]
        %v708 = vld [vmem:[%s245 + $0xd18] sm:$0xff]
        %v709 = vld [vmem:[%s245 + $0xd20] sm:$0xff]
        %v710 = vld [vmem:[%s245 + $0xd28] sm:$0xff]
        %v711 = vld [vmem:[%s245 + $0xd30] sm:$0xff]
        %v712 = vld [vmem:[%s245 + $0xd38] sm:$0xff]
        %v713 = vld [vmem:[%s245 + $0xd40] sm:$0xff]
        %v714 = vld [vmem:[%s245 + $0xd48] sm:$0xff]
        %v715 = vld [vmem:[%s245 + $0xd50] sm:$0xff]
        %v716 = vld [vmem:[%s245 + $0xd58] sm:$0xff]
        %v717 = vld [vmem:[%s245 + $0xd60] sm:$0xff]
        %v718 = vld [vmem:[%s245 + $0xd68] sm:$0xff]
        %v719 = vld [vmem:[%s245 + $0xd70] sm:$0xff]
        %v720 = vld [vmem:[%s245 + $0xd78] sm:$0xff]
        %v721 = vld [vmem:[%s245 + $0xd80] sm:$0xff]
        %v722 = vld [vmem:[%s245 + $0xd88] sm:$0xff]
        %v723 = vld [vmem:[%s245 + $0xd90] sm:$0xff]
        %v724 = vld [vmem:[%s245 + $0xd98] sm:$0xff]
        %v725 = vld [vmem:[%s245 + $0xda0] sm:$0xff]
        %v726 = vld [vmem:[%s245 + $0xda8] sm:$0xff]
        %v727 = vld [vmem:[%s245 + $0xdb0] sm:$0xff]
        %v728 = vld [vmem:[%s245 + $0xdb8] sm:$0xff]
        %v729 = vld [vmem:[%s245 + $0xdc0] sm:$0xff]
        %v730 = vld [vmem:[%s245 + $0xdc8] sm:$0xff]
        %v731 = vld [vmem:[%s245 + $0xdd0] sm:$0xff]
        %v732 = vld [vmem:[%s245 + $0xdd8] sm:$0xff]
        %v733 = vld [vmem:[%s245 + $0xde0] sm:$0xff]
        %v734 = vld [vmem:[%s245 + $0xde8] sm:$0xff]
        %v735 = vld [vmem:[%s245 + $0xdf0] sm:$0xff]
        %v736 = vld [vmem:[%s245 + $0xdf8] sm:$0xff]
        %v737 = vld [vmem:[%s245 + $0xe00] sm:$0xff]
        %v738 = vld [vmem:[%s245 + $0xe08] sm:$0xff]
        %v739 = vld [vmem:[%s245 + $0xe10] sm:$0xff]
        %v740 = vld [vmem:[%s245 + $0xe18] sm:$0xff]
        %v741 = vld [vmem:[%s245 + $0xe20] sm:$0xff]
        %v742 = vld [vmem:[%s245 + $0xe28] sm:$0xff]
        %v743 = vld [vmem:[%s245 + $0xe30] sm:$0xff]
        %v744 = vld [vmem:[%s245 + $0xe38] sm:$0xff]
        %v745 = vld [vmem:[%s245 + $0xe40] sm:$0xff]
        %v746 = vld [vmem:[%s245 + $0xe48] sm:$0xff]
        %v747 = vld [vmem:[%s245 + $0xe50] sm:$0xff]
        %v748 = vld [vmem:[%s245 + $0xe58] sm:$0xff]
        %v749 = vld [vmem:[%s245 + $0xe60] sm:$0xff]
        %v750 = vld [vmem:[%s245 + $0xe68] sm:$0xff]
        %v751 = vld [vmem:[%s245 + $0xe70] sm:$0xff]
        %v752 = vld [vmem:[%s245 + $0xe78] sm:$0xff]
        %v753 = vld [vmem:[%s245 + $0xe80] sm:$0xff]
        %v754 = vld [vmem:[%s245 + $0xe88] sm:$0xff]
        %v755 = vld [vmem:[%s245 + $0xe90] sm:$0xff]
        %v756 = vld [vmem:[%s245 + $0xe98] sm:$0xff]
        %v757 = vld [vmem:[%s245 + $0xea0] sm:$0xff]
        %v758 = vld [vmem:[%s245 + $0xea8] sm:$0xff]
        %v759 = vld [vmem:[%s245 + $0xeb0] sm:$0xff]
        %v760 = vld [vmem:[%s245 + $0xeb8] sm:$0xff]
        %v761 = vld [vmem:[%s245 + $0xec0] sm:$0xff]
        %v762 = vld [vmem:[%s245 + $0xec8] sm:$0xff]
        %v763 = vld [vmem:[%s245 + $0xed0] sm:$0xff]
        %v764 = vld [vmem:[%s245 + $0xed8] sm:$0xff]
        %v765 = vld [vmem:[%s245 + $0xee0] sm:$0xff]
        %v766 = vld [vmem:[%s245 + $0xee8] sm:$0xff]
        %v767 = vld [vmem:[%s245 + $0xef0] sm:$0xff]
        %v768 = vld [vmem:[%s245 + $0xef8] sm:$0xff]
        %v769 = vld [vmem:[%s245 + $0xf00] sm:$0xff]
        %v770 = vld [vmem:[%s245 + $0xf08] sm:$0xff]
        %v771 = vld [vmem:[%s245 + $0xf10] sm:$0xff]
        %v772 = vld [vmem:[%s245 + $0xf18] sm:$0xff]
        %v773 = vld [vmem:[%s245 + $0xf20] sm:$0xff]
        %v774 = vld [vmem:[%s245 + $0xf28] sm:$0xff]
        %v775 = vld [vmem:[%s245 + $0xf30] sm:$0xff]
        %v776 = vld [vmem:[%s245 + $0xf38] sm:$0xff]
        %v777 = vld [vmem:[%s245 + $0xf40] sm:$0xff]
        %v778 = vld [vmem:[%s245 + $0xf48] sm:$0xff]
        %v779 = vld [vmem:[%s245 + $0xf50] sm:$0xff]
        %v780 = vld [vmem:[%s245 + $0xf58] sm:$0xff]
        %v781 = vld [vmem:[%s245 + $0xf60] sm:$0xff]
        %v782 = vld [vmem:[%s245 + $0xf68] sm:$0xff]
        %v783 = vld [vmem:[%s245 + $0xf70] sm:$0xff]
        %v784 = vld [vmem:[%s245 + $0xf78] sm:$0xff]
        %v785 = vld [vmem:[%s245 + $0xf80] sm:$0xff]
        %v786 = vld [vmem:[%s245 + $0xf88] sm:$0xff]
        %v787 = vld [vmem:[%s245 + $0xf90] sm:$0xff]
        %v788 = vld [vmem:[%s245 + $0xf98] sm:$0xff]
        %v789 = vld [vmem:[%s245 + $0xfa0] sm:$0xff]
        %v790 = vld [vmem:[%s245 + $0xfa8] sm:$0xff]
        %v791 = vld [vmem:[%s245 + $0xfb0] sm:$0xff]
        %v792 = vld [vmem:[%s245 + $0xfb8] sm:$0xff]
        %v793 = vld [vmem:[%s245 + $0xfc0] sm:$0xff]
        %v794 = vld [vmem:[%s245 + $0xfc8] sm:$0xff]
        %v795 = vld [vmem:[%s245 + $0xfd0] sm:$0xff]
        %v796 = vld [vmem:[%s245 + $0xfd8] sm:$0xff]
        %v797 = vld [vmem:[%s245 + $0xfe0] sm:$0xff]
        %v798 = vld [vmem:[%s245 + $0xfe8] sm:$0xff]
        %v799 = vld [vmem:[%s245 + $0xff0] sm:$0xff]
        %v800 = vld [vmem:[%s245 + $0xff8] sm:$0xff]
        %v801 = vld [vmem:[%s245 + $0x1000] sm:$0xff]
        %v802 = vld [vmem:[%s245 + $0x1008] sm:$0xff]
        %v803 = vld [vmem:[%s245 + $0x1010] sm:$0xff]
        %v804 = vld [vmem:[%s245 + $0x1018] sm:$0xff]
        %v805 = vld [vmem:[%s245 + $0x1020] sm:$0xff]
        %v806 = vld [vmem:[%s245 + $0x1028] sm:$0xff]
        %v807 = vld [vmem:[%s245 + $0x1030] sm:$0xff]
        %v808 = vld [vmem:[%s245 + $0x1038] sm:$0xff]
        %v809 = vld [vmem:[%s245 + $0x1040] sm:$0xff]
        %v810 = vld [vmem:[%s245 + $0x1048] sm:$0xff]
        %v811 = vld [vmem:[%s245 + $0x1050] sm:$0xff]
        %v812 = vld [vmem:[%s245 + $0x1058] sm:$0xff]
        %v813 = vld [vmem:[%s245 + $0x1060] sm:$0xff]
        %v814 = vld [vmem:[%s245 + $0x1068] sm:$0xff]
        %v815 = vld [vmem:[%s245 + $0x1070] sm:$0xff]
        %v816 = vld [vmem:[%s245 + $0x1078] sm:$0xff]
        %v817 = vld [vmem:[%s245 + $0x1080] sm:$0xff]
        %v818 = vld [vmem:[%s245 + $0x1088] sm:$0xff]
        %v819 = vld [vmem:[%s245 + $0x1090] sm:$0xff]
        %v820 = vld [vmem:[%s245 + $0x1098] sm:$0xff]
        %v821 = vld [vmem:[%s245 + $0x10a0] sm:$0xff]
        %v822 = vld [vmem:[%s245 + $0x10a8] sm:$0xff]
        %v823 = vld [vmem:[%s245 + $0x10b0] sm:$0xff]
        %v824 = vld [vmem:[%s245 + $0x10b8] sm:$0xff]
        %v825 = vld [vmem:[%s245 + $0x10c0] sm:$0xff]
        %v826 = vld [vmem:[%s245 + $0x10c8] sm:$0xff]
        %v827 = vld [vmem:[%s245 + $0x10d0] sm:$0xff]
        %v828 = vld [vmem:[%s245 + $0x10d8] sm:$0xff]
        %v829 = vld [vmem:[%s245 + $0x10e0] sm:$0xff]
        %v830 = vld [vmem:[%s245 + $0x10e8] sm:$0xff]
        %v831 = vld [vmem:[%s245 + $0x10f0] sm:$0xff]
        %v832 = vld [vmem:[%s245 + $0x10f8] sm:$0xff]
        %v833 = vld [vmem:[%s245 + $0x1100] sm:$0xff]
        %v834 = vld [vmem:[%s245 + $0x1108] sm:$0xff]
        %v835 = vld [vmem:[%s245 + $0x1110] sm:$0xff]
        %v836 = vld [vmem:[%s245 + $0x1118] sm:$0xff]
        %v837 = vld [vmem:[%s245 + $0x1120] sm:$0xff]
        %v838 = vld [vmem:[%s245 + $0x1128] sm:$0xff]
        %v839 = vld [vmem:[%s245 + $0x1130] sm:$0xff]
        %v840 = vld [vmem:[%s245 + $0x1138] sm:$0xff]
        %v841 = vld [vmem:[%s245 + $0x1140] sm:$0xff]
        %v842 = vld [vmem:[%s245 + $0x1148] sm:$0xff]
        %v843 = vld [vmem:[%s245 + $0x1150] sm:$0xff]
        %v844 = vld [vmem:[%s245 + $0x1158] sm:$0xff]
        %v845 = vld [vmem:[%s245 + $0x1160] sm:$0xff]
        %v846 = vld [vmem:[%s245 + $0x1168] sm:$0xff]
        %v847 = vld [vmem:[%s245 + $0x1170] sm:$0xff]
        %v848 = vld [vmem:[%s245 + $0x1178] sm:$0xff]
        %v849 = vld [vmem:[%s245 + $0x1180] sm:$0xff]
        %v850 = vld [vmem:[%s245 + $0x1188] sm:$0xff]
        %v851 = vld [vmem:[%s245 + $0x1190] sm:$0xff]
        %v852 = vld [vmem:[%s245 + $0x1198] sm:$0xff]
        %v853 = vld [vmem:[%s245 + $0x11a0] sm:$0xff]
        %v854 = vld [vmem:[%s245 + $0x11a8] sm:$0xff]
        %v855 = vld [vmem:[%s245 + $0x11b0] sm:$0xff]
        %v856 = vld [vmem:[%s245 + $0x11b8] sm:$0xff]
        %v857 = vld [vmem:[%s245 + $0x11c0] sm:$0xff]
        %v858 = vld [vmem:[%s245 + $0x11c8] sm:$0xff]
        %v859 = vld [vmem:[%s245 + $0x11d0] sm:$0xff]
        %v860 = vld [vmem:[%s245 + $0x11d8] sm:$0xff]
        %v861 = vld [vmem:[%s245 + $0x11e0] sm:$0xff]
        %v862 = vld [vmem:[%s245 + $0x11e8] sm:$0xff]
        %v863 = vld [vmem:[%s245 + $0x11f0] sm:$0xff]
        %v864 = vld [vmem:[%s245 + $0x11f8] sm:$0xff]
        %v865 = vld [vmem:[%s245 + $0x1200] sm:$0xff]
        %v866 = vld [vmem:[%s245 + $0x1208] sm:$0xff]
        %v867 = vld [vmem:[%s245 + $0x1210] sm:$0xff]
        %v868 = vld [vmem:[%s245 + $0x1218] sm:$0xff]
        %v869 = vld [vmem:[%s245 + $0x1220] sm:$0xff]
        %v870 = vld [vmem:[%s245 + $0x1228] sm:$0xff]
        %v871 = vld [vmem:[%s245 + $0x1230] sm:$0xff]
        %v872 = vld [vmem:[%s245 + $0x1238] sm:$0xff]
        %v873 = vld [vmem:[%s245 + $0x1240] sm:$0xff]
        %v874 = vld [vmem:[%s245 + $0x1248] sm:$0xff]
        %v875 = vld [vmem:[%s245 + $0x1250] sm:$0xff]
        %v876 = vld [vmem:[%s245 + $0x1258] sm:$0xff]
        %v877 = vld [vmem:[%s245 + $0x1260] sm:$0xff]
        %v878 = vld [vmem:[%s245 + $0x1268] sm:$0xff]
        %v879 = vld [vmem:[%s245 + $0x1270] sm:$0xff]
        %v880 = vld [vmem:[%s245 + $0x1278] sm:$0xff]
        %v881 = vld [vmem:[%s245 + $0x1280] sm:$0xff]
        %v882 = vld [vmem:[%s245 + $0x1288] sm:$0xff]
        %v883 = vld [vmem:[%s245 + $0x1290] sm:$0xff]
        %v884 = vld [vmem:[%s245 + $0x1298] sm:$0xff]
        %v885 = vld [vmem:[%s245 + $0x12a0] sm:$0xff]
        %v886 = vld [vmem:[%s245 + $0x12a8] sm:$0xff]
        %v887 = vld [vmem:[%s245 + $0x12b0] sm:$0xff]
        %v888 = vld [vmem:[%s245 + $0x12b8] sm:$0xff]
        %v889 = vld [vmem:[%s245 + $0x12c0] sm:$0xff]
        %v890 = vld [vmem:[%s245 + $0x12c8] sm:$0xff]
        %v891 = vld [vmem:[%s245 + $0x12d0] sm:$0xff]
        %v892 = vld [vmem:[%s245 + $0x12d8] sm:$0xff]
        %v893 = vld [vmem:[%s245 + $0x12e0] sm:$0xff]
        %v894 = vld [vmem:[%s245 + $0x12e8] sm:$0xff]
        %v895 = vld [vmem:[%s245 + $0x12f0] sm:$0xff]
        %v896 = vld [vmem:[%s245 + $0x12f8] sm:$0xff]
        %v897 = vld [vmem:[%s245 + $0x1300] sm:$0xff]
        %v898 = vld [vmem:[%s245 + $0x1308] sm:$0xff]
        %v899 = vld [vmem:[%s245 + $0x1310] sm:$0xff]
        %v900 = vld [vmem:[%s245 + $0x1318] sm:$0xff]
        %v901 = vld [vmem:[%s245 + $0x1320] sm:$0xff]
        %v902 = vld [vmem:[%s245 + $0x1328] sm:$0xff]
        %v903 = vld [vmem:[%s245 + $0x1330] sm:$0xff]
        %v904 = vld [vmem:[%s245 + $0x1338] sm:$0xff]
        %v905 = vld [vmem:[%s245 + $0x1340] sm:$0xff]
        %v906 = vld [vmem:[%s245 + $0x1348] sm:$0xff]
        %v907 = vld [vmem:[%s245 + $0x1350] sm:$0xff]
        %v908 = vld [vmem:[%s245 + $0x1358] sm:$0xff]
        %v909 = vld [vmem:[%s245 + $0x1360] sm:$0xff]
        %v910 = vld [vmem:[%s245 + $0x1368] sm:$0xff]
        %v911 = vld [vmem:[%s245 + $0x1370] sm:$0xff]
        %v912 = vld [vmem:[%s245 + $0x1378] sm:$0xff]
        %v913 = vld [vmem:[%s245 + $0x1380] sm:$0xff]
        %v914 = vld [vmem:[%s245 + $0x1388] sm:$0xff]
        %v915 = vld [vmem:[%s245 + $0x1390] sm:$0xff]
        %v916 = vld [vmem:[%s245 + $0x1398] sm:$0xff]
        %v917 = vld [vmem:[%s245 + $0x13a0] sm:$0xff]
        %v918 = vld [vmem:[%s245 + $0x13a8] sm:$0xff]
        %v919 = vld [vmem:[%s245 + $0x13b0] sm:$0xff]
        %v920 = vld [vmem:[%s245 + $0x13b8] sm:$0xff]
        %v921 = vld [vmem:[%s245 + $0x13c0] sm:$0xff]
        %v922 = vld [vmem:[%s245 + $0x13c8] sm:$0xff]
        %v923 = vld [vmem:[%s245 + $0x13d0] sm:$0xff]
        %v924 = vld [vmem:[%s245 + $0x13d8] sm:$0xff]
        %v925 = vld [vmem:[%s245 + $0x13e0] sm:$0xff]
        %v926 = vld [vmem:[%s245 + $0x13e8] sm:$0xff]
        %v927 = vld [vmem:[%s245 + $0x13f0] sm:$0xff]
        %v928 = vld [vmem:[%s245 + $0x13f8] sm:$0xff]
        %v929 = vld [vmem:[%s245 + $0x1400] sm:$0xff]
        %v930 = vld [vmem:[%s245 + $0x1408] sm:$0xff]
        %v931 = vld [vmem:[%s245 + $0x1410] sm:$0xff]
        %v932 = vld [vmem:[%s245 + $0x1418] sm:$0xff]
        %v933 = vld [vmem:[%s245 + $0x1420] sm:$0xff]
        %v934 = vld [vmem:[%s245 + $0x1428] sm:$0xff]
        %v935 = vld [vmem:[%s245 + $0x1430] sm:$0xff]
        %v936 = vld [vmem:[%s245 + $0x1438] sm:$0xff]
        %v937 = vld [vmem:[%s245 + $0x1440] sm:$0xff]
        %v938 = vld [vmem:[%s245 + $0x1448] sm:$0xff]
        %v939 = vld [vmem:[%s245 + $0x1450] sm:$0xff]
        %v940 = vld [vmem:[%s245 + $0x1458] sm:$0xff]
        %v941 = vld [vmem:[%s245 + $0x1460] sm:$0xff]
        %v942 = vld [vmem:[%s245 + $0x1468] sm:$0xff]
        %v943 = vld [vmem:[%s245 + $0x1470] sm:$0xff]
        %v944 = vld [vmem:[%s245 + $0x1478] sm:$0xff]
        %v945 = vld [vmem:[%s245 + $0x1480] sm:$0xff]
        %v946 = vld [vmem:[%s245 + $0x1488] sm:$0xff]
        %v947 = vld [vmem:[%s245 + $0x1490] sm:$0xff]
        %v948 = vld [vmem:[%s245 + $0x1498] sm:$0xff]
        %v949 = vld [vmem:[%s245 + $0x14a0] sm:$0xff]
        %v950 = vld [vmem:[%s245 + $0x14a8] sm:$0xff]
        %v951 = vld [vmem:[%s245 + $0x14b0] sm:$0xff]
        %v952 = vld [vmem:[%s245 + $0x14b8] sm:$0xff]
        %v953 = vld [vmem:[%s245 + $0x14c0] sm:$0xff]
        %v954 = vld [vmem:[%s245 + $0x14c8] sm:$0xff]
        %v955 = vld [vmem:[%s245 + $0x14d0] sm:$0xff]
        %v956 = vld [vmem:[%s245 + $0x14d8] sm:$0xff]
        %v957 = vld [vmem:[%s245 + $0x14e0] sm:$0xff]
        %v958 = vld [vmem:[%s245 + $0x14e8] sm:$0xff]
        %v959 = vld [vmem:[%s245 + $0x14f0] sm:$0xff]
        %v960 = vld [vmem:[%s245 + $0x14f8] sm:$0xff]
        %v961 = vld [vmem:[%s245 + $0x1500] sm:$0xff]
        %v962 = vld [vmem:[%s245 + $0x1508] sm:$0xff]
        %v963 = vld [vmem:[%s245 + $0x1510] sm:$0xff]
        %v964 = vld [vmem:[%s245 + $0x1518] sm:$0xff]
        %v965 = vld [vmem:[%s245 + $0x1520] sm:$0xff]
        %v966 = vld [vmem:[%s245 + $0x1528] sm:$0xff]
        %v967 = vld [vmem:[%s245 + $0x1530] sm:$0xff]
        %v968 = vld [vmem:[%s245 + $0x1538] sm:$0xff]
        %v969 = vld [vmem:[%s245 + $0x1540] sm:$0xff]
        %v970 = vld [vmem:[%s245 + $0x1548] sm:$0xff]
        %v971 = vld [vmem:[%s245 + $0x1550] sm:$0xff]
        %v972 = vld [vmem:[%s245 + $0x1558] sm:$0xff]
        %v973 = vld [vmem:[%s245 + $0x1560] sm:$0xff]
        %v974 = vld [vmem:[%s245 + $0x1568] sm:$0xff]
        %v975 = vld [vmem:[%s245 + $0x1570] sm:$0xff]
        %v976 = vld [vmem:[%s245 + $0x1578] sm:$0xff]
        %v977 = vld [vmem:[%s245 + $0x1580] sm:$0xff]
        %v978 = vld [vmem:[%s245 + $0x1588] sm:$0xff]
        %v979 = vld [vmem:[%s245 + $0x1590] sm:$0xff]
        %v980 = vld [vmem:[%s245 + $0x1598] sm:$0xff]
        %v981 = vld [vmem:[%s245 + $0x15a0] sm:$0xff]
        %v982 = vld [vmem:[%s245 + $0x15a8] sm:$0xff]
        %v983 = vld [vmem:[%s245 + $0x15b0] sm:$0xff]
        %v984 = vld [vmem:[%s245 + $0x15b8] sm:$0xff]
        %v985 = vld [vmem:[%s245 + $0x15c0] sm:$0xff]
        %v986 = vld [vmem:[%s245 + $0x15c8] sm:$0xff]
        %v987 = vld [vmem:[%s245 + $0x15d0] sm:$0xff]
        %v988 = vld [vmem:[%s245 + $0x15d8] sm:$0xff]
        %v989 = vld [vmem:[%s245 + $0x15e0] sm:$0xff]
        %v990 = vld [vmem:[%s245 + $0x15e8] sm:$0xff]
        %v991 = vld [vmem:[%s245 + $0x15f0] sm:$0xff]
        %v992 = vld [vmem:[%s245 + $0x15f8] sm:$0xff]
        %v993 = vld [vmem:[%s245 + $0x1600] sm:$0xff]
        %v994 = vld [vmem:[%s245 + $0x1608] sm:$0xff]
        %v995 = vld [vmem:[%s245 + $0x1610] sm:$0xff]
        %v996 = vld [vmem:[%s245 + $0x1618] sm:$0xff]
        %v997 = vld [vmem:[%s245 + $0x1620] sm:$0xff]
        %v998 = vld [vmem:[%s245 + $0x1628] sm:$0xff]
        %v999 = vld [vmem:[%s245 + $0x1630] sm:$0xff]
        %v1000 = vld [vmem:[%s245 + $0x1638] sm:$0xff]
        %v1001 = vld [vmem:[%s245 + $0x1640] sm:$0xff]
        %v1002 = vld [vmem:[%s245 + $0x1648] sm:$0xff]
        %v1003 = vld [vmem:[%s245 + $0x1650] sm:$0xff]
        %v1004 = vld [vmem:[%s245 + $0x1658] sm:$0xff]
        %v1005 = vld [vmem:[%s245 + $0x1660] sm:$0xff]
        %v1006 = vld [vmem:[%s245 + $0x1668] sm:$0xff]
        %v1007 = vld [vmem:[%s245 + $0x1670] sm:$0xff]
        %v1008 = vld [vmem:[%s245 + $0x1678] sm:$0xff]
        %v1009 = vld [vmem:[%s245 + $0x1680] sm:$0xff]
        %v1010 = vld [vmem:[%s245 + $0x1688] sm:$0xff]
        %v1011 = vld [vmem:[%s245 + $0x1690] sm:$0xff]
        %v1012 = vld [vmem:[%s245 + $0x1698] sm:$0xff]
        %v1013 = vld [vmem:[%s245 + $0x16a0] sm:$0xff]
        %v1014 = vld [vmem:[%s245 + $0x16a8] sm:$0xff]
        %v1015 = vld [vmem:[%s245 + $0x16b0] sm:$0xff]
        %v1016 = vld [vmem:[%s245 + $0x16b8] sm:$0xff]
        %v1017 = vld [vmem:[%s245 + $0x16c0] sm:$0xff]
        %v1018 = vld [vmem:[%s245 + $0x16c8] sm:$0xff]
        %v1019 = vld [vmem:[%s245 + $0x16d0] sm:$0xff]
        %v1020 = vld [vmem:[%s245 + $0x16d8] sm:$0xff]
        %v1021 = vld [vmem:[%s245 + $0x16e0] sm:$0xff]
        %v1022 = vld [vmem:[%s245 + $0x16e8] sm:$0xff]
        %v1023 = vld [vmem:[%s245 + $0x16f0] sm:$0xff]
        %v1024 = vld [vmem:[%s245 + $0x16f8] sm:$0xff]
        %v1025 = vld [vmem:[%s245 + $0x1700] sm:$0xff]
        %v1026 = vld [vmem:[%s245 + $0x1708] sm:$0xff]
        %v1027 = vld [vmem:[%s245 + $0x1710] sm:$0xff]
        %v1028 = vld [vmem:[%s245 + $0x1718] sm:$0xff]
        %v1029 = vld [vmem:[%s245 + $0x1720] sm:$0xff]
        %v1030 = vld [vmem:[%s245 + $0x1728] sm:$0xff]
        %v1031 = vld [vmem:[%s245 + $0x1730] sm:$0xff]
        %v1032 = vld [vmem:[%s245 + $0x1738] sm:$0xff]
        %v1033 = vld [vmem:[%s245 + $0x1740] sm:$0xff]
        %v1034 = vld [vmem:[%s245 + $0x1748] sm:$0xff]
        %v1035 = vld [vmem:[%s245 + $0x1750] sm:$0xff]
        %v1036 = vld [vmem:[%s245 + $0x1758] sm:$0xff]
        %v1037 = vld [vmem:[%s245 + $0x1760] sm:$0xff]
        %v1038 = vld [vmem:[%s245 + $0x1768] sm:$0xff]
        %v1039 = vld [vmem:[%s245 + $0x1770] sm:$0xff]
        %v1040 = vld [vmem:[%s245 + $0x1778] sm:$0xff]
        %v1041 = vld [vmem:[%s245 + $0x1780] sm:$0xff]
        %v1042 = vld [vmem:[%s245 + $0x1788] sm:$0xff]
        %v1043 = vld [vmem:[%s245 + $0x1790] sm:$0xff]
        %v1044 = vld [vmem:[%s245 + $0x1798] sm:$0xff]
        %v1045 = vld [vmem:[%s245 + $0x17a0] sm:$0xff]
        %v1046 = vld [vmem:[%s245 + $0x17a8] sm:$0xff]
        %v1047 = vld [vmem:[%s245 + $0x17b0] sm:$0xff]
        %v1048 = vld [vmem:[%s245 + $0x17b8] sm:$0xff]
        %v1049 = vld [vmem:[%s245 + $0x17c0] sm:$0xff]
        %v1050 = vld [vmem:[%s245 + $0x17c8] sm:$0xff]
        %v1051 = vld [vmem:[%s245 + $0x17d0] sm:$0xff]
        %v1052 = vld [vmem:[%s245 + $0x17d8] sm:$0xff]
        %v1053 = vld [vmem:[%s245 + $0x17e0] sm:$0xff]
        %v1054 = vld [vmem:[%s245 + $0x17e8] sm:$0xff]
        %v1055 = vld [vmem:[%s245 + $0x17f0] sm:$0xff]
        %v1056 = vld [vmem:[%s245 + $0x17f8] sm:$0xff]
        %v1057 = vld [vmem:[%s245 + $0x1800] sm:$0xff]
        %v1058 = vld [vmem:[%s245 + $0x1808] sm:$0xff]
        %v1059 = vld [vmem:[%s245 + $0x1810] sm:$0xff]
        %v1060 = vld [vmem:[%s245 + $0x1818] sm:$0xff]
        %v1061 = vld [vmem:[%s245 + $0x1820] sm:$0xff]
        %v1062 = vld [vmem:[%s245 + $0x1828] sm:$0xff]
        %v1063 = vld [vmem:[%s245 + $0x1830] sm:$0xff]
        %v1064 = vld [vmem:[%s245 + $0x1838] sm:$0xff]
        %v1065 = vld [vmem:[%s245 + $0x1840] sm:$0xff]
        %v1066 = vld [vmem:[%s245 + $0x1848] sm:$0xff]
        %v1067 = vld [vmem:[%s245 + $0x1850] sm:$0xff]
        %v1068 = vld [vmem:[%s245 + $0x1858] sm:$0xff]
        %v1069 = vld [vmem:[%s245 + $0x1860] sm:$0xff]
        %v1070 = vld [vmem:[%s245 + $0x1868] sm:$0xff]
        %v1071 = vld [vmem:[%s245 + $0x1870] sm:$0xff]
        %v1072 = vld [vmem:[%s245 + $0x1878] sm:$0xff]
        %v1073 = vld [vmem:[%s245 + $0x1880] sm:$0xff]
        %v1074 = vld [vmem:[%s245 + $0x1888] sm:$0xff]
        %v1075 = vld [vmem:[%s245 + $0x1890] sm:$0xff]
        %v1076 = vld [vmem:[%s245 + $0x1898] sm:$0xff]
        %v1077 = vld [vmem:[%s245 + $0x18a0] sm:$0xff]
        %v1078 = vld [vmem:[%s245 + $0x18a8] sm:$0xff]
        %v1079 = vld [vmem:[%s245 + $0x18b0] sm:$0xff]
        %v1080 = vld [vmem:[%s245 + $0x18b8] sm:$0xff]
        %v1081 = vld [vmem:[%s245 + $0x18c0] sm:$0xff]
        %v1082 = vld [vmem:[%s245 + $0x18c8] sm:$0xff]
        %v1083 = vld [vmem:[%s245 + $0x18d0] sm:$0xff]
        %v1084 = vld [vmem:[%s245 + $0x18d8] sm:$0xff]
        %v1085 = vld [vmem:[%s245 + $0x18e0] sm:$0xff]
        %v1086 = vld [vmem:[%s245 + $0x18e8] sm:$0xff]
        %v1087 = vld [vmem:[%s245 + $0x18f0] sm:$0xff]
        %v1088 = vld [vmem:[%s245 + $0x18f8] sm:$0xff]
        %v1089 = vld [vmem:[%s245 + $0x1900] sm:$0xff]
        %v1090 = vld [vmem:[%s245 + $0x1908] sm:$0xff]
        %v1091 = vld [vmem:[%s245 + $0x1910] sm:$0xff]
        %v1092 = vld [vmem:[%s245 + $0x1918] sm:$0xff]
        %v1093 = vld [vmem:[%s245 + $0x1920] sm:$0xff]
        %v1094 = vld [vmem:[%s245 + $0x1928] sm:$0xff]
        %v1095 = vld [vmem:[%s245 + $0x1930] sm:$0xff]
        %v1096 = vld [vmem:[%s245 + $0x1938] sm:$0xff]
        %v1097 = vld [vmem:[%s245 + $0x1940] sm:$0xff]
        %v1098 = vld [vmem:[%s245 + $0x1948] sm:$0xff]
        %v1099 = vld [vmem:[%s245 + $0x1950] sm:$0xff]
        %v1100 = vld [vmem:[%s245 + $0x1958] sm:$0xff]
        %v1101 = vld [vmem:[%s245 + $0x1960] sm:$0xff]
        %v1102 = vld [vmem:[%s245 + $0x1968] sm:$0xff]
        %v1103 = vld [vmem:[%s245 + $0x1970] sm:$0xff]
        %v1104 = vld [vmem:[%s245 + $0x1978] sm:$0xff]
        %v1105 = vld [vmem:[%s245 + $0x1980] sm:$0xff]
        %v1106 = vld [vmem:[%s245 + $0x1988] sm:$0xff]
        %v1107 = vld [vmem:[%s245 + $0x1990] sm:$0xff]
        %v1108 = vld [vmem:[%s245 + $0x1998] sm:$0xff]
        %v1109 = vld [vmem:[%s245 + $0x19a0] sm:$0xff]
        %v1110 = vld [vmem:[%s245 + $0x19a8] sm:$0xff]
        %v1111 = vld [vmem:[%s245 + $0x19b0] sm:$0xff]
        %v1112 = vld [vmem:[%s245 + $0x19b8] sm:$0xff]
        %v1113 = vld [vmem:[%s245 + $0x19c0] sm:$0xff]
        %v1114 = vld [vmem:[%s245 + $0x19c8] sm:$0xff]
        %v1115 = vld [vmem:[%s245 + $0x19d0] sm:$0xff]
        %v1116 = vld [vmem:[%s245 + $0x19d8] sm:$0xff]
        %v1117 = vld [vmem:[%s245 + $0x19e0] sm:$0xff]
        %v1118 = vld [vmem:[%s245 + $0x19e8] sm:$0xff]
        %v1119 = vld [vmem:[%s245 + $0x19f0] sm:$0xff]
        %v1120 = vld [vmem:[%s245 + $0x19f8] sm:$0xff]
        %v1121 = vld [vmem:[%s245 + $0x1a00] sm:$0xff]
        %v1122 = vld [vmem:[%s245 + $0x1a08] sm:$0xff]
        %v1123 = vld [vmem:[%s245 + $0x1a10] sm:$0xff]
        %v1124 = vld [vmem:[%s245 + $0x1a18] sm:$0xff]
        %v1125 = vld [vmem:[%s245 + $0x1a20] sm:$0xff]
        %v1126 = vld [vmem:[%s245 + $0x1a28] sm:$0xff]
        %v1127 = vld [vmem:[%s245 + $0x1a30] sm:$0xff]
        %v1128 = vld [vmem:[%s245 + $0x1a38] sm:$0xff]
        %v1129 = vld [vmem:[%s245 + $0x1a40] sm:$0xff]
        %v1130 = vld [vmem:[%s245 + $0x1a48] sm:$0xff]
        %v1131 = vld [vmem:[%s245 + $0x1a50] sm:$0xff]
        %v1132 = vld [vmem:[%s245 + $0x1a58] sm:$0xff]
        %v1133 = vld [vmem:[%s245 + $0x1a60] sm:$0xff]
        %v1134 = vld [vmem:[%s245 + $0x1a68] sm:$0xff]
        %v1135 = vld [vmem:[%s245 + $0x1a70] sm:$0xff]
        %v1136 = vld [vmem:[%s245 + $0x1a78] sm:$0xff]
        %v1137 = vld [vmem:[%s245 + $0x1a80] sm:$0xff]
        %v1138 = vld [vmem:[%s245 + $0x1a88] sm:$0xff]
        %v1139 = vld [vmem:[%s245 + $0x1a90] sm:$0xff]
        %v1140 = vld [vmem:[%s245 + $0x1a98] sm:$0xff]
        %v1141 = vld [vmem:[%s245 + $0x1aa0] sm:$0xff]
        %v1142 = vld [vmem:[%s245 + $0x1aa8] sm:$0xff]
        %v1143 = vld [vmem:[%s245 + $0x1ab0] sm:$0xff]
        %v1144 = vld [vmem:[%s245 + $0x1ab8] sm:$0xff]
        %v1145 = vld [vmem:[%s245 + $0x1ac0] sm:$0xff]
        %v1146 = vld [vmem:[%s245 + $0x1ac8] sm:$0xff]
        %v1147 = vld [vmem:[%s245 + $0x1ad0] sm:$0xff]
        %v1148 = vld [vmem:[%s245 + $0x1ad8] sm:$0xff]
        %v1149 = vld [vmem:[%s245 + $0x1ae0] sm:$0xff]
        %v1150 = vld [vmem:[%s245 + $0x1ae8] sm:$0xff]
        %v1151 = vld [vmem:[%s245 + $0x1af0] sm:$0xff]
        %v1152 = vld [vmem:[%s245 + $0x1af8] sm:$0xff]
        %v1153 = vld [vmem:[%s245 + $0x1b00] sm:$0xff]
        %v1154 = vld [vmem:[%s245 + $0x1b08] sm:$0xff]
        %v1155 = vld [vmem:[%s245 + $0x1b10] sm:$0xff]
        %v1156 = vld [vmem:[%s245 + $0x1b18] sm:$0xff]
        %v1157 = vld [vmem:[%s245 + $0x1b20] sm:$0xff]
        %v1158 = vld [vmem:[%s245 + $0x1b28] sm:$0xff]
        %v1159 = vld [vmem:[%s245 + $0x1b30] sm:$0xff]
        %v1160 = vld [vmem:[%s245 + $0x1b38] sm:$0xff]
        %v1161 = vld [vmem:[%s245 + $0x1b40] sm:$0xff]
        %v1162 = vld [vmem:[%s245 + $0x1b48] sm:$0xff]
        %v1163 = vld [vmem:[%s245 + $0x1b50] sm:$0xff]
        %v1164 = vld [vmem:[%s245 + $0x1b58] sm:$0xff]
        %v1165 = vld [vmem:[%s245 + $0x1b60] sm:$0xff]
        %v1166 = vld [vmem:[%s245 + $0x1b68] sm:$0xff]
        %v1167 = vld [vmem:[%s245 + $0x1b70] sm:$0xff]
        %v1168 = vld [vmem:[%s245 + $0x1b78] sm:$0xff]
        %v1169 = vld [vmem:[%s245 + $0x1b80] sm:$0xff]
        %v1170 = vld [vmem:[%s245 + $0x1b88] sm:$0xff]
        %v1171 = vld [vmem:[%s245 + $0x1b90] sm:$0xff]
        %v1172 = vld [vmem:[%s245 + $0x1b98] sm:$0xff]
        %v1173 = vld [vmem:[%s245 + $0x1ba0] sm:$0xff]
        %v1174 = vld [vmem:[%s245 + $0x1ba8] sm:$0xff]
        %v1175 = vld [vmem:[%s245 + $0x1bb0] sm:$0xff]
        %v1176 = vld [vmem:[%s245 + $0x1bb8] sm:$0xff]
        %v1177 = vld [vmem:[%s245 + $0x1bc0] sm:$0xff]
        %v1178 = vld [vmem:[%s245 + $0x1bc8] sm:$0xff]
        %v1179 = vld [vmem:[%s245 + $0x1bd0] sm:$0xff]
        %v1180 = vld [vmem:[%s245 + $0x1bd8] sm:$0xff]
        %v1181 = vld [vmem:[%s245 + $0x1be0] sm:$0xff]
        %v1182 = vld [vmem:[%s245 + $0x1be8] sm:$0xff]
        %v1183 = vld [vmem:[%s245 + $0x1bf0] sm:$0xff]
        %v1184 = vld [vmem:[%s245 + $0x1bf8] sm:$0xff]
        %v1185 = vld [vmem:[%s245 + $0x1c00] sm:$0xff]
        %v1186 = vld [vmem:[%s245 + $0x1c08] sm:$0xff]
        %v1187 = vld [vmem:[%s245 + $0x1c10] sm:$0xff]
        %v1188 = vld [vmem:[%s245 + $0x1c18] sm:$0xff]
        %v1189 = vld [vmem:[%s245 + $0x1c20] sm:$0xff]
        %v1190 = vld [vmem:[%s245 + $0x1c28] sm:$0xff]
        %v1191 = vld [vmem:[%s245 + $0x1c30] sm:$0xff]
        %v1192 = vld [vmem:[%s245 + $0x1c38] sm:$0xff]
        %v1193 = vld [vmem:[%s245 + $0x1c40] sm:$0xff]
        %v1194 = vld [vmem:[%s245 + $0x1c48] sm:$0xff]
        %v1195 = vld [vmem:[%s245 + $0x1c50] sm:$0xff]
        %v1196 = vld [vmem:[%s245 + $0x1c58] sm:$0xff]
        %v1197 = vld [vmem:[%s245 + $0x1c60] sm:$0xff]
        %v1198 = vld [vmem:[%s245 + $0x1c68] sm:$0xff]
        %v1199 = vld [vmem:[%s245 + $0x1c70] sm:$0xff]
        %v1200 = vld [vmem:[%s245 + $0x1c78] sm:$0xff]
        %v1201 = vld [vmem:[%s245 + $0x1c80] sm:$0xff]
        %v1202 = vld [vmem:[%s245 + $0x1c88] sm:$0xff]
        %v1203 = vld [vmem:[%s245 + $0x1c90] sm:$0xff]
        %v1204 = vld [vmem:[%s245 + $0x1c98] sm:$0xff]
        %v1205 = vld [vmem:[%s245 + $0x1ca0] sm:$0xff]
        %v1206 = vld [vmem:[%s245 + $0x1ca8] sm:$0xff]
        %v1207 = vld [vmem:[%s245 + $0x1cb0] sm:$0xff]
        %v1208 = vld [vmem:[%s245 + $0x1cb8] sm:$0xff]
        %v1209 = vld [vmem:[%s245 + $0x1cc0] sm:$0xff]
        %v1210 = vld [vmem:[%s245 + $0x1cc8] sm:$0xff]
        %v1211 = vld [vmem:[%s245 + $0x1cd0] sm:$0xff]
        %v1212 = vld [vmem:[%s245 + $0x1cd8] sm:$0xff]
        %v1213 = vld [vmem:[%s245 + $0x1ce0] sm:$0xff]
        %v1214 = vld [vmem:[%s245 + $0x1ce8] sm:$0xff]
        %v1215 = vld [vmem:[%s245 + $0x1cf0] sm:$0xff]
        %v1216 = vld [vmem:[%s245 + $0x1cf8] sm:$0xff]
        %v1217 = vld [vmem:[%s245 + $0x1d00] sm:$0xff]
        %v1218 = vld [vmem:[%s245 + $0x1d08] sm:$0xff]
        %v1219 = vld [vmem:[%s245 + $0x1d10] sm:$0xff]
        %v1220 = vld [vmem:[%s245 + $0x1d18] sm:$0xff]
        %v1221 = vld [vmem:[%s245 + $0x1d20] sm:$0xff]
        %v1222 = vld [vmem:[%s245 + $0x1d28] sm:$0xff]
        %v1223 = vld [vmem:[%s245 + $0x1d30] sm:$0xff]
        %v1224 = vld [vmem:[%s245 + $0x1d38] sm:$0xff]
        %v1225 = vld [vmem:[%s245 + $0x1d40] sm:$0xff]
        %v1226 = vld [vmem:[%s245 + $0x1d48] sm:$0xff]
        %v1227 = vld [vmem:[%s245 + $0x1d50] sm:$0xff]
        %v1228 = vld [vmem:[%s245 + $0x1d58] sm:$0xff]
        %v1229 = vld [vmem:[%s245 + $0x1d60] sm:$0xff]
        %v1230 = vld [vmem:[%s245 + $0x1d68] sm:$0xff]
        %v1231 = vld [vmem:[%s245 + $0x1d70] sm:$0xff]
        %v1232 = vld [vmem:[%s245 + $0x1d78] sm:$0xff]
        %v1233 = vld [vmem:[%s245 + $0x1d80] sm:$0xff]
        %v1234 = vld [vmem:[%s245 + $0x1d88] sm:$0xff]
        %v1235 = vld [vmem:[%s245 + $0x1d90] sm:$0xff]
        %v1236 = vld [vmem:[%s245 + $0x1d98] sm:$0xff]
        %v1237 = vld [vmem:[%s245 + $0x1da0] sm:$0xff]
        %v1238 = vld [vmem:[%s245 + $0x1da8] sm:$0xff]
        %v1239 = vld [vmem:[%s245 + $0x1db0] sm:$0xff]
        %v1240 = vld [vmem:[%s245 + $0x1db8] sm:$0xff]
        %v1241 = vld [vmem:[%s245 + $0x1dc0] sm:$0xff]
        %v1242 = vld [vmem:[%s245 + $0x1dc8] sm:$0xff]
        %v1243 = vld [vmem:[%s245 + $0x1dd0] sm:$0xff]
        %v1244 = vld [vmem:[%s245 + $0x1dd8] sm:$0xff]
        %v1245 = vld [vmem:[%s245 + $0x1de0] sm:$0xff]
        %v1246 = vld [vmem:[%s245 + $0x1de8] sm:$0xff]
        %v1247 = vld [vmem:[%s245 + $0x1df0] sm:$0xff]
        %v1248 = vld [vmem:[%s245 + $0x1df8] sm:$0xff]
        %v1249 = vld [vmem:[%s245 + $0x1e00] sm:$0xff]
        %v1250 = vld [vmem:[%s245 + $0x1e08] sm:$0xff]
        %v1251 = vld [vmem:[%s245 + $0x1e10] sm:$0xff]
        %v1252 = vld [vmem:[%s245 + $0x1e18] sm:$0xff]
        %v1253 = vld [vmem:[%s245 + $0x1e20] sm:$0xff]
        %v1254 = vld [vmem:[%s245 + $0x1e28] sm:$0xff]
        %v1255 = vld [vmem:[%s245 + $0x1e30] sm:$0xff]
        %v1256 = vld [vmem:[%s245 + $0x1e38] sm:$0xff]
        %v1257 = vld [vmem:[%s245 + $0x1e40] sm:$0xff]
        %v1258 = vld [vmem:[%s245 + $0x1e48] sm:$0xff]
        %v1259 = vld [vmem:[%s245 + $0x1e50] sm:$0xff]
        %v1260 = vld [vmem:[%s245 + $0x1e58] sm:$0xff]
        %v1261 = vld [vmem:[%s245 + $0x1e60] sm:$0xff]
        %v1262 = vld [vmem:[%s245 + $0x1e68] sm:$0xff]
        %v1263 = vld [vmem:[%s245 + $0x1e70] sm:$0xff]
        %v1264 = vld [vmem:[%s245 + $0x1e78] sm:$0xff]
        %v1265 = vld [vmem:[%s245 + $0x1e80] sm:$0xff]
        %v1266 = vld [vmem:[%s245 + $0x1e88] sm:$0xff]
        %v1267 = vld [vmem:[%s245 + $0x1e90] sm:$0xff]
        %v1268 = vld [vmem:[%s245 + $0x1e98] sm:$0xff]
        %v1269 = vld [vmem:[%s245 + $0x1ea0] sm:$0xff]
        %v1270 = vld [vmem:[%s245 + $0x1ea8] sm:$0xff]
        %v1271 = vld [vmem:[%s245 + $0x1eb0] sm:$0xff]
        %v1272 = vld [vmem:[%s245 + $0x1eb8] sm:$0xff]
        %v1273 = vld [vmem:[%s245 + $0x1ec0] sm:$0xff]
        %v1274 = vld [vmem:[%s245 + $0x1ec8] sm:$0xff]
        %v1275 = vld [vmem:[%s245 + $0x1ed0] sm:$0xff]
        %v1276 = vld [vmem:[%s245 + $0x1ed8] sm:$0xff]
        %v1277 = vld [vmem:[%s245 + $0x1ee0] sm:$0xff]
        %v1278 = vld [vmem:[%s245 + $0x1ee8] sm:$0xff]
        %v1279 = vld [vmem:[%s245 + $0x1ef0] sm:$0xff]
        %v1280 = vld [vmem:[%s245 + $0x1ef8] sm:$0xff]
        %v1281 = vld [vmem:[%s245 + $0x1f00] sm:$0xff]
        %v1282 = vld [vmem:[%s245 + $0x1f08] sm:$0xff]
        %v1283 = vld [vmem:[%s245 + $0x1f10] sm:$0xff]
        %v1284 = vld [vmem:[%s245 + $0x1f18] sm:$0xff]
        %v1285 = vld [vmem:[%s245 + $0x1f20] sm:$0xff]
        %v1286 = vld [vmem:[%s245 + $0x1f28] sm:$0xff]
        %v1287 = vld [vmem:[%s245 + $0x1f30] sm:$0xff]
        %v1288 = vld [vmem:[%s245 + $0x1f38] sm:$0xff]
        %v1289 = vld [vmem:[%s245 + $0x1f40] sm:$0xff]
        %v1290 = vld [vmem:[%s245 + $0x1f48] sm:$0xff]
        %v1291 = vld [vmem:[%s245 + $0x1f50] sm:$0xff]
        %v1292 = vld [vmem:[%s245 + $0x1f58] sm:$0xff]
        %v1293 = vld [vmem:[%s245 + $0x1f60] sm:$0xff]
        %v1294 = vld [vmem:[%s245 + $0x1f68] sm:$0xff]
        %v1295 = vld [vmem:[%s245 + $0x1f70] sm:$0xff]
        %v1296 = vld [vmem:[%s245 + $0x1f78] sm:$0xff]
        %v1297 = vld [vmem:[%s245 + $0x1f80] sm:$0xff]
        %v1298 = vld [vmem:[%s245 + $0x1f88] sm:$0xff]
        %v1299 = vld [vmem:[%s245 + $0x1f90] sm:$0xff]
        %v1300 = vld [vmem:[%s245 + $0x1f98] sm:$0xff]
        %v1301 = vld [vmem:[%s245 + $0x1fa0] sm:$0xff]
        %v1302 = vld [vmem:[%s245 + $0x1fa8] sm:$0xff]
        %v1303 = vld [vmem:[%s245 + $0x1fb0] sm:$0xff]
        %v1304 = vld [vmem:[%s245 + $0x1fb8] sm:$0xff]
        %v1305 = vld [vmem:[%s245 + $0x1fc0] sm:$0xff]
        %v1306 = vld [vmem:[%s245 + $0x1fc8] sm:$0xff]
        %v1307 = vld [vmem:[%s245 + $0x1fd0] sm:$0xff]
        %v1308 = vld [vmem:[%s245 + $0x1fd8] sm:$0xff]
        %v1309 = vld [vmem:[%s245 + $0x1fe0] sm:$0xff]
        %v1310 = vld [vmem:[%s245 + $0x1fe8] sm:$0xff]
        %v1311 = vld [vmem:[%s245 + $0x1ff0] sm:$0xff]
        %v1312 = vld [vmem:[%s245 + $0x1ff8] sm:$0xff]
        %v1313 = vunpack.c.l.bf16 %v289
        %v1314 = vunpack.c.h.bf16 %v289
        %v1315 = vunpack.c.l.bf16 %v290
        %v1316 = vunpack.c.h.bf16 %v290
        %v1317 = vunpack.c.l.bf16 %v291
        %v1318 = vunpack.c.h.bf16 %v291
        %v1319 = vunpack.c.l.bf16 %v292
        %v1320 = vunpack.c.h.bf16 %v292
        %v1321 = vunpack.c.l.bf16 %v293
        %v1322 = vunpack.c.h.bf16 %v293
        %v1323 = vunpack.c.l.bf16 %v294
        %v1324 = vunpack.c.h.bf16 %v294
        %v1325 = vunpack.c.l.bf16 %v295
        %v1326 = vunpack.c.h.bf16 %v295
        %v1327 = vunpack.c.l.bf16 %v296
        %v1328 = vunpack.c.h.bf16 %v296
        %v1329 = vunpack.c.l.bf16 %v297
        %v1330 = vunpack.c.h.bf16 %v297
        %v1331 = vunpack.c.l.bf16 %v298
        %v1332 = vunpack.c.h.bf16 %v298
        %v1333 = vunpack.c.l.bf16 %v299
        %v1334 = vunpack.c.h.bf16 %v299
        %v1335 = vunpack.c.l.bf16 %v300
        %v1336 = vunpack.c.h.bf16 %v300
        %v1337 = vunpack.c.l.bf16 %v301
        %v1338 = vunpack.c.h.bf16 %v301
        %v1339 = vunpack.c.l.bf16 %v302
        %v1340 = vunpack.c.h.bf16 %v302
        %v1341 = vunpack.c.l.bf16 %v303
        %v1342 = vunpack.c.h.bf16 %v303
        %v1343 = vunpack.c.l.bf16 %v304
        %v1344 = vunpack.c.h.bf16 %v304
        %v1345 = vunpack.c.l.bf16 %v305
        %v1346 = vunpack.c.h.bf16 %v305
        %v1347 = vunpack.c.l.bf16 %v306
        %v1348 = vunpack.c.h.bf16 %v306
        %v1349 = vunpack.c.l.bf16 %v307
        %v1350 = vunpack.c.h.bf16 %v307
        %v1351 = vunpack.c.l.bf16 %v308
        %v1352 = vunpack.c.h.bf16 %v308
        %v1353 = vunpack.c.l.bf16 %v309
        %v1354 = vunpack.c.h.bf16 %v309
        %v1355 = vunpack.c.l.bf16 %v310
        %v1356 = vunpack.c.h.bf16 %v310
        %v1357 = vunpack.c.l.bf16 %v311
        %v1358 = vunpack.c.h.bf16 %v311
        %v1359 = vunpack.c.l.bf16 %v312
        %v1360 = vunpack.c.h.bf16 %v312
        %v1361 = vunpack.c.l.bf16 %v313
        %v1362 = vunpack.c.h.bf16 %v313
        %v1363 = vunpack.c.l.bf16 %v314
        %v1364 = vunpack.c.h.bf16 %v314
        %v1365 = vunpack.c.l.bf16 %v315
        %v1366 = vunpack.c.h.bf16 %v315
        %v1367 = vunpack.c.l.bf16 %v316
        %v1368 = vunpack.c.h.bf16 %v316
        %v1369 = vunpack.c.l.bf16 %v317
        %v1370 = vunpack.c.h.bf16 %v317
        %v1371 = vunpack.c.l.bf16 %v318
        %v1372 = vunpack.c.h.bf16 %v318
        %v1373 = vunpack.c.l.bf16 %v319
        %v1374 = vunpack.c.h.bf16 %v319
        %v1375 = vunpack.c.l.bf16 %v320
        %v1376 = vunpack.c.h.bf16 %v320
        %v1377 = vunpack.c.l.bf16 %v321
        %v1378 = vunpack.c.h.bf16 %v321
        %v1379 = vunpack.c.l.bf16 %v322
        %v1380 = vunpack.c.h.bf16 %v322
        %v1381 = vunpack.c.l.bf16 %v323
        %v1382 = vunpack.c.h.bf16 %v323
        %v1383 = vunpack.c.l.bf16 %v324
        %v1384 = vunpack.c.h.bf16 %v324
        %v1385 = vunpack.c.l.bf16 %v325
        %v1386 = vunpack.c.h.bf16 %v325
        %v1387 = vunpack.c.l.bf16 %v326
        %v1388 = vunpack.c.h.bf16 %v326
        %v1389 = vunpack.c.l.bf16 %v327
        %v1390 = vunpack.c.h.bf16 %v327
        %v1391 = vunpack.c.l.bf16 %v328
        %v1392 = vunpack.c.h.bf16 %v328
        %v1393 = vunpack.c.l.bf16 %v329
        %v1394 = vunpack.c.h.bf16 %v329
        %v1395 = vunpack.c.l.bf16 %v330
        %v1396 = vunpack.c.h.bf16 %v330
        %v1397 = vunpack.c.l.bf16 %v331
        %v1398 = vunpack.c.h.bf16 %v331
        %v1399 = vunpack.c.l.bf16 %v332
        %v1400 = vunpack.c.h.bf16 %v332
        %v1401 = vunpack.c.l.bf16 %v333
        %v1402 = vunpack.c.h.bf16 %v333
        %v1403 = vunpack.c.l.bf16 %v334
        %v1404 = vunpack.c.h.bf16 %v334
        %v1405 = vunpack.c.l.bf16 %v335
        %v1406 = vunpack.c.h.bf16 %v335
        %v1407 = vunpack.c.l.bf16 %v336
        %v1408 = vunpack.c.h.bf16 %v336
        %v1409 = vunpack.c.l.bf16 %v337
        %v1410 = vunpack.c.h.bf16 %v337
        %v1411 = vunpack.c.l.bf16 %v338
        %v1412 = vunpack.c.h.bf16 %v338
        %v1413 = vunpack.c.l.bf16 %v339
        %v1414 = vunpack.c.h.bf16 %v339
        %v1415 = vunpack.c.l.bf16 %v340
        %v1416 = vunpack.c.h.bf16 %v340
        %v1417 = vunpack.c.l.bf16 %v341
        %v1418 = vunpack.c.h.bf16 %v341
        %v1419 = vunpack.c.l.bf16 %v342
        %v1420 = vunpack.c.h.bf16 %v342
        %v1421 = vunpack.c.l.bf16 %v343
        %v1422 = vunpack.c.h.bf16 %v343
        %v1423 = vunpack.c.l.bf16 %v344
        %v1424 = vunpack.c.h.bf16 %v344
        %v1425 = vunpack.c.l.bf16 %v345
        %v1426 = vunpack.c.h.bf16 %v345
        %v1427 = vunpack.c.l.bf16 %v346
        %v1428 = vunpack.c.h.bf16 %v346
        %v1429 = vunpack.c.l.bf16 %v347
        %v1430 = vunpack.c.h.bf16 %v347
        %v1431 = vunpack.c.l.bf16 %v348
        %v1432 = vunpack.c.h.bf16 %v348
        %v1433 = vunpack.c.l.bf16 %v349
        %v1434 = vunpack.c.h.bf16 %v349
        %v1435 = vunpack.c.l.bf16 %v350
        %v1436 = vunpack.c.h.bf16 %v350
        %v1437 = vunpack.c.l.bf16 %v351
        %v1438 = vunpack.c.h.bf16 %v351
        %v1439 = vunpack.c.l.bf16 %v352
        %v1440 = vunpack.c.h.bf16 %v352
        %v1441 = vunpack.c.l.bf16 %v353
        %v1442 = vunpack.c.h.bf16 %v353
        %v1443 = vunpack.c.l.bf16 %v354
        %v1444 = vunpack.c.h.bf16 %v354
        %v1445 = vunpack.c.l.bf16 %v355
        %v1446 = vunpack.c.h.bf16 %v355
        %v1447 = vunpack.c.l.bf16 %v356
        %v1448 = vunpack.c.h.bf16 %v356
        %v1449 = vunpack.c.l.bf16 %v357
        %v1450 = vunpack.c.h.bf16 %v357
        %v1451 = vunpack.c.l.bf16 %v358
        %v1452 = vunpack.c.h.bf16 %v358
        %v1453 = vunpack.c.l.bf16 %v359
        %v1454 = vunpack.c.h.bf16 %v359
        %v1455 = vunpack.c.l.bf16 %v360
        %v1456 = vunpack.c.h.bf16 %v360
        %v1457 = vunpack.c.l.bf16 %v361
        %v1458 = vunpack.c.h.bf16 %v361
        %v1459 = vunpack.c.l.bf16 %v362
        %v1460 = vunpack.c.h.bf16 %v362
        %v1461 = vunpack.c.l.bf16 %v363
        %v1462 = vunpack.c.h.bf16 %v363
        %v1463 = vunpack.c.l.bf16 %v364
        %v1464 = vunpack.c.h.bf16 %v364
        %v1465 = vunpack.c.l.bf16 %v365
        %v1466 = vunpack.c.h.bf16 %v365
        %v1467 = vunpack.c.l.bf16 %v366
        %v1468 = vunpack.c.h.bf16 %v366
        %v1469 = vunpack.c.l.bf16 %v367
        %v1470 = vunpack.c.h.bf16 %v367
        %v1471 = vunpack.c.l.bf16 %v368
        %v1472 = vunpack.c.h.bf16 %v368
        %v1473 = vunpack.c.l.bf16 %v369
        %v1474 = vunpack.c.h.bf16 %v369
        %v1475 = vunpack.c.l.bf16 %v370
        %v1476 = vunpack.c.h.bf16 %v370
        %v1477 = vunpack.c.l.bf16 %v371
        %v1478 = vunpack.c.h.bf16 %v371
        %v1479 = vunpack.c.l.bf16 %v372
        %v1480 = vunpack.c.h.bf16 %v372
        %v1481 = vunpack.c.l.bf16 %v373
        %v1482 = vunpack.c.h.bf16 %v373
        %v1483 = vunpack.c.l.bf16 %v374
        %v1484 = vunpack.c.h.bf16 %v374
        %v1485 = vunpack.c.l.bf16 %v375
        %v1486 = vunpack.c.h.bf16 %v375
        %v1487 = vunpack.c.l.bf16 %v376
        %v1488 = vunpack.c.h.bf16 %v376
        %v1489 = vunpack.c.l.bf16 %v377
        %v1490 = vunpack.c.h.bf16 %v377
        %v1491 = vunpack.c.l.bf16 %v378
        %v1492 = vunpack.c.h.bf16 %v378
        %v1493 = vunpack.c.l.bf16 %v379
        %v1494 = vunpack.c.h.bf16 %v379
        %v1495 = vunpack.c.l.bf16 %v380
        %v1496 = vunpack.c.h.bf16 %v380
        %v1497 = vunpack.c.l.bf16 %v381
        %v1498 = vunpack.c.h.bf16 %v381
        %v1499 = vunpack.c.l.bf16 %v382
        %v1500 = vunpack.c.h.bf16 %v382
        %v1501 = vunpack.c.l.bf16 %v383
        %v1502 = vunpack.c.h.bf16 %v383
        %v1503 = vunpack.c.l.bf16 %v384
        %v1504 = vunpack.c.h.bf16 %v384
        %v1505 = vunpack.c.l.bf16 %v385
        %v1506 = vunpack.c.h.bf16 %v385
        %v1507 = vunpack.c.l.bf16 %v386
        %v1508 = vunpack.c.h.bf16 %v386
        %v1509 = vunpack.c.l.bf16 %v387
        %v1510 = vunpack.c.h.bf16 %v387
        %v1511 = vunpack.c.l.bf16 %v388
        %v1512 = vunpack.c.h.bf16 %v388
        %v1513 = vunpack.c.l.bf16 %v389
        %v1514 = vunpack.c.h.bf16 %v389
        %v1515 = vunpack.c.l.bf16 %v390
        %v1516 = vunpack.c.h.bf16 %v390
        %v1517 = vunpack.c.l.bf16 %v391
        %v1518 = vunpack.c.h.bf16 %v391
        %v1519 = vunpack.c.l.bf16 %v392
        %v1520 = vunpack.c.h.bf16 %v392
        %v1521 = vunpack.c.l.bf16 %v393
        %v1522 = vunpack.c.h.bf16 %v393
        %v1523 = vunpack.c.l.bf16 %v394
        %v1524 = vunpack.c.h.bf16 %v394
        %v1525 = vunpack.c.l.bf16 %v395
        %v1526 = vunpack.c.h.bf16 %v395
        %v1527 = vunpack.c.l.bf16 %v396
        %v1528 = vunpack.c.h.bf16 %v396
        %v1529 = vunpack.c.l.bf16 %v397
        %v1530 = vunpack.c.h.bf16 %v397
        %v1531 = vunpack.c.l.bf16 %v398
        %v1532 = vunpack.c.h.bf16 %v398
        %v1533 = vunpack.c.l.bf16 %v399
        %v1534 = vunpack.c.h.bf16 %v399
        %v1535 = vunpack.c.l.bf16 %v400
        %v1536 = vunpack.c.h.bf16 %v400
        %v1537 = vunpack.c.l.bf16 %v401
        %v1538 = vunpack.c.h.bf16 %v401
        %v1539 = vunpack.c.l.bf16 %v402
        %v1540 = vunpack.c.h.bf16 %v402
        %v1541 = vunpack.c.l.bf16 %v403
        %v1542 = vunpack.c.h.bf16 %v403
        %v1543 = vunpack.c.l.bf16 %v404
        %v1544 = vunpack.c.h.bf16 %v404
        %v1545 = vunpack.c.l.bf16 %v405
        %v1546 = vunpack.c.h.bf16 %v405
        %v1547 = vunpack.c.l.bf16 %v406
        %v1548 = vunpack.c.h.bf16 %v406
        %v1549 = vunpack.c.l.bf16 %v407
        %v1550 = vunpack.c.h.bf16 %v407
        %v1551 = vunpack.c.l.bf16 %v408
        %v1552 = vunpack.c.h.bf16 %v408
        %v1553 = vunpack.c.l.bf16 %v409
        %v1554 = vunpack.c.h.bf16 %v409
        %v1555 = vunpack.c.l.bf16 %v410
        %v1556 = vunpack.c.h.bf16 %v410
        %v1557 = vunpack.c.l.bf16 %v411
        %v1558 = vunpack.c.h.bf16 %v411
        %v1559 = vunpack.c.l.bf16 %v412
        %v1560 = vunpack.c.h.bf16 %v412
        %v1561 = vunpack.c.l.bf16 %v413
        %v1562 = vunpack.c.h.bf16 %v413
        %v1563 = vunpack.c.l.bf16 %v414
        %v1564 = vunpack.c.h.bf16 %v414
        %v1565 = vunpack.c.l.bf16 %v415
        %v1566 = vunpack.c.h.bf16 %v415
        %v1567 = vunpack.c.l.bf16 %v416
        %v1568 = vunpack.c.h.bf16 %v416
        %v1569 = vunpack.c.l.bf16 %v417
        %v1570 = vunpack.c.h.bf16 %v417
        %v1571 = vunpack.c.l.bf16 %v418
        %v1572 = vunpack.c.h.bf16 %v418
        %v1573 = vunpack.c.l.bf16 %v419
        %v1574 = vunpack.c.h.bf16 %v419
        %v1575 = vunpack.c.l.bf16 %v420
        %v1576 = vunpack.c.h.bf16 %v420
        %v1577 = vunpack.c.l.bf16 %v421
        %v1578 = vunpack.c.h.bf16 %v421
        %v1579 = vunpack.c.l.bf16 %v422
        %v1580 = vunpack.c.h.bf16 %v422
        %v1581 = vunpack.c.l.bf16 %v423
        %v1582 = vunpack.c.h.bf16 %v423
        %v1583 = vunpack.c.l.bf16 %v424
        %v1584 = vunpack.c.h.bf16 %v424
        %v1585 = vunpack.c.l.bf16 %v425
        %v1586 = vunpack.c.h.bf16 %v425
        %v1587 = vunpack.c.l.bf16 %v426
        %v1588 = vunpack.c.h.bf16 %v426
        %v1589 = vunpack.c.l.bf16 %v427
        %v1590 = vunpack.c.h.bf16 %v427
        %v1591 = vunpack.c.l.bf16 %v428
        %v1592 = vunpack.c.h.bf16 %v428
        %v1593 = vunpack.c.l.bf16 %v429
        %v1594 = vunpack.c.h.bf16 %v429
        %v1595 = vunpack.c.l.bf16 %v430
        %v1596 = vunpack.c.h.bf16 %v430
        %v1597 = vunpack.c.l.bf16 %v431
        %v1598 = vunpack.c.h.bf16 %v431
        %v1599 = vunpack.c.l.bf16 %v432
        %v1600 = vunpack.c.h.bf16 %v432
        %v1601 = vunpack.c.l.bf16 %v433
        %v1602 = vunpack.c.h.bf16 %v433
        %v1603 = vunpack.c.l.bf16 %v434
        %v1604 = vunpack.c.h.bf16 %v434
        %v1605 = vunpack.c.l.bf16 %v435
        %v1606 = vunpack.c.h.bf16 %v435
        %v1607 = vunpack.c.l.bf16 %v436
        %v1608 = vunpack.c.h.bf16 %v436
        %v1609 = vunpack.c.l.bf16 %v437
        %v1610 = vunpack.c.h.bf16 %v437
        %v1611 = vunpack.c.l.bf16 %v438
        %v1612 = vunpack.c.h.bf16 %v438
        %v1613 = vunpack.c.l.bf16 %v439
        %v1614 = vunpack.c.h.bf16 %v439
        %v1615 = vunpack.c.l.bf16 %v440
        %v1616 = vunpack.c.h.bf16 %v440
        %v1617 = vunpack.c.l.bf16 %v441
        %v1618 = vunpack.c.h.bf16 %v441
        %v1619 = vunpack.c.l.bf16 %v442
        %v1620 = vunpack.c.h.bf16 %v442
        %v1621 = vunpack.c.l.bf16 %v443
        %v1622 = vunpack.c.h.bf16 %v443
        %v1623 = vunpack.c.l.bf16 %v444
        %v1624 = vunpack.c.h.bf16 %v444
        %v1625 = vunpack.c.l.bf16 %v445
        %v1626 = vunpack.c.h.bf16 %v445
        %v1627 = vunpack.c.l.bf16 %v446
        %v1628 = vunpack.c.h.bf16 %v446
        %v1629 = vunpack.c.l.bf16 %v447
        %v1630 = vunpack.c.h.bf16 %v447
        %v1631 = vunpack.c.l.bf16 %v448
        %v1632 = vunpack.c.h.bf16 %v448
        %v1633 = vunpack.c.l.bf16 %v449
        %v1634 = vunpack.c.h.bf16 %v449
        %v1635 = vunpack.c.l.bf16 %v450
        %v1636 = vunpack.c.h.bf16 %v450
        %v1637 = vunpack.c.l.bf16 %v451
        %v1638 = vunpack.c.h.bf16 %v451
        %v1639 = vunpack.c.l.bf16 %v452
        %v1640 = vunpack.c.h.bf16 %v452
        %v1641 = vunpack.c.l.bf16 %v453
        %v1642 = vunpack.c.h.bf16 %v453
        %v1643 = vunpack.c.l.bf16 %v454
        %v1644 = vunpack.c.h.bf16 %v454
        %v1645 = vunpack.c.l.bf16 %v455
        %v1646 = vunpack.c.h.bf16 %v455
        %v1647 = vunpack.c.l.bf16 %v456
        %v1648 = vunpack.c.h.bf16 %v456
        %v1649 = vunpack.c.l.bf16 %v457
        %v1650 = vunpack.c.h.bf16 %v457
        %v1651 = vunpack.c.l.bf16 %v458
        %v1652 = vunpack.c.h.bf16 %v458
        %v1653 = vunpack.c.l.bf16 %v459
        %v1654 = vunpack.c.h.bf16 %v459
        %v1655 = vunpack.c.l.bf16 %v460
        %v1656 = vunpack.c.h.bf16 %v460
        %v1657 = vunpack.c.l.bf16 %v461
        %v1658 = vunpack.c.h.bf16 %v461
        %v1659 = vunpack.c.l.bf16 %v462
        %v1660 = vunpack.c.h.bf16 %v462
        %v1661 = vunpack.c.l.bf16 %v463
        %v1662 = vunpack.c.h.bf16 %v463
        %v1663 = vunpack.c.l.bf16 %v464
        %v1664 = vunpack.c.h.bf16 %v464
        %v1665 = vunpack.c.l.bf16 %v465
        %v1666 = vunpack.c.h.bf16 %v465
        %v1667 = vunpack.c.l.bf16 %v466
        %v1668 = vunpack.c.h.bf16 %v466
        %v1669 = vunpack.c.l.bf16 %v467
        %v1670 = vunpack.c.h.bf16 %v467
        %v1671 = vunpack.c.l.bf16 %v468
        %v1672 = vunpack.c.h.bf16 %v468
        %v1673 = vunpack.c.l.bf16 %v469
        %v1674 = vunpack.c.h.bf16 %v469
        %v1675 = vunpack.c.l.bf16 %v470
        %v1676 = vunpack.c.h.bf16 %v470
        %v1677 = vunpack.c.l.bf16 %v471
        %v1678 = vunpack.c.h.bf16 %v471
        %v1679 = vunpack.c.l.bf16 %v472
        %v1680 = vunpack.c.h.bf16 %v472
        %v1681 = vunpack.c.l.bf16 %v473
        %v1682 = vunpack.c.h.bf16 %v473
        %v1683 = vunpack.c.l.bf16 %v474
        %v1684 = vunpack.c.h.bf16 %v474
        %v1685 = vunpack.c.l.bf16 %v475
        %v1686 = vunpack.c.h.bf16 %v475
        %v1687 = vunpack.c.l.bf16 %v476
        %v1688 = vunpack.c.h.bf16 %v476
        %v1689 = vunpack.c.l.bf16 %v477
        %v1690 = vunpack.c.h.bf16 %v477
        %v1691 = vunpack.c.l.bf16 %v478
        %v1692 = vunpack.c.h.bf16 %v478
        %v1693 = vunpack.c.l.bf16 %v479
        %v1694 = vunpack.c.h.bf16 %v479
        %v1695 = vunpack.c.l.bf16 %v480
        %v1696 = vunpack.c.h.bf16 %v480
        %v1697 = vunpack.c.l.bf16 %v481
        %v1698 = vunpack.c.h.bf16 %v481
        %v1699 = vunpack.c.l.bf16 %v482
        %v1700 = vunpack.c.h.bf16 %v482
        %v1701 = vunpack.c.l.bf16 %v483
        %v1702 = vunpack.c.h.bf16 %v483
        %v1703 = vunpack.c.l.bf16 %v484
        %v1704 = vunpack.c.h.bf16 %v484
        %v1705 = vunpack.c.l.bf16 %v485
        %v1706 = vunpack.c.h.bf16 %v485
        %v1707 = vunpack.c.l.bf16 %v486
        %v1708 = vunpack.c.h.bf16 %v486
        %v1709 = vunpack.c.l.bf16 %v487
        %v1710 = vunpack.c.h.bf16 %v487
        %v1711 = vunpack.c.l.bf16 %v488
        %v1712 = vunpack.c.h.bf16 %v488
        %v1713 = vunpack.c.l.bf16 %v489
        %v1714 = vunpack.c.h.bf16 %v489
        %v1715 = vunpack.c.l.bf16 %v490
        %v1716 = vunpack.c.h.bf16 %v490
        %v1717 = vunpack.c.l.bf16 %v491
        %v1718 = vunpack.c.h.bf16 %v491
        %v1719 = vunpack.c.l.bf16 %v492
        %v1720 = vunpack.c.h.bf16 %v492
        %v1721 = vunpack.c.l.bf16 %v493
        %v1722 = vunpack.c.h.bf16 %v493
        %v1723 = vunpack.c.l.bf16 %v494
        %v1724 = vunpack.c.h.bf16 %v494
        %v1725 = vunpack.c.l.bf16 %v495
        %v1726 = vunpack.c.h.bf16 %v495
        %v1727 = vunpack.c.l.bf16 %v496
        %v1728 = vunpack.c.h.bf16 %v496
        %v1729 = vunpack.c.l.bf16 %v497
        %v1730 = vunpack.c.h.bf16 %v497
        %v1731 = vunpack.c.l.bf16 %v498
        %v1732 = vunpack.c.h.bf16 %v498
        %v1733 = vunpack.c.l.bf16 %v499
        %v1734 = vunpack.c.h.bf16 %v499
        %v1735 = vunpack.c.l.bf16 %v500
        %v1736 = vunpack.c.h.bf16 %v500
        %v1737 = vunpack.c.l.bf16 %v501
        %v1738 = vunpack.c.h.bf16 %v501
        %v1739 = vunpack.c.l.bf16 %v502
        %v1740 = vunpack.c.h.bf16 %v502
        %v1741 = vunpack.c.l.bf16 %v503
        %v1742 = vunpack.c.h.bf16 %v503
        %v1743 = vunpack.c.l.bf16 %v504
        %v1744 = vunpack.c.h.bf16 %v504
        %v1745 = vunpack.c.l.bf16 %v505
        %v1746 = vunpack.c.h.bf16 %v505
        %v1747 = vunpack.c.l.bf16 %v506
        %v1748 = vunpack.c.h.bf16 %v506
        %v1749 = vunpack.c.l.bf16 %v507
        %v1750 = vunpack.c.h.bf16 %v507
        %v1751 = vunpack.c.l.bf16 %v508
        %v1752 = vunpack.c.h.bf16 %v508
        %v1753 = vunpack.c.l.bf16 %v509
        %v1754 = vunpack.c.h.bf16 %v509
        %v1755 = vunpack.c.l.bf16 %v510
        %v1756 = vunpack.c.h.bf16 %v510
        %v1757 = vunpack.c.l.bf16 %v511
        %v1758 = vunpack.c.h.bf16 %v511
        %v1759 = vunpack.c.l.bf16 %v512
        %v1760 = vunpack.c.h.bf16 %v512
        %v1761 = vunpack.c.l.bf16 %v513
        %v1762 = vunpack.c.h.bf16 %v513
        %v1763 = vunpack.c.l.bf16 %v514
        %v1764 = vunpack.c.h.bf16 %v514
        %v1765 = vunpack.c.l.bf16 %v515
        %v1766 = vunpack.c.h.bf16 %v515
        %v1767 = vunpack.c.l.bf16 %v516
        %v1768 = vunpack.c.h.bf16 %v516
        %v1769 = vunpack.c.l.bf16 %v517
        %v1770 = vunpack.c.h.bf16 %v517
        %v1771 = vunpack.c.l.bf16 %v518
        %v1772 = vunpack.c.h.bf16 %v518
        %v1773 = vunpack.c.l.bf16 %v519
        %v1774 = vunpack.c.h.bf16 %v519
        %v1775 = vunpack.c.l.bf16 %v520
        %v1776 = vunpack.c.h.bf16 %v520
        %v1777 = vunpack.c.l.bf16 %v521
        %v1778 = vunpack.c.h.bf16 %v521
        %v1779 = vunpack.c.l.bf16 %v522
        %v1780 = vunpack.c.h.bf16 %v522
        %v1781 = vunpack.c.l.bf16 %v523
        %v1782 = vunpack.c.h.bf16 %v523
        %v1783 = vunpack.c.l.bf16 %v524
        %v1784 = vunpack.c.h.bf16 %v524
        %v1785 = vunpack.c.l.bf16 %v525
        %v1786 = vunpack.c.h.bf16 %v525
        %v1787 = vunpack.c.l.bf16 %v526
        %v1788 = vunpack.c.h.bf16 %v526
        %v1789 = vunpack.c.l.bf16 %v527
        %v1790 = vunpack.c.h.bf16 %v527
        %v1791 = vunpack.c.l.bf16 %v528
        %v1792 = vunpack.c.h.bf16 %v528
        %v1793 = vunpack.c.l.bf16 %v529
        %v1794 = vunpack.c.h.bf16 %v529
        %v1795 = vunpack.c.l.bf16 %v530
        %v1796 = vunpack.c.h.bf16 %v530
        %v1797 = vunpack.c.l.bf16 %v531
        %v1798 = vunpack.c.h.bf16 %v531
        %v1799 = vunpack.c.l.bf16 %v532
        %v1800 = vunpack.c.h.bf16 %v532
        %v1801 = vunpack.c.l.bf16 %v533
        %v1802 = vunpack.c.h.bf16 %v533
        %v1803 = vunpack.c.l.bf16 %v534
        %v1804 = vunpack.c.h.bf16 %v534
        %v1805 = vunpack.c.l.bf16 %v535
        %v1806 = vunpack.c.h.bf16 %v535
        %v1807 = vunpack.c.l.bf16 %v536
        %v1808 = vunpack.c.h.bf16 %v536
        %v1809 = vunpack.c.l.bf16 %v537
        %v1810 = vunpack.c.h.bf16 %v537
        %v1811 = vunpack.c.l.bf16 %v538
        %v1812 = vunpack.c.h.bf16 %v538
        %v1813 = vunpack.c.l.bf16 %v539
        %v1814 = vunpack.c.h.bf16 %v539
        %v1815 = vunpack.c.l.bf16 %v540
        %v1816 = vunpack.c.h.bf16 %v540
        %v1817 = vunpack.c.l.bf16 %v541
        %v1818 = vunpack.c.h.bf16 %v541
        %v1819 = vunpack.c.l.bf16 %v542
        %v1820 = vunpack.c.h.bf16 %v542
        %v1821 = vunpack.c.l.bf16 %v543
        %v1822 = vunpack.c.h.bf16 %v543
        %v1823 = vunpack.c.l.bf16 %v544
        %v1824 = vunpack.c.h.bf16 %v544
        %v1825 = vunpack.c.l.bf16 %v545
        %v1826 = vunpack.c.h.bf16 %v545
        %v1827 = vunpack.c.l.bf16 %v546
        %v1828 = vunpack.c.h.bf16 %v546
        %v1829 = vunpack.c.l.bf16 %v547
        %v1830 = vunpack.c.h.bf16 %v547
        %v1831 = vunpack.c.l.bf16 %v548
        %v1832 = vunpack.c.h.bf16 %v548
        %v1833 = vunpack.c.l.bf16 %v549
        %v1834 = vunpack.c.h.bf16 %v549
        %v1835 = vunpack.c.l.bf16 %v550
        %v1836 = vunpack.c.h.bf16 %v550
        %v1837 = vunpack.c.l.bf16 %v551
        %v1838 = vunpack.c.h.bf16 %v551
        %v1839 = vunpack.c.l.bf16 %v552
        %v1840 = vunpack.c.h.bf16 %v552
        %v1841 = vunpack.c.l.bf16 %v553
        %v1842 = vunpack.c.h.bf16 %v553
        %v1843 = vunpack.c.l.bf16 %v554
        %v1844 = vunpack.c.h.bf16 %v554
        %v1845 = vunpack.c.l.bf16 %v555
        %v1846 = vunpack.c.h.bf16 %v555
        %v1847 = vunpack.c.l.bf16 %v556
        %v1848 = vunpack.c.h.bf16 %v556
        %v1849 = vunpack.c.l.bf16 %v557
        %v1850 = vunpack.c.h.bf16 %v557
        %v1851 = vunpack.c.l.bf16 %v558
        %v1852 = vunpack.c.h.bf16 %v558
        %v1853 = vunpack.c.l.bf16 %v559
        %v1854 = vunpack.c.h.bf16 %v559
        %v1855 = vunpack.c.l.bf16 %v560
        %v1856 = vunpack.c.h.bf16 %v560
        %v1857 = vunpack.c.l.bf16 %v561
        %v1858 = vunpack.c.h.bf16 %v561
        %v1859 = vunpack.c.l.bf16 %v562
        %v1860 = vunpack.c.h.bf16 %v562
        %v1861 = vunpack.c.l.bf16 %v563
        %v1862 = vunpack.c.h.bf16 %v563
        %v1863 = vunpack.c.l.bf16 %v564
        %v1864 = vunpack.c.h.bf16 %v564
        %v1865 = vunpack.c.l.bf16 %v565
        %v1866 = vunpack.c.h.bf16 %v565
        %v1867 = vunpack.c.l.bf16 %v566
        %v1868 = vunpack.c.h.bf16 %v566
        %v1869 = vunpack.c.l.bf16 %v567
        %v1870 = vunpack.c.h.bf16 %v567
        %v1871 = vunpack.c.l.bf16 %v568
        %v1872 = vunpack.c.h.bf16 %v568
        %v1873 = vunpack.c.l.bf16 %v569
        %v1874 = vunpack.c.h.bf16 %v569
        %v1875 = vunpack.c.l.bf16 %v570
        %v1876 = vunpack.c.h.bf16 %v570
        %v1877 = vunpack.c.l.bf16 %v571
        %v1878 = vunpack.c.h.bf16 %v571
        %v1879 = vunpack.c.l.bf16 %v572
        %v1880 = vunpack.c.h.bf16 %v572
        %v1881 = vunpack.c.l.bf16 %v573
        %v1882 = vunpack.c.h.bf16 %v573
        %v1883 = vunpack.c.l.bf16 %v574
        %v1884 = vunpack.c.h.bf16 %v574
        %v1885 = vunpack.c.l.bf16 %v575
        %v1886 = vunpack.c.h.bf16 %v575
        %v1887 = vunpack.c.l.bf16 %v576
        %v1888 = vunpack.c.h.bf16 %v576
        %v1889 = vunpack.c.l.bf16 %v577
        %v1890 = vunpack.c.h.bf16 %v577
        %v1891 = vunpack.c.l.bf16 %v578
        %v1892 = vunpack.c.h.bf16 %v578
        %v1893 = vunpack.c.l.bf16 %v579
        %v1894 = vunpack.c.h.bf16 %v579
        %v1895 = vunpack.c.l.bf16 %v580
        %v1896 = vunpack.c.h.bf16 %v580
        %v1897 = vunpack.c.l.bf16 %v581
        %v1898 = vunpack.c.h.bf16 %v581
        %v1899 = vunpack.c.l.bf16 %v582
        %v1900 = vunpack.c.h.bf16 %v582
        %v1901 = vunpack.c.l.bf16 %v583
        %v1902 = vunpack.c.h.bf16 %v583
        %v1903 = vunpack.c.l.bf16 %v584
        %v1904 = vunpack.c.h.bf16 %v584
        %v1905 = vunpack.c.l.bf16 %v585
        %v1906 = vunpack.c.h.bf16 %v585
        %v1907 = vunpack.c.l.bf16 %v586
        %v1908 = vunpack.c.h.bf16 %v586
        %v1909 = vunpack.c.l.bf16 %v587
        %v1910 = vunpack.c.h.bf16 %v587
        %v1911 = vunpack.c.l.bf16 %v588
        %v1912 = vunpack.c.h.bf16 %v588
        %v1913 = vunpack.c.l.bf16 %v589
        %v1914 = vunpack.c.h.bf16 %v589
        %v1915 = vunpack.c.l.bf16 %v590
        %v1916 = vunpack.c.h.bf16 %v590
        %v1917 = vunpack.c.l.bf16 %v591
        %v1918 = vunpack.c.h.bf16 %v591
        %v1919 = vunpack.c.l.bf16 %v592
        %v1920 = vunpack.c.h.bf16 %v592
        %v1921 = vunpack.c.l.bf16 %v593
        %v1922 = vunpack.c.h.bf16 %v593
        %v1923 = vunpack.c.l.bf16 %v594
        %v1924 = vunpack.c.h.bf16 %v594
        %v1925 = vunpack.c.l.bf16 %v595
        %v1926 = vunpack.c.h.bf16 %v595
        %v1927 = vunpack.c.l.bf16 %v596
        %v1928 = vunpack.c.h.bf16 %v596
        %v1929 = vunpack.c.l.bf16 %v597
        %v1930 = vunpack.c.h.bf16 %v597
        %v1931 = vunpack.c.l.bf16 %v598
        %v1932 = vunpack.c.h.bf16 %v598
        %v1933 = vunpack.c.l.bf16 %v599
        %v1934 = vunpack.c.h.bf16 %v599
        %v1935 = vunpack.c.l.bf16 %v600
        %v1936 = vunpack.c.h.bf16 %v600
        %v1937 = vunpack.c.l.bf16 %v601
        %v1938 = vunpack.c.h.bf16 %v601
        %v1939 = vunpack.c.l.bf16 %v602
        %v1940 = vunpack.c.h.bf16 %v602
        %v1941 = vunpack.c.l.bf16 %v603
        %v1942 = vunpack.c.h.bf16 %v603
        %v1943 = vunpack.c.l.bf16 %v604
        %v1944 = vunpack.c.h.bf16 %v604
        %v1945 = vunpack.c.l.bf16 %v605
        %v1946 = vunpack.c.h.bf16 %v605
        %v1947 = vunpack.c.l.bf16 %v606
        %v1948 = vunpack.c.h.bf16 %v606
        %v1949 = vunpack.c.l.bf16 %v607
        %v1950 = vunpack.c.h.bf16 %v607
        %v1951 = vunpack.c.l.bf16 %v608
        %v1952 = vunpack.c.h.bf16 %v608
        %v1953 = vunpack.c.l.bf16 %v609
        %v1954 = vunpack.c.h.bf16 %v609
        %v1955 = vunpack.c.l.bf16 %v610
        %v1956 = vunpack.c.h.bf16 %v610
        %v1957 = vunpack.c.l.bf16 %v611
        %v1958 = vunpack.c.h.bf16 %v611
        %v1959 = vunpack.c.l.bf16 %v612
        %v1960 = vunpack.c.h.bf16 %v612
        %v1961 = vunpack.c.l.bf16 %v613
        %v1962 = vunpack.c.h.bf16 %v613
        %v1963 = vunpack.c.l.bf16 %v614
        %v1964 = vunpack.c.h.bf16 %v614
        %v1965 = vunpack.c.l.bf16 %v615
        %v1966 = vunpack.c.h.bf16 %v615
        %v1967 = vunpack.c.l.bf16 %v616
        %v1968 = vunpack.c.h.bf16 %v616
        %v1969 = vunpack.c.l.bf16 %v617
        %v1970 = vunpack.c.h.bf16 %v617
        %v1971 = vunpack.c.l.bf16 %v618
        %v1972 = vunpack.c.h.bf16 %v618
        %v1973 = vunpack.c.l.bf16 %v619
        %v1974 = vunpack.c.h.bf16 %v619
        %v1975 = vunpack.c.l.bf16 %v620
        %v1976 = vunpack.c.h.bf16 %v620
        %v1977 = vunpack.c.l.bf16 %v621
        %v1978 = vunpack.c.h.bf16 %v621
        %v1979 = vunpack.c.l.bf16 %v622
        %v1980 = vunpack.c.h.bf16 %v622
        %v1981 = vunpack.c.l.bf16 %v623
        %v1982 = vunpack.c.h.bf16 %v623
        %v1983 = vunpack.c.l.bf16 %v624
        %v1984 = vunpack.c.h.bf16 %v624
        %v1985 = vunpack.c.l.bf16 %v625
        %v1986 = vunpack.c.h.bf16 %v625
        %v1987 = vunpack.c.l.bf16 %v626
        %v1988 = vunpack.c.h.bf16 %v626
        %v1989 = vunpack.c.l.bf16 %v627
        %v1990 = vunpack.c.h.bf16 %v627
        %v1991 = vunpack.c.l.bf16 %v628
        %v1992 = vunpack.c.h.bf16 %v628
        %v1993 = vunpack.c.l.bf16 %v629
        %v1994 = vunpack.c.h.bf16 %v629
        %v1995 = vunpack.c.l.bf16 %v630
        %v1996 = vunpack.c.h.bf16 %v630
        %v1997 = vunpack.c.l.bf16 %v631
        %v1998 = vunpack.c.h.bf16 %v631
        %v1999 = vunpack.c.l.bf16 %v632
        %v2000 = vunpack.c.h.bf16 %v632
        %v2001 = vunpack.c.l.bf16 %v633
        %v2002 = vunpack.c.h.bf16 %v633
        %v2003 = vunpack.c.l.bf16 %v634
        %v2004 = vunpack.c.h.bf16 %v634
        %v2005 = vunpack.c.l.bf16 %v635
        %v2006 = vunpack.c.h.bf16 %v635
        %v2007 = vunpack.c.l.bf16 %v636
        %v2008 = vunpack.c.h.bf16 %v636
        %v2009 = vunpack.c.l.bf16 %v637
        %v2010 = vunpack.c.h.bf16 %v637
        %v2011 = vunpack.c.l.bf16 %v638
        %v2012 = vunpack.c.h.bf16 %v638
        %v2013 = vunpack.c.l.bf16 %v639
        %v2014 = vunpack.c.h.bf16 %v639
        %v2015 = vunpack.c.l.bf16 %v640
        %v2016 = vunpack.c.h.bf16 %v640
        %v2017 = vunpack.c.l.bf16 %v641
        %v2018 = vunpack.c.h.bf16 %v641
        %v2019 = vunpack.c.l.bf16 %v642
        %v2020 = vunpack.c.h.bf16 %v642
        %v2021 = vunpack.c.l.bf16 %v643
        %v2022 = vunpack.c.h.bf16 %v643
        %v2023 = vunpack.c.l.bf16 %v644
        %v2024 = vunpack.c.h.bf16 %v644
        %v2025 = vunpack.c.l.bf16 %v645
        %v2026 = vunpack.c.h.bf16 %v645
        %v2027 = vunpack.c.l.bf16 %v646
        %v2028 = vunpack.c.h.bf16 %v646
        %v2029 = vunpack.c.l.bf16 %v647
        %v2030 = vunpack.c.h.bf16 %v647
        %v2031 = vunpack.c.l.bf16 %v648
        %v2032 = vunpack.c.h.bf16 %v648
        %v2033 = vunpack.c.l.bf16 %v649
        %v2034 = vunpack.c.h.bf16 %v649
        %v2035 = vunpack.c.l.bf16 %v650
        %v2036 = vunpack.c.h.bf16 %v650
        %v2037 = vunpack.c.l.bf16 %v651
        %v2038 = vunpack.c.h.bf16 %v651
        %v2039 = vunpack.c.l.bf16 %v652
        %v2040 = vunpack.c.h.bf16 %v652
        %v2041 = vunpack.c.l.bf16 %v653
        %v2042 = vunpack.c.h.bf16 %v653
        %v2043 = vunpack.c.l.bf16 %v654
        %v2044 = vunpack.c.h.bf16 %v654
        %v2045 = vunpack.c.l.bf16 %v655
        %v2046 = vunpack.c.h.bf16 %v655
        %v2047 = vunpack.c.l.bf16 %v656
        %v2048 = vunpack.c.h.bf16 %v656
        %v2049 = vunpack.c.l.bf16 %v657
        %v2050 = vunpack.c.h.bf16 %v657
        %v2051 = vunpack.c.l.bf16 %v658
        %v2052 = vunpack.c.h.bf16 %v658
        %v2053 = vunpack.c.l.bf16 %v659
        %v2054 = vunpack.c.h.bf16 %v659
        %v2055 = vunpack.c.l.bf16 %v660
        %v2056 = vunpack.c.h.bf16 %v660
        %v2057 = vunpack.c.l.bf16 %v661
        %v2058 = vunpack.c.h.bf16 %v661
        %v2059 = vunpack.c.l.bf16 %v662
        %v2060 = vunpack.c.h.bf16 %v662
        %v2061 = vunpack.c.l.bf16 %v663
        %v2062 = vunpack.c.h.bf16 %v663
        %v2063 = vunpack.c.l.bf16 %v664
        %v2064 = vunpack.c.h.bf16 %v664
        %v2065 = vunpack.c.l.bf16 %v665
        %v2066 = vunpack.c.h.bf16 %v665
        %v2067 = vunpack.c.l.bf16 %v666
        %v2068 = vunpack.c.h.bf16 %v666
        %v2069 = vunpack.c.l.bf16 %v667
        %v2070 = vunpack.c.h.bf16 %v667
        %v2071 = vunpack.c.l.bf16 %v668
        %v2072 = vunpack.c.h.bf16 %v668
        %v2073 = vunpack.c.l.bf16 %v669
        %v2074 = vunpack.c.h.bf16 %v669
        %v2075 = vunpack.c.l.bf16 %v670
        %v2076 = vunpack.c.h.bf16 %v670
        %v2077 = vunpack.c.l.bf16 %v671
        %v2078 = vunpack.c.h.bf16 %v671
        %v2079 = vunpack.c.l.bf16 %v672
        %v2080 = vunpack.c.h.bf16 %v672
        %v2081 = vunpack.c.l.bf16 %v673
        %v2082 = vunpack.c.h.bf16 %v673
        %v2083 = vunpack.c.l.bf16 %v674
        %v2084 = vunpack.c.h.bf16 %v674
        %v2085 = vunpack.c.l.bf16 %v675
        %v2086 = vunpack.c.h.bf16 %v675
        %v2087 = vunpack.c.l.bf16 %v676
        %v2088 = vunpack.c.h.bf16 %v676
        %v2089 = vunpack.c.l.bf16 %v677
        %v2090 = vunpack.c.h.bf16 %v677
        %v2091 = vunpack.c.l.bf16 %v678
        %v2092 = vunpack.c.h.bf16 %v678
        %v2093 = vunpack.c.l.bf16 %v679
        %v2094 = vunpack.c.h.bf16 %v679
        %v2095 = vunpack.c.l.bf16 %v680
        %v2096 = vunpack.c.h.bf16 %v680
        %v2097 = vunpack.c.l.bf16 %v681
        %v2098 = vunpack.c.h.bf16 %v681
        %v2099 = vunpack.c.l.bf16 %v682
        %v2100 = vunpack.c.h.bf16 %v682
        %v2101 = vunpack.c.l.bf16 %v683
        %v2102 = vunpack.c.h.bf16 %v683
        %v2103 = vunpack.c.l.bf16 %v684
        %v2104 = vunpack.c.h.bf16 %v684
        %v2105 = vunpack.c.l.bf16 %v685
        %v2106 = vunpack.c.h.bf16 %v685
        %v2107 = vunpack.c.l.bf16 %v686
        %v2108 = vunpack.c.h.bf16 %v686
        %v2109 = vunpack.c.l.bf16 %v687
        %v2110 = vunpack.c.h.bf16 %v687
        %v2111 = vunpack.c.l.bf16 %v688
        %v2112 = vunpack.c.h.bf16 %v688
        %v2113 = vunpack.c.l.bf16 %v689
        %v2114 = vunpack.c.h.bf16 %v689
        %v2115 = vunpack.c.l.bf16 %v690
        %v2116 = vunpack.c.h.bf16 %v690
        %v2117 = vunpack.c.l.bf16 %v691
        %v2118 = vunpack.c.h.bf16 %v691
        %v2119 = vunpack.c.l.bf16 %v692
        %v2120 = vunpack.c.h.bf16 %v692
        %v2121 = vunpack.c.l.bf16 %v693
        %v2122 = vunpack.c.h.bf16 %v693
        %v2123 = vunpack.c.l.bf16 %v694
        %v2124 = vunpack.c.h.bf16 %v694
        %v2125 = vunpack.c.l.bf16 %v695
        %v2126 = vunpack.c.h.bf16 %v695
        %v2127 = vunpack.c.l.bf16 %v696
        %v2128 = vunpack.c.h.bf16 %v696
        %v2129 = vunpack.c.l.bf16 %v697
        %v2130 = vunpack.c.h.bf16 %v697
        %v2131 = vunpack.c.l.bf16 %v698
        %v2132 = vunpack.c.h.bf16 %v698
        %v2133 = vunpack.c.l.bf16 %v699
        %v2134 = vunpack.c.h.bf16 %v699
        %v2135 = vunpack.c.l.bf16 %v700
        %v2136 = vunpack.c.h.bf16 %v700
        %v2137 = vunpack.c.l.bf16 %v701
        %v2138 = vunpack.c.h.bf16 %v701
        %v2139 = vunpack.c.l.bf16 %v702
        %v2140 = vunpack.c.h.bf16 %v702
        %v2141 = vunpack.c.l.bf16 %v703
        %v2142 = vunpack.c.h.bf16 %v703
        %v2143 = vunpack.c.l.bf16 %v704
        %v2144 = vunpack.c.h.bf16 %v704
        %v2145 = vunpack.c.l.bf16 %v705
        %v2146 = vunpack.c.h.bf16 %v705
        %v2147 = vunpack.c.l.bf16 %v706
        %v2148 = vunpack.c.h.bf16 %v706
        %v2149 = vunpack.c.l.bf16 %v707
        %v2150 = vunpack.c.h.bf16 %v707
        %v2151 = vunpack.c.l.bf16 %v708
        %v2152 = vunpack.c.h.bf16 %v708
        %v2153 = vunpack.c.l.bf16 %v709
        %v2154 = vunpack.c.h.bf16 %v709
        %v2155 = vunpack.c.l.bf16 %v710
        %v2156 = vunpack.c.h.bf16 %v710
        %v2157 = vunpack.c.l.bf16 %v711
        %v2158 = vunpack.c.h.bf16 %v711
        %v2159 = vunpack.c.l.bf16 %v712
        %v2160 = vunpack.c.h.bf16 %v712
        %v2161 = vunpack.c.l.bf16 %v713
        %v2162 = vunpack.c.h.bf16 %v713
        %v2163 = vunpack.c.l.bf16 %v714
        %v2164 = vunpack.c.h.bf16 %v714
        %v2165 = vunpack.c.l.bf16 %v715
        %v2166 = vunpack.c.h.bf16 %v715
        %v2167 = vunpack.c.l.bf16 %v716
        %v2168 = vunpack.c.h.bf16 %v716
        %v2169 = vunpack.c.l.bf16 %v717
        %v2170 = vunpack.c.h.bf16 %v717
        %v2171 = vunpack.c.l.bf16 %v718
        %v2172 = vunpack.c.h.bf16 %v718
        %v2173 = vunpack.c.l.bf16 %v719
        %v2174 = vunpack.c.h.bf16 %v719
        %v2175 = vunpack.c.l.bf16 %v720
        %v2176 = vunpack.c.h.bf16 %v720
        %v2177 = vunpack.c.l.bf16 %v721
        %v2178 = vunpack.c.h.bf16 %v721
        %v2179 = vunpack.c.l.bf16 %v722
        %v2180 = vunpack.c.h.bf16 %v722
        %v2181 = vunpack.c.l.bf16 %v723
        %v2182 = vunpack.c.h.bf16 %v723
        %v2183 = vunpack.c.l.bf16 %v724
        %v2184 = vunpack.c.h.bf16 %v724
        %v2185 = vunpack.c.l.bf16 %v725
        %v2186 = vunpack.c.h.bf16 %v725
        %v2187 = vunpack.c.l.bf16 %v726
        %v2188 = vunpack.c.h.bf16 %v726
        %v2189 = vunpack.c.l.bf16 %v727
        %v2190 = vunpack.c.h.bf16 %v727
        %v2191 = vunpack.c.l.bf16 %v728
        %v2192 = vunpack.c.h.bf16 %v728
        %v2193 = vunpack.c.l.bf16 %v729
        %v2194 = vunpack.c.h.bf16 %v729
        %v2195 = vunpack.c.l.bf16 %v730
        %v2196 = vunpack.c.h.bf16 %v730
        %v2197 = vunpack.c.l.bf16 %v731
        %v2198 = vunpack.c.h.bf16 %v731
        %v2199 = vunpack.c.l.bf16 %v732
        %v2200 = vunpack.c.h.bf16 %v732
        %v2201 = vunpack.c.l.bf16 %v733
        %v2202 = vunpack.c.h.bf16 %v733
        %v2203 = vunpack.c.l.bf16 %v734
        %v2204 = vunpack.c.h.bf16 %v734
        %v2205 = vunpack.c.l.bf16 %v735
        %v2206 = vunpack.c.h.bf16 %v735
        %v2207 = vunpack.c.l.bf16 %v736
        %v2208 = vunpack.c.h.bf16 %v736
        %v2209 = vunpack.c.l.bf16 %v737
        %v2210 = vunpack.c.h.bf16 %v737
        %v2211 = vunpack.c.l.bf16 %v738
        %v2212 = vunpack.c.h.bf16 %v738
        %v2213 = vunpack.c.l.bf16 %v739
        %v2214 = vunpack.c.h.bf16 %v739
        %v2215 = vunpack.c.l.bf16 %v740
        %v2216 = vunpack.c.h.bf16 %v740
        %v2217 = vunpack.c.l.bf16 %v741
        %v2218 = vunpack.c.h.bf16 %v741
        %v2219 = vunpack.c.l.bf16 %v742
        %v2220 = vunpack.c.h.bf16 %v742
        %v2221 = vunpack.c.l.bf16 %v743
        %v2222 = vunpack.c.h.bf16 %v743
        %v2223 = vunpack.c.l.bf16 %v744
        %v2224 = vunpack.c.h.bf16 %v744
        %v2225 = vunpack.c.l.bf16 %v745
        %v2226 = vunpack.c.h.bf16 %v745
        %v2227 = vunpack.c.l.bf16 %v746
        %v2228 = vunpack.c.h.bf16 %v746
        %v2229 = vunpack.c.l.bf16 %v747
        %v2230 = vunpack.c.h.bf16 %v747
        %v2231 = vunpack.c.l.bf16 %v748
        %v2232 = vunpack.c.h.bf16 %v748
        %v2233 = vunpack.c.l.bf16 %v749
        %v2234 = vunpack.c.h.bf16 %v749
        %v2235 = vunpack.c.l.bf16 %v750
        %v2236 = vunpack.c.h.bf16 %v750
        %v2237 = vunpack.c.l.bf16 %v751
        %v2238 = vunpack.c.h.bf16 %v751
        %v2239 = vunpack.c.l.bf16 %v752
        %v2240 = vunpack.c.h.bf16 %v752
        %v2241 = vunpack.c.l.bf16 %v753
        %v2242 = vunpack.c.h.bf16 %v753
        %v2243 = vunpack.c.l.bf16 %v754
        %v2244 = vunpack.c.h.bf16 %v754
        %v2245 = vunpack.c.l.bf16 %v755
        %v2246 = vunpack.c.h.bf16 %v755
        %v2247 = vunpack.c.l.bf16 %v756
        %v2248 = vunpack.c.h.bf16 %v756
        %v2249 = vunpack.c.l.bf16 %v757
        %v2250 = vunpack.c.h.bf16 %v757
        %v2251 = vunpack.c.l.bf16 %v758
        %v2252 = vunpack.c.h.bf16 %v758
        %v2253 = vunpack.c.l.bf16 %v759
        %v2254 = vunpack.c.h.bf16 %v759
        %v2255 = vunpack.c.l.bf16 %v760
        %v2256 = vunpack.c.h.bf16 %v760
        %v2257 = vunpack.c.l.bf16 %v761
        %v2258 = vunpack.c.h.bf16 %v761
        %v2259 = vunpack.c.l.bf16 %v762
        %v2260 = vunpack.c.h.bf16 %v762
        %v2261 = vunpack.c.l.bf16 %v763
        %v2262 = vunpack.c.h.bf16 %v763
        %v2263 = vunpack.c.l.bf16 %v764
        %v2264 = vunpack.c.h.bf16 %v764
        %v2265 = vunpack.c.l.bf16 %v765
        %v2266 = vunpack.c.h.bf16 %v765
        %v2267 = vunpack.c.l.bf16 %v766
        %v2268 = vunpack.c.h.bf16 %v766
        %v2269 = vunpack.c.l.bf16 %v767
        %v2270 = vunpack.c.h.bf16 %v767
        %v2271 = vunpack.c.l.bf16 %v768
        %v2272 = vunpack.c.h.bf16 %v768
        %v2273 = vunpack.c.l.bf16 %v769
        %v2274 = vunpack.c.h.bf16 %v769
        %v2275 = vunpack.c.l.bf16 %v770
        %v2276 = vunpack.c.h.bf16 %v770
        %v2277 = vunpack.c.l.bf16 %v771
        %v2278 = vunpack.c.h.bf16 %v771
        %v2279 = vunpack.c.l.bf16 %v772
        %v2280 = vunpack.c.h.bf16 %v772
        %v2281 = vunpack.c.l.bf16 %v773
        %v2282 = vunpack.c.h.bf16 %v773
        %v2283 = vunpack.c.l.bf16 %v774
        %v2284 = vunpack.c.h.bf16 %v774
        %v2285 = vunpack.c.l.bf16 %v775
        %v2286 = vunpack.c.h.bf16 %v775
        %v2287 = vunpack.c.l.bf16 %v776
        %v2288 = vunpack.c.h.bf16 %v776
        %v2289 = vunpack.c.l.bf16 %v777
        %v2290 = vunpack.c.h.bf16 %v777
        %v2291 = vunpack.c.l.bf16 %v778
        %v2292 = vunpack.c.h.bf16 %v778
        %v2293 = vunpack.c.l.bf16 %v779
        %v2294 = vunpack.c.h.bf16 %v779
        %v2295 = vunpack.c.l.bf16 %v780
        %v2296 = vunpack.c.h.bf16 %v780
        %v2297 = vunpack.c.l.bf16 %v781
        %v2298 = vunpack.c.h.bf16 %v781
        %v2299 = vunpack.c.l.bf16 %v782
        %v2300 = vunpack.c.h.bf16 %v782
        %v2301 = vunpack.c.l.bf16 %v783
        %v2302 = vunpack.c.h.bf16 %v783
        %v2303 = vunpack.c.l.bf16 %v784
        %v2304 = vunpack.c.h.bf16 %v784
        %v2305 = vunpack.c.l.bf16 %v785
        %v2306 = vunpack.c.h.bf16 %v785
        %v2307 = vunpack.c.l.bf16 %v786
        %v2308 = vunpack.c.h.bf16 %v786
        %v2309 = vunpack.c.l.bf16 %v787
        %v2310 = vunpack.c.h.bf16 %v787
        %v2311 = vunpack.c.l.bf16 %v788
        %v2312 = vunpack.c.h.bf16 %v788
        %v2313 = vunpack.c.l.bf16 %v789
        %v2314 = vunpack.c.h.bf16 %v789
        %v2315 = vunpack.c.l.bf16 %v790
        %v2316 = vunpack.c.h.bf16 %v790
        %v2317 = vunpack.c.l.bf16 %v791
        %v2318 = vunpack.c.h.bf16 %v791
        %v2319 = vunpack.c.l.bf16 %v792
        %v2320 = vunpack.c.h.bf16 %v792
        %v2321 = vunpack.c.l.bf16 %v793
        %v2322 = vunpack.c.h.bf16 %v793
        %v2323 = vunpack.c.l.bf16 %v794
        %v2324 = vunpack.c.h.bf16 %v794
        %v2325 = vunpack.c.l.bf16 %v795
        %v2326 = vunpack.c.h.bf16 %v795
        %v2327 = vunpack.c.l.bf16 %v796
        %v2328 = vunpack.c.h.bf16 %v796
        %v2329 = vunpack.c.l.bf16 %v797
        %v2330 = vunpack.c.h.bf16 %v797
        %v2331 = vunpack.c.l.bf16 %v798
        %v2332 = vunpack.c.h.bf16 %v798
        %v2333 = vunpack.c.l.bf16 %v799
        %v2334 = vunpack.c.h.bf16 %v799
        %v2335 = vunpack.c.l.bf16 %v800
        %v2336 = vunpack.c.h.bf16 %v800
        %v2337 = vunpack.c.l.bf16 %v801
        %v2338 = vunpack.c.h.bf16 %v801
        %v2339 = vunpack.c.l.bf16 %v802
        %v2340 = vunpack.c.h.bf16 %v802
        %v2341 = vunpack.c.l.bf16 %v803
        %v2342 = vunpack.c.h.bf16 %v803
        %v2343 = vunpack.c.l.bf16 %v804
        %v2344 = vunpack.c.h.bf16 %v804
        %v2345 = vunpack.c.l.bf16 %v805
        %v2346 = vunpack.c.h.bf16 %v805
        %v2347 = vunpack.c.l.bf16 %v806
        %v2348 = vunpack.c.h.bf16 %v806
        %v2349 = vunpack.c.l.bf16 %v807
        %v2350 = vunpack.c.h.bf16 %v807
        %v2351 = vunpack.c.l.bf16 %v808
        %v2352 = vunpack.c.h.bf16 %v808
        %v2353 = vunpack.c.l.bf16 %v809
        %v2354 = vunpack.c.h.bf16 %v809
        %v2355 = vunpack.c.l.bf16 %v810
        %v2356 = vunpack.c.h.bf16 %v810
        %v2357 = vunpack.c.l.bf16 %v811
        %v2358 = vunpack.c.h.bf16 %v811
        %v2359 = vunpack.c.l.bf16 %v812
        %v2360 = vunpack.c.h.bf16 %v812
        %v2361 = vunpack.c.l.bf16 %v813
        %v2362 = vunpack.c.h.bf16 %v813
        %v2363 = vunpack.c.l.bf16 %v814
        %v2364 = vunpack.c.h.bf16 %v814
        %v2365 = vunpack.c.l.bf16 %v815
        %v2366 = vunpack.c.h.bf16 %v815
        %v2367 = vunpack.c.l.bf16 %v816
        %v2368 = vunpack.c.h.bf16 %v816
        %v2369 = vunpack.c.l.bf16 %v817
        %v2370 = vunpack.c.h.bf16 %v817
        %v2371 = vunpack.c.l.bf16 %v818
        %v2372 = vunpack.c.h.bf16 %v818
        %v2373 = vunpack.c.l.bf16 %v819
        %v2374 = vunpack.c.h.bf16 %v819
        %v2375 = vunpack.c.l.bf16 %v820
        %v2376 = vunpack.c.h.bf16 %v820
        %v2377 = vunpack.c.l.bf16 %v821
        %v2378 = vunpack.c.h.bf16 %v821
        %v2379 = vunpack.c.l.bf16 %v822
        %v2380 = vunpack.c.h.bf16 %v822
        %v2381 = vunpack.c.l.bf16 %v823
        %v2382 = vunpack.c.h.bf16 %v823
        %v2383 = vunpack.c.l.bf16 %v824
        %v2384 = vunpack.c.h.bf16 %v824
        %v2385 = vunpack.c.l.bf16 %v825
        %v2386 = vunpack.c.h.bf16 %v825
        %v2387 = vunpack.c.l.bf16 %v826
        %v2388 = vunpack.c.h.bf16 %v826
        %v2389 = vunpack.c.l.bf16 %v827
        %v2390 = vunpack.c.h.bf16 %v827
        %v2391 = vunpack.c.l.bf16 %v828
        %v2392 = vunpack.c.h.bf16 %v828
        %v2393 = vunpack.c.l.bf16 %v829
        %v2394 = vunpack.c.h.bf16 %v829
        %v2395 = vunpack.c.l.bf16 %v830
        %v2396 = vunpack.c.h.bf16 %v830
        %v2397 = vunpack.c.l.bf16 %v831
        %v2398 = vunpack.c.h.bf16 %v831
        %v2399 = vunpack.c.l.bf16 %v832
        %v2400 = vunpack.c.h.bf16 %v832
        %v2401 = vunpack.c.l.bf16 %v833
        %v2402 = vunpack.c.h.bf16 %v833
        %v2403 = vunpack.c.l.bf16 %v834
        %v2404 = vunpack.c.h.bf16 %v834
        %v2405 = vunpack.c.l.bf16 %v835
        %v2406 = vunpack.c.h.bf16 %v835
        %v2407 = vunpack.c.l.bf16 %v836
        %v2408 = vunpack.c.h.bf16 %v836
        %v2409 = vunpack.c.l.bf16 %v837
        %v2410 = vunpack.c.h.bf16 %v837
        %v2411 = vunpack.c.l.bf16 %v838
        %v2412 = vunpack.c.h.bf16 %v838
        %v2413 = vunpack.c.l.bf16 %v839
        %v2414 = vunpack.c.h.bf16 %v839
        %v2415 = vunpack.c.l.bf16 %v840
        %v2416 = vunpack.c.h.bf16 %v840
        %v2417 = vunpack.c.l.bf16 %v841
        %v2418 = vunpack.c.h.bf16 %v841
        %v2419 = vunpack.c.l.bf16 %v842
        %v2420 = vunpack.c.h.bf16 %v842
        %v2421 = vunpack.c.l.bf16 %v843
        %v2422 = vunpack.c.h.bf16 %v843
        %v2423 = vunpack.c.l.bf16 %v844
        %v2424 = vunpack.c.h.bf16 %v844
        %v2425 = vunpack.c.l.bf16 %v845
        %v2426 = vunpack.c.h.bf16 %v845
        %v2427 = vunpack.c.l.bf16 %v846
        %v2428 = vunpack.c.h.bf16 %v846
        %v2429 = vunpack.c.l.bf16 %v847
        %v2430 = vunpack.c.h.bf16 %v847
        %v2431 = vunpack.c.l.bf16 %v848
        %v2432 = vunpack.c.h.bf16 %v848
        %v2433 = vunpack.c.l.bf16 %v849
        %v2434 = vunpack.c.h.bf16 %v849
        %v2435 = vunpack.c.l.bf16 %v850
        %v2436 = vunpack.c.h.bf16 %v850
        %v2437 = vunpack.c.l.bf16 %v851
        %v2438 = vunpack.c.h.bf16 %v851
        %v2439 = vunpack.c.l.bf16 %v852
        %v2440 = vunpack.c.h.bf16 %v852
        %v2441 = vunpack.c.l.bf16 %v853
        %v2442 = vunpack.c.h.bf16 %v853
        %v2443 = vunpack.c.l.bf16 %v854
        %v2444 = vunpack.c.h.bf16 %v854
        %v2445 = vunpack.c.l.bf16 %v855
        %v2446 = vunpack.c.h.bf16 %v855
        %v2447 = vunpack.c.l.bf16 %v856
        %v2448 = vunpack.c.h.bf16 %v856
        %v2449 = vunpack.c.l.bf16 %v857
        %v2450 = vunpack.c.h.bf16 %v857
        %v2451 = vunpack.c.l.bf16 %v858
        %v2452 = vunpack.c.h.bf16 %v858
        %v2453 = vunpack.c.l.bf16 %v859
        %v2454 = vunpack.c.h.bf16 %v859
        %v2455 = vunpack.c.l.bf16 %v860
        %v2456 = vunpack.c.h.bf16 %v860
        %v2457 = vunpack.c.l.bf16 %v861
        %v2458 = vunpack.c.h.bf16 %v861
        %v2459 = vunpack.c.l.bf16 %v862
        %v2460 = vunpack.c.h.bf16 %v862
        %v2461 = vunpack.c.l.bf16 %v863
        %v2462 = vunpack.c.h.bf16 %v863
        %v2463 = vunpack.c.l.bf16 %v864
        %v2464 = vunpack.c.h.bf16 %v864
        %v2465 = vunpack.c.l.bf16 %v865
        %v2466 = vunpack.c.h.bf16 %v865
        %v2467 = vunpack.c.l.bf16 %v866
        %v2468 = vunpack.c.h.bf16 %v866
        %v2469 = vunpack.c.l.bf16 %v867
        %v2470 = vunpack.c.h.bf16 %v867
        %v2471 = vunpack.c.l.bf16 %v868
        %v2472 = vunpack.c.h.bf16 %v868
        %v2473 = vunpack.c.l.bf16 %v869
        %v2474 = vunpack.c.h.bf16 %v869
        %v2475 = vunpack.c.l.bf16 %v870
        %v2476 = vunpack.c.h.bf16 %v870
        %v2477 = vunpack.c.l.bf16 %v871
        %v2478 = vunpack.c.h.bf16 %v871
        %v2479 = vunpack.c.l.bf16 %v872
        %v2480 = vunpack.c.h.bf16 %v872
        %v2481 = vunpack.c.l.bf16 %v873
        %v2482 = vunpack.c.h.bf16 %v873
        %v2483 = vunpack.c.l.bf16 %v874
        %v2484 = vunpack.c.h.bf16 %v874
        %v2485 = vunpack.c.l.bf16 %v875
        %v2486 = vunpack.c.h.bf16 %v875
        %v2487 = vunpack.c.l.bf16 %v876
        %v2488 = vunpack.c.h.bf16 %v876
        %v2489 = vunpack.c.l.bf16 %v877
        %v2490 = vunpack.c.h.bf16 %v877
        %v2491 = vunpack.c.l.bf16 %v878
        %v2492 = vunpack.c.h.bf16 %v878
        %v2493 = vunpack.c.l.bf16 %v879
        %v2494 = vunpack.c.h.bf16 %v879
        %v2495 = vunpack.c.l.bf16 %v880
        %v2496 = vunpack.c.h.bf16 %v880
        %v2497 = vunpack.c.l.bf16 %v881
        %v2498 = vunpack.c.h.bf16 %v881
        %v2499 = vunpack.c.l.bf16 %v882
        %v2500 = vunpack.c.h.bf16 %v882
        %v2501 = vunpack.c.l.bf16 %v883
        %v2502 = vunpack.c.h.bf16 %v883
        %v2503 = vunpack.c.l.bf16 %v884
        %v2504 = vunpack.c.h.bf16 %v884
        %v2505 = vunpack.c.l.bf16 %v885
        %v2506 = vunpack.c.h.bf16 %v885
        %v2507 = vunpack.c.l.bf16 %v886
        %v2508 = vunpack.c.h.bf16 %v886
        %v2509 = vunpack.c.l.bf16 %v887
        %v2510 = vunpack.c.h.bf16 %v887
        %v2511 = vunpack.c.l.bf16 %v888
        %v2512 = vunpack.c.h.bf16 %v888
        %v2513 = vunpack.c.l.bf16 %v889
        %v2514 = vunpack.c.h.bf16 %v889
        %v2515 = vunpack.c.l.bf16 %v890
        %v2516 = vunpack.c.h.bf16 %v890
        %v2517 = vunpack.c.l.bf16 %v891
        %v2518 = vunpack.c.h.bf16 %v891
        %v2519 = vunpack.c.l.bf16 %v892
        %v2520 = vunpack.c.h.bf16 %v892
        %v2521 = vunpack.c.l.bf16 %v893
        %v2522 = vunpack.c.h.bf16 %v893
        %v2523 = vunpack.c.l.bf16 %v894
        %v2524 = vunpack.c.h.bf16 %v894
        %v2525 = vunpack.c.l.bf16 %v895
        %v2526 = vunpack.c.h.bf16 %v895
        %v2527 = vunpack.c.l.bf16 %v896
        %v2528 = vunpack.c.h.bf16 %v896
        %v2529 = vunpack.c.l.bf16 %v897
        %v2530 = vunpack.c.h.bf16 %v897
        %v2531 = vunpack.c.l.bf16 %v898
        %v2532 = vunpack.c.h.bf16 %v898
        %v2533 = vunpack.c.l.bf16 %v899
        %v2534 = vunpack.c.h.bf16 %v899
        %v2535 = vunpack.c.l.bf16 %v900
        %v2536 = vunpack.c.h.bf16 %v900
        %v2537 = vunpack.c.l.bf16 %v901
        %v2538 = vunpack.c.h.bf16 %v901
        %v2539 = vunpack.c.l.bf16 %v902
        %v2540 = vunpack.c.h.bf16 %v902
        %v2541 = vunpack.c.l.bf16 %v903
        %v2542 = vunpack.c.h.bf16 %v903
        %v2543 = vunpack.c.l.bf16 %v904
        %v2544 = vunpack.c.h.bf16 %v904
        %v2545 = vunpack.c.l.bf16 %v905
        %v2546 = vunpack.c.h.bf16 %v905
        %v2547 = vunpack.c.l.bf16 %v906
        %v2548 = vunpack.c.h.bf16 %v906
        %v2549 = vunpack.c.l.bf16 %v907
        %v2550 = vunpack.c.h.bf16 %v907
        %v2551 = vunpack.c.l.bf16 %v908
        %v2552 = vunpack.c.h.bf16 %v908
        %v2553 = vunpack.c.l.bf16 %v909
        %v2554 = vunpack.c.h.bf16 %v909
        %v2555 = vunpack.c.l.bf16 %v910
        %v2556 = vunpack.c.h.bf16 %v910
        %v2557 = vunpack.c.l.bf16 %v911
        %v2558 = vunpack.c.h.bf16 %v911
        %v2559 = vunpack.c.l.bf16 %v912
        %v2560 = vunpack.c.h.bf16 %v912
        %v2561 = vunpack.c.l.bf16 %v913
        %v2562 = vunpack.c.h.bf16 %v913
        %v2563 = vunpack.c.l.bf16 %v914
        %v2564 = vunpack.c.h.bf16 %v914
        %v2565 = vunpack.c.l.bf16 %v915
        %v2566 = vunpack.c.h.bf16 %v915
        %v2567 = vunpack.c.l.bf16 %v916
        %v2568 = vunpack.c.h.bf16 %v916
        %v2569 = vunpack.c.l.bf16 %v917
        %v2570 = vunpack.c.h.bf16 %v917
        %v2571 = vunpack.c.l.bf16 %v918
        %v2572 = vunpack.c.h.bf16 %v918
        %v2573 = vunpack.c.l.bf16 %v919
        %v2574 = vunpack.c.h.bf16 %v919
        %v2575 = vunpack.c.l.bf16 %v920
        %v2576 = vunpack.c.h.bf16 %v920
        %v2577 = vunpack.c.l.bf16 %v921
        %v2578 = vunpack.c.h.bf16 %v921
        %v2579 = vunpack.c.l.bf16 %v922
        %v2580 = vunpack.c.h.bf16 %v922
        %v2581 = vunpack.c.l.bf16 %v923
        %v2582 = vunpack.c.h.bf16 %v923
        %v2583 = vunpack.c.l.bf16 %v924
        %v2584 = vunpack.c.h.bf16 %v924
        %v2585 = vunpack.c.l.bf16 %v925
        %v2586 = vunpack.c.h.bf16 %v925
        %v2587 = vunpack.c.l.bf16 %v926
        %v2588 = vunpack.c.h.bf16 %v926
        %v2589 = vunpack.c.l.bf16 %v927
        %v2590 = vunpack.c.h.bf16 %v927
        %v2591 = vunpack.c.l.bf16 %v928
        %v2592 = vunpack.c.h.bf16 %v928
        %v2593 = vunpack.c.l.bf16 %v929
        %v2594 = vunpack.c.h.bf16 %v929
        %v2595 = vunpack.c.l.bf16 %v930
        %v2596 = vunpack.c.h.bf16 %v930
        %v2597 = vunpack.c.l.bf16 %v931
        %v2598 = vunpack.c.h.bf16 %v931
        %v2599 = vunpack.c.l.bf16 %v932
        %v2600 = vunpack.c.h.bf16 %v932
        %v2601 = vunpack.c.l.bf16 %v933
        %v2602 = vunpack.c.h.bf16 %v933
        %v2603 = vunpack.c.l.bf16 %v934
        %v2604 = vunpack.c.h.bf16 %v934
        %v2605 = vunpack.c.l.bf16 %v935
        %v2606 = vunpack.c.h.bf16 %v935
        %v2607 = vunpack.c.l.bf16 %v936
        %v2608 = vunpack.c.h.bf16 %v936
        %v2609 = vunpack.c.l.bf16 %v937
        %v2610 = vunpack.c.h.bf16 %v937
        %v2611 = vunpack.c.l.bf16 %v938
        %v2612 = vunpack.c.h.bf16 %v938
        %v2613 = vunpack.c.l.bf16 %v939
        %v2614 = vunpack.c.h.bf16 %v939
        %v2615 = vunpack.c.l.bf16 %v940
        %v2616 = vunpack.c.h.bf16 %v940
        %v2617 = vunpack.c.l.bf16 %v941
        %v2618 = vunpack.c.h.bf16 %v941
        %v2619 = vunpack.c.l.bf16 %v942
        %v2620 = vunpack.c.h.bf16 %v942
        %v2621 = vunpack.c.l.bf16 %v943
        %v2622 = vunpack.c.h.bf16 %v943
        %v2623 = vunpack.c.l.bf16 %v944
        %v2624 = vunpack.c.h.bf16 %v944
        %v2625 = vunpack.c.l.bf16 %v945
        %v2626 = vunpack.c.h.bf16 %v945
        %v2627 = vunpack.c.l.bf16 %v946
        %v2628 = vunpack.c.h.bf16 %v946
        %v2629 = vunpack.c.l.bf16 %v947
        %v2630 = vunpack.c.h.bf16 %v947
        %v2631 = vunpack.c.l.bf16 %v948
        %v2632 = vunpack.c.h.bf16 %v948
        %v2633 = vunpack.c.l.bf16 %v949
        %v2634 = vunpack.c.h.bf16 %v949
        %v2635 = vunpack.c.l.bf16 %v950
        %v2636 = vunpack.c.h.bf16 %v950
        %v2637 = vunpack.c.l.bf16 %v951
        %v2638 = vunpack.c.h.bf16 %v951
        %v2639 = vunpack.c.l.bf16 %v952
        %v2640 = vunpack.c.h.bf16 %v952
        %v2641 = vunpack.c.l.bf16 %v953
        %v2642 = vunpack.c.h.bf16 %v953
        %v2643 = vunpack.c.l.bf16 %v954
        %v2644 = vunpack.c.h.bf16 %v954
        %v2645 = vunpack.c.l.bf16 %v955
        %v2646 = vunpack.c.h.bf16 %v955
        %v2647 = vunpack.c.l.bf16 %v956
        %v2648 = vunpack.c.h.bf16 %v956
        %v2649 = vunpack.c.l.bf16 %v957
        %v2650 = vunpack.c.h.bf16 %v957
        %v2651 = vunpack.c.l.bf16 %v958
        %v2652 = vunpack.c.h.bf16 %v958
        %v2653 = vunpack.c.l.bf16 %v959
        %v2654 = vunpack.c.h.bf16 %v959
        %v2655 = vunpack.c.l.bf16 %v960
        %v2656 = vunpack.c.h.bf16 %v960
        %v2657 = vunpack.c.l.bf16 %v961
        %v2658 = vunpack.c.h.bf16 %v961
        %v2659 = vunpack.c.l.bf16 %v962
        %v2660 = vunpack.c.h.bf16 %v962
        %v2661 = vunpack.c.l.bf16 %v963
        %v2662 = vunpack.c.h.bf16 %v963
        %v2663 = vunpack.c.l.bf16 %v964
        %v2664 = vunpack.c.h.bf16 %v964
        %v2665 = vunpack.c.l.bf16 %v965
        %v2666 = vunpack.c.h.bf16 %v965
        %v2667 = vunpack.c.l.bf16 %v966
        %v2668 = vunpack.c.h.bf16 %v966
        %v2669 = vunpack.c.l.bf16 %v967
        %v2670 = vunpack.c.h.bf16 %v967
        %v2671 = vunpack.c.l.bf16 %v968
        %v2672 = vunpack.c.h.bf16 %v968
        %v2673 = vunpack.c.l.bf16 %v969
        %v2674 = vunpack.c.h.bf16 %v969
        %v2675 = vunpack.c.l.bf16 %v970
        %v2676 = vunpack.c.h.bf16 %v970
        %v2677 = vunpack.c.l.bf16 %v971
        %v2678 = vunpack.c.h.bf16 %v971
        %v2679 = vunpack.c.l.bf16 %v972
        %v2680 = vunpack.c.h.bf16 %v972
        %v2681 = vunpack.c.l.bf16 %v973
        %v2682 = vunpack.c.h.bf16 %v973
        %v2683 = vunpack.c.l.bf16 %v974
        %v2684 = vunpack.c.h.bf16 %v974
        %v2685 = vunpack.c.l.bf16 %v975
        %v2686 = vunpack.c.h.bf16 %v975
        %v2687 = vunpack.c.l.bf16 %v976
        %v2688 = vunpack.c.h.bf16 %v976
        %v2689 = vunpack.c.l.bf16 %v977
        %v2690 = vunpack.c.h.bf16 %v977
        %v2691 = vunpack.c.l.bf16 %v978
        %v2692 = vunpack.c.h.bf16 %v978
        %v2693 = vunpack.c.l.bf16 %v979
        %v2694 = vunpack.c.h.bf16 %v979
        %v2695 = vunpack.c.l.bf16 %v980
        %v2696 = vunpack.c.h.bf16 %v980
        %v2697 = vunpack.c.l.bf16 %v981
        %v2698 = vunpack.c.h.bf16 %v981
        %v2699 = vunpack.c.l.bf16 %v982
        %v2700 = vunpack.c.h.bf16 %v982
        %v2701 = vunpack.c.l.bf16 %v983
        %v2702 = vunpack.c.h.bf16 %v983
        %v2703 = vunpack.c.l.bf16 %v984
        %v2704 = vunpack.c.h.bf16 %v984
        %v2705 = vunpack.c.l.bf16 %v985
        %v2706 = vunpack.c.h.bf16 %v985
        %v2707 = vunpack.c.l.bf16 %v986
        %v2708 = vunpack.c.h.bf16 %v986
        %v2709 = vunpack.c.l.bf16 %v987
        %v2710 = vunpack.c.h.bf16 %v987
        %v2711 = vunpack.c.l.bf16 %v988
        %v2712 = vunpack.c.h.bf16 %v988
        %v2713 = vunpack.c.l.bf16 %v989
        %v2714 = vunpack.c.h.bf16 %v989
        %v2715 = vunpack.c.l.bf16 %v990
        %v2716 = vunpack.c.h.bf16 %v990
        %v2717 = vunpack.c.l.bf16 %v991
        %v2718 = vunpack.c.h.bf16 %v991
        %v2719 = vunpack.c.l.bf16 %v992
        %v2720 = vunpack.c.h.bf16 %v992
        %v2721 = vunpack.c.l.bf16 %v993
        %v2722 = vunpack.c.h.bf16 %v993
        %v2723 = vunpack.c.l.bf16 %v994
        %v2724 = vunpack.c.h.bf16 %v994
        %v2725 = vunpack.c.l.bf16 %v995
        %v2726 = vunpack.c.h.bf16 %v995
        %v2727 = vunpack.c.l.bf16 %v996
        %v2728 = vunpack.c.h.bf16 %v996
        %v2729 = vunpack.c.l.bf16 %v997
        %v2730 = vunpack.c.h.bf16 %v997
        %v2731 = vunpack.c.l.bf16 %v998
        %v2732 = vunpack.c.h.bf16 %v998
        %v2733 = vunpack.c.l.bf16 %v999
        %v2734 = vunpack.c.h.bf16 %v999
        %v2735 = vunpack.c.l.bf16 %v1000
        %v2736 = vunpack.c.h.bf16 %v1000
        %v2737 = vunpack.c.l.bf16 %v1001
        %v2738 = vunpack.c.h.bf16 %v1001
        %v2739 = vunpack.c.l.bf16 %v1002
        %v2740 = vunpack.c.h.bf16 %v1002
        %v2741 = vunpack.c.l.bf16 %v1003
        %v2742 = vunpack.c.h.bf16 %v1003
        %v2743 = vunpack.c.l.bf16 %v1004
        %v2744 = vunpack.c.h.bf16 %v1004
        %v2745 = vunpack.c.l.bf16 %v1005
        %v2746 = vunpack.c.h.bf16 %v1005
        %v2747 = vunpack.c.l.bf16 %v1006
        %v2748 = vunpack.c.h.bf16 %v1006
        %v2749 = vunpack.c.l.bf16 %v1007
        %v2750 = vunpack.c.h.bf16 %v1007
        %v2751 = vunpack.c.l.bf16 %v1008
        %v2752 = vunpack.c.h.bf16 %v1008
        %v2753 = vunpack.c.l.bf16 %v1009
        %v2754 = vunpack.c.h.bf16 %v1009
        %v2755 = vunpack.c.l.bf16 %v1010
        %v2756 = vunpack.c.h.bf16 %v1010
        %v2757 = vunpack.c.l.bf16 %v1011
        %v2758 = vunpack.c.h.bf16 %v1011
        %v2759 = vunpack.c.l.bf16 %v1012
        %v2760 = vunpack.c.h.bf16 %v1012
        %v2761 = vunpack.c.l.bf16 %v1013
        %v2762 = vunpack.c.h.bf16 %v1013
        %v2763 = vunpack.c.l.bf16 %v1014
        %v2764 = vunpack.c.h.bf16 %v1014
        %v2765 = vunpack.c.l.bf16 %v1015
        %v2766 = vunpack.c.h.bf16 %v1015
        %v2767 = vunpack.c.l.bf16 %v1016
        %v2768 = vunpack.c.h.bf16 %v1016
        %v2769 = vunpack.c.l.bf16 %v1017
        %v2770 = vunpack.c.h.bf16 %v1017
        %v2771 = vunpack.c.l.bf16 %v1018
        %v2772 = vunpack.c.h.bf16 %v1018
        %v2773 = vunpack.c.l.bf16 %v1019
        %v2774 = vunpack.c.h.bf16 %v1019
        %v2775 = vunpack.c.l.bf16 %v1020
        %v2776 = vunpack.c.h.bf16 %v1020
        %v2777 = vunpack.c.l.bf16 %v1021
        %v2778 = vunpack.c.h.bf16 %v1021
        %v2779 = vunpack.c.l.bf16 %v1022
        %v2780 = vunpack.c.h.bf16 %v1022
        %v2781 = vunpack.c.l.bf16 %v1023
        %v2782 = vunpack.c.h.bf16 %v1023
        %v2783 = vunpack.c.l.bf16 %v1024
        %v2784 = vunpack.c.h.bf16 %v1024
        %v2785 = vunpack.c.l.bf16 %v1025
        %v2786 = vunpack.c.h.bf16 %v1025
        %v2787 = vunpack.c.l.bf16 %v1026
        %v2788 = vunpack.c.h.bf16 %v1026
        %v2789 = vunpack.c.l.bf16 %v1027
        %v2790 = vunpack.c.h.bf16 %v1027
        %v2791 = vunpack.c.l.bf16 %v1028
        %v2792 = vunpack.c.h.bf16 %v1028
        %v2793 = vunpack.c.l.bf16 %v1029
        %v2794 = vunpack.c.h.bf16 %v1029
        %v2795 = vunpack.c.l.bf16 %v1030
        %v2796 = vunpack.c.h.bf16 %v1030
        %v2797 = vunpack.c.l.bf16 %v1031
        %v2798 = vunpack.c.h.bf16 %v1031
        %v2799 = vunpack.c.l.bf16 %v1032
        %v2800 = vunpack.c.h.bf16 %v1032
        %v2801 = vunpack.c.l.bf16 %v1033
        %v2802 = vunpack.c.h.bf16 %v1033
        %v2803 = vunpack.c.l.bf16 %v1034
        %v2804 = vunpack.c.h.bf16 %v1034
        %v2805 = vunpack.c.l.bf16 %v1035
        %v2806 = vunpack.c.h.bf16 %v1035
        %v2807 = vunpack.c.l.bf16 %v1036
        %v2808 = vunpack.c.h.bf16 %v1036
        %v2809 = vunpack.c.l.bf16 %v1037
        %v2810 = vunpack.c.h.bf16 %v1037
        %v2811 = vunpack.c.l.bf16 %v1038
        %v2812 = vunpack.c.h.bf16 %v1038
        %v2813 = vunpack.c.l.bf16 %v1039
        %v2814 = vunpack.c.h.bf16 %v1039
        %v2815 = vunpack.c.l.bf16 %v1040
        %v2816 = vunpack.c.h.bf16 %v1040
        %v2817 = vunpack.c.l.bf16 %v1041
        %v2818 = vunpack.c.h.bf16 %v1041
        %v2819 = vunpack.c.l.bf16 %v1042
        %v2820 = vunpack.c.h.bf16 %v1042
        %v2821 = vunpack.c.l.bf16 %v1043
        %v2822 = vunpack.c.h.bf16 %v1043
        %v2823 = vunpack.c.l.bf16 %v1044
        %v2824 = vunpack.c.h.bf16 %v1044
        %v2825 = vunpack.c.l.bf16 %v1045
        %v2826 = vunpack.c.h.bf16 %v1045
        %v2827 = vunpack.c.l.bf16 %v1046
        %v2828 = vunpack.c.h.bf16 %v1046
        %v2829 = vunpack.c.l.bf16 %v1047
        %v2830 = vunpack.c.h.bf16 %v1047
        %v2831 = vunpack.c.l.bf16 %v1048
        %v2832 = vunpack.c.h.bf16 %v1048
        %v2833 = vunpack.c.l.bf16 %v1049
        %v2834 = vunpack.c.h.bf16 %v1049
        %v2835 = vunpack.c.l.bf16 %v1050
        %v2836 = vunpack.c.h.bf16 %v1050
        %v2837 = vunpack.c.l.bf16 %v1051
        %v2838 = vunpack.c.h.bf16 %v1051
        %v2839 = vunpack.c.l.bf16 %v1052
        %v2840 = vunpack.c.h.bf16 %v1052
        %v2841 = vunpack.c.l.bf16 %v1053
        %v2842 = vunpack.c.h.bf16 %v1053
        %v2843 = vunpack.c.l.bf16 %v1054
        %v2844 = vunpack.c.h.bf16 %v1054
        %v2845 = vunpack.c.l.bf16 %v1055
        %v2846 = vunpack.c.h.bf16 %v1055
        %v2847 = vunpack.c.l.bf16 %v1056
        %v2848 = vunpack.c.h.bf16 %v1056
        %v2849 = vunpack.c.l.bf16 %v1057
        %v2850 = vunpack.c.h.bf16 %v1057
        %v2851 = vunpack.c.l.bf16 %v1058
        %v2852 = vunpack.c.h.bf16 %v1058
        %v2853 = vunpack.c.l.bf16 %v1059
        %v2854 = vunpack.c.h.bf16 %v1059
        %v2855 = vunpack.c.l.bf16 %v1060
        %v2856 = vunpack.c.h.bf16 %v1060
        %v2857 = vunpack.c.l.bf16 %v1061
        %v2858 = vunpack.c.h.bf16 %v1061
        %v2859 = vunpack.c.l.bf16 %v1062
        %v2860 = vunpack.c.h.bf16 %v1062
        %v2861 = vunpack.c.l.bf16 %v1063
        %v2862 = vunpack.c.h.bf16 %v1063
        %v2863 = vunpack.c.l.bf16 %v1064
        %v2864 = vunpack.c.h.bf16 %v1064
        %v2865 = vunpack.c.l.bf16 %v1065
        %v2866 = vunpack.c.h.bf16 %v1065
        %v2867 = vunpack.c.l.bf16 %v1066
        %v2868 = vunpack.c.h.bf16 %v1066
        %v2869 = vunpack.c.l.bf16 %v1067
        %v2870 = vunpack.c.h.bf16 %v1067
        %v2871 = vunpack.c.l.bf16 %v1068
        %v2872 = vunpack.c.h.bf16 %v1068
        %v2873 = vunpack.c.l.bf16 %v1069
        %v2874 = vunpack.c.h.bf16 %v1069
        %v2875 = vunpack.c.l.bf16 %v1070
        %v2876 = vunpack.c.h.bf16 %v1070
        %v2877 = vunpack.c.l.bf16 %v1071
        %v2878 = vunpack.c.h.bf16 %v1071
        %v2879 = vunpack.c.l.bf16 %v1072
        %v2880 = vunpack.c.h.bf16 %v1072
        %v2881 = vunpack.c.l.bf16 %v1073
        %v2882 = vunpack.c.h.bf16 %v1073
        %v2883 = vunpack.c.l.bf16 %v1074
        %v2884 = vunpack.c.h.bf16 %v1074
        %v2885 = vunpack.c.l.bf16 %v1075
        %v2886 = vunpack.c.h.bf16 %v1075
        %v2887 = vunpack.c.l.bf16 %v1076
        %v2888 = vunpack.c.h.bf16 %v1076
        %v2889 = vunpack.c.l.bf16 %v1077
        %v2890 = vunpack.c.h.bf16 %v1077
        %v2891 = vunpack.c.l.bf16 %v1078
        %v2892 = vunpack.c.h.bf16 %v1078
        %v2893 = vunpack.c.l.bf16 %v1079
        %v2894 = vunpack.c.h.bf16 %v1079
        %v2895 = vunpack.c.l.bf16 %v1080
        %v2896 = vunpack.c.h.bf16 %v1080
        %v2897 = vunpack.c.l.bf16 %v1081
        %v2898 = vunpack.c.h.bf16 %v1081
        %v2899 = vunpack.c.l.bf16 %v1082
        %v2900 = vunpack.c.h.bf16 %v1082
        %v2901 = vunpack.c.l.bf16 %v1083
        %v2902 = vunpack.c.h.bf16 %v1083
        %v2903 = vunpack.c.l.bf16 %v1084
        %v2904 = vunpack.c.h.bf16 %v1084
        %v2905 = vunpack.c.l.bf16 %v1085
        %v2906 = vunpack.c.h.bf16 %v1085
        %v2907 = vunpack.c.l.bf16 %v1086
        %v2908 = vunpack.c.h.bf16 %v1086
        %v2909 = vunpack.c.l.bf16 %v1087
        %v2910 = vunpack.c.h.bf16 %v1087
        %v2911 = vunpack.c.l.bf16 %v1088
        %v2912 = vunpack.c.h.bf16 %v1088
        %v2913 = vunpack.c.l.bf16 %v1089
        %v2914 = vunpack.c.h.bf16 %v1089
        %v2915 = vunpack.c.l.bf16 %v1090
        %v2916 = vunpack.c.h.bf16 %v1090
        %v2917 = vunpack.c.l.bf16 %v1091
        %v2918 = vunpack.c.h.bf16 %v1091
        %v2919 = vunpack.c.l.bf16 %v1092
        %v2920 = vunpack.c.h.bf16 %v1092
        %v2921 = vunpack.c.l.bf16 %v1093
        %v2922 = vunpack.c.h.bf16 %v1093
        %v2923 = vunpack.c.l.bf16 %v1094
        %v2924 = vunpack.c.h.bf16 %v1094
        %v2925 = vunpack.c.l.bf16 %v1095
        %v2926 = vunpack.c.h.bf16 %v1095
        %v2927 = vunpack.c.l.bf16 %v1096
        %v2928 = vunpack.c.h.bf16 %v1096
        %v2929 = vunpack.c.l.bf16 %v1097
        %v2930 = vunpack.c.h.bf16 %v1097
        %v2931 = vunpack.c.l.bf16 %v1098
        %v2932 = vunpack.c.h.bf16 %v1098
        %v2933 = vunpack.c.l.bf16 %v1099
        %v2934 = vunpack.c.h.bf16 %v1099
        %v2935 = vunpack.c.l.bf16 %v1100
        %v2936 = vunpack.c.h.bf16 %v1100
        %v2937 = vunpack.c.l.bf16 %v1101
        %v2938 = vunpack.c.h.bf16 %v1101
        %v2939 = vunpack.c.l.bf16 %v1102
        %v2940 = vunpack.c.h.bf16 %v1102
        %v2941 = vunpack.c.l.bf16 %v1103
        %v2942 = vunpack.c.h.bf16 %v1103
        %v2943 = vunpack.c.l.bf16 %v1104
        %v2944 = vunpack.c.h.bf16 %v1104
        %v2945 = vunpack.c.l.bf16 %v1105
        %v2946 = vunpack.c.h.bf16 %v1105
        %v2947 = vunpack.c.l.bf16 %v1106
        %v2948 = vunpack.c.h.bf16 %v1106
        %v2949 = vunpack.c.l.bf16 %v1107
        %v2950 = vunpack.c.h.bf16 %v1107
        %v2951 = vunpack.c.l.bf16 %v1108
        %v2952 = vunpack.c.h.bf16 %v1108
        %v2953 = vunpack.c.l.bf16 %v1109
        %v2954 = vunpack.c.h.bf16 %v1109
        %v2955 = vunpack.c.l.bf16 %v1110
        %v2956 = vunpack.c.h.bf16 %v1110
        %v2957 = vunpack.c.l.bf16 %v1111
        %v2958 = vunpack.c.h.bf16 %v1111
        %v2959 = vunpack.c.l.bf16 %v1112
        %v2960 = vunpack.c.h.bf16 %v1112
        %v2961 = vunpack.c.l.bf16 %v1113
        %v2962 = vunpack.c.h.bf16 %v1113
        %v2963 = vunpack.c.l.bf16 %v1114
        %v2964 = vunpack.c.h.bf16 %v1114
        %v2965 = vunpack.c.l.bf16 %v1115
        %v2966 = vunpack.c.h.bf16 %v1115
        %v2967 = vunpack.c.l.bf16 %v1116
        %v2968 = vunpack.c.h.bf16 %v1116
        %v2969 = vunpack.c.l.bf16 %v1117
        %v2970 = vunpack.c.h.bf16 %v1117
        %v2971 = vunpack.c.l.bf16 %v1118
        %v2972 = vunpack.c.h.bf16 %v1118
        %v2973 = vunpack.c.l.bf16 %v1119
        %v2974 = vunpack.c.h.bf16 %v1119
        %v2975 = vunpack.c.l.bf16 %v1120
        %v2976 = vunpack.c.h.bf16 %v1120
        %v2977 = vunpack.c.l.bf16 %v1121
        %v2978 = vunpack.c.h.bf16 %v1121
        %v2979 = vunpack.c.l.bf16 %v1122
        %v2980 = vunpack.c.h.bf16 %v1122
        %v2981 = vunpack.c.l.bf16 %v1123
        %v2982 = vunpack.c.h.bf16 %v1123
        %v2983 = vunpack.c.l.bf16 %v1124
        %v2984 = vunpack.c.h.bf16 %v1124
        %v2985 = vunpack.c.l.bf16 %v1125
        %v2986 = vunpack.c.h.bf16 %v1125
        %v2987 = vunpack.c.l.bf16 %v1126
        %v2988 = vunpack.c.h.bf16 %v1126
        %v2989 = vunpack.c.l.bf16 %v1127
        %v2990 = vunpack.c.h.bf16 %v1127
        %v2991 = vunpack.c.l.bf16 %v1128
        %v2992 = vunpack.c.h.bf16 %v1128
        %v2993 = vunpack.c.l.bf16 %v1129
        %v2994 = vunpack.c.h.bf16 %v1129
        %v2995 = vunpack.c.l.bf16 %v1130
        %v2996 = vunpack.c.h.bf16 %v1130
        %v2997 = vunpack.c.l.bf16 %v1131
        %v2998 = vunpack.c.h.bf16 %v1131
        %v2999 = vunpack.c.l.bf16 %v1132
        %v3000 = vunpack.c.h.bf16 %v1132
        %v3001 = vunpack.c.l.bf16 %v1133
        %v3002 = vunpack.c.h.bf16 %v1133
        %v3003 = vunpack.c.l.bf16 %v1134
        %v3004 = vunpack.c.h.bf16 %v1134
        %v3005 = vunpack.c.l.bf16 %v1135
        %v3006 = vunpack.c.h.bf16 %v1135
        %v3007 = vunpack.c.l.bf16 %v1136
        %v3008 = vunpack.c.h.bf16 %v1136
        %v3009 = vunpack.c.l.bf16 %v1137
        %v3010 = vunpack.c.h.bf16 %v1137
        %v3011 = vunpack.c.l.bf16 %v1138
        %v3012 = vunpack.c.h.bf16 %v1138
        %v3013 = vunpack.c.l.bf16 %v1139
        %v3014 = vunpack.c.h.bf16 %v1139
        %v3015 = vunpack.c.l.bf16 %v1140
        %v3016 = vunpack.c.h.bf16 %v1140
        %v3017 = vunpack.c.l.bf16 %v1141
        %v3018 = vunpack.c.h.bf16 %v1141
        %v3019 = vunpack.c.l.bf16 %v1142
        %v3020 = vunpack.c.h.bf16 %v1142
        %v3021 = vunpack.c.l.bf16 %v1143
        %v3022 = vunpack.c.h.bf16 %v1143
        %v3023 = vunpack.c.l.bf16 %v1144
        %v3024 = vunpack.c.h.bf16 %v1144
        %v3025 = vunpack.c.l.bf16 %v1145
        %v3026 = vunpack.c.h.bf16 %v1145
        %v3027 = vunpack.c.l.bf16 %v1146
        %v3028 = vunpack.c.h.bf16 %v1146
        %v3029 = vunpack.c.l.bf16 %v1147
        %v3030 = vunpack.c.h.bf16 %v1147
        %v3031 = vunpack.c.l.bf16 %v1148
        %v3032 = vunpack.c.h.bf16 %v1148
        %v3033 = vunpack.c.l.bf16 %v1149
        %v3034 = vunpack.c.h.bf16 %v1149
        %v3035 = vunpack.c.l.bf16 %v1150
        %v3036 = vunpack.c.h.bf16 %v1150
        %v3037 = vunpack.c.l.bf16 %v1151
        %v3038 = vunpack.c.h.bf16 %v1151
        %v3039 = vunpack.c.l.bf16 %v1152
        %v3040 = vunpack.c.h.bf16 %v1152
        %v3041 = vunpack.c.l.bf16 %v1153
        %v3042 = vunpack.c.h.bf16 %v1153
        %v3043 = vunpack.c.l.bf16 %v1154
        %v3044 = vunpack.c.h.bf16 %v1154
        %v3045 = vunpack.c.l.bf16 %v1155
        %v3046 = vunpack.c.h.bf16 %v1155
        %v3047 = vunpack.c.l.bf16 %v1156
        %v3048 = vunpack.c.h.bf16 %v1156
        %v3049 = vunpack.c.l.bf16 %v1157
        %v3050 = vunpack.c.h.bf16 %v1157
        %v3051 = vunpack.c.l.bf16 %v1158
        %v3052 = vunpack.c.h.bf16 %v1158
        %v3053 = vunpack.c.l.bf16 %v1159
        %v3054 = vunpack.c.h.bf16 %v1159
        %v3055 = vunpack.c.l.bf16 %v1160
        %v3056 = vunpack.c.h.bf16 %v1160
        %v3057 = vunpack.c.l.bf16 %v1161
        %v3058 = vunpack.c.h.bf16 %v1161
        %v3059 = vunpack.c.l.bf16 %v1162
        %v3060 = vunpack.c.h.bf16 %v1162
        %v3061 = vunpack.c.l.bf16 %v1163
        %v3062 = vunpack.c.h.bf16 %v1163
        %v3063 = vunpack.c.l.bf16 %v1164
        %v3064 = vunpack.c.h.bf16 %v1164
        %v3065 = vunpack.c.l.bf16 %v1165
        %v3066 = vunpack.c.h.bf16 %v1165
        %v3067 = vunpack.c.l.bf16 %v1166
        %v3068 = vunpack.c.h.bf16 %v1166
        %v3069 = vunpack.c.l.bf16 %v1167
        %v3070 = vunpack.c.h.bf16 %v1167
        %v3071 = vunpack.c.l.bf16 %v1168
        %v3072 = vunpack.c.h.bf16 %v1168
        %v3073 = vunpack.c.l.bf16 %v1169
        %v3074 = vunpack.c.h.bf16 %v1169
        %v3075 = vunpack.c.l.bf16 %v1170
        %v3076 = vunpack.c.h.bf16 %v1170
        %v3077 = vunpack.c.l.bf16 %v1171
        %v3078 = vunpack.c.h.bf16 %v1171
        %v3079 = vunpack.c.l.bf16 %v1172
        %v3080 = vunpack.c.h.bf16 %v1172
        %v3081 = vunpack.c.l.bf16 %v1173
        %v3082 = vunpack.c.h.bf16 %v1173
        %v3083 = vunpack.c.l.bf16 %v1174
        %v3084 = vunpack.c.h.bf16 %v1174
        %v3085 = vunpack.c.l.bf16 %v1175
        %v3086 = vunpack.c.h.bf16 %v1175
        %v3087 = vunpack.c.l.bf16 %v1176
        %v3088 = vunpack.c.h.bf16 %v1176
        %v3089 = vunpack.c.l.bf16 %v1177
        %v3090 = vunpack.c.h.bf16 %v1177
        %v3091 = vunpack.c.l.bf16 %v1178
        %v3092 = vunpack.c.h.bf16 %v1178
        %v3093 = vunpack.c.l.bf16 %v1179
        %v3094 = vunpack.c.h.bf16 %v1179
        %v3095 = vunpack.c.l.bf16 %v1180
        %v3096 = vunpack.c.h.bf16 %v1180
        %v3097 = vunpack.c.l.bf16 %v1181
        %v3098 = vunpack.c.h.bf16 %v1181
        %v3099 = vunpack.c.l.bf16 %v1182
        %v3100 = vunpack.c.h.bf16 %v1182
        %v3101 = vunpack.c.l.bf16 %v1183
        %v3102 = vunpack.c.h.bf16 %v1183
        %v3103 = vunpack.c.l.bf16 %v1184
        %v3104 = vunpack.c.h.bf16 %v1184
        %v3105 = vunpack.c.l.bf16 %v1185
        %v3106 = vunpack.c.h.bf16 %v1185
        %v3107 = vunpack.c.l.bf16 %v1186
        %v3108 = vunpack.c.h.bf16 %v1186
        %v3109 = vunpack.c.l.bf16 %v1187
        %v3110 = vunpack.c.h.bf16 %v1187
        %v3111 = vunpack.c.l.bf16 %v1188
        %v3112 = vunpack.c.h.bf16 %v1188
        %v3113 = vunpack.c.l.bf16 %v1189
        %v3114 = vunpack.c.h.bf16 %v1189
        %v3115 = vunpack.c.l.bf16 %v1190
        %v3116 = vunpack.c.h.bf16 %v1190
        %v3117 = vunpack.c.l.bf16 %v1191
        %v3118 = vunpack.c.h.bf16 %v1191
        %v3119 = vunpack.c.l.bf16 %v1192
        %v3120 = vunpack.c.h.bf16 %v1192
        %v3121 = vunpack.c.l.bf16 %v1193
        %v3122 = vunpack.c.h.bf16 %v1193
        %v3123 = vunpack.c.l.bf16 %v1194
        %v3124 = vunpack.c.h.bf16 %v1194
        %v3125 = vunpack.c.l.bf16 %v1195
        %v3126 = vunpack.c.h.bf16 %v1195
        %v3127 = vunpack.c.l.bf16 %v1196
        %v3128 = vunpack.c.h.bf16 %v1196
        %v3129 = vunpack.c.l.bf16 %v1197
        %v3130 = vunpack.c.h.bf16 %v1197
        %v3131 = vunpack.c.l.bf16 %v1198
        %v3132 = vunpack.c.h.bf16 %v1198
        %v3133 = vunpack.c.l.bf16 %v1199
        %v3134 = vunpack.c.h.bf16 %v1199
        %v3135 = vunpack.c.l.bf16 %v1200
        %v3136 = vunpack.c.h.bf16 %v1200
        %v3137 = vunpack.c.l.bf16 %v1201
        %v3138 = vunpack.c.h.bf16 %v1201
        %v3139 = vunpack.c.l.bf16 %v1202
        %v3140 = vunpack.c.h.bf16 %v1202
        %v3141 = vunpack.c.l.bf16 %v1203
        %v3142 = vunpack.c.h.bf16 %v1203
        %v3143 = vunpack.c.l.bf16 %v1204
        %v3144 = vunpack.c.h.bf16 %v1204
        %v3145 = vunpack.c.l.bf16 %v1205
        %v3146 = vunpack.c.h.bf16 %v1205
        %v3147 = vunpack.c.l.bf16 %v1206
        %v3148 = vunpack.c.h.bf16 %v1206
        %v3149 = vunpack.c.l.bf16 %v1207
        %v3150 = vunpack.c.h.bf16 %v1207
        %v3151 = vunpack.c.l.bf16 %v1208
        %v3152 = vunpack.c.h.bf16 %v1208
        %v3153 = vunpack.c.l.bf16 %v1209
        %v3154 = vunpack.c.h.bf16 %v1209
        %v3155 = vunpack.c.l.bf16 %v1210
        %v3156 = vunpack.c.h.bf16 %v1210
        %v3157 = vunpack.c.l.bf16 %v1211
        %v3158 = vunpack.c.h.bf16 %v1211
        %v3159 = vunpack.c.l.bf16 %v1212
        %v3160 = vunpack.c.h.bf16 %v1212
        %v3161 = vunpack.c.l.bf16 %v1213
        %v3162 = vunpack.c.h.bf16 %v1213
        %v3163 = vunpack.c.l.bf16 %v1214
        %v3164 = vunpack.c.h.bf16 %v1214
        %v3165 = vunpack.c.l.bf16 %v1215
        %v3166 = vunpack.c.h.bf16 %v1215
        %v3167 = vunpack.c.l.bf16 %v1216
        %v3168 = vunpack.c.h.bf16 %v1216
        %v3169 = vunpack.c.l.bf16 %v1217
        %v3170 = vunpack.c.h.bf16 %v1217
        %v3171 = vunpack.c.l.bf16 %v1218
        %v3172 = vunpack.c.h.bf16 %v1218
        %v3173 = vunpack.c.l.bf16 %v1219
        %v3174 = vunpack.c.h.bf16 %v1219
        %v3175 = vunpack.c.l.bf16 %v1220
        %v3176 = vunpack.c.h.bf16 %v1220
        %v3177 = vunpack.c.l.bf16 %v1221
        %v3178 = vunpack.c.h.bf16 %v1221
        %v3179 = vunpack.c.l.bf16 %v1222
        %v3180 = vunpack.c.h.bf16 %v1222
        %v3181 = vunpack.c.l.bf16 %v1223
        %v3182 = vunpack.c.h.bf16 %v1223
        %v3183 = vunpack.c.l.bf16 %v1224
        %v3184 = vunpack.c.h.bf16 %v1224
        %v3185 = vunpack.c.l.bf16 %v1225
        %v3186 = vunpack.c.h.bf16 %v1225
        %v3187 = vunpack.c.l.bf16 %v1226
        %v3188 = vunpack.c.h.bf16 %v1226
        %v3189 = vunpack.c.l.bf16 %v1227
        %v3190 = vunpack.c.h.bf16 %v1227
        %v3191 = vunpack.c.l.bf16 %v1228
        %v3192 = vunpack.c.h.bf16 %v1228
        %v3193 = vunpack.c.l.bf16 %v1229
        %v3194 = vunpack.c.h.bf16 %v1229
        %v3195 = vunpack.c.l.bf16 %v1230
        %v3196 = vunpack.c.h.bf16 %v1230
        %v3197 = vunpack.c.l.bf16 %v1231
        %v3198 = vunpack.c.h.bf16 %v1231
        %v3199 = vunpack.c.l.bf16 %v1232
        %v3200 = vunpack.c.h.bf16 %v1232
        %v3201 = vunpack.c.l.bf16 %v1233
        %v3202 = vunpack.c.h.bf16 %v1233
        %v3203 = vunpack.c.l.bf16 %v1234
        %v3204 = vunpack.c.h.bf16 %v1234
        %v3205 = vunpack.c.l.bf16 %v1235
        %v3206 = vunpack.c.h.bf16 %v1235
        %v3207 = vunpack.c.l.bf16 %v1236
        %v3208 = vunpack.c.h.bf16 %v1236
        %v3209 = vunpack.c.l.bf16 %v1237
        %v3210 = vunpack.c.h.bf16 %v1237
        %v3211 = vunpack.c.l.bf16 %v1238
        %v3212 = vunpack.c.h.bf16 %v1238
        %v3213 = vunpack.c.l.bf16 %v1239
        %v3214 = vunpack.c.h.bf16 %v1239
        %v3215 = vunpack.c.l.bf16 %v1240
        %v3216 = vunpack.c.h.bf16 %v1240
        %v3217 = vunpack.c.l.bf16 %v1241
        %v3218 = vunpack.c.h.bf16 %v1241
        %v3219 = vunpack.c.l.bf16 %v1242
        %v3220 = vunpack.c.h.bf16 %v1242
        %v3221 = vunpack.c.l.bf16 %v1243
        %v3222 = vunpack.c.h.bf16 %v1243
        %v3223 = vunpack.c.l.bf16 %v1244
        %v3224 = vunpack.c.h.bf16 %v1244
        %v3225 = vunpack.c.l.bf16 %v1245
        %v3226 = vunpack.c.h.bf16 %v1245
        %v3227 = vunpack.c.l.bf16 %v1246
        %v3228 = vunpack.c.h.bf16 %v1246
        %v3229 = vunpack.c.l.bf16 %v1247
        %v3230 = vunpack.c.h.bf16 %v1247
        %v3231 = vunpack.c.l.bf16 %v1248
        %v3232 = vunpack.c.h.bf16 %v1248
        %v3233 = vunpack.c.l.bf16 %v1249
        %v3234 = vunpack.c.h.bf16 %v1249
        %v3235 = vunpack.c.l.bf16 %v1250
        %v3236 = vunpack.c.h.bf16 %v1250
        %v3237 = vunpack.c.l.bf16 %v1251
        %v3238 = vunpack.c.h.bf16 %v1251
        %v3239 = vunpack.c.l.bf16 %v1252
        %v3240 = vunpack.c.h.bf16 %v1252
        %v3241 = vunpack.c.l.bf16 %v1253
        %v3242 = vunpack.c.h.bf16 %v1253
        %v3243 = vunpack.c.l.bf16 %v1254
        %v3244 = vunpack.c.h.bf16 %v1254
        %v3245 = vunpack.c.l.bf16 %v1255
        %v3246 = vunpack.c.h.bf16 %v1255
        %v3247 = vunpack.c.l.bf16 %v1256
        %v3248 = vunpack.c.h.bf16 %v1256
        %v3249 = vunpack.c.l.bf16 %v1257
        %v3250 = vunpack.c.h.bf16 %v1257
        %v3251 = vunpack.c.l.bf16 %v1258
        %v3252 = vunpack.c.h.bf16 %v1258
        %v3253 = vunpack.c.l.bf16 %v1259
        %v3254 = vunpack.c.h.bf16 %v1259
        %v3255 = vunpack.c.l.bf16 %v1260
        %v3256 = vunpack.c.h.bf16 %v1260
        %v3257 = vunpack.c.l.bf16 %v1261
        %v3258 = vunpack.c.h.bf16 %v1261
        %v3259 = vunpack.c.l.bf16 %v1262
        %v3260 = vunpack.c.h.bf16 %v1262
        %v3261 = vunpack.c.l.bf16 %v1263
        %v3262 = vunpack.c.h.bf16 %v1263
        %v3263 = vunpack.c.l.bf16 %v1264
        %v3264 = vunpack.c.h.bf16 %v1264
        %v3265 = vunpack.c.l.bf16 %v1265
        %v3266 = vunpack.c.h.bf16 %v1265
        %v3267 = vunpack.c.l.bf16 %v1266
        %v3268 = vunpack.c.h.bf16 %v1266
        %v3269 = vunpack.c.l.bf16 %v1267
        %v3270 = vunpack.c.h.bf16 %v1267
        %v3271 = vunpack.c.l.bf16 %v1268
        %v3272 = vunpack.c.h.bf16 %v1268
        %v3273 = vunpack.c.l.bf16 %v1269
        %v3274 = vunpack.c.h.bf16 %v1269
        %v3275 = vunpack.c.l.bf16 %v1270
        %v3276 = vunpack.c.h.bf16 %v1270
        %v3277 = vunpack.c.l.bf16 %v1271
        %v3278 = vunpack.c.h.bf16 %v1271
        %v3279 = vunpack.c.l.bf16 %v1272
        %v3280 = vunpack.c.h.bf16 %v1272
        %v3281 = vunpack.c.l.bf16 %v1273
        %v3282 = vunpack.c.h.bf16 %v1273
        %v3283 = vunpack.c.l.bf16 %v1274
        %v3284 = vunpack.c.h.bf16 %v1274
        %v3285 = vunpack.c.l.bf16 %v1275
        %v3286 = vunpack.c.h.bf16 %v1275
        %v3287 = vunpack.c.l.bf16 %v1276
        %v3288 = vunpack.c.h.bf16 %v1276
        %v3289 = vunpack.c.l.bf16 %v1277
        %v3290 = vunpack.c.h.bf16 %v1277
        %v3291 = vunpack.c.l.bf16 %v1278
        %v3292 = vunpack.c.h.bf16 %v1278
        %v3293 = vunpack.c.l.bf16 %v1279
        %v3294 = vunpack.c.h.bf16 %v1279
        %v3295 = vunpack.c.l.bf16 %v1280
        %v3296 = vunpack.c.h.bf16 %v1280
        %v3297 = vunpack.c.l.bf16 %v1281
        %v3298 = vunpack.c.h.bf16 %v1281
        %v3299 = vunpack.c.l.bf16 %v1282
        %v3300 = vunpack.c.h.bf16 %v1282
        %v3301 = vunpack.c.l.bf16 %v1283
        %v3302 = vunpack.c.h.bf16 %v1283
        %v3303 = vunpack.c.l.bf16 %v1284
        %v3304 = vunpack.c.h.bf16 %v1284
        %v3305 = vunpack.c.l.bf16 %v1285
        %v3306 = vunpack.c.h.bf16 %v1285
        %v3307 = vunpack.c.l.bf16 %v1286
        %v3308 = vunpack.c.h.bf16 %v1286
        %v3309 = vunpack.c.l.bf16 %v1287
        %v3310 = vunpack.c.h.bf16 %v1287
        %v3311 = vunpack.c.l.bf16 %v1288
        %v3312 = vunpack.c.h.bf16 %v1288
        %v3313 = vunpack.c.l.bf16 %v1289
        %v3314 = vunpack.c.h.bf16 %v1289
        %v3315 = vunpack.c.l.bf16 %v1290
        %v3316 = vunpack.c.h.bf16 %v1290
        %v3317 = vunpack.c.l.bf16 %v1291
        %v3318 = vunpack.c.h.bf16 %v1291
        %v3319 = vunpack.c.l.bf16 %v1292
        %v3320 = vunpack.c.h.bf16 %v1292
        %v3321 = vunpack.c.l.bf16 %v1293
        %v3322 = vunpack.c.h.bf16 %v1293
        %v3323 = vunpack.c.l.bf16 %v1294
        %v3324 = vunpack.c.h.bf16 %v1294
        %v3325 = vunpack.c.l.bf16 %v1295
        %v3326 = vunpack.c.h.bf16 %v1295
        %v3327 = vunpack.c.l.bf16 %v1296
        %v3328 = vunpack.c.h.bf16 %v1296
        %v3329 = vunpack.c.l.bf16 %v1297
        %v3330 = vunpack.c.h.bf16 %v1297
        %v3331 = vunpack.c.l.bf16 %v1298
        %v3332 = vunpack.c.h.bf16 %v1298
        %v3333 = vunpack.c.l.bf16 %v1299
        %v3334 = vunpack.c.h.bf16 %v1299
        %v3335 = vunpack.c.l.bf16 %v1300
        %v3336 = vunpack.c.h.bf16 %v1300
        %v3337 = vunpack.c.l.bf16 %v1301
        %v3338 = vunpack.c.h.bf16 %v1301
        %v3339 = vunpack.c.l.bf16 %v1302
        %v3340 = vunpack.c.h.bf16 %v1302
        %v3341 = vunpack.c.l.bf16 %v1303
        %v3342 = vunpack.c.h.bf16 %v1303
        %v3343 = vunpack.c.l.bf16 %v1304
        %v3344 = vunpack.c.h.bf16 %v1304
        %v3345 = vunpack.c.l.bf16 %v1305
        %v3346 = vunpack.c.h.bf16 %v1305
        %v3347 = vunpack.c.l.bf16 %v1306
        %v3348 = vunpack.c.h.bf16 %v1306
        %v3349 = vunpack.c.l.bf16 %v1307
        %v3350 = vunpack.c.h.bf16 %v1307
        %v3351 = vunpack.c.l.bf16 %v1308
        %v3352 = vunpack.c.h.bf16 %v1308
        %v3353 = vunpack.c.l.bf16 %v1309
        %v3354 = vunpack.c.h.bf16 %v1309
        %v3355 = vunpack.c.l.bf16 %v1310
        %v3356 = vunpack.c.h.bf16 %v1310
        %v3357 = vunpack.c.l.bf16 %v1311
        %v3358 = vunpack.c.h.bf16 %v1311
        %v3359 = vunpack.c.l.bf16 %v1312
        %v3360 = vunpack.c.h.bf16 %v1312
        %v3369 = vcombine.high %v281, %v281
        %v3371 = vunpack.c.l.s4 1983009808
        %v3372 = vunpack.c.0.s8 %v3371
        %v3373 = vlaneseq
        %v3374 = vshrl.u32 %v3373, 7
        %v3375 = vsub.s32 %v3372, %v3374
        %v3376 = vrot.slane %v281, %v3375
        %v3378 = vunpack.c.l.s4 1983009808
        %v3379 = vunpack.c.0.s8 %v3378
        %v3380 = vlaneseq
        %v3381 = vshrl.u32 %v3380, 7
        %v3382 = vsub.s32 %v3379, %v3381
        %v3383 = vrot.slane %v3369, %v3382
        %v3384 = vcombine.high %v3376, %v3376
        %v3385 = vcombine.high %v3383, %v3383
        %v3386 = vcombine.high %v282, %v282
        %v3388 = vunpack.c.l.s4 1983009808
        %v3389 = vunpack.c.0.s8 %v3388
        %v3390 = vlaneseq
        %v3391 = vshrl.u32 %v3390, 7
        %v3392 = vsub.s32 %v3389, %v3391
        %v3393 = vrot.slane %v282, %v3392
        %v3395 = vunpack.c.l.s4 1983009808
        %v3396 = vunpack.c.0.s8 %v3395
        %v3397 = vlaneseq
        %v3398 = vshrl.u32 %v3397, 7
        %v3399 = vsub.s32 %v3396, %v3398
        %v3400 = vrot.slane %v3386, %v3399
        %v3401 = vcombine.high %v3393, %v3393
        %v3402 = vcombine.high %v3400, %v3400
        %v3403 = vcombine.high %v283, %v283
        %v3405 = vunpack.c.l.s4 1983009808
        %v3406 = vunpack.c.0.s8 %v3405
        %v3407 = vlaneseq
        %v3408 = vshrl.u32 %v3407, 7
        %v3409 = vsub.s32 %v3406, %v3408
        %v3410 = vrot.slane %v283, %v3409
        %v3412 = vunpack.c.l.s4 1983009808
        %v3413 = vunpack.c.0.s8 %v3412
        %v3414 = vlaneseq
        %v3415 = vshrl.u32 %v3414, 7
        %v3416 = vsub.s32 %v3413, %v3415
        %v3417 = vrot.slane %v3403, %v3416
        %v3418 = vcombine.high %v3410, %v3410
        %v3419 = vcombine.high %v3417, %v3417
        %v3420 = vcombine.high %v284, %v284
        %v3422 = vunpack.c.l.s4 1983009808
        %v3423 = vunpack.c.0.s8 %v3422
        %v3424 = vlaneseq
        %v3425 = vshrl.u32 %v3424, 7
        %v3426 = vsub.s32 %v3423, %v3425
        %v3427 = vrot.slane %v284, %v3426
        %v3429 = vunpack.c.l.s4 1983009808
        %v3430 = vunpack.c.0.s8 %v3429
        %v3431 = vlaneseq
        %v3432 = vshrl.u32 %v3431, 7
        %v3433 = vsub.s32 %v3430, %v3432
        %v3434 = vrot.slane %v3420, %v3433
        %v3435 = vcombine.high %v3427, %v3427
        %v3436 = vcombine.high %v3434, %v3434
        %v3437 = vcombine.high %v285, %v285
        %v3439 = vunpack.c.l.s4 1983009808
        %v3440 = vunpack.c.0.s8 %v3439
        %v3441 = vlaneseq
        %v3442 = vshrl.u32 %v3441, 7
        %v3443 = vsub.s32 %v3440, %v3442
        %v3444 = vrot.slane %v285, %v3443
        %v3446 = vunpack.c.l.s4 1983009808
        %v3447 = vunpack.c.0.s8 %v3446
        %v3448 = vlaneseq
        %v3449 = vshrl.u32 %v3448, 7
        %v3450 = vsub.s32 %v3447, %v3449
        %v3451 = vrot.slane %v3437, %v3450
        %v3452 = vcombine.high %v3444, %v3444
        %v3453 = vcombine.high %v3451, %v3451
        %v3454 = vcombine.high %v286, %v286
        %v3456 = vunpack.c.l.s4 1983009808
        %v3457 = vunpack.c.0.s8 %v3456
        %v3458 = vlaneseq
        %v3459 = vshrl.u32 %v3458, 7
        %v3460 = vsub.s32 %v3457, %v3459
        %v3461 = vrot.slane %v286, %v3460
        %v3463 = vunpack.c.l.s4 1983009808
        %v3464 = vunpack.c.0.s8 %v3463
        %v3465 = vlaneseq
        %v3466 = vshrl.u32 %v3465, 7
        %v3467 = vsub.s32 %v3464, %v3466
        %v3468 = vrot.slane %v3454, %v3467
        %v3469 = vcombine.high %v3461, %v3461
        %v3470 = vcombine.high %v3468, %v3468
        %v3471 = vcombine.high %v287, %v287
        %v3473 = vunpack.c.l.s4 1983009808
        %v3474 = vunpack.c.0.s8 %v3473
        %v3475 = vlaneseq
        %v3476 = vshrl.u32 %v3475, 7
        %v3477 = vsub.s32 %v3474, %v3476
        %v3478 = vrot.slane %v287, %v3477
        %v3480 = vunpack.c.l.s4 1983009808
        %v3481 = vunpack.c.0.s8 %v3480
        %v3482 = vlaneseq
        %v3483 = vshrl.u32 %v3482, 7
        %v3484 = vsub.s32 %v3481, %v3483
        %v3485 = vrot.slane %v3471, %v3484
        %v3486 = vcombine.high %v3478, %v3478
        %v3487 = vcombine.high %v3485, %v3485
        %v3488 = vcombine.high %v288, %v288
        %v3490 = vunpack.c.l.s4 1983009808
        %v3491 = vunpack.c.0.s8 %v3490
        %v3492 = vlaneseq
        %v3493 = vshrl.u32 %v3492, 7
        %v3494 = vsub.s32 %v3491, %v3493
        %v3495 = vrot.slane %v288, %v3494
        %v3497 = vunpack.c.l.s4 1983009808
        %v3498 = vunpack.c.0.s8 %v3497
        %v3499 = vlaneseq
        %v3500 = vshrl.u32 %v3499, 7
        %v3501 = vsub.s32 %v3498, %v3500
        %v3502 = vrot.slane %v3488, %v3501
        %v3503 = vcombine.high %v3495, %v3495
        %v3504 = vcombine.high %v3502, %v3502
        %3537 = vmatprep.subr.mxu0 %v1314
        %3538 = vmatpush1.msra.mxu0 %v1313
        %3539 = vmatprep.subr.mxu0 %v1318
        %3540 = vmatpush1.msra.mxu0 %v1317
        %3541 = vmatprep.subr.mxu0 %v1322
        %3542 = vmatpush1.msra.mxu0 %v1321
        %3543 = vmatprep.subr.mxu0 %v1326
        %3544 = vmatpush1.msra.mxu0 %v1325
        %3545 = vmatprep.subr.mxu0 %v1330
        %3546 = vmatpush1.msra.mxu0 %v1329
        %3547 = vmatprep.subr.mxu0 %v1334
        %3548 = vmatpush1.msra.mxu0 %v1333
        %3549 = vmatprep.subr.mxu0 %v1338
        %3550 = vmatpush1.msra.mxu0 %v1337
        %3551 = vmatprep.subr.mxu0 %v1342
        %3552 = vmatpush1.msra.mxu0 %v1341
        %3553 = vmatprep.subr.mxu0 %v1346
        %3554 = vmatpush1.msra.mxu0 %v1345
        %3555 = vmatprep.subr.mxu0 %v1350
        %3556 = vmatpush1.msra.mxu0 %v1349
        %3557 = vmatprep.subr.mxu0 %v1354
        %3558 = vmatpush1.msra.mxu0 %v1353
        %3559 = vmatprep.subr.mxu0 %v1358
        %3560 = vmatpush1.msra.mxu0 %v1357
        %3561 = vmatprep.subr.mxu0 %v1362
        %3562 = vmatpush1.msra.mxu0 %v1361
        %3563 = vmatprep.subr.mxu0 %v1366
        %3564 = vmatpush1.msra.mxu0 %v1365
        %3565 = vmatprep.subr.mxu0 %v1370
        %3566 = vmatpush1.msra.mxu0 %v1369
        %3567 = vmatprep.subr.mxu0 %v1374
        %3568 = vmatpush1.msra.mxu0 %v1373
        %3569 = vmatprep.subr.mxu0 %v1378
        %3570 = vmatpush1.msra.mxu0 %v1377
        %3571 = vmatprep.subr.mxu0 %v1382
        %3572 = vmatpush1.msra.mxu0 %v1381
        %3573 = vmatprep.subr.mxu0 %v1386
        %3574 = vmatpush1.msra.mxu0 %v1385
        %3575 = vmatprep.subr.mxu0 %v1390
        %3576 = vmatpush1.msra.mxu0 %v1389
        %3577 = vmatprep.subr.mxu0 %v1394
        %3578 = vmatpush1.msra.mxu0 %v1393
        %3579 = vmatprep.subr.mxu0 %v1398
        %3580 = vmatpush1.msra.mxu0 %v1397
        %3581 = vmatprep.subr.mxu0 %v1402
        %3582 = vmatpush1.msra.mxu0 %v1401
        %3583 = vmatprep.subr.mxu0 %v1406
        %3584 = vmatpush1.msra.mxu0 %v1405
        %3585 = vmatprep.subr.mxu0 %v1410
        %3586 = vmatpush1.msra.mxu0 %v1409
        %3587 = vmatprep.subr.mxu0 %v1414
        %3588 = vmatpush1.msra.mxu0 %v1413
        %3589 = vmatprep.subr.mxu0 %v1418
        %3590 = vmatpush1.msra.mxu0 %v1417
        %3591 = vmatprep.subr.mxu0 %v1422
        %3592 = vmatpush1.msra.mxu0 %v1421
        %3593 = vmatprep.subr.mxu0 %v1426
        %3594 = vmatpush1.msra.mxu0 %v1425
        %3595 = vmatprep.subr.mxu0 %v1430
        %3596 = vmatpush1.msra.mxu0 %v1429
        %3597 = vmatprep.subr.mxu0 %v1434
        %3598 = vmatpush1.msra.mxu0 %v1433
        %3599 = vmatprep.subr.mxu0 %v1438
        %3600 = vmatpush1.msra.mxu0 %v1437
        %3601 = vmatprep.mubr.f32.mxu0 %v3384
        %3602 = vmatmul.mubr.f32.gmra.mrb[0].mxu0 %v3376
        %v3603 = vpop.f32.mrb[0].mxu0
        %v3604 = vadd.f32 0.0, %v3603
        %v3605 = vpop.f32.mrb[0].mxu0
        %v3606 = vadd.f32 0.0, %v3605
        %3607 = vdwg.mxu0
        %3608 = vmatprep.subr.mxu0 %v1442
        %3609 = vmatpush1.msra.mxu0 %v1441
        %3610 = vmatprep.subr.mxu0 %v1446
        %3611 = vmatpush1.msra.mxu0 %v1445
        %3612 = vmatprep.subr.mxu0 %v1450
        %3613 = vmatpush1.msra.mxu0 %v1449
        %3614 = vmatprep.subr.mxu0 %v1454
        %3615 = vmatpush1.msra.mxu0 %v1453
        %3616 = vmatprep.subr.mxu0 %v1458
        %3617 = vmatpush1.msra.mxu0 %v1457
        %3618 = vmatprep.subr.mxu0 %v1462
        %3619 = vmatpush1.msra.mxu0 %v1461
        %3620 = vmatprep.subr.mxu0 %v1466
        %3621 = vmatpush1.msra.mxu0 %v1465
        %3622 = vmatprep.subr.mxu0 %v1470
        %3623 = vmatpush1.msra.mxu0 %v1469
        %3624 = vmatprep.subr.mxu0 %v1474
        %3625 = vmatpush1.msra.mxu0 %v1473
        %3626 = vmatprep.subr.mxu0 %v1478
        %3627 = vmatpush1.msra.mxu0 %v1477
        %3628 = vmatprep.subr.mxu0 %v1482
        %3629 = vmatpush1.msra.mxu0 %v1481
        %3630 = vmatprep.subr.mxu0 %v1486
        %3631 = vmatpush1.msra.mxu0 %v1485
        %3632 = vmatprep.subr.mxu0 %v1490
        %3633 = vmatpush1.msra.mxu0 %v1489
        %3634 = vmatprep.subr.mxu0 %v1494
        %3635 = vmatpush1.msra.mxu0 %v1493
        %3636 = vmatprep.subr.mxu0 %v1498
        %3637 = vmatpush1.msra.mxu0 %v1497
        %3638 = vmatprep.subr.mxu0 %v1502
        %3639 = vmatpush1.msra.mxu0 %v1501
        %3640 = vmatprep.subr.mxu0 %v1506
        %3641 = vmatpush1.msra.mxu0 %v1505
        %3642 = vmatprep.subr.mxu0 %v1510
        %3643 = vmatpush1.msra.mxu0 %v1509
        %3644 = vmatprep.subr.mxu0 %v1514
        %3645 = vmatpush1.msra.mxu0 %v1513
        %3646 = vmatprep.subr.mxu0 %v1518
        %3647 = vmatpush1.msra.mxu0 %v1517
        %3648 = vmatprep.subr.mxu0 %v1522
        %3649 = vmatpush1.msra.mxu0 %v1521
        %3650 = vmatprep.subr.mxu0 %v1526
        %3651 = vmatpush1.msra.mxu0 %v1525
        %3652 = vmatprep.subr.mxu0 %v1530
        %3653 = vmatpush1.msra.mxu0 %v1529
        %3654 = vmatprep.subr.mxu0 %v1534
        %3655 = vmatpush1.msra.mxu0 %v1533
        %3656 = vmatprep.subr.mxu0 %v1538
        %3657 = vmatpush1.msra.mxu0 %v1537
        %3658 = vmatprep.subr.mxu0 %v1542
        %3659 = vmatpush1.msra.mxu0 %v1541
        %3660 = vmatprep.subr.mxu0 %v1546
        %3661 = vmatpush1.msra.mxu0 %v1545
        %3662 = vmatprep.subr.mxu0 %v1550
        %3663 = vmatpush1.msra.mxu0 %v1549
        %3664 = vmatprep.subr.mxu0 %v1554
        %3665 = vmatpush1.msra.mxu0 %v1553
        %3666 = vmatprep.subr.mxu0 %v1558
        %3667 = vmatpush1.msra.mxu0 %v1557
        %3668 = vmatprep.subr.mxu0 %v1562
        %3669 = vmatpush1.msra.mxu0 %v1561
        %3670 = vmatprep.subr.mxu0 %v1566
        %3671 = vmatpush1.msra.mxu0 %v1565
        %3672 = vmatprep.mubr.f32.mxu0 %v3385
        %3673 = vmatmul.mubr.f32.gmra.mrb[0].mxu0 %v3383
        %v3674 = vpop.f32.mrb[0].mxu0
        %v3675 = vadd.f32 %v3604, %v3674
        %v3676 = vpop.f32.mrb[0].mxu0
        %v3677 = vadd.f32 %v3606, %v3676
        %3678 = vdwg.mxu0
        %3679 = vmatprep.subr.mxu0 %v1570
        %3680 = vmatpush1.msra.mxu0 %v1569
        %3681 = vmatprep.subr.mxu0 %v1574
        %3682 = vmatpush1.msra.mxu0 %v1573
        %3683 = vmatprep.subr.mxu0 %v1578
        %3684 = vmatpush1.msra.mxu0 %v1577
        %3685 = vmatprep.subr.mxu0 %v1582
        %3686 = vmatpush1.msra.mxu0 %v1581
        %3687 = vmatprep.subr.mxu0 %v1586
        %3688 = vmatpush1.msra.mxu0 %v1585
        %3689 = vmatprep.subr.mxu0 %v1590
        %3690 = vmatpush1.msra.mxu0 %v1589
        %3691 = vmatprep.subr.mxu0 %v1594
        %3692 = vmatpush1.msra.mxu0 %v1593
        %3693 = vmatprep.subr.mxu0 %v1598
        %3694 = vmatpush1.msra.mxu0 %v1597
        %3695 = vmatprep.subr.mxu0 %v1602
        %3696 = vmatpush1.msra.mxu0 %v1601
        %3697 = vmatprep.subr.mxu0 %v1606
        %3698 = vmatpush1.msra.mxu0 %v1605
        %3699 = vmatprep.subr.mxu0 %v1610
        %3700 = vmatpush1.msra.mxu0 %v1609
        %3701 = vmatprep.subr.mxu0 %v1614
        %3702 = vmatpush1.msra.mxu0 %v1613
        %3703 = vmatprep.subr.mxu0 %v1618
        %3704 = vmatpush1.msra.mxu0 %v1617
        %3705 = vmatprep.subr.mxu0 %v1622
        %3706 = vmatpush1.msra.mxu0 %v1621
        %3707 = vmatprep.subr.mxu0 %v1626
        %3708 = vmatpush1.msra.mxu0 %v1625
        %3709 = vmatprep.subr.mxu0 %v1630
        %3710 = vmatpush1.msra.mxu0 %v1629
        %3711 = vmatprep.subr.mxu0 %v1634
        %3712 = vmatpush1.msra.mxu0 %v1633
        %3713 = vmatprep.subr.mxu0 %v1638
        %3714 = vmatpush1.msra.mxu0 %v1637
        %3715 = vmatprep.subr.mxu0 %v1642
        %3716 = vmatpush1.msra.mxu0 %v1641
        %3717 = vmatprep.subr.mxu0 %v1646
        %3718 = vmatpush1.msra.mxu0 %v1645
        %3719 = vmatprep.subr.mxu0 %v1650
        %3720 = vmatpush1.msra.mxu0 %v1649
        %3721 = vmatprep.subr.mxu0 %v1654
        %3722 = vmatpush1.msra.mxu0 %v1653
        %3723 = vmatprep.subr.mxu0 %v1658
        %3724 = vmatpush1.msra.mxu0 %v1657
        %3725 = vmatprep.subr.mxu0 %v1662
        %3726 = vmatpush1.msra.mxu0 %v1661
        %3727 = vmatprep.subr.mxu0 %v1666
        %3728 = vmatpush1.msra.mxu0 %v1665
        %3729 = vmatprep.subr.mxu0 %v1670
        %3730 = vmatpush1.msra.mxu0 %v1669
        %3731 = vmatprep.subr.mxu0 %v1674
        %3732 = vmatpush1.msra.mxu0 %v1673
        %3733 = vmatprep.subr.mxu0 %v1678
        %3734 = vmatpush1.msra.mxu0 %v1677
        %3735 = vmatprep.subr.mxu0 %v1682
        %3736 = vmatpush1.msra.mxu0 %v1681
        %3737 = vmatprep.subr.mxu0 %v1686
        %3738 = vmatpush1.msra.mxu0 %v1685
        %3739 = vmatprep.subr.mxu0 %v1690
        %3740 = vmatpush1.msra.mxu0 %v1689
        %3741 = vmatprep.subr.mxu0 %v1694
        %3742 = vmatpush1.msra.mxu0 %v1693
        %3743 = vmatprep.mubr.f32.mxu0 %v3401
        %3744 = vmatmul.mubr.f32.gmra.mrb[0].mxu0 %v3393
        %v3745 = vpop.f32.mrb[0].mxu0
        %v3746 = vadd.f32 %v3675, %v3745
        %v3747 = vpop.f32.mrb[0].mxu0
        %v3748 = vadd.f32 %v3677, %v3747
        %3749 = vdwg.mxu0
        %3750 = vmatprep.subr.mxu0 %v1698
        %3751 = vmatpush1.msra.mxu0 %v1697
        %3752 = vmatprep.subr.mxu0 %v1702
        %3753 = vmatpush1.msra.mxu0 %v1701
        %3754 = vmatprep.subr.mxu0 %v1706
        %3755 = vmatpush1.msra.mxu0 %v1705
        %3756 = vmatprep.subr.mxu0 %v1710
        %3757 = vmatpush1.msra.mxu0 %v1709
        %3758 = vmatprep.subr.mxu0 %v1714
        %3759 = vmatpush1.msra.mxu0 %v1713
        %3760 = vmatprep.subr.mxu0 %v1718
        %3761 = vmatpush1.msra.mxu0 %v1717
        %3762 = vmatprep.subr.mxu0 %v1722
        %3763 = vmatpush1.msra.mxu0 %v1721
        %3764 = vmatprep.subr.mxu0 %v1726
        %3765 = vmatpush1.msra.mxu0 %v1725
        %3766 = vmatprep.subr.mxu0 %v1730
        %3767 = vmatpush1.msra.mxu0 %v1729
        %3768 = vmatprep.subr.mxu0 %v1734
        %3769 = vmatpush1.msra.mxu0 %v1733
        %3770 = vmatprep.subr.mxu0 %v1738
        %3771 = vmatpush1.msra.mxu0 %v1737
        %3772 = vmatprep.subr.mxu0 %v1742
        %3773 = vmatpush1.msra.mxu0 %v1741
        %3774 = vmatprep.subr.mxu0 %v1746
        %3775 = vmatpush1.msra.mxu0 %v1745
        %3776 = vmatprep.subr.mxu0 %v1750
        %3777 = vmatpush1.msra.mxu0 %v1749
        %3778 = vmatprep.subr.mxu0 %v1754
        %3779 = vmatpush1.msra.mxu0 %v1753
        %3780 = vmatprep.subr.mxu0 %v1758
        %3781 = vmatpush1.msra.mxu0 %v1757
        %3782 = vmatprep.subr.mxu0 %v1762
        %3783 = vmatpush1.msra.mxu0 %v1761
        %3784 = vmatprep.subr.mxu0 %v1766
        %3785 = vmatpush1.msra.mxu0 %v1765
        %3786 = vmatprep.subr.mxu0 %v1770
        %3787 = vmatpush1.msra.mxu0 %v1769
        %3788 = vmatprep.subr.mxu0 %v1774
        %3789 = vmatpush1.msra.mxu0 %v1773
        %3790 = vmatprep.subr.mxu0 %v1778
        %3791 = vmatpush1.msra.mxu0 %v1777
        %3792 = vmatprep.subr.mxu0 %v1782
        %3793 = vmatpush1.msra.mxu0 %v1781
        %3794 = vmatprep.subr.mxu0 %v1786
        %3795 = vmatpush1.msra.mxu0 %v1785
        %3796 = vmatprep.subr.mxu0 %v1790
        %3797 = vmatpush1.msra.mxu0 %v1789
        %3798 = vmatprep.subr.mxu0 %v1794
        %3799 = vmatpush1.msra.mxu0 %v1793
        %3800 = vmatprep.subr.mxu0 %v1798
        %3801 = vmatpush1.msra.mxu0 %v1797
        %3802 = vmatprep.subr.mxu0 %v1802
        %3803 = vmatpush1.msra.mxu0 %v1801
        %3804 = vmatprep.subr.mxu0 %v1806
        %3805 = vmatpush1.msra.mxu0 %v1805
        %3806 = vmatprep.subr.mxu0 %v1810
        %3807 = vmatpush1.msra.mxu0 %v1809
        %3808 = vmatprep.subr.mxu0 %v1814
        %3809 = vmatpush1.msra.mxu0 %v1813
        %3810 = vmatprep.subr.mxu0 %v1818
        %3811 = vmatpush1.msra.mxu0 %v1817
        %3812 = vmatprep.subr.mxu0 %v1822
        %3813 = vmatpush1.msra.mxu0 %v1821
        %3814 = vmatprep.mubr.f32.mxu0 %v3402
        %3815 = vmatmul.mubr.f32.gmra.mrb[0].mxu0 %v3400
        %v3816 = vpop.f32.mrb[0].mxu0
        %v3817 = vadd.f32 %v3746, %v3816
        %v3818 = vpop.f32.mrb[0].mxu0
        %v3819 = vadd.f32 %v3748, %v3818
        %3820 = vdwg.mxu0
        %3821 = vmatprep.subr.mxu0 %v1826
        %3822 = vmatpush1.msra.mxu0 %v1825
        %3823 = vmatprep.subr.mxu0 %v1830
        %3824 = vmatpush1.msra.mxu0 %v1829
        %3825 = vmatprep.subr.mxu0 %v1834
        %3826 = vmatpush1.msra.mxu0 %v1833
        %3827 = vmatprep.subr.mxu0 %v1838
        %3828 = vmatpush1.msra.mxu0 %v1837
        %3829 = vmatprep.subr.mxu0 %v1842
        %3830 = vmatpush1.msra.mxu0 %v1841
        %3831 = vmatprep.subr.mxu0 %v1846
        %3832 = vmatpush1.msra.mxu0 %v1845
        %3833 = vmatprep.subr.mxu0 %v1850
        %3834 = vmatpush1.msra.mxu0 %v1849
        %3835 = vmatprep.subr.mxu0 %v1854
        %3836 = vmatpush1.msra.mxu0 %v1853
        %3837 = vmatprep.subr.mxu0 %v1858
        %3838 = vmatpush1.msra.mxu0 %v1857
        %3839 = vmatprep.subr.mxu0 %v1862
        %3840 = vmatpush1.msra.mxu0 %v1861
        %3841 = vmatprep.subr.mxu0 %v1866
        %3842 = vmatpush1.msra.mxu0 %v1865
        %3843 = vmatprep.subr.mxu0 %v1870
        %3844 = vmatpush1.msra.mxu0 %v1869
        %3845 = vmatprep.subr.mxu0 %v1874
        %3846 = vmatpush1.msra.mxu0 %v1873
        %3847 = vmatprep.subr.mxu0 %v1878
        %3848 = vmatpush1.msra.mxu0 %v1877
        %3849 = vmatprep.subr.mxu0 %v1882
        %3850 = vmatpush1.msra.mxu0 %v1881
        %3851 = vmatprep.subr.mxu0 %v1886
        %3852 = vmatpush1.msra.mxu0 %v1885
        %3853 = vmatprep.subr.mxu0 %v1890
        %3854 = vmatpush1.msra.mxu0 %v1889
        %3855 = vmatprep.subr.mxu0 %v1894
        %3856 = vmatpush1.msra.mxu0 %v1893
        %3857 = vmatprep.subr.mxu0 %v1898
        %3858 = vmatpush1.msra.mxu0 %v1897
        %3859 = vmatprep.subr.mxu0 %v1902
        %3860 = vmatpush1.msra.mxu0 %v1901
        %3861 = vmatprep.subr.mxu0 %v1906
        %3862 = vmatpush1.msra.mxu0 %v1905
        %3863 = vmatprep.subr.mxu0 %v1910
        %3864 = vmatpush1.msra.mxu0 %v1909
        %3865 = vmatprep.subr.mxu0 %v1914
        %3866 = vmatpush1.msra.mxu0 %v1913
        %3867 = vmatprep.subr.mxu0 %v1918
        %3868 = vmatpush1.msra.mxu0 %v1917
        %3869 = vmatprep.subr.mxu0 %v1922
        %3870 = vmatpush1.msra.mxu0 %v1921
        %3871 = vmatprep.subr.mxu0 %v1926
        %3872 = vmatpush1.msra.mxu0 %v1925
        %3873 = vmatprep.subr.mxu0 %v1930
        %3874 = vmatpush1.msra.mxu0 %v1929
        %3875 = vmatprep.subr.mxu0 %v1934
        %3876 = vmatpush1.msra.mxu0 %v1933
        %3877 = vmatprep.subr.mxu0 %v1938
        %3878 = vmatpush1.msra.mxu0 %v1937
        %3879 = vmatprep.subr.mxu0 %v1942
        %3880 = vmatpush1.msra.mxu0 %v1941
        %3881 = vmatprep.subr.mxu0 %v1946
        %3882 = vmatpush1.msra.mxu0 %v1945
        %3883 = vmatprep.subr.mxu0 %v1950
        %3884 = vmatpush1.msra.mxu0 %v1949
        %3885 = vmatprep.mubr.f32.mxu0 %v3418
        %3886 = vmatmul.mubr.f32.gmra.mrb[0].mxu0 %v3410
        %v3887 = vpop.f32.mrb[0].mxu0
        %v3888 = vadd.f32 %v3817, %v3887
        %v3889 = vpop.f32.mrb[0].mxu0
        %v3890 = vadd.f32 %v3819, %v3889
        %3891 = vdwg.mxu0
        %3892 = vmatprep.subr.mxu0 %v1954
        %3893 = vmatpush1.msra.mxu0 %v1953
        %3894 = vmatprep.subr.mxu0 %v1958
        %3895 = vmatpush1.msra.mxu0 %v1957
        %3896 = vmatprep.subr.mxu0 %v1962
        %3897 = vmatpush1.msra.mxu0 %v1961
        %3898 = vmatprep.subr.mxu0 %v1966
        %3899 = vmatpush1.msra.mxu0 %v1965
        %3900 = vmatprep.subr.mxu0 %v1970
        %3901 = vmatpush1.msra.mxu0 %v1969
        %3902 = vmatprep.subr.mxu0 %v1974
        %3903 = vmatpush1.msra.mxu0 %v1973
        %3904 = vmatprep.subr.mxu0 %v1978
        %3905 = vmatpush1.msra.mxu0 %v1977
        %3906 = vmatprep.subr.mxu0 %v1982
        %3907 = vmatpush1.msra.mxu0 %v1981
        %3908 = vmatprep.subr.mxu0 %v1986
        %3909 = vmatpush1.msra.mxu0 %v1985
        %3910 = vmatprep.subr.mxu0 %v1990
        %3911 = vmatpush1.msra.mxu0 %v1989
        %3912 = vmatprep.subr.mxu0 %v1994
        %3913 = vmatpush1.msra.mxu0 %v1993
        %3914 = vmatprep.subr.mxu0 %v1998
        %3915 = vmatpush1.msra.mxu0 %v1997
        %3916 = vmatprep.subr.mxu0 %v2002
        %3917 = vmatpush1.msra.mxu0 %v2001
        %3918 = vmatprep.subr.mxu0 %v2006
        %3919 = vmatpush1.msra.mxu0 %v2005
        %3920 = vmatprep.subr.mxu0 %v2010
        %3921 = vmatpush1.msra.mxu0 %v2009
        %3922 = vmatprep.subr.mxu0 %v2014
        %3923 = vmatpush1.msra.mxu0 %v2013
        %3924 = vmatprep.subr.mxu0 %v2018
        %3925 = vmatpush1.msra.mxu0 %v2017
        %3926 = vmatprep.subr.mxu0 %v2022
        %3927 = vmatpush1.msra.mxu0 %v2021
        %3928 = vmatprep.subr.mxu0 %v2026
        %3929 = vmatpush1.msra.mxu0 %v2025
        %3930 = vmatprep.subr.mxu0 %v2030
        %3931 = vmatpush1.msra.mxu0 %v2029
        %3932 = vmatprep.subr.mxu0 %v2034
        %3933 = vmatpush1.msra.mxu0 %v2033
        %3934 = vmatprep.subr.mxu0 %v2038
        %3935 = vmatpush1.msra.mxu0 %v2037
        %3936 = vmatprep.subr.mxu0 %v2042
        %3937 = vmatpush1.msra.mxu0 %v2041
        %3938 = vmatprep.subr.mxu0 %v2046
        %3939 = vmatpush1.msra.mxu0 %v2045
        %3940 = vmatprep.subr.mxu0 %v2050
        %3941 = vmatpush1.msra.mxu0 %v2049
        %3942 = vmatprep.subr.mxu0 %v2054
        %3943 = vmatpush1.msra.mxu0 %v2053
        %3944 = vmatprep.subr.mxu0 %v2058
        %3945 = vmatpush1.msra.mxu0 %v2057
        %3946 = vmatprep.subr.mxu0 %v2062
        %3947 = vmatpush1.msra.mxu0 %v2061
        %3948 = vmatprep.subr.mxu0 %v2066
        %3949 = vmatpush1.msra.mxu0 %v2065
        %3950 = vmatprep.subr.mxu0 %v2070
        %3951 = vmatpush1.msra.mxu0 %v2069
        %3952 = vmatprep.subr.mxu0 %v2074
        %3953 = vmatpush1.msra.mxu0 %v2073
        %3954 = vmatprep.subr.mxu0 %v2078
        %3955 = vmatpush1.msra.mxu0 %v2077
        %3956 = vmatprep.mubr.f32.mxu0 %v3419
        %3957 = vmatmul.mubr.f32.gmra.mrb[0].mxu0 %v3417
        %v3958 = vpop.f32.mrb[0].mxu0
        %v3959 = vadd.f32 %v3888, %v3958
        %v3960 = vpop.f32.mrb[0].mxu0
        %v3961 = vadd.f32 %v3890, %v3960
        %3962 = vdwg.mxu0
        %3963 = vmatprep.subr.mxu0 %v2082
        %3964 = vmatpush1.msra.mxu0 %v2081
        %3965 = vmatprep.subr.mxu0 %v2086
        %3966 = vmatpush1.msra.mxu0 %v2085
        %3967 = vmatprep.subr.mxu0 %v2090
        %3968 = vmatpush1.msra.mxu0 %v2089
        %3969 = vmatprep.subr.mxu0 %v2094
        %3970 = vmatpush1.msra.mxu0 %v2093
        %3971 = vmatprep.subr.mxu0 %v2098
        %3972 = vmatpush1.msra.mxu0 %v2097
        %3973 = vmatprep.subr.mxu0 %v2102
        %3974 = vmatpush1.msra.mxu0 %v2101
        %3975 = vmatprep.subr.mxu0 %v2106
        %3976 = vmatpush1.msra.mxu0 %v2105
        %3977 = vmatprep.subr.mxu0 %v2110
        %3978 = vmatpush1.msra.mxu0 %v2109
        %3979 = vmatprep.subr.mxu0 %v2114
        %3980 = vmatpush1.msra.mxu0 %v2113
        %3981 = vmatprep.subr.mxu0 %v2118
        %3982 = vmatpush1.msra.mxu0 %v2117
        %3983 = vmatprep.subr.mxu0 %v2122
        %3984 = vmatpush1.msra.mxu0 %v2121
        %3985 = vmatprep.subr.mxu0 %v2126
        %3986 = vmatpush1.msra.mxu0 %v2125
        %3987 = vmatprep.subr.mxu0 %v2130
        %3988 = vmatpush1.msra.mxu0 %v2129
        %3989 = vmatprep.subr.mxu0 %v2134
        %3990 = vmatpush1.msra.mxu0 %v2133
        %3991 = vmatprep.subr.mxu0 %v2138
        %3992 = vmatpush1.msra.mxu0 %v2137
        %3993 = vmatprep.subr.mxu0 %v2142
        %3994 = vmatpush1.msra.mxu0 %v2141
        %3995 = vmatprep.subr.mxu0 %v2146
        %3996 = vmatpush1.msra.mxu0 %v2145
        %3997 = vmatprep.subr.mxu0 %v2150
        %3998 = vmatpush1.msra.mxu0 %v2149
        %3999 = vmatprep.subr.mxu0 %v2154
        %4000 = vmatpush1.msra.mxu0 %v2153
        %4001 = vmatprep.subr.mxu0 %v2158
        %4002 = vmatpush1.msra.mxu0 %v2157
        %4003 = vmatprep.subr.mxu0 %v2162
        %4004 = vmatpush1.msra.mxu0 %v2161
        %4005 = vmatprep.subr.mxu0 %v2166
        %4006 = vmatpush1.msra.mxu0 %v2165
        %4007 = vmatprep.subr.mxu0 %v2170
        %4008 = vmatpush1.msra.mxu0 %v2169
        %4009 = vmatprep.subr.mxu0 %v2174
        %4010 = vmatpush1.msra.mxu0 %v2173
        %4011 = vmatprep.subr.mxu0 %v2178
        %4012 = vmatpush1.msra.mxu0 %v2177
        %4013 = vmatprep.subr.mxu0 %v2182
        %4014 = vmatpush1.msra.mxu0 %v2181
        %4015 = vmatprep.subr.mxu0 %v2186
        %4016 = vmatpush1.msra.mxu0 %v2185
        %4017 = vmatprep.subr.mxu0 %v2190
        %4018 = vmatpush1.msra.mxu0 %v2189
        %4019 = vmatprep.subr.mxu0 %v2194
        %4020 = vmatpush1.msra.mxu0 %v2193
        %4021 = vmatprep.subr.mxu0 %v2198
        %4022 = vmatpush1.msra.mxu0 %v2197
        %4023 = vmatprep.subr.mxu0 %v2202
        %4024 = vmatpush1.msra.mxu0 %v2201
        %4025 = vmatprep.subr.mxu0 %v2206
        %4026 = vmatpush1.msra.mxu0 %v2205
        %4027 = vmatprep.mubr.f32.mxu0 %v3435
        %4028 = vmatmul.mubr.f32.gmra.mrb[0].mxu0 %v3427
        %v4029 = vpop.f32.mrb[0].mxu0
        %v4030 = vadd.f32 %v3959, %v4029
        %v4031 = vpop.f32.mrb[0].mxu0
        %v4032 = vadd.f32 %v3961, %v4031
        %4033 = vdwg.mxu0
        %4034 = vmatprep.subr.mxu0 %v2210
        %4035 = vmatpush1.msra.mxu0 %v2209
        %4036 = vmatprep.subr.mxu0 %v2214
        %4037 = vmatpush1.msra.mxu0 %v2213
        %4038 = vmatprep.subr.mxu0 %v2218
        %4039 = vmatpush1.msra.mxu0 %v2217
        %4040 = vmatprep.subr.mxu0 %v2222
        %4041 = vmatpush1.msra.mxu0 %v2221
        %4042 = vmatprep.subr.mxu0 %v2226
        %4043 = vmatpush1.msra.mxu0 %v2225
        %4044 = vmatprep.subr.mxu0 %v2230
        %4045 = vmatpush1.msra.mxu0 %v2229
        %4046 = vmatprep.subr.mxu0 %v2234
        %4047 = vmatpush1.msra.mxu0 %v2233
        %4048 = vmatprep.subr.mxu0 %v2238
        %4049 = vmatpush1.msra.mxu0 %v2237
        %4050 = vmatprep.subr.mxu0 %v2242
        %4051 = vmatpush1.msra.mxu0 %v2241
        %4052 = vmatprep.subr.mxu0 %v2246
        %4053 = vmatpush1.msra.mxu0 %v2245
        %4054 = vmatprep.subr.mxu0 %v2250
        %4055 = vmatpush1.msra.mxu0 %v2249
        %4056 = vmatprep.subr.mxu0 %v2254
        %4057 = vmatpush1.msra.mxu0 %v2253
        %4058 = vmatprep.subr.mxu0 %v2258
        %4059 = vmatpush1.msra.mxu0 %v2257
        %4060 = vmatprep.subr.mxu0 %v2262
        %4061 = vmatpush1.msra.mxu0 %v2261
        %4062 = vmatprep.subr.mxu0 %v2266
        %4063 = vmatpush1.msra.mxu0 %v2265
        %4064 = vmatprep.subr.mxu0 %v2270
        %4065 = vmatpush1.msra.mxu0 %v2269
        %4066 = vmatprep.subr.mxu0 %v2274
        %4067 = vmatpush1.msra.mxu0 %v2273
        %4068 = vmatprep.subr.mxu0 %v2278
        %4069 = vmatpush1.msra.mxu0 %v2277
        %4070 = vmatprep.subr.mxu0 %v2282
        %4071 = vmatpush1.msra.mxu0 %v2281
        %4072 = vmatprep.subr.mxu0 %v2286
        %4073 = vmatpush1.msra.mxu0 %v2285
        %4074 = vmatprep.subr.mxu0 %v2290
        %4075 = vmatpush1.msra.mxu0 %v2289
        %4076 = vmatprep.subr.mxu0 %v2294
        %4077 = vmatpush1.msra.mxu0 %v2293
        %4078 = vmatprep.subr.mxu0 %v2298
        %4079 = vmatpush1.msra.mxu0 %v2297
        %4080 = vmatprep.subr.mxu0 %v2302
        %4081 = vmatpush1.msra.mxu0 %v2301
        %4082 = vmatprep.subr.mxu0 %v2306
        %4083 = vmatpush1.msra.mxu0 %v2305
        %4084 = vmatprep.subr.mxu0 %v2310
        %4085 = vmatpush1.msra.mxu0 %v2309
        %4086 = vmatprep.subr.mxu0 %v2314
        %4087 = vmatpush1.msra.mxu0 %v2313
        %4088 = vmatprep.subr.mxu0 %v2318
        %4089 = vmatpush1.msra.mxu0 %v2317
        %4090 = vmatprep.subr.mxu0 %v2322
        %4091 = vmatpush1.msra.mxu0 %v2321
        %4092 = vmatprep.subr.mxu0 %v2326
        %4093 = vmatpush1.msra.mxu0 %v2325
        %4094 = vmatprep.subr.mxu0 %v2330
        %4095 = vmatpush1.msra.mxu0 %v2329
        %4096 = vmatprep.subr.mxu0 %v2334
        %4097 = vmatpush1.msra.mxu0 %v2333
        %4098 = vmatprep.mubr.f32.mxu0 %v3436
        %4099 = vmatmul.mubr.f32.gmra.mrb[0].mxu0 %v3434
        %v4100 = vpop.f32.mrb[0].mxu0
        %v4101 = vadd.f32 %v4030, %v4100
        %v4102 = vpop.f32.mrb[0].mxu0
        %v4103 = vadd.f32 %v4032, %v4102
        %4104 = vdwg.mxu0
        %4105 = vmatprep.subr.mxu0 %v2338
        %4106 = vmatpush1.msra.mxu0 %v2337
        %4107 = vmatprep.subr.mxu0 %v2342
        %4108 = vmatpush1.msra.mxu0 %v2341
        %4109 = vmatprep.subr.mxu0 %v2346
        %4110 = vmatpush1.msra.mxu0 %v2345
        %4111 = vmatprep.subr.mxu0 %v2350
        %4112 = vmatpush1.msra.mxu0 %v2349
        %4113 = vmatprep.subr.mxu0 %v2354
        %4114 = vmatpush1.msra.mxu0 %v2353
        %4115 = vmatprep.subr.mxu0 %v2358
        %4116 = vmatpush1.msra.mxu0 %v2357
        %4117 = vmatprep.subr.mxu0 %v2362
        %4118 = vmatpush1.msra.mxu0 %v2361
        %4119 = vmatprep.subr.mxu0 %v2366
        %4120 = vmatpush1.msra.mxu0 %v2365
        %4121 = vmatprep.subr.mxu0 %v2370
        %4122 = vmatpush1.msra.mxu0 %v2369
        %4123 = vmatprep.subr.mxu0 %v2374
        %4124 = vmatpush1.msra.mxu0 %v2373
        %4125 = vmatprep.subr.mxu0 %v2378
        %4126 = vmatpush1.msra.mxu0 %v2377
        %4127 = vmatprep.subr.mxu0 %v2382
        %4128 = vmatpush1.msra.mxu0 %v2381
        %4129 = vmatprep.subr.mxu0 %v2386
        %4130 = vmatpush1.msra.mxu0 %v2385
        %4131 = vmatprep.subr.mxu0 %v2390
        %4132 = vmatpush1.msra.mxu0 %v2389
        %4133 = vmatprep.subr.mxu0 %v2394
        %4134 = vmatpush1.msra.mxu0 %v2393
        %4135 = vmatprep.subr.mxu0 %v2398
        %4136 = vmatpush1.msra.mxu0 %v2397
        %4137 = vmatprep.subr.mxu0 %v2402
        %4138 = vmatpush1.msra.mxu0 %v2401
        %4139 = vmatprep.subr.mxu0 %v2406
        %4140 = vmatpush1.msra.mxu0 %v2405
        %4141 = vmatprep.subr.mxu0 %v2410
        %4142 = vmatpush1.msra.mxu0 %v2409
        %4143 = vmatprep.subr.mxu0 %v2414
        %4144 = vmatpush1.msra.mxu0 %v2413
        %4145 = vmatprep.subr.mxu0 %v2418
        %4146 = vmatpush1.msra.mxu0 %v2417
        %4147 = vmatprep.subr.mxu0 %v2422
        %4148 = vmatpush1.msra.mxu0 %v2421
        %4149 = vmatprep.subr.mxu0 %v2426
        %4150 = vmatpush1.msra.mxu0 %v2425
        %4151 = vmatprep.subr.mxu0 %v2430
        %4152 = vmatpush1.msra.mxu0 %v2429
        %4153 = vmatprep.subr.mxu0 %v2434
        %4154 = vmatpush1.msra.mxu0 %v2433
        %4155 = vmatprep.subr.mxu0 %v2438
        %4156 = vmatpush1.msra.mxu0 %v2437
        %4157 = vmatprep.subr.mxu0 %v2442
        %4158 = vmatpush1.msra.mxu0 %v2441
        %4159 = vmatprep.subr.mxu0 %v2446
        %4160 = vmatpush1.msra.mxu0 %v2445
        %4161 = vmatprep.subr.mxu0 %v2450
        %4162 = vmatpush1.msra.mxu0 %v2449
        %4163 = vmatprep.subr.mxu0 %v2454
        %4164 = vmatpush1.msra.mxu0 %v2453
        %4165 = vmatprep.subr.mxu0 %v2458
        %4166 = vmatpush1.msra.mxu0 %v2457
        %4167 = vmatprep.subr.mxu0 %v2462
        %4168 = vmatpush1.msra.mxu0 %v2461
        %4169 = vmatprep.mubr.f32.mxu0 %v3452
        %4170 = vmatmul.mubr.f32.gmra.mrb[0].mxu0 %v3444
        %v4171 = vpop.f32.mrb[0].mxu0
        %v4172 = vadd.f32 %v4101, %v4171
        %v4173 = vpop.f32.mrb[0].mxu0
        %v4174 = vadd.f32 %v4103, %v4173
        %4175 = vdwg.mxu0
        %4176 = vmatprep.subr.mxu0 %v2466
        %4177 = vmatpush1.msra.mxu0 %v2465
        %4178 = vmatprep.subr.mxu0 %v2470
        %4179 = vmatpush1.msra.mxu0 %v2469
        %4180 = vmatprep.subr.mxu0 %v2474
        %4181 = vmatpush1.msra.mxu0 %v2473
        %4182 = vmatprep.subr.mxu0 %v2478
        %4183 = vmatpush1.msra.mxu0 %v2477
        %4184 = vmatprep.subr.mxu0 %v2482
        %4185 = vmatpush1.msra.mxu0 %v2481
        %4186 = vmatprep.subr.mxu0 %v2486
        %4187 = vmatpush1.msra.mxu0 %v2485
        %4188 = vmatprep.subr.mxu0 %v2490
        %4189 = vmatpush1.msra.mxu0 %v2489
        %4190 = vmatprep.subr.mxu0 %v2494
        %4191 = vmatpush1.msra.mxu0 %v2493
        %4192 = vmatprep.subr.mxu0 %v2498
        %4193 = vmatpush1.msra.mxu0 %v2497
        %4194 = vmatprep.subr.mxu0 %v2502
        %4195 = vmatpush1.msra.mxu0 %v2501
        %4196 = vmatprep.subr.mxu0 %v2506
        %4197 = vmatpush1.msra.mxu0 %v2505
        %4198 = vmatprep.subr.mxu0 %v2510
        %4199 = vmatpush1.msra.mxu0 %v2509
        %4200 = vmatprep.subr.mxu0 %v2514
        %4201 = vmatpush1.msra.mxu0 %v2513
        %4202 = vmatprep.subr.mxu0 %v2518
        %4203 = vmatpush1.msra.mxu0 %v2517
        %4204 = vmatprep.subr.mxu0 %v2522
        %4205 = vmatpush1.msra.mxu0 %v2521
        %4206 = vmatprep.subr.mxu0 %v2526
        %4207 = vmatpush1.msra.mxu0 %v2525
        %4208 = vmatprep.subr.mxu0 %v2530
        %4209 = vmatpush1.msra.mxu0 %v2529
        %4210 = vmatprep.subr.mxu0 %v2534
        %4211 = vmatpush1.msra.mxu0 %v2533
        %4212 = vmatprep.subr.mxu0 %v2538
        %4213 = vmatpush1.msra.mxu0 %v2537
        %4214 = vmatprep.subr.mxu0 %v2542
        %4215 = vmatpush1.msra.mxu0 %v2541
        %4216 = vmatprep.subr.mxu0 %v2546
        %4217 = vmatpush1.msra.mxu0 %v2545
        %4218 = vmatprep.subr.mxu0 %v2550
        %4219 = vmatpush1.msra.mxu0 %v2549
        %4220 = vmatprep.subr.mxu0 %v2554
        %4221 = vmatpush1.msra.mxu0 %v2553
        %4222 = vmatprep.subr.mxu0 %v2558
        %4223 = vmatpush1.msra.mxu0 %v2557
        %4224 = vmatprep.subr.mxu0 %v2562
        %4225 = vmatpush1.msra.mxu0 %v2561
        %4226 = vmatprep.subr.mxu0 %v2566
        %4227 = vmatpush1.msra.mxu0 %v2565
        %4228 = vmatprep.subr.mxu0 %v2570
        %4229 = vmatpush1.msra.mxu0 %v2569
        %4230 = vmatprep.subr.mxu0 %v2574
        %4231 = vmatpush1.msra.mxu0 %v2573
        %4232 = vmatprep.subr.mxu0 %v2578
        %4233 = vmatpush1.msra.mxu0 %v2577
        %4234 = vmatprep.subr.mxu0 %v2582
        %4235 = vmatpush1.msra.mxu0 %v2581
        %4236 = vmatprep.subr.mxu0 %v2586
        %4237 = vmatpush1.msra.mxu0 %v2585
        %4238 = vmatprep.subr.mxu0 %v2590
        %4239 = vmatpush1.msra.mxu0 %v2589
        %4240 = vmatprep.mubr.f32.mxu0 %v3453
        %4241 = vmatmul.mubr.f32.gmra.mrb[0].mxu0 %v3451
        %v4242 = vpop.f32.mrb[0].mxu0
        %v4243 = vadd.f32 %v4172, %v4242
        %v4244 = vpop.f32.mrb[0].mxu0
        %v4245 = vadd.f32 %v4174, %v4244
        %4246 = vdwg.mxu0
        %4247 = vmatprep.subr.mxu0 %v2594
        %4248 = vmatpush1.msra.mxu0 %v2593
        %4249 = vmatprep.subr.mxu0 %v2598
        %4250 = vmatpush1.msra.mxu0 %v2597
        %4251 = vmatprep.subr.mxu0 %v2602
        %4252 = vmatpush1.msra.mxu0 %v2601
        %4253 = vmatprep.subr.mxu0 %v2606
        %4254 = vmatpush1.msra.mxu0 %v2605
        %4255 = vmatprep.subr.mxu0 %v2610
        %4256 = vmatpush1.msra.mxu0 %v2609
        %4257 = vmatprep.subr.mxu0 %v2614
        %4258 = vmatpush1.msra.mxu0 %v2613
        %4259 = vmatprep.subr.mxu0 %v2618
        %4260 = vmatpush1.msra.mxu0 %v2617
        %4261 = vmatprep.subr.mxu0 %v2622
        %4262 = vmatpush1.msra.mxu0 %v2621
        %4263 = vmatprep.subr.mxu0 %v2626
        %4264 = vmatpush1.msra.mxu0 %v2625
        %4265 = vmatprep.subr.mxu0 %v2630
        %4266 = vmatpush1.msra.mxu0 %v2629
        %4267 = vmatprep.subr.mxu0 %v2634
        %4268 = vmatpush1.msra.mxu0 %v2633
        %4269 = vmatprep.subr.mxu0 %v2638
        %4270 = vmatpush1.msra.mxu0 %v2637
        %4271 = vmatprep.subr.mxu0 %v2642
        %4272 = vmatpush1.msra.mxu0 %v2641
        %4273 = vmatprep.subr.mxu0 %v2646
        %4274 = vmatpush1.msra.mxu0 %v2645
        %4275 = vmatprep.subr.mxu0 %v2650
        %4276 = vmatpush1.msra.mxu0 %v2649
        %4277 = vmatprep.subr.mxu0 %v2654
        %4278 = vmatpush1.msra.mxu0 %v2653
        %4279 = vmatprep.subr.mxu0 %v2658
        %4280 = vmatpush1.msra.mxu0 %v2657
        %4281 = vmatprep.subr.mxu0 %v2662
        %4282 = vmatpush1.msra.mxu0 %v2661
        %4283 = vmatprep.subr.mxu0 %v2666
        %4284 = vmatpush1.msra.mxu0 %v2665
        %4285 = vmatprep.subr.mxu0 %v2670
        %4286 = vmatpush1.msra.mxu0 %v2669
        %4287 = vmatprep.subr.mxu0 %v2674
        %4288 = vmatpush1.msra.mxu0 %v2673
        %4289 = vmatprep.subr.mxu0 %v2678
        %4290 = vmatpush1.msra.mxu0 %v2677
        %4291 = vmatprep.subr.mxu0 %v2682
        %4292 = vmatpush1.msra.mxu0 %v2681
        %4293 = vmatprep.subr.mxu0 %v2686
        %4294 = vmatpush1.msra.mxu0 %v2685
        %4295 = vmatprep.subr.mxu0 %v2690
        %4296 = vmatpush1.msra.mxu0 %v2689
        %4297 = vmatprep.subr.mxu0 %v2694
        %4298 = vmatpush1.msra.mxu0 %v2693
        %4299 = vmatprep.subr.mxu0 %v2698
        %4300 = vmatpush1.msra.mxu0 %v2697
        %4301 = vmatprep.subr.mxu0 %v2702
        %4302 = vmatpush1.msra.mxu0 %v2701
        %4303 = vmatprep.subr.mxu0 %v2706
        %4304 = vmatpush1.msra.mxu0 %v2705
        %4305 = vmatprep.subr.mxu0 %v2710
        %4306 = vmatpush1.msra.mxu0 %v2709
        %4307 = vmatprep.subr.mxu0 %v2714
        %4308 = vmatpush1.msra.mxu0 %v2713
        %4309 = vmatprep.subr.mxu0 %v2718
        %4310 = vmatpush1.msra.mxu0 %v2717
        %4311 = vmatprep.mubr.f32.mxu0 %v3469
        %4312 = vmatmul.mubr.f32.gmra.mrb[0].mxu0 %v3461
        %v4313 = vpop.f32.mrb[0].mxu0
        %v4314 = vadd.f32 %v4243, %v4313
        %v4315 = vpop.f32.mrb[0].mxu0
        %v4316 = vadd.f32 %v4245, %v4315
        %4317 = vdwg.mxu0
        %4318 = vmatprep.subr.mxu0 %v2722
        %4319 = vmatpush1.msra.mxu0 %v2721
        %4320 = vmatprep.subr.mxu0 %v2726
        %4321 = vmatpush1.msra.mxu0 %v2725
        %4322 = vmatprep.subr.mxu0 %v2730
        %4323 = vmatpush1.msra.mxu0 %v2729
        %4324 = vmatprep.subr.mxu0 %v2734
        %4325 = vmatpush1.msra.mxu0 %v2733
        %4326 = vmatprep.subr.mxu0 %v2738
        %4327 = vmatpush1.msra.mxu0 %v2737
        %4328 = vmatprep.subr.mxu0 %v2742
        %4329 = vmatpush1.msra.mxu0 %v2741
        %4330 = vmatprep.subr.mxu0 %v2746
        %4331 = vmatpush1.msra.mxu0 %v2745
        %4332 = vmatprep.subr.mxu0 %v2750
        %4333 = vmatpush1.msra.mxu0 %v2749
        %4334 = vmatprep.subr.mxu0 %v2754
        %4335 = vmatpush1.msra.mxu0 %v2753
        %4336 = vmatprep.subr.mxu0 %v2758
        %4337 = vmatpush1.msra.mxu0 %v2757
        %4338 = vmatprep.subr.mxu0 %v2762
        %4339 = vmatpush1.msra.mxu0 %v2761
        %4340 = vmatprep.subr.mxu0 %v2766
        %4341 = vmatpush1.msra.mxu0 %v2765
        %4342 = vmatprep.subr.mxu0 %v2770
        %4343 = vmatpush1.msra.mxu0 %v2769
        %4344 = vmatprep.subr.mxu0 %v2774
        %4345 = vmatpush1.msra.mxu0 %v2773
        %4346 = vmatprep.subr.mxu0 %v2778
        %4347 = vmatpush1.msra.mxu0 %v2777
        %4348 = vmatprep.subr.mxu0 %v2782
        %4349 = vmatpush1.msra.mxu0 %v2781
        %4350 = vmatprep.subr.mxu0 %v2786
        %4351 = vmatpush1.msra.mxu0 %v2785
        %4352 = vmatprep.subr.mxu0 %v2790
        %4353 = vmatpush1.msra.mxu0 %v2789
        %4354 = vmatprep.subr.mxu0 %v2794
        %4355 = vmatpush1.msra.mxu0 %v2793
        %4356 = vmatprep.subr.mxu0 %v2798
        %4357 = vmatpush1.msra.mxu0 %v2797
        %4358 = vmatprep.subr.mxu0 %v2802
        %4359 = vmatpush1.msra.mxu0 %v2801
        %4360 = vmatprep.subr.mxu0 %v2806
        %4361 = vmatpush1.msra.mxu0 %v2805
        %4362 = vmatprep.subr.mxu0 %v2810
        %4363 = vmatpush1.msra.mxu0 %v2809
        %4364 = vmatprep.subr.mxu0 %v2814
        %4365 = vmatpush1.msra.mxu0 %v2813
        %4366 = vmatprep.subr.mxu0 %v2818
        %4367 = vmatpush1.msra.mxu0 %v2817
        %4368 = vmatprep.subr.mxu0 %v2822
        %4369 = vmatpush1.msra.mxu0 %v2821
        %4370 = vmatprep.subr.mxu0 %v2826
        %4371 = vmatpush1.msra.mxu0 %v2825
        %4372 = vmatprep.subr.mxu0 %v2830
        %4373 = vmatpush1.msra.mxu0 %v2829
        %4374 = vmatprep.subr.mxu0 %v2834
        %4375 = vmatpush1.msra.mxu0 %v2833
        %4376 = vmatprep.subr.mxu0 %v2838
        %4377 = vmatpush1.msra.mxu0 %v2837
        %4378 = vmatprep.subr.mxu0 %v2842
        %4379 = vmatpush1.msra.mxu0 %v2841
        %4380 = vmatprep.subr.mxu0 %v2846
        %4381 = vmatpush1.msra.mxu0 %v2845
        %4382 = vmatprep.mubr.f32.mxu0 %v3470
        %4383 = vmatmul.mubr.f32.gmra.mrb[0].mxu0 %v3468
        %v4384 = vpop.f32.mrb[0].mxu0
        %v4385 = vadd.f32 %v4314, %v4384
        %v4386 = vpop.f32.mrb[0].mxu0
        %v4387 = vadd.f32 %v4316, %v4386
        %4388 = vdwg.mxu0
        %4389 = vmatprep.subr.mxu0 %v2850
        %4390 = vmatpush1.msra.mxu0 %v2849
        %4391 = vmatprep.subr.mxu0 %v2854
        %4392 = vmatpush1.msra.mxu0 %v2853
        %4393 = vmatprep.subr.mxu0 %v2858
        %4394 = vmatpush1.msra.mxu0 %v2857
        %4395 = vmatprep.subr.mxu0 %v2862
        %4396 = vmatpush1.msra.mxu0 %v2861
        %4397 = vmatprep.subr.mxu0 %v2866
        %4398 = vmatpush1.msra.mxu0 %v2865
        %4399 = vmatprep.subr.mxu0 %v2870
        %4400 = vmatpush1.msra.mxu0 %v2869
        %4401 = vmatprep.subr.mxu0 %v2874
        %4402 = vmatpush1.msra.mxu0 %v2873
        %4403 = vmatprep.subr.mxu0 %v2878
        %4404 = vmatpush1.msra.mxu0 %v2877
        %4405 = vmatprep.subr.mxu0 %v2882
        %4406 = vmatpush1.msra.mxu0 %v2881
        %4407 = vmatprep.subr.mxu0 %v2886
        %4408 = vmatpush1.msra.mxu0 %v2885
        %4409 = vmatprep.subr.mxu0 %v2890
        %4410 = vmatpush1.msra.mxu0 %v2889
        %4411 = vmatprep.subr.mxu0 %v2894
        %4412 = vmatpush1.msra.mxu0 %v2893
        %4413 = vmatprep.subr.mxu0 %v2898
        %4414 = vmatpush1.msra.mxu0 %v2897
        %4415 = vmatprep.subr.mxu0 %v2902
        %4416 = vmatpush1.msra.mxu0 %v2901
        %4417 = vmatprep.subr.mxu0 %v2906
        %4418 = vmatpush1.msra.mxu0 %v2905
        %4419 = vmatprep.subr.mxu0 %v2910
        %4420 = vmatpush1.msra.mxu0 %v2909
        %4421 = vmatprep.subr.mxu0 %v2914
        %4422 = vmatpush1.msra.mxu0 %v2913
        %4423 = vmatprep.subr.mxu0 %v2918
        %4424 = vmatpush1.msra.mxu0 %v2917
        %4425 = vmatprep.subr.mxu0 %v2922
        %4426 = vmatpush1.msra.mxu0 %v2921
        %4427 = vmatprep.subr.mxu0 %v2926
        %4428 = vmatpush1.msra.mxu0 %v2925
        %4429 = vmatprep.subr.mxu0 %v2930
        %4430 = vmatpush1.msra.mxu0 %v2929
        %4431 = vmatprep.subr.mxu0 %v2934
        %4432 = vmatpush1.msra.mxu0 %v2933
        %4433 = vmatprep.subr.mxu0 %v2938
        %4434 = vmatpush1.msra.mxu0 %v2937
        %4435 = vmatprep.subr.mxu0 %v2942
        %4436 = vmatpush1.msra.mxu0 %v2941
        %4437 = vmatprep.subr.mxu0 %v2946
        %4438 = vmatpush1.msra.mxu0 %v2945
        %4439 = vmatprep.subr.mxu0 %v2950
        %4440 = vmatpush1.msra.mxu0 %v2949
        %4441 = vmatprep.subr.mxu0 %v2954
        %4442 = vmatpush1.msra.mxu0 %v2953
        %4443 = vmatprep.subr.mxu0 %v2958
        %4444 = vmatpush1.msra.mxu0 %v2957
        %4445 = vmatprep.subr.mxu0 %v2962
        %4446 = vmatpush1.msra.mxu0 %v2961
        %4447 = vmatprep.subr.mxu0 %v2966
        %4448 = vmatpush1.msra.mxu0 %v2965
        %4449 = vmatprep.subr.mxu0 %v2970
        %4450 = vmatpush1.msra.mxu0 %v2969
        %4451 = vmatprep.subr.mxu0 %v2974
        %4452 = vmatpush1.msra.mxu0 %v2973
        %4453 = vmatprep.mubr.f32.mxu0 %v3486
        %4454 = vmatmul.mubr.f32.gmra.mrb[0].mxu0 %v3478
        %v4455 = vpop.f32.mrb[0].mxu0
        %v4456 = vadd.f32 %v4385, %v4455
        %v4457 = vpop.f32.mrb[0].mxu0
        %v4458 = vadd.f32 %v4387, %v4457
        %4459 = vdwg.mxu0
        %4460 = vmatprep.subr.mxu0 %v2978
        %4461 = vmatpush1.msra.mxu0 %v2977
        %4462 = vmatprep.subr.mxu0 %v2982
        %4463 = vmatpush1.msra.mxu0 %v2981
        %4464 = vmatprep.subr.mxu0 %v2986
        %4465 = vmatpush1.msra.mxu0 %v2985
        %4466 = vmatprep.subr.mxu0 %v2990
        %4467 = vmatpush1.msra.mxu0 %v2989
        %4468 = vmatprep.subr.mxu0 %v2994
        %4469 = vmatpush1.msra.mxu0 %v2993
        %4470 = vmatprep.subr.mxu0 %v2998
        %4471 = vmatpush1.msra.mxu0 %v2997
        %4472 = vmatprep.subr.mxu0 %v3002
        %4473 = vmatpush1.msra.mxu0 %v3001
        %4474 = vmatprep.subr.mxu0 %v3006
        %4475 = vmatpush1.msra.mxu0 %v3005
        %4476 = vmatprep.subr.mxu0 %v3010
        %4477 = vmatpush1.msra.mxu0 %v3009
        %4478 = vmatprep.subr.mxu0 %v3014
        %4479 = vmatpush1.msra.mxu0 %v3013
        %4480 = vmatprep.subr.mxu0 %v3018
        %4481 = vmatpush1.msra.mxu0 %v3017
        %4482 = vmatprep.subr.mxu0 %v3022
        %4483 = vmatpush1.msra.mxu0 %v3021
        %4484 = vmatprep.subr.mxu0 %v3026
        %4485 = vmatpush1.msra.mxu0 %v3025
        %4486 = vmatprep.subr.mxu0 %v3030
        %4487 = vmatpush1.msra.mxu0 %v3029
        %4488 = vmatprep.subr.mxu0 %v3034
        %4489 = vmatpush1.msra.mxu0 %v3033
        %4490 = vmatprep.subr.mxu0 %v3038
        %4491 = vmatpush1.msra.mxu0 %v3037
        %4492 = vmatprep.subr.mxu0 %v3042
        %4493 = vmatpush1.msra.mxu0 %v3041
        %4494 = vmatprep.subr.mxu0 %v3046
        %4495 = vmatpush1.msra.mxu0 %v3045
        %4496 = vmatprep.subr.mxu0 %v3050
        %4497 = vmatpush1.msra.mxu0 %v3049
        %4498 = vmatprep.subr.mxu0 %v3054
        %4499 = vmatpush1.msra.mxu0 %v3053
        %4500 = vmatprep.subr.mxu0 %v3058
        %4501 = vmatpush1.msra.mxu0 %v3057
        %4502 = vmatprep.subr.mxu0 %v3062
        %4503 = vmatpush1.msra.mxu0 %v3061
        %4504 = vmatprep.subr.mxu0 %v3066
        %4505 = vmatpush1.msra.mxu0 %v3065
        %4506 = vmatprep.subr.mxu0 %v3070
        %4507 = vmatpush1.msra.mxu0 %v3069
        %4508 = vmatprep.subr.mxu0 %v3074
        %4509 = vmatpush1.msra.mxu0 %v3073
        %4510 = vmatprep.subr.mxu0 %v3078
        %4511 = vmatpush1.msra.mxu0 %v3077
        %4512 = vmatprep.subr.mxu0 %v3082
        %4513 = vmatpush1.msra.mxu0 %v3081
        %4514 = vmatprep.subr.mxu0 %v3086
        %4515 = vmatpush1.msra.mxu0 %v3085
        %4516 = vmatprep.subr.mxu0 %v3090
        %4517 = vmatpush1.msra.mxu0 %v3089
        %4518 = vmatprep.subr.mxu0 %v3094
        %4519 = vmatpush1.msra.mxu0 %v3093
        %4520 = vmatprep.subr.mxu0 %v3098
        %4521 = vmatpush1.msra.mxu0 %v3097
        %4522 = vmatprep.subr.mxu0 %v3102
        %4523 = vmatpush1.msra.mxu0 %v3101
        %4524 = vmatprep.mubr.f32.mxu0 %v3487
        %4525 = vmatmul.mubr.f32.gmra.mrb[0].mxu0 %v3485
        %v4526 = vpop.f32.mrb[0].mxu0
        %v4527 = vadd.f32 %v4456, %v4526
        %v4528 = vpop.f32.mrb[0].mxu0
        %v4529 = vadd.f32 %v4458, %v4528
        %4530 = vdwg.mxu0
        %4531 = vmatprep.subr.mxu0 %v3106
        %4532 = vmatpush1.msra.mxu0 %v3105
        %4533 = vmatprep.subr.mxu0 %v3110
        %4534 = vmatpush1.msra.mxu0 %v3109
        %4535 = vmatprep.subr.mxu0 %v3114
        %4536 = vmatpush1.msra.mxu0 %v3113
        %4537 = vmatprep.subr.mxu0 %v3118
        %4538 = vmatpush1.msra.mxu0 %v3117
        %4539 = vmatprep.subr.mxu0 %v3122
        %4540 = vmatpush1.msra.mxu0 %v3121
        %4541 = vmatprep.subr.mxu0 %v3126
        %4542 = vmatpush1.msra.mxu0 %v3125
        %4543 = vmatprep.subr.mxu0 %v3130
        %4544 = vmatpush1.msra.mxu0 %v3129
        %4545 = vmatprep.subr.mxu0 %v3134
        %4546 = vmatpush1.msra.mxu0 %v3133
        %4547 = vmatprep.subr.mxu0 %v3138
        %4548 = vmatpush1.msra.mxu0 %v3137
        %4549 = vmatprep.subr.mxu0 %v3142
        %4550 = vmatpush1.msra.mxu0 %v3141
        %4551 = vmatprep.subr.mxu0 %v3146
        %4552 = vmatpush1.msra.mxu0 %v3145
        %4553 = vmatprep.subr.mxu0 %v3150
        %4554 = vmatpush1.msra.mxu0 %v3149
        %4555 = vmatprep.subr.mxu0 %v3154
        %4556 = vmatpush1.msra.mxu0 %v3153
        %4557 = vmatprep.subr.mxu0 %v3158
        %4558 = vmatpush1.msra.mxu0 %v3157
        %4559 = vmatprep.subr.mxu0 %v3162
        %4560 = vmatpush1.msra.mxu0 %v3161
        %4561 = vmatprep.subr.mxu0 %v3166
        %4562 = vmatpush1.msra.mxu0 %v3165
        %4563 = vmatprep.subr.mxu0 %v3170
        %4564 = vmatpush1.msra.mxu0 %v3169
        %4565 = vmatprep.subr.mxu0 %v3174
        %4566 = vmatpush1.msra.mxu0 %v3173
        %4567 = vmatprep.subr.mxu0 %v3178
        %4568 = vmatpush1.msra.mxu0 %v3177
        %4569 = vmatprep.subr.mxu0 %v3182
        %4570 = vmatpush1.msra.mxu0 %v3181
        %4571 = vmatprep.subr.mxu0 %v3186
        %4572 = vmatpush1.msra.mxu0 %v3185
        %4573 = vmatprep.subr.mxu0 %v3190
        %4574 = vmatpush1.msra.mxu0 %v3189
        %4575 = vmatprep.subr.mxu0 %v3194
        %4576 = vmatpush1.msra.mxu0 %v3193
        %4577 = vmatprep.subr.mxu0 %v3198
        %4578 = vmatpush1.msra.mxu0 %v3197
        %4579 = vmatprep.subr.mxu0 %v3202
        %4580 = vmatpush1.msra.mxu0 %v3201
        %4581 = vmatprep.subr.mxu0 %v3206
        %4582 = vmatpush1.msra.mxu0 %v3205
        %4583 = vmatprep.subr.mxu0 %v3210
        %4584 = vmatpush1.msra.mxu0 %v3209
        %4585 = vmatprep.subr.mxu0 %v3214
        %4586 = vmatpush1.msra.mxu0 %v3213
        %4587 = vmatprep.subr.mxu0 %v3218
        %4588 = vmatpush1.msra.mxu0 %v3217
        %4589 = vmatprep.subr.mxu0 %v3222
        %4590 = vmatpush1.msra.mxu0 %v3221
        %4591 = vmatprep.subr.mxu0 %v3226
        %4592 = vmatpush1.msra.mxu0 %v3225
        %4593 = vmatprep.subr.mxu0 %v3230
        %4594 = vmatpush1.msra.mxu0 %v3229
        %4595 = vmatprep.mubr.f32.mxu0 %v3503
        %4596 = vmatmul.mubr.f32.gmra.mrb[0].mxu0 %v3495
        %v4597 = vpop.f32.mrb[0].mxu0
        %v4598 = vadd.f32 %v4527, %v4597
        %v4599 = vpop.f32.mrb[0].mxu0
        %v4600 = vadd.f32 %v4529, %v4599
        %4601 = vdwg.mxu0
        %4602 = vmatprep.subr.mxu0 %v3234
        %4603 = vmatpush1.msra.mxu0 %v3233
        %4604 = vmatprep.subr.mxu0 %v3238
        %4605 = vmatpush1.msra.mxu0 %v3237
        %4606 = vmatprep.subr.mxu0 %v3242
        %4607 = vmatpush1.msra.mxu0 %v3241
        %4608 = vmatprep.subr.mxu0 %v3246
        %4609 = vmatpush1.msra.mxu0 %v3245
        %4610 = vmatprep.subr.mxu0 %v3250
        %4611 = vmatpush1.msra.mxu0 %v3249
        %4612 = vmatprep.subr.mxu0 %v3254
        %4613 = vmatpush1.msra.mxu0 %v3253
        %4614 = vmatprep.subr.mxu0 %v3258
        %4615 = vmatpush1.msra.mxu0 %v3257
        %4616 = vmatprep.subr.mxu0 %v3262
        %4617 = vmatpush1.msra.mxu0 %v3261
        %4618 = vmatprep.subr.mxu0 %v3266
        %4619 = vmatpush1.msra.mxu0 %v3265
        %4620 = vmatprep.subr.mxu0 %v3270
        %4621 = vmatpush1.msra.mxu0 %v3269
        %4622 = vmatprep.subr.mxu0 %v3274
        %4623 = vmatpush1.msra.mxu0 %v3273
        %4624 = vmatprep.subr.mxu0 %v3278
        %4625 = vmatpush1.msra.mxu0 %v3277
        %4626 = vmatprep.subr.mxu0 %v3282
        %4627 = vmatpush1.msra.mxu0 %v3281
        %4628 = vmatprep.subr.mxu0 %v3286
        %4629 = vmatpush1.msra.mxu0 %v3285
        %4630 = vmatprep.subr.mxu0 %v3290
        %4631 = vmatpush1.msra.mxu0 %v3289
        %4632 = vmatprep.subr.mxu0 %v3294
        %4633 = vmatpush1.msra.mxu0 %v3293
        %4634 = vmatprep.subr.mxu0 %v3298
        %4635 = vmatpush1.msra.mxu0 %v3297
        %4636 = vmatprep.subr.mxu0 %v3302
        %4637 = vmatpush1.msra.mxu0 %v3301
        %4638 = vmatprep.subr.mxu0 %v3306
        %4639 = vmatpush1.msra.mxu0 %v3305
        %4640 = vmatprep.subr.mxu0 %v3310
        %4641 = vmatpush1.msra.mxu0 %v3309
        %4642 = vmatprep.subr.mxu0 %v3314
        %4643 = vmatpush1.msra.mxu0 %v3313
        %4644 = vmatprep.subr.mxu0 %v3318
        %4645 = vmatpush1.msra.mxu0 %v3317
        %4646 = vmatprep.subr.mxu0 %v3322
        %4647 = vmatpush1.msra.mxu0 %v3321
        %4648 = vmatprep.subr.mxu0 %v3326
        %4649 = vmatpush1.msra.mxu0 %v3325
        %4650 = vmatprep.subr.mxu0 %v3330
        %4651 = vmatpush1.msra.mxu0 %v3329
        %4652 = vmatprep.subr.mxu0 %v3334
        %4653 = vmatpush1.msra.mxu0 %v3333
        %4654 = vmatprep.subr.mxu0 %v3338
        %4655 = vmatpush1.msra.mxu0 %v3337
        %4656 = vmatprep.subr.mxu0 %v3342
        %4657 = vmatpush1.msra.mxu0 %v3341
        %4658 = vmatprep.subr.mxu0 %v3346
        %4659 = vmatpush1.msra.mxu0 %v3345
        %4660 = vmatprep.subr.mxu0 %v3350
        %4661 = vmatpush1.msra.mxu0 %v3349
        %4662 = vmatprep.subr.mxu0 %v3354
        %4663 = vmatpush1.msra.mxu0 %v3353
        %4664 = vmatprep.subr.mxu0 %v3358
        %4665 = vmatpush1.msra.mxu0 %v3357
        %4666 = vmatprep.mubr.f32.mxu0 %v3504
        %4667 = vmatmul.mubr.f32.gmra.mrb[0].mxu0 %v3502
        %v4668 = vpop.f32.mrb[0].mxu0
        %v4669 = vadd.f32 %v4598, %v4668
        %v4670 = vpop.f32.mrb[0].mxu0
        %v4671 = vadd.f32 %v4600, %v4670
        %4672 = vdwg.mxu0
        %4673 = vmatprep.subr.mxu0 %v1316
        %4674 = vmatpush1.msra.mxu0 %v1315
        %4675 = vmatprep.subr.mxu0 %v1320
        %4676 = vmatpush1.msra.mxu0 %v1319
        %4677 = vmatprep.subr.mxu0 %v1324
        %4678 = vmatpush1.msra.mxu0 %v1323
        %4679 = vmatprep.subr.mxu0 %v1328
        %4680 = vmatpush1.msra.mxu0 %v1327
        %4681 = vmatprep.subr.mxu0 %v1332
        %4682 = vmatpush1.msra.mxu0 %v1331
        %4683 = vmatprep.subr.mxu0 %v1336
        %4684 = vmatpush1.msra.mxu0 %v1335
        %4685 = vmatprep.subr.mxu0 %v1340
        %4686 = vmatpush1.msra.mxu0 %v1339
        %4687 = vmatprep.subr.mxu0 %v1344
        %4688 = vmatpush1.msra.mxu0 %v1343
        %4689 = vmatprep.subr.mxu0 %v1348
        %4690 = vmatpush1.msra.mxu0 %v1347
        %4691 = vmatprep.subr.mxu0 %v1352
        %4692 = vmatpush1.msra.mxu0 %v1351
        %4693 = vmatprep.subr.mxu0 %v1356
        %4694 = vmatpush1.msra.mxu0 %v1355
        %4695 = vmatprep.subr.mxu0 %v1360
        %4696 = vmatpush1.msra.mxu0 %v1359
        %4697 = vmatprep.subr.mxu0 %v1364
        %4698 = vmatpush1.msra.mxu0 %v1363
        %4699 = vmatprep.subr.mxu0 %v1368
        %4700 = vmatpush1.msra.mxu0 %v1367
        %4701 = vmatprep.subr.mxu0 %v1372
        %4702 = vmatpush1.msra.mxu0 %v1371
        %4703 = vmatprep.subr.mxu0 %v1376
        %4704 = vmatpush1.msra.mxu0 %v1375
        %4705 = vmatprep.subr.mxu0 %v1380
        %4706 = vmatpush1.msra.mxu0 %v1379
        %4707 = vmatprep.subr.mxu0 %v1384
        %4708 = vmatpush1.msra.mxu0 %v1383
        %4709 = vmatprep.subr.mxu0 %v1388
        %4710 = vmatpush1.msra.mxu0 %v1387
        %4711 = vmatprep.subr.mxu0 %v1392
        %4712 = vmatpush1.msra.mxu0 %v1391
        %4713 = vmatprep.subr.mxu0 %v1396
        %4714 = vmatpush1.msra.mxu0 %v1395
        %4715 = vmatprep.subr.mxu0 %v1400
        %4716 = vmatpush1.msra.mxu0 %v1399
        %4717 = vmatprep.subr.mxu0 %v1404
        %4718 = vmatpush1.msra.mxu0 %v1403
        %4719 = vmatprep.subr.mxu0 %v1408
        %4720 = vmatpush1.msra.mxu0 %v1407
        %4721 = vmatprep.subr.mxu0 %v1412
        %4722 = vmatpush1.msra.mxu0 %v1411
        %4723 = vmatprep.subr.mxu0 %v1416
        %4724 = vmatpush1.msra.mxu0 %v1415
        %4725 = vmatprep.subr.mxu0 %v1420
        %4726 = vmatpush1.msra.mxu0 %v1419
        %4727 = vmatprep.subr.mxu0 %v1424
        %4728 = vmatpush1.msra.mxu0 %v1423
        %4729 = vmatprep.subr.mxu0 %v1428
        %4730 = vmatpush1.msra.mxu0 %v1427
        %4731 = vmatprep.subr.mxu0 %v1432
        %4732 = vmatpush1.msra.mxu0 %v1431
        %4733 = vmatprep.subr.mxu0 %v1436
        %4734 = vmatpush1.msra.mxu0 %v1435
        %4735 = vmatprep.subr.mxu0 %v1440
        %4736 = vmatpush1.msra.mxu0 %v1439
        %4737 = vmatprep.mubr.f32.mxu0 %v3384
        %4738 = vmatmul.mubr.f32.gmra.mrb[0].mxu0 %v3376
        %v4739 = vpop.f32.mrb[0].mxu0
        %v4740 = vadd.f32 0.0, %v4739
        %v4741 = vpop.f32.mrb[0].mxu0
        %v4742 = vadd.f32 0.0, %v4741
        %4743 = vdwg.mxu0
        %4744 = vmatprep.subr.mxu0 %v1444
        %4745 = vmatpush1.msra.mxu0 %v1443
        %4746 = vmatprep.subr.mxu0 %v1448
        %4747 = vmatpush1.msra.mxu0 %v1447
        %4748 = vmatprep.subr.mxu0 %v1452
        %4749 = vmatpush1.msra.mxu0 %v1451
        %4750 = vmatprep.subr.mxu0 %v1456
        %4751 = vmatpush1.msra.mxu0 %v1455
        %4752 = vmatprep.subr.mxu0 %v1460
        %4753 = vmatpush1.msra.mxu0 %v1459
        %4754 = vmatprep.subr.mxu0 %v1464
        %4755 = vmatpush1.msra.mxu0 %v1463
        %4756 = vmatprep.subr.mxu0 %v1468
        %4757 = vmatpush1.msra.mxu0 %v1467
        %4758 = vmatprep.subr.mxu0 %v1472
        %4759 = vmatpush1.msra.mxu0 %v1471
        %4760 = vmatprep.subr.mxu0 %v1476
        %4761 = vmatpush1.msra.mxu0 %v1475
        %4762 = vmatprep.subr.mxu0 %v1480
        %4763 = vmatpush1.msra.mxu0 %v1479
        %4764 = vmatprep.subr.mxu0 %v1484
        %4765 = vmatpush1.msra.mxu0 %v1483
        %4766 = vmatprep.subr.mxu0 %v1488
        %4767 = vmatpush1.msra.mxu0 %v1487
        %4768 = vmatprep.subr.mxu0 %v1492
        %4769 = vmatpush1.msra.mxu0 %v1491
        %4770 = vmatprep.subr.mxu0 %v1496
        %4771 = vmatpush1.msra.mxu0 %v1495
        %4772 = vmatprep.subr.mxu0 %v1500
        %4773 = vmatpush1.msra.mxu0 %v1499
        %4774 = vmatprep.subr.mxu0 %v1504
        %4775 = vmatpush1.msra.mxu0 %v1503
        %4776 = vmatprep.subr.mxu0 %v1508
        %4777 = vmatpush1.msra.mxu0 %v1507
        %4778 = vmatprep.subr.mxu0 %v1512
        %4779 = vmatpush1.msra.mxu0 %v1511
        %4780 = vmatprep.subr.mxu0 %v1516
        %4781 = vmatpush1.msra.mxu0 %v1515
        %4782 = vmatprep.subr.mxu0 %v1520
        %4783 = vmatpush1.msra.mxu0 %v1519
        %4784 = vmatprep.subr.mxu0 %v1524
        %4785 = vmatpush1.msra.mxu0 %v1523
        %4786 = vmatprep.subr.mxu0 %v1528
        %4787 = vmatpush1.msra.mxu0 %v1527
        %4788 = vmatprep.subr.mxu0 %v1532
        %4789 = vmatpush1.msra.mxu0 %v1531
        %4790 = vmatprep.subr.mxu0 %v1536
        %4791 = vmatpush1.msra.mxu0 %v1535
        %4792 = vmatprep.subr.mxu0 %v1540
        %4793 = vmatpush1.msra.mxu0 %v1539
        %4794 = vmatprep.subr.mxu0 %v1544
        %4795 = vmatpush1.msra.mxu0 %v1543
        %4796 = vmatprep.subr.mxu0 %v1548
        %4797 = vmatpush1.msra.mxu0 %v1547
        %4798 = vmatprep.subr.mxu0 %v1552
        %4799 = vmatpush1.msra.mxu0 %v1551
        %4800 = vmatprep.subr.mxu0 %v1556
        %4801 = vmatpush1.msra.mxu0 %v1555
        %4802 = vmatprep.subr.mxu0 %v1560
        %4803 = vmatpush1.msra.mxu0 %v1559
        %4804 = vmatprep.subr.mxu0 %v1564
        %4805 = vmatpush1.msra.mxu0 %v1563
        %4806 = vmatprep.subr.mxu0 %v1568
        %4807 = vmatpush1.msra.mxu0 %v1567
        %4808 = vmatprep.mubr.f32.mxu0 %v3385
        %4809 = vmatmul.mubr.f32.gmra.mrb[0].mxu0 %v3383
        %v4810 = vpop.f32.mrb[0].mxu0
        %v4811 = vadd.f32 %v4740, %v4810
        %v4812 = vpop.f32.mrb[0].mxu0
        %v4813 = vadd.f32 %v4742, %v4812
        %4814 = vdwg.mxu0
        %4815 = vmatprep.subr.mxu0 %v1572
        %4816 = vmatpush1.msra.mxu0 %v1571
        %4817 = vmatprep.subr.mxu0 %v1576
        %4818 = vmatpush1.msra.mxu0 %v1575
        %4819 = vmatprep.subr.mxu0 %v1580
        %4820 = vmatpush1.msra.mxu0 %v1579
        %4821 = vmatprep.subr.mxu0 %v1584
        %4822 = vmatpush1.msra.mxu0 %v1583
        %4823 = vmatprep.subr.mxu0 %v1588
        %4824 = vmatpush1.msra.mxu0 %v1587
        %4825 = vmatprep.subr.mxu0 %v1592
        %4826 = vmatpush1.msra.mxu0 %v1591
        %4827 = vmatprep.subr.mxu0 %v1596
        %4828 = vmatpush1.msra.mxu0 %v1595
        %4829 = vmatprep.subr.mxu0 %v1600
        %4830 = vmatpush1.msra.mxu0 %v1599
        %4831 = vmatprep.subr.mxu0 %v1604
        %4832 = vmatpush1.msra.mxu0 %v1603
        %4833 = vmatprep.subr.mxu0 %v1608
        %4834 = vmatpush1.msra.mxu0 %v1607
        %4835 = vmatprep.subr.mxu0 %v1612
        %4836 = vmatpush1.msra.mxu0 %v1611
        %4837 = vmatprep.subr.mxu0 %v1616
        %4838 = vmatpush1.msra.mxu0 %v1615
        %4839 = vmatprep.subr.mxu0 %v1620
        %4840 = vmatpush1.msra.mxu0 %v1619
        %4841 = vmatprep.subr.mxu0 %v1624
        %4842 = vmatpush1.msra.mxu0 %v1623
        %4843 = vmatprep.subr.mxu0 %v1628
        %4844 = vmatpush1.msra.mxu0 %v1627
        %4845 = vmatprep.subr.mxu0 %v1632
        %4846 = vmatpush1.msra.mxu0 %v1631
        %4847 = vmatprep.subr.mxu0 %v1636
        %4848 = vmatpush1.msra.mxu0 %v1635
        %4849 = vmatprep.subr.mxu0 %v1640
        %4850 = vmatpush1.msra.mxu0 %v1639
        %4851 = vmatprep.subr.mxu0 %v1644
        %4852 = vmatpush1.msra.mxu0 %v1643
        %4853 = vmatprep.subr.mxu0 %v1648
        %4854 = vmatpush1.msra.mxu0 %v1647
        %4855 = vmatprep.subr.mxu0 %v1652
        %4856 = vmatpush1.msra.mxu0 %v1651
        %4857 = vmatprep.subr.mxu0 %v1656
        %4858 = vmatpush1.msra.mxu0 %v1655
        %4859 = vmatprep.subr.mxu0 %v1660
        %4860 = vmatpush1.msra.mxu0 %v1659
        %4861 = vmatprep.subr.mxu0 %v1664
        %4862 = vmatpush1.msra.mxu0 %v1663
        %4863 = vmatprep.subr.mxu0 %v1668
        %4864 = vmatpush1.msra.mxu0 %v1667
        %4865 = vmatprep.subr.mxu0 %v1672
        %4866 = vmatpush1.msra.mxu0 %v1671
        %4867 = vmatprep.subr.mxu0 %v1676
        %4868 = vmatpush1.msra.mxu0 %v1675
        %4869 = vmatprep.subr.mxu0 %v1680
        %4870 = vmatpush1.msra.mxu0 %v1679
        %4871 = vmatprep.subr.mxu0 %v1684
        %4872 = vmatpush1.msra.mxu0 %v1683
        %4873 = vmatprep.subr.mxu0 %v1688
        %4874 = vmatpush1.msra.mxu0 %v1687
        %4875 = vmatprep.subr.mxu0 %v1692
        %4876 = vmatpush1.msra.mxu0 %v1691
        %4877 = vmatprep.subr.mxu0 %v1696
        %4878 = vmatpush1.msra.mxu0 %v1695
        %4879 = vmatprep.mubr.f32.mxu0 %v3401
        %4880 = vmatmul.mubr.f32.gmra.mrb[0].mxu0 %v3393
        %v4881 = vpop.f32.mrb[0].mxu0
        %v4882 = vadd.f32 %v4811, %v4881
        %v4883 = vpop.f32.mrb[0].mxu0
        %v4884 = vadd.f32 %v4813, %v4883
        %4885 = vdwg.mxu0
        %4886 = vmatprep.subr.mxu0 %v1700
        %4887 = vmatpush1.msra.mxu0 %v1699
        %4888 = vmatprep.subr.mxu0 %v1704
        %4889 = vmatpush1.msra.mxu0 %v1703
        %4890 = vmatprep.subr.mxu0 %v1708
        %4891 = vmatpush1.msra.mxu0 %v1707
        %4892 = vmatprep.subr.mxu0 %v1712
        %4893 = vmatpush1.msra.mxu0 %v1711
        %4894 = vmatprep.subr.mxu0 %v1716
        %4895 = vmatpush1.msra.mxu0 %v1715
        %4896 = vmatprep.subr.mxu0 %v1720
        %4897 = vmatpush1.msra.mxu0 %v1719
        %4898 = vmatprep.subr.mxu0 %v1724
        %4899 = vmatpush1.msra.mxu0 %v1723
        %4900 = vmatprep.subr.mxu0 %v1728
        %4901 = vmatpush1.msra.mxu0 %v1727
        %4902 = vmatprep.subr.mxu0 %v1732
        %4903 = vmatpush1.msra.mxu0 %v1731
        %4904 = vmatprep.subr.mxu0 %v1736
        %4905 = vmatpush1.msra.mxu0 %v1735
        %4906 = vmatprep.subr.mxu0 %v1740
        %4907 = vmatpush1.msra.mxu0 %v1739
        %4908 = vmatprep.subr.mxu0 %v1744
        %4909 = vmatpush1.msra.mxu0 %v1743
        %4910 = vmatprep.subr.mxu0 %v1748
        %4911 = vmatpush1.msra.mxu0 %v1747
        %4912 = vmatprep.subr.mxu0 %v1752
        %4913 = vmatpush1.msra.mxu0 %v1751
        %4914 = vmatprep.subr.mxu0 %v1756
        %4915 = vmatpush1.msra.mxu0 %v1755
        %4916 = vmatprep.subr.mxu0 %v1760
        %4917 = vmatpush1.msra.mxu0 %v1759
        %4918 = vmatprep.subr.mxu0 %v1764
        %4919 = vmatpush1.msra.mxu0 %v1763
        %4920 = vmatprep.subr.mxu0 %v1768
        %4921 = vmatpush1.msra.mxu0 %v1767
        %4922 = vmatprep.subr.mxu0 %v1772
        %4923 = vmatpush1.msra.mxu0 %v1771
        %4924 = vmatprep.subr.mxu0 %v1776
        %4925 = vmatpush1.msra.mxu0 %v1775
        %4926 = vmatprep.subr.mxu0 %v1780
        %4927 = vmatpush1.msra.mxu0 %v1779
        %4928 = vmatprep.subr.mxu0 %v1784
        %4929 = vmatpush1.msra.mxu0 %v1783
        %4930 = vmatprep.subr.mxu0 %v1788
        %4931 = vmatpush1.msra.mxu0 %v1787
        %4932 = vmatprep.subr.mxu0 %v1792
        %4933 = vmatpush1.msra.mxu0 %v1791
        %4934 = vmatprep.subr.mxu0 %v1796
        %4935 = vmatpush1.msra.mxu0 %v1795
        %4936 = vmatprep.subr.mxu0 %v1800
        %4937 = vmatpush1.msra.mxu0 %v1799
        %4938 = vmatprep.subr.mxu0 %v1804
        %4939 = vmatpush1.msra.mxu0 %v1803
        %4940 = vmatprep.subr.mxu0 %v1808
        %4941 = vmatpush1.msra.mxu0 %v1807
        %4942 = vmatprep.subr.mxu0 %v1812
        %4943 = vmatpush1.msra.mxu0 %v1811
        %4944 = vmatprep.subr.mxu0 %v1816
        %4945 = vmatpush1.msra.mxu0 %v1815
        %4946 = vmatprep.subr.mxu0 %v1820
        %4947 = vmatpush1.msra.mxu0 %v1819
        %4948 = vmatprep.subr.mxu0 %v1824
        %4949 = vmatpush1.msra.mxu0 %v1823
        %4950 = vmatprep.mubr.f32.mxu0 %v3402
        %4951 = vmatmul.mubr.f32.gmra.mrb[0].mxu0 %v3400
        %v4952 = vpop.f32.mrb[0].mxu0
        %v4953 = vadd.f32 %v4882, %v4952
        %v4954 = vpop.f32.mrb[0].mxu0
        %v4955 = vadd.f32 %v4884, %v4954
        %4956 = vdwg.mxu0
        %4957 = vmatprep.subr.mxu0 %v1828
        %4958 = vmatpush1.msra.mxu0 %v1827
        %4959 = vmatprep.subr.mxu0 %v1832
        %4960 = vmatpush1.msra.mxu0 %v1831
        %4961 = vmatprep.subr.mxu0 %v1836
        %4962 = vmatpush1.msra.mxu0 %v1835
        %4963 = vmatprep.subr.mxu0 %v1840
        %4964 = vmatpush1.msra.mxu0 %v1839
        %4965 = vmatprep.subr.mxu0 %v1844
        %4966 = vmatpush1.msra.mxu0 %v1843
        %4967 = vmatprep.subr.mxu0 %v1848
        %4968 = vmatpush1.msra.mxu0 %v1847
        %4969 = vmatprep.subr.mxu0 %v1852
        %4970 = vmatpush1.msra.mxu0 %v1851
        %4971 = vmatprep.subr.mxu0 %v1856
        %4972 = vmatpush1.msra.mxu0 %v1855
        %4973 = vmatprep.subr.mxu0 %v1860
        %4974 = vmatpush1.msra.mxu0 %v1859
        %4975 = vmatprep.subr.mxu0 %v1864
        %4976 = vmatpush1.msra.mxu0 %v1863
        %4977 = vmatprep.subr.mxu0 %v1868
        %4978 = vmatpush1.msra.mxu0 %v1867
        %4979 = vmatprep.subr.mxu0 %v1872
        %4980 = vmatpush1.msra.mxu0 %v1871
        %4981 = vmatprep.subr.mxu0 %v1876
        %4982 = vmatpush1.msra.mxu0 %v1875
        %4983 = vmatprep.subr.mxu0 %v1880
        %4984 = vmatpush1.msra.mxu0 %v1879
        %4985 = vmatprep.subr.mxu0 %v1884
        %4986 = vmatpush1.msra.mxu0 %v1883
        %4987 = vmatprep.subr.mxu0 %v1888
        %4988 = vmatpush1.msra.mxu0 %v1887
        %4989 = vmatprep.subr.mxu0 %v1892
        %4990 = vmatpush1.msra.mxu0 %v1891
        %4991 = vmatprep.subr.mxu0 %v1896
        %4992 = vmatpush1.msra.mxu0 %v1895
        %4993 = vmatprep.subr.mxu0 %v1900
        %4994 = vmatpush1.msra.mxu0 %v1899
        %4995 = vmatprep.subr.mxu0 %v1904
        %4996 = vmatpush1.msra.mxu0 %v1903
        %4997 = vmatprep.subr.mxu0 %v1908
        %4998 = vmatpush1.msra.mxu0 %v1907
        %4999 = vmatprep.subr.mxu0 %v1912
        %5000 = vmatpush1.msra.mxu0 %v1911
        %5001 = vmatprep.subr.mxu0 %v1916
        %5002 = vmatpush1.msra.mxu0 %v1915
        %5003 = vmatprep.subr.mxu0 %v1920
        %5004 = vmatpush1.msra.mxu0 %v1919
        %5005 = vmatprep.subr.mxu0 %v1924
        %5006 = vmatpush1.msra.mxu0 %v1923
        %5007 = vmatprep.subr.mxu0 %v1928
        %5008 = vmatpush1.msra.mxu0 %v1927
        %5009 = vmatprep.subr.mxu0 %v1932
        %5010 = vmatpush1.msra.mxu0 %v1931
        %5011 = vmatprep.subr.mxu0 %v1936
        %5012 = vmatpush1.msra.mxu0 %v1935
        %5013 = vmatprep.subr.mxu0 %v1940
        %5014 = vmatpush1.msra.mxu0 %v1939
        %5015 = vmatprep.subr.mxu0 %v1944
        %5016 = vmatpush1.msra.mxu0 %v1943
        %5017 = vmatprep.subr.mxu0 %v1948
        %5018 = vmatpush1.msra.mxu0 %v1947
        %5019 = vmatprep.subr.mxu0 %v1952
        %5020 = vmatpush1.msra.mxu0 %v1951
        %5021 = vmatprep.mubr.f32.mxu0 %v3418
        %5022 = vmatmul.mubr.f32.gmra.mrb[0].mxu0 %v3410
        %v5023 = vpop.f32.mrb[0].mxu0
        %v5024 = vadd.f32 %v4953, %v5023
        %v5025 = vpop.f32.mrb[0].mxu0
        %v5026 = vadd.f32 %v4955, %v5025
        %5027 = vdwg.mxu0
        %5028 = vmatprep.subr.mxu0 %v1956
        %5029 = vmatpush1.msra.mxu0 %v1955
        %5030 = vmatprep.subr.mxu0 %v1960
        %5031 = vmatpush1.msra.mxu0 %v1959
        %5032 = vmatprep.subr.mxu0 %v1964
        %5033 = vmatpush1.msra.mxu0 %v1963
        %5034 = vmatprep.subr.mxu0 %v1968
        %5035 = vmatpush1.msra.mxu0 %v1967
        %5036 = vmatprep.subr.mxu0 %v1972
        %5037 = vmatpush1.msra.mxu0 %v1971
        %5038 = vmatprep.subr.mxu0 %v1976
        %5039 = vmatpush1.msra.mxu0 %v1975
        %5040 = vmatprep.subr.mxu0 %v1980
        %5041 = vmatpush1.msra.mxu0 %v1979
        %5042 = vmatprep.subr.mxu0 %v1984
        %5043 = vmatpush1.msra.mxu0 %v1983
        %5044 = vmatprep.subr.mxu0 %v1988
        %5045 = vmatpush1.msra.mxu0 %v1987
        %5046 = vmatprep.subr.mxu0 %v1992
        %5047 = vmatpush1.msra.mxu0 %v1991
        %5048 = vmatprep.subr.mxu0 %v1996
        %5049 = vmatpush1.msra.mxu0 %v1995
        %5050 = vmatprep.subr.mxu0 %v2000
        %5051 = vmatpush1.msra.mxu0 %v1999
        %5052 = vmatprep.subr.mxu0 %v2004
        %5053 = vmatpush1.msra.mxu0 %v2003
        %5054 = vmatprep.subr.mxu0 %v2008
        %5055 = vmatpush1.msra.mxu0 %v2007
        %5056 = vmatprep.subr.mxu0 %v2012
        %5057 = vmatpush1.msra.mxu0 %v2011
        %5058 = vmatprep.subr.mxu0 %v2016
        %5059 = vmatpush1.msra.mxu0 %v2015
        %5060 = vmatprep.subr.mxu0 %v2020
        %5061 = vmatpush1.msra.mxu0 %v2019
        %5062 = vmatprep.subr.mxu0 %v2024
        %5063 = vmatpush1.msra.mxu0 %v2023
        %5064 = vmatprep.subr.mxu0 %v2028
        %5065 = vmatpush1.msra.mxu0 %v2027
        %5066 = vmatprep.subr.mxu0 %v2032
        %5067 = vmatpush1.msra.mxu0 %v2031
        %5068 = vmatprep.subr.mxu0 %v2036
        %5069 = vmatpush1.msra.mxu0 %v2035
        %5070 = vmatprep.subr.mxu0 %v2040
        %5071 = vmatpush1.msra.mxu0 %v2039
        %5072 = vmatprep.subr.mxu0 %v2044
        %5073 = vmatpush1.msra.mxu0 %v2043
        %5074 = vmatprep.subr.mxu0 %v2048
        %5075 = vmatpush1.msra.mxu0 %v2047
        %5076 = vmatprep.subr.mxu0 %v2052
        %5077 = vmatpush1.msra.mxu0 %v2051
        %5078 = vmatprep.subr.mxu0 %v2056
        %5079 = vmatpush1.msra.mxu0 %v2055
        %5080 = vmatprep.subr.mxu0 %v2060
        %5081 = vmatpush1.msra.mxu0 %v2059
        %5082 = vmatprep.subr.mxu0 %v2064
        %5083 = vmatpush1.msra.mxu0 %v2063
        %5084 = vmatprep.subr.mxu0 %v2068
        %5085 = vmatpush1.msra.mxu0 %v2067
        %5086 = vmatprep.subr.mxu0 %v2072
        %5087 = vmatpush1.msra.mxu0 %v2071
        %5088 = vmatprep.subr.mxu0 %v2076
        %5089 = vmatpush1.msra.mxu0 %v2075
        %5090 = vmatprep.subr.mxu0 %v2080
        %5091 = vmatpush1.msra.mxu0 %v2079
        %5092 = vmatprep.mubr.f32.mxu0 %v3419
        %5093 = vmatmul.mubr.f32.gmra.mrb[0].mxu0 %v3417
        %v5094 = vpop.f32.mrb[0].mxu0
        %v5095 = vadd.f32 %v5024, %v5094
        %v5096 = vpop.f32.mrb[0].mxu0
        %v5097 = vadd.f32 %v5026, %v5096
        %5098 = vdwg.mxu0
        %5099 = vmatprep.subr.mxu0 %v2084
        %5100 = vmatpush1.msra.mxu0 %v2083
        %5101 = vmatprep.subr.mxu0 %v2088
        %5102 = vmatpush1.msra.mxu0 %v2087
        %5103 = vmatprep.subr.mxu0 %v2092
        %5104 = vmatpush1.msra.mxu0 %v2091
        %5105 = vmatprep.subr.mxu0 %v2096
        %5106 = vmatpush1.msra.mxu0 %v2095
        %5107 = vmatprep.subr.mxu0 %v2100
        %5108 = vmatpush1.msra.mxu0 %v2099
        %5109 = vmatprep.subr.mxu0 %v2104
        %5110 = vmatpush1.msra.mxu0 %v2103
        %5111 = vmatprep.subr.mxu0 %v2108
        %5112 = vmatpush1.msra.mxu0 %v2107
        %5113 = vmatprep.subr.mxu0 %v2112
        %5114 = vmatpush1.msra.mxu0 %v2111
        %5115 = vmatprep.subr.mxu0 %v2116
        %5116 = vmatpush1.msra.mxu0 %v2115
        %5117 = vmatprep.subr.mxu0 %v2120
        %5118 = vmatpush1.msra.mxu0 %v2119
        %5119 = vmatprep.subr.mxu0 %v2124
        %5120 = vmatpush1.msra.mxu0 %v2123
        %5121 = vmatprep.subr.mxu0 %v2128
        %5122 = vmatpush1.msra.mxu0 %v2127
        %5123 = vmatprep.subr.mxu0 %v2132
        %5124 = vmatpush1.msra.mxu0 %v2131
        %5125 = vmatprep.subr.mxu0 %v2136
        %5126 = vmatpush1.msra.mxu0 %v2135
        %5127 = vmatprep.subr.mxu0 %v2140
        %5128 = vmatpush1.msra.mxu0 %v2139
        %5129 = vmatprep.subr.mxu0 %v2144
        %5130 = vmatpush1.msra.mxu0 %v2143
        %5131 = vmatprep.subr.mxu0 %v2148
        %5132 = vmatpush1.msra.mxu0 %v2147
        %5133 = vmatprep.subr.mxu0 %v2152
        %5134 = vmatpush1.msra.mxu0 %v2151
        %5135 = vmatprep.subr.mxu0 %v2156
        %5136 = vmatpush1.msra.mxu0 %v2155
        %5137 = vmatprep.subr.mxu0 %v2160
        %5138 = vmatpush1.msra.mxu0 %v2159
        %5139 = vmatprep.subr.mxu0 %v2164
        %5140 = vmatpush1.msra.mxu0 %v2163
        %5141 = vmatprep.subr.mxu0 %v2168
        %5142 = vmatpush1.msra.mxu0 %v2167
        %5143 = vmatprep.subr.mxu0 %v2172
        %5144 = vmatpush1.msra.mxu0 %v2171
        %5145 = vmatprep.subr.mxu0 %v2176
        %5146 = vmatpush1.msra.mxu0 %v2175
        %5147 = vmatprep.subr.mxu0 %v2180
        %5148 = vmatpush1.msra.mxu0 %v2179
        %5149 = vmatprep.subr.mxu0 %v2184
        %5150 = vmatpush1.msra.mxu0 %v2183
        %5151 = vmatprep.subr.mxu0 %v2188
        %5152 = vmatpush1.msra.mxu0 %v2187
        %5153 = vmatprep.subr.mxu0 %v2192
        %5154 = vmatpush1.msra.mxu0 %v2191
        %5155 = vmatprep.subr.mxu0 %v2196
        %5156 = vmatpush1.msra.mxu0 %v2195
        %5157 = vmatprep.subr.mxu0 %v2200
        %5158 = vmatpush1.msra.mxu0 %v2199
        %5159 = vmatprep.subr.mxu0 %v2204
        %5160 = vmatpush1.msra.mxu0 %v2203
        %5161 = vmatprep.subr.mxu0 %v2208
        %5162 = vmatpush1.msra.mxu0 %v2207
        %5163 = vmatprep.mubr.f32.mxu0 %v3435
        %5164 = vmatmul.mubr.f32.gmra.mrb[0].mxu0 %v3427
        %v5165 = vpop.f32.mrb[0].mxu0
        %v5166 = vadd.f32 %v5095, %v5165
        %v5167 = vpop.f32.mrb[0].mxu0
        %v5168 = vadd.f32 %v5097, %v5167
        %5169 = vdwg.mxu0
        %5170 = vmatprep.subr.mxu0 %v2212
        %5171 = vmatpush1.msra.mxu0 %v2211
        %5172 = vmatprep.subr.mxu0 %v2216
        %5173 = vmatpush1.msra.mxu0 %v2215
        %5174 = vmatprep.subr.mxu0 %v2220
        %5175 = vmatpush1.msra.mxu0 %v2219
        %5176 = vmatprep.subr.mxu0 %v2224
        %5177 = vmatpush1.msra.mxu0 %v2223
        %5178 = vmatprep.subr.mxu0 %v2228
        %5179 = vmatpush1.msra.mxu0 %v2227
        %5180 = vmatprep.subr.mxu0 %v2232
        %5181 = vmatpush1.msra.mxu0 %v2231
        %5182 = vmatprep.subr.mxu0 %v2236
        %5183 = vmatpush1.msra.mxu0 %v2235
        %5184 = vmatprep.subr.mxu0 %v2240
        %5185 = vmatpush1.msra.mxu0 %v2239
        %5186 = vmatprep.subr.mxu0 %v2244
        %5187 = vmatpush1.msra.mxu0 %v2243
        %5188 = vmatprep.subr.mxu0 %v2248
        %5189 = vmatpush1.msra.mxu0 %v2247
        %5190 = vmatprep.subr.mxu0 %v2252
        %5191 = vmatpush1.msra.mxu0 %v2251
        %5192 = vmatprep.subr.mxu0 %v2256
        %5193 = vmatpush1.msra.mxu0 %v2255
        %5194 = vmatprep.subr.mxu0 %v2260
        %5195 = vmatpush1.msra.mxu0 %v2259
        %5196 = vmatprep.subr.mxu0 %v2264
        %5197 = vmatpush1.msra.mxu0 %v2263
        %5198 = vmatprep.subr.mxu0 %v2268
        %5199 = vmatpush1.msra.mxu0 %v2267
        %5200 = vmatprep.subr.mxu0 %v2272
        %5201 = vmatpush1.msra.mxu0 %v2271
        %5202 = vmatprep.subr.mxu0 %v2276
        %5203 = vmatpush1.msra.mxu0 %v2275
        %5204 = vmatprep.subr.mxu0 %v2280
        %5205 = vmatpush1.msra.mxu0 %v2279
        %5206 = vmatprep.subr.mxu0 %v2284
        %5207 = vmatpush1.msra.mxu0 %v2283
        %5208 = vmatprep.subr.mxu0 %v2288
        %5209 = vmatpush1.msra.mxu0 %v2287
        %5210 = vmatprep.subr.mxu0 %v2292
        %5211 = vmatpush1.msra.mxu0 %v2291
        %5212 = vmatprep.subr.mxu0 %v2296
        %5213 = vmatpush1.msra.mxu0 %v2295
        %5214 = vmatprep.subr.mxu0 %v2300
        %5215 = vmatpush1.msra.mxu0 %v2299
        %5216 = vmatprep.subr.mxu0 %v2304
        %5217 = vmatpush1.msra.mxu0 %v2303
        %5218 = vmatprep.subr.mxu0 %v2308
        %5219 = vmatpush1.msra.mxu0 %v2307
        %5220 = vmatprep.subr.mxu0 %v2312
        %5221 = vmatpush1.msra.mxu0 %v2311
        %5222 = vmatprep.subr.mxu0 %v2316
        %5223 = vmatpush1.msra.mxu0 %v2315
        %5224 = vmatprep.subr.mxu0 %v2320
        %5225 = vmatpush1.msra.mxu0 %v2319
        %5226 = vmatprep.subr.mxu0 %v2324
        %5227 = vmatpush1.msra.mxu0 %v2323
        %5228 = vmatprep.subr.mxu0 %v2328
        %5229 = vmatpush1.msra.mxu0 %v2327
        %5230 = vmatprep.subr.mxu0 %v2332
        %5231 = vmatpush1.msra.mxu0 %v2331
        %5232 = vmatprep.subr.mxu0 %v2336
        %5233 = vmatpush1.msra.mxu0 %v2335
        %5234 = vmatprep.mubr.f32.mxu0 %v3436
        %5235 = vmatmul.mubr.f32.gmra.mrb[0].mxu0 %v3434
        %v5236 = vpop.f32.mrb[0].mxu0
        %v5237 = vadd.f32 %v5166, %v5236
        %v5238 = vpop.f32.mrb[0].mxu0
        %v5239 = vadd.f32 %v5168, %v5238
        %5240 = vdwg.mxu0
        %5241 = vmatprep.subr.mxu0 %v2340
        %5242 = vmatpush1.msra.mxu0 %v2339
        %5243 = vmatprep.subr.mxu0 %v2344
        %5244 = vmatpush1.msra.mxu0 %v2343
        %5245 = vmatprep.subr.mxu0 %v2348
        %5246 = vmatpush1.msra.mxu0 %v2347
        %5247 = vmatprep.subr.mxu0 %v2352
        %5248 = vmatpush1.msra.mxu0 %v2351
        %5249 = vmatprep.subr.mxu0 %v2356
        %5250 = vmatpush1.msra.mxu0 %v2355
        %5251 = vmatprep.subr.mxu0 %v2360
        %5252 = vmatpush1.msra.mxu0 %v2359
        %5253 = vmatprep.subr.mxu0 %v2364
        %5254 = vmatpush1.msra.mxu0 %v2363
        %5255 = vmatprep.subr.mxu0 %v2368
        %5256 = vmatpush1.msra.mxu0 %v2367
        %5257 = vmatprep.subr.mxu0 %v2372
        %5258 = vmatpush1.msra.mxu0 %v2371
        %5259 = vmatprep.subr.mxu0 %v2376
        %5260 = vmatpush1.msra.mxu0 %v2375
        %5261 = vmatprep.subr.mxu0 %v2380
        %5262 = vmatpush1.msra.mxu0 %v2379
        %5263 = vmatprep.subr.mxu0 %v2384
        %5264 = vmatpush1.msra.mxu0 %v2383
        %5265 = vmatprep.subr.mxu0 %v2388
        %5266 = vmatpush1.msra.mxu0 %v2387
        %5267 = vmatprep.subr.mxu0 %v2392
        %5268 = vmatpush1.msra.mxu0 %v2391
        %5269 = vmatprep.subr.mxu0 %v2396
        %5270 = vmatpush1.msra.mxu0 %v2395
        %5271 = vmatprep.subr.mxu0 %v2400
        %5272 = vmatpush1.msra.mxu0 %v2399
        %5273 = vmatprep.subr.mxu0 %v2404
        %5274 = vmatpush1.msra.mxu0 %v2403
        %5275 = vmatprep.subr.mxu0 %v2408
        %5276 = vmatpush1.msra.mxu0 %v2407
        %5277 = vmatprep.subr.mxu0 %v2412
        %5278 = vmatpush1.msra.mxu0 %v2411
        %5279 = vmatprep.subr.mxu0 %v2416
        %5280 = vmatpush1.msra.mxu0 %v2415
        %5281 = vmatprep.subr.mxu0 %v2420
        %5282 = vmatpush1.msra.mxu0 %v2419
        %5283 = vmatprep.subr.mxu0 %v2424
        %5284 = vmatpush1.msra.mxu0 %v2423
        %5285 = vmatprep.subr.mxu0 %v2428
        %5286 = vmatpush1.msra.mxu0 %v2427
        %5287 = vmatprep.subr.mxu0 %v2432
        %5288 = vmatpush1.msra.mxu0 %v2431
        %5289 = vmatprep.subr.mxu0 %v2436
        %5290 = vmatpush1.msra.mxu0 %v2435
        %5291 = vmatprep.subr.mxu0 %v2440
        %5292 = vmatpush1.msra.mxu0 %v2439
        %5293 = vmatprep.subr.mxu0 %v2444
        %5294 = vmatpush1.msra.mxu0 %v2443
        %5295 = vmatprep.subr.mxu0 %v2448
        %5296 = vmatpush1.msra.mxu0 %v2447
        %5297 = vmatprep.subr.mxu0 %v2452
        %5298 = vmatpush1.msra.mxu0 %v2451
        %5299 = vmatprep.subr.mxu0 %v2456
        %5300 = vmatpush1.msra.mxu0 %v2455
        %5301 = vmatprep.subr.mxu0 %v2460
        %5302 = vmatpush1.msra.mxu0 %v2459
        %5303 = vmatprep.subr.mxu0 %v2464
        %5304 = vmatpush1.msra.mxu0 %v2463
        %5305 = vmatprep.mubr.f32.mxu0 %v3452
        %5306 = vmatmul.mubr.f32.gmra.mrb[0].mxu0 %v3444
        %v5307 = vpop.f32.mrb[0].mxu0
        %v5308 = vadd.f32 %v5237, %v5307
        %v5309 = vpop.f32.mrb[0].mxu0
        %v5310 = vadd.f32 %v5239, %v5309
        %5311 = vdwg.mxu0
        %5312 = vmatprep.subr.mxu0 %v2468
        %5313 = vmatpush1.msra.mxu0 %v2467
        %5314 = vmatprep.subr.mxu0 %v2472
        %5315 = vmatpush1.msra.mxu0 %v2471
        %5316 = vmatprep.subr.mxu0 %v2476
        %5317 = vmatpush1.msra.mxu0 %v2475
        %5318 = vmatprep.subr.mxu0 %v2480
        %5319 = vmatpush1.msra.mxu0 %v2479
        %5320 = vmatprep.subr.mxu0 %v2484
        %5321 = vmatpush1.msra.mxu0 %v2483
        %5322 = vmatprep.subr.mxu0 %v2488
        %5323 = vmatpush1.msra.mxu0 %v2487
        %5324 = vmatprep.subr.mxu0 %v2492
        %5325 = vmatpush1.msra.mxu0 %v2491
        %5326 = vmatprep.subr.mxu0 %v2496
        %5327 = vmatpush1.msra.mxu0 %v2495
        %5328 = vmatprep.subr.mxu0 %v2500
        %5329 = vmatpush1.msra.mxu0 %v2499
        %5330 = vmatprep.subr.mxu0 %v2504
        %5331 = vmatpush1.msra.mxu0 %v2503
        %5332 = vmatprep.subr.mxu0 %v2508
        %5333 = vmatpush1.msra.mxu0 %v2507
        %5334 = vmatprep.subr.mxu0 %v2512
        %5335 = vmatpush1.msra.mxu0 %v2511
        %5336 = vmatprep.subr.mxu0 %v2516
        %5337 = vmatpush1.msra.mxu0 %v2515
        %5338 = vmatprep.subr.mxu0 %v2520
        %5339 = vmatpush1.msra.mxu0 %v2519
        %5340 = vmatprep.subr.mxu0 %v2524
        %5341 = vmatpush1.msra.mxu0 %v2523
        %5342 = vmatprep.subr.mxu0 %v2528
        %5343 = vmatpush1.msra.mxu0 %v2527
        %5344 = vmatprep.subr.mxu0 %v2532
        %5345 = vmatpush1.msra.mxu0 %v2531
        %5346 = vmatprep.subr.mxu0 %v2536
        %5347 = vmatpush1.msra.mxu0 %v2535
        %5348 = vmatprep.subr.mxu0 %v2540
        %5349 = vmatpush1.msra.mxu0 %v2539
        %5350 = vmatprep.subr.mxu0 %v2544
        %5351 = vmatpush1.msra.mxu0 %v2543
        %5352 = vmatprep.subr.mxu0 %v2548
        %5353 = vmatpush1.msra.mxu0 %v2547
        %5354 = vmatprep.subr.mxu0 %v2552
        %5355 = vmatpush1.msra.mxu0 %v2551
        %5356 = vmatprep.subr.mxu0 %v2556
        %5357 = vmatpush1.msra.mxu0 %v2555
        %5358 = vmatprep.subr.mxu0 %v2560
        %5359 = vmatpush1.msra.mxu0 %v2559
        %5360 = vmatprep.subr.mxu0 %v2564
        %5361 = vmatpush1.msra.mxu0 %v2563
        %5362 = vmatprep.subr.mxu0 %v2568
        %5363 = vmatpush1.msra.mxu0 %v2567
        %5364 = vmatprep.subr.mxu0 %v2572
        %5365 = vmatpush1.msra.mxu0 %v2571
        %5366 = vmatprep.subr.mxu0 %v2576
        %5367 = vmatpush1.msra.mxu0 %v2575
        %5368 = vmatprep.subr.mxu0 %v2580
        %5369 = vmatpush1.msra.mxu0 %v2579
        %5370 = vmatprep.subr.mxu0 %v2584
        %5371 = vmatpush1.msra.mxu0 %v2583
        %5372 = vmatprep.subr.mxu0 %v2588
        %5373 = vmatpush1.msra.mxu0 %v2587
        %5374 = vmatprep.subr.mxu0 %v2592
        %5375 = vmatpush1.msra.mxu0 %v2591
        %5376 = vmatprep.mubr.f32.mxu0 %v3453
        %5377 = vmatmul.mubr.f32.gmra.mrb[0].mxu0 %v3451
        %v5378 = vpop.f32.mrb[0].mxu0
        %v5379 = vadd.f32 %v5308, %v5378
        %v5380 = vpop.f32.mrb[0].mxu0
        %v5381 = vadd.f32 %v5310, %v5380
        %5382 = vdwg.mxu0
        %5383 = vmatprep.subr.mxu0 %v2596
        %5384 = vmatpush1.msra.mxu0 %v2595
        %5385 = vmatprep.subr.mxu0 %v2600
        %5386 = vmatpush1.msra.mxu0 %v2599
        %5387 = vmatprep.subr.mxu0 %v2604
        %5388 = vmatpush1.msra.mxu0 %v2603
        %5389 = vmatprep.subr.mxu0 %v2608
        %5390 = vmatpush1.msra.mxu0 %v2607
        %5391 = vmatprep.subr.mxu0 %v2612
        %5392 = vmatpush1.msra.mxu0 %v2611
        %5393 = vmatprep.subr.mxu0 %v2616
        %5394 = vmatpush1.msra.mxu0 %v2615
        %5395 = vmatprep.subr.mxu0 %v2620
        %5396 = vmatpush1.msra.mxu0 %v2619
        %5397 = vmatprep.subr.mxu0 %v2624
        %5398 = vmatpush1.msra.mxu0 %v2623
        %5399 = vmatprep.subr.mxu0 %v2628
        %5400 = vmatpush1.msra.mxu0 %v2627
        %5401 = vmatprep.subr.mxu0 %v2632
        %5402 = vmatpush1.msra.mxu0 %v2631
        %5403 = vmatprep.subr.mxu0 %v2636
        %5404 = vmatpush1.msra.mxu0 %v2635
        %5405 = vmatprep.subr.mxu0 %v2640
        %5406 = vmatpush1.msra.mxu0 %v2639
        %5407 = vmatprep.subr.mxu0 %v2644
        %5408 = vmatpush1.msra.mxu0 %v2643
        %5409 = vmatprep.subr.mxu0 %v2648
        %5410 = vmatpush1.msra.mxu0 %v2647
        %5411 = vmatprep.subr.mxu0 %v2652
        %5412 = vmatpush1.msra.mxu0 %v2651
        %5413 = vmatprep.subr.mxu0 %v2656
        %5414 = vmatpush1.msra.mxu0 %v2655
        %5415 = vmatprep.subr.mxu0 %v2660
        %5416 = vmatpush1.msra.mxu0 %v2659
        %5417 = vmatprep.subr.mxu0 %v2664
        %5418 = vmatpush1.msra.mxu0 %v2663
        %5419 = vmatprep.subr.mxu0 %v2668
        %5420 = vmatpush1.msra.mxu0 %v2667
        %5421 = vmatprep.subr.mxu0 %v2672
        %5422 = vmatpush1.msra.mxu0 %v2671
        %5423 = vmatprep.subr.mxu0 %v2676
        %5424 = vmatpush1.msra.mxu0 %v2675
        %5425 = vmatprep.subr.mxu0 %v2680
        %5426 = vmatpush1.msra.mxu0 %v2679
        %5427 = vmatprep.subr.mxu0 %v2684
        %5428 = vmatpush1.msra.mxu0 %v2683
        %5429 = vmatprep.subr.mxu0 %v2688
        %5430 = vmatpush1.msra.mxu0 %v2687
        %5431 = vmatprep.subr.mxu0 %v2692
        %5432 = vmatpush1.msra.mxu0 %v2691
        %5433 = vmatprep.subr.mxu0 %v2696
        %5434 = vmatpush1.msra.mxu0 %v2695
        %5435 = vmatprep.subr.mxu0 %v2700
        %5436 = vmatpush1.msra.mxu0 %v2699
        %5437 = vmatprep.subr.mxu0 %v2704
        %5438 = vmatpush1.msra.mxu0 %v2703
        %5439 = vmatprep.subr.mxu0 %v2708
        %5440 = vmatpush1.msra.mxu0 %v2707
        %5441 = vmatprep.subr.mxu0 %v2712
        %5442 = vmatpush1.msra.mxu0 %v2711
        %5443 = vmatprep.subr.mxu0 %v2716
        %5444 = vmatpush1.msra.mxu0 %v2715
        %5445 = vmatprep.subr.mxu0 %v2720
        %5446 = vmatpush1.msra.mxu0 %v2719
        %5447 = vmatprep.mubr.f32.mxu0 %v3469
        %5448 = vmatmul.mubr.f32.gmra.mrb[0].mxu0 %v3461
        %v5449 = vpop.f32.mrb[0].mxu0
        %v5450 = vadd.f32 %v5379, %v5449
        %v5451 = vpop.f32.mrb[0].mxu0
        %v5452 = vadd.f32 %v5381, %v5451
        %5453 = vdwg.mxu0
        %5454 = vmatprep.subr.mxu0 %v2724
        %5455 = vmatpush1.msra.mxu0 %v2723
        %5456 = vmatprep.subr.mxu0 %v2728
        %5457 = vmatpush1.msra.mxu0 %v2727
        %5458 = vmatprep.subr.mxu0 %v2732
        %5459 = vmatpush1.msra.mxu0 %v2731
        %5460 = vmatprep.subr.mxu0 %v2736
        %5461 = vmatpush1.msra.mxu0 %v2735
        %5462 = vmatprep.subr.mxu0 %v2740
        %5463 = vmatpush1.msra.mxu0 %v2739
        %5464 = vmatprep.subr.mxu0 %v2744
        %5465 = vmatpush1.msra.mxu0 %v2743
        %5466 = vmatprep.subr.mxu0 %v2748
        %5467 = vmatpush1.msra.mxu0 %v2747
        %5468 = vmatprep.subr.mxu0 %v2752
        %5469 = vmatpush1.msra.mxu0 %v2751
        %5470 = vmatprep.subr.mxu0 %v2756
        %5471 = vmatpush1.msra.mxu0 %v2755
        %5472 = vmatprep.subr.mxu0 %v2760
        %5473 = vmatpush1.msra.mxu0 %v2759
        %5474 = vmatprep.subr.mxu0 %v2764
        %5475 = vmatpush1.msra.mxu0 %v2763
        %5476 = vmatprep.subr.mxu0 %v2768
        %5477 = vmatpush1.msra.mxu0 %v2767
        %5478 = vmatprep.subr.mxu0 %v2772
        %5479 = vmatpush1.msra.mxu0 %v2771
        %5480 = vmatprep.subr.mxu0 %v2776
        %5481 = vmatpush1.msra.mxu0 %v2775
        %5482 = vmatprep.subr.mxu0 %v2780
        %5483 = vmatpush1.msra.mxu0 %v2779
        %5484 = vmatprep.subr.mxu0 %v2784
        %5485 = vmatpush1.msra.mxu0 %v2783
        %5486 = vmatprep.subr.mxu0 %v2788
        %5487 = vmatpush1.msra.mxu0 %v2787
        %5488 = vmatprep.subr.mxu0 %v2792
        %5489 = vmatpush1.msra.mxu0 %v2791
        %5490 = vmatprep.subr.mxu0 %v2796
        %5491 = vmatpush1.msra.mxu0 %v2795
        %5492 = vmatprep.subr.mxu0 %v2800
        %5493 = vmatpush1.msra.mxu0 %v2799
        %5494 = vmatprep.subr.mxu0 %v2804
        %5495 = vmatpush1.msra.mxu0 %v2803
        %5496 = vmatprep.subr.mxu0 %v2808
        %5497 = vmatpush1.msra.mxu0 %v2807
        %5498 = vmatprep.subr.mxu0 %v2812
        %5499 = vmatpush1.msra.mxu0 %v2811
        %5500 = vmatprep.subr.mxu0 %v2816
        %5501 = vmatpush1.msra.mxu0 %v2815
        %5502 = vmatprep.subr.mxu0 %v2820
        %5503 = vmatpush1.msra.mxu0 %v2819
        %5504 = vmatprep.subr.mxu0 %v2824
        %5505 = vmatpush1.msra.mxu0 %v2823
        %5506 = vmatprep.subr.mxu0 %v2828
        %5507 = vmatpush1.msra.mxu0 %v2827
        %5508 = vmatprep.subr.mxu0 %v2832
        %5509 = vmatpush1.msra.mxu0 %v2831
        %5510 = vmatprep.subr.mxu0 %v2836
        %5511 = vmatpush1.msra.mxu0 %v2835
        %5512 = vmatprep.subr.mxu0 %v2840
        %5513 = vmatpush1.msra.mxu0 %v2839
        %5514 = vmatprep.subr.mxu0 %v2844
        %5515 = vmatpush1.msra.mxu0 %v2843
        %5516 = vmatprep.subr.mxu0 %v2848
        %5517 = vmatpush1.msra.mxu0 %v2847
        %5518 = vmatprep.mubr.f32.mxu0 %v3470
        %5519 = vmatmul.mubr.f32.gmra.mrb[0].mxu0 %v3468
        %v5520 = vpop.f32.mrb[0].mxu0
        %v5521 = vadd.f32 %v5450, %v5520
        %v5522 = vpop.f32.mrb[0].mxu0
        %v5523 = vadd.f32 %v5452, %v5522
        %5524 = vdwg.mxu0
        %5525 = vmatprep.subr.mxu0 %v2852
        %5526 = vmatpush1.msra.mxu0 %v2851
        %5527 = vmatprep.subr.mxu0 %v2856
        %5528 = vmatpush1.msra.mxu0 %v2855
        %5529 = vmatprep.subr.mxu0 %v2860
        %5530 = vmatpush1.msra.mxu0 %v2859
        %5531 = vmatprep.subr.mxu0 %v2864
        %5532 = vmatpush1.msra.mxu0 %v2863
        %5533 = vmatprep.subr.mxu0 %v2868
        %5534 = vmatpush1.msra.mxu0 %v2867
        %5535 = vmatprep.subr.mxu0 %v2872
        %5536 = vmatpush1.msra.mxu0 %v2871
        %5537 = vmatprep.subr.mxu0 %v2876
        %5538 = vmatpush1.msra.mxu0 %v2875
        %5539 = vmatprep.subr.mxu0 %v2880
        %5540 = vmatpush1.msra.mxu0 %v2879
        %5541 = vmatprep.subr.mxu0 %v2884
        %5542 = vmatpush1.msra.mxu0 %v2883
        %5543 = vmatprep.subr.mxu0 %v2888
        %5544 = vmatpush1.msra.mxu0 %v2887
        %5545 = vmatprep.subr.mxu0 %v2892
        %5546 = vmatpush1.msra.mxu0 %v2891
        %5547 = vmatprep.subr.mxu0 %v2896
        %5548 = vmatpush1.msra.mxu0 %v2895
        %5549 = vmatprep.subr.mxu0 %v2900
        %5550 = vmatpush1.msra.mxu0 %v2899
        %5551 = vmatprep.subr.mxu0 %v2904
        %5552 = vmatpush1.msra.mxu0 %v2903
        %5553 = vmatprep.subr.mxu0 %v2908
        %5554 = vmatpush1.msra.mxu0 %v2907
        %5555 = vmatprep.subr.mxu0 %v2912
        %5556 = vmatpush1.msra.mxu0 %v2911
        %5557 = vmatprep.subr.mxu0 %v2916
        %5558 = vmatpush1.msra.mxu0 %v2915
        %5559 = vmatprep.subr.mxu0 %v2920
        %5560 = vmatpush1.msra.mxu0 %v2919
        %5561 = vmatprep.subr.mxu0 %v2924
        %5562 = vmatpush1.msra.mxu0 %v2923
        %5563 = vmatprep.subr.mxu0 %v2928
        %5564 = vmatpush1.msra.mxu0 %v2927
        %5565 = vmatprep.subr.mxu0 %v2932
        %5566 = vmatpush1.msra.mxu0 %v2931
        %5567 = vmatprep.subr.mxu0 %v2936
        %5568 = vmatpush1.msra.mxu0 %v2935
        %5569 = vmatprep.subr.mxu0 %v2940
        %5570 = vmatpush1.msra.mxu0 %v2939
        %5571 = vmatprep.subr.mxu0 %v2944
        %5572 = vmatpush1.msra.mxu0 %v2943
        %5573 = vmatprep.subr.mxu0 %v2948
        %5574 = vmatpush1.msra.mxu0 %v2947
        %5575 = vmatprep.subr.mxu0 %v2952
        %5576 = vmatpush1.msra.mxu0 %v2951
        %5577 = vmatprep.subr.mxu0 %v2956
        %5578 = vmatpush1.msra.mxu0 %v2955
        %5579 = vmatprep.subr.mxu0 %v2960
        %5580 = vmatpush1.msra.mxu0 %v2959
        %5581 = vmatprep.subr.mxu0 %v2964
        %5582 = vmatpush1.msra.mxu0 %v2963
        %5583 = vmatprep.subr.mxu0 %v2968
        %5584 = vmatpush1.msra.mxu0 %v2967
        %5585 = vmatprep.subr.mxu0 %v2972
        %5586 = vmatpush1.msra.mxu0 %v2971
        %5587 = vmatprep.subr.mxu0 %v2976
        %5588 = vmatpush1.msra.mxu0 %v2975
        %5589 = vmatprep.mubr.f32.mxu0 %v3486
        %5590 = vmatmul.mubr.f32.gmra.mrb[0].mxu0 %v3478
        %v5591 = vpop.f32.mrb[0].mxu0
        %v5592 = vadd.f32 %v5521, %v5591
        %v5593 = vpop.f32.mrb[0].mxu0
        %v5594 = vadd.f32 %v5523, %v5593
        %5595 = vdwg.mxu0
        %5596 = vmatprep.subr.mxu0 %v2980
        %5597 = vmatpush1.msra.mxu0 %v2979
        %5598 = vmatprep.subr.mxu0 %v2984
        %5599 = vmatpush1.msra.mxu0 %v2983
        %5600 = vmatprep.subr.mxu0 %v2988
        %5601 = vmatpush1.msra.mxu0 %v2987
        %5602 = vmatprep.subr.mxu0 %v2992
        %5603 = vmatpush1.msra.mxu0 %v2991
        %5604 = vmatprep.subr.mxu0 %v2996
        %5605 = vmatpush1.msra.mxu0 %v2995
        %5606 = vmatprep.subr.mxu0 %v3000
        %5607 = vmatpush1.msra.mxu0 %v2999
        %5608 = vmatprep.subr.mxu0 %v3004
        %5609 = vmatpush1.msra.mxu0 %v3003
        %5610 = vmatprep.subr.mxu0 %v3008
        %5611 = vmatpush1.msra.mxu0 %v3007
        %5612 = vmatprep.subr.mxu0 %v3012
        %5613 = vmatpush1.msra.mxu0 %v3011
        %5614 = vmatprep.subr.mxu0 %v3016
        %5615 = vmatpush1.msra.mxu0 %v3015
        %5616 = vmatprep.subr.mxu0 %v3020
        %5617 = vmatpush1.msra.mxu0 %v3019
        %5618 = vmatprep.subr.mxu0 %v3024
        %5619 = vmatpush1.msra.mxu0 %v3023
        %5620 = vmatprep.subr.mxu0 %v3028
        %5621 = vmatpush1.msra.mxu0 %v3027
        %5622 = vmatprep.subr.mxu0 %v3032
        %5623 = vmatpush1.msra.mxu0 %v3031
        %5624 = vmatprep.subr.mxu0 %v3036
        %5625 = vmatpush1.msra.mxu0 %v3035
        %5626 = vmatprep.subr.mxu0 %v3040
        %5627 = vmatpush1.msra.mxu0 %v3039
        %5628 = vmatprep.subr.mxu0 %v3044
        %5629 = vmatpush1.msra.mxu0 %v3043
        %5630 = vmatprep.subr.mxu0 %v3048
        %5631 = vmatpush1.msra.mxu0 %v3047
        %5632 = vmatprep.subr.mxu0 %v3052
        %5633 = vmatpush1.msra.mxu0 %v3051
        %5634 = vmatprep.subr.mxu0 %v3056
        %5635 = vmatpush1.msra.mxu0 %v3055
        %5636 = vmatprep.subr.mxu0 %v3060
        %5637 = vmatpush1.msra.mxu0 %v3059
        %5638 = vmatprep.subr.mxu0 %v3064
        %5639 = vmatpush1.msra.mxu0 %v3063
        %5640 = vmatprep.subr.mxu0 %v3068
        %5641 = vmatpush1.msra.mxu0 %v3067
        %5642 = vmatprep.subr.mxu0 %v3072
        %5643 = vmatpush1.msra.mxu0 %v3071
        %5644 = vmatprep.subr.mxu0 %v3076
        %5645 = vmatpush1.msra.mxu0 %v3075
        %5646 = vmatprep.subr.mxu0 %v3080
        %5647 = vmatpush1.msra.mxu0 %v3079
        %5648 = vmatprep.subr.mxu0 %v3084
        %5649 = vmatpush1.msra.mxu0 %v3083
        %5650 = vmatprep.subr.mxu0 %v3088
        %5651 = vmatpush1.msra.mxu0 %v3087
        %5652 = vmatprep.subr.mxu0 %v3092
        %5653 = vmatpush1.msra.mxu0 %v3091
        %5654 = vmatprep.subr.mxu0 %v3096
        %5655 = vmatpush1.msra.mxu0 %v3095
        %5656 = vmatprep.subr.mxu0 %v3100
        %5657 = vmatpush1.msra.mxu0 %v3099
        %5658 = vmatprep.subr.mxu0 %v3104
        %5659 = vmatpush1.msra.mxu0 %v3103
        %5660 = vmatprep.mubr.f32.mxu0 %v3487
        %5661 = vmatmul.mubr.f32.gmra.mrb[0].mxu0 %v3485
        %v5662 = vpop.f32.mrb[0].mxu0
        %v5663 = vadd.f32 %v5592, %v5662
        %v5664 = vpop.f32.mrb[0].mxu0
        %v5665 = vadd.f32 %v5594, %v5664
        %5666 = vdwg.mxu0
        %5667 = vmatprep.subr.mxu0 %v3108
        %5668 = vmatpush1.msra.mxu0 %v3107
        %5669 = vmatprep.subr.mxu0 %v3112
        %5670 = vmatpush1.msra.mxu0 %v3111
        %5671 = vmatprep.subr.mxu0 %v3116
        %5672 = vmatpush1.msra.mxu0 %v3115
        %5673 = vmatprep.subr.mxu0 %v3120
        %5674 = vmatpush1.msra.mxu0 %v3119
        %5675 = vmatprep.subr.mxu0 %v3124
        %5676 = vmatpush1.msra.mxu0 %v3123
        %5677 = vmatprep.subr.mxu0 %v3128
        %5678 = vmatpush1.msra.mxu0 %v3127
        %5679 = vmatprep.subr.mxu0 %v3132
        %5680 = vmatpush1.msra.mxu0 %v3131
        %5681 = vmatprep.subr.mxu0 %v3136
        %5682 = vmatpush1.msra.mxu0 %v3135
        %5683 = vmatprep.subr.mxu0 %v3140
        %5684 = vmatpush1.msra.mxu0 %v3139
        %5685 = vmatprep.subr.mxu0 %v3144
        %5686 = vmatpush1.msra.mxu0 %v3143
        %5687 = vmatprep.subr.mxu0 %v3148
        %5688 = vmatpush1.msra.mxu0 %v3147
        %5689 = vmatprep.subr.mxu0 %v3152
        %5690 = vmatpush1.msra.mxu0 %v3151
        %5691 = vmatprep.subr.mxu0 %v3156
        %5692 = vmatpush1.msra.mxu0 %v3155
        %5693 = vmatprep.subr.mxu0 %v3160
        %5694 = vmatpush1.msra.mxu0 %v3159
        %5695 = vmatprep.subr.mxu0 %v3164
        %5696 = vmatpush1.msra.mxu0 %v3163
        %5697 = vmatprep.subr.mxu0 %v3168
        %5698 = vmatpush1.msra.mxu0 %v3167
        %5699 = vmatprep.subr.mxu0 %v3172
        %5700 = vmatpush1.msra.mxu0 %v3171
        %5701 = vmatprep.subr.mxu0 %v3176
        %5702 = vmatpush1.msra.mxu0 %v3175
        %5703 = vmatprep.subr.mxu0 %v3180
        %5704 = vmatpush1.msra.mxu0 %v3179
        %5705 = vmatprep.subr.mxu0 %v3184
        %5706 = vmatpush1.msra.mxu0 %v3183
        %5707 = vmatprep.subr.mxu0 %v3188
        %5708 = vmatpush1.msra.mxu0 %v3187
        %5709 = vmatprep.subr.mxu0 %v3192
        %5710 = vmatpush1.msra.mxu0 %v3191
        %5711 = vmatprep.subr.mxu0 %v3196
        %5712 = vmatpush1.msra.mxu0 %v3195
        %5713 = vmatprep.subr.mxu0 %v3200
        %5714 = vmatpush1.msra.mxu0 %v3199
        %5715 = vmatprep.subr.mxu0 %v3204
        %5716 = vmatpush1.msra.mxu0 %v3203
        %5717 = vmatprep.subr.mxu0 %v3208
        %5718 = vmatpush1.msra.mxu0 %v3207
        %5719 = vmatprep.subr.mxu0 %v3212
        %5720 = vmatpush1.msra.mxu0 %v3211
        %5721 = vmatprep.subr.mxu0 %v3216
        %5722 = vmatpush1.msra.mxu0 %v3215
        %5723 = vmatprep.subr.mxu0 %v3220
        %5724 = vmatpush1.msra.mxu0 %v3219
        %5725 = vmatprep.subr.mxu0 %v3224
        %5726 = vmatpush1.msra.mxu0 %v3223
        %5727 = vmatprep.subr.mxu0 %v3228
        %5728 = vmatpush1.msra.mxu0 %v3227
        %5729 = vmatprep.subr.mxu0 %v3232
        %5730 = vmatpush1.msra.mxu0 %v3231
        %5731 = vmatprep.mubr.f32.mxu0 %v3503
        %5732 = vmatmul.mubr.f32.gmra.mrb[0].mxu0 %v3495
        %v5733 = vpop.f32.mrb[0].mxu0
        %v5734 = vadd.f32 %v5663, %v5733
        %v5735 = vpop.f32.mrb[0].mxu0
        %v5736 = vadd.f32 %v5665, %v5735
        %5737 = vdwg.mxu0
        %5738 = vmatprep.subr.mxu0 %v3236
        %5739 = vmatpush1.msra.mxu0 %v3235
        %5740 = vmatprep.subr.mxu0 %v3240
        %5741 = vmatpush1.msra.mxu0 %v3239
        %5742 = vmatprep.subr.mxu0 %v3244
        %5743 = vmatpush1.msra.mxu0 %v3243
        %5744 = vmatprep.subr.mxu0 %v3248
        %5745 = vmatpush1.msra.mxu0 %v3247
        %5746 = vmatprep.subr.mxu0 %v3252
        %5747 = vmatpush1.msra.mxu0 %v3251
        %5748 = vmatprep.subr.mxu0 %v3256
        %5749 = vmatpush1.msra.mxu0 %v3255
        %5750 = vmatprep.subr.mxu0 %v3260
        %5751 = vmatpush1.msra.mxu0 %v3259
        %5752 = vmatprep.subr.mxu0 %v3264
        %5753 = vmatpush1.msra.mxu0 %v3263
        %5754 = vmatprep.subr.mxu0 %v3268
        %5755 = vmatpush1.msra.mxu0 %v3267
        %5756 = vmatprep.subr.mxu0 %v3272
        %5757 = vmatpush1.msra.mxu0 %v3271
        %5758 = vmatprep.subr.mxu0 %v3276
        %5759 = vmatpush1.msra.mxu0 %v3275
        %5760 = vmatprep.subr.mxu0 %v3280
        %5761 = vmatpush1.msra.mxu0 %v3279
        %5762 = vmatprep.subr.mxu0 %v3284
        %5763 = vmatpush1.msra.mxu0 %v3283
        %5764 = vmatprep.subr.mxu0 %v3288
        %5765 = vmatpush1.msra.mxu0 %v3287
        %5766 = vmatprep.subr.mxu0 %v3292
        %5767 = vmatpush1.msra.mxu0 %v3291
        %5768 = vmatprep.subr.mxu0 %v3296
        %5769 = vmatpush1.msra.mxu0 %v3295
        %5770 = vmatprep.subr.mxu0 %v3300
        %5771 = vmatpush1.msra.mxu0 %v3299
        %5772 = vmatprep.subr.mxu0 %v3304
        %5773 = vmatpush1.msra.mxu0 %v3303
        %5774 = vmatprep.subr.mxu0 %v3308
        %5775 = vmatpush1.msra.mxu0 %v3307
        %5776 = vmatprep.subr.mxu0 %v3312
        %5777 = vmatpush1.msra.mxu0 %v3311
        %5778 = vmatprep.subr.mxu0 %v3316
        %5779 = vmatpush1.msra.mxu0 %v3315
        %5780 = vmatprep.subr.mxu0 %v3320
        %5781 = vmatpush1.msra.mxu0 %v3319
        %5782 = vmatprep.subr.mxu0 %v3324
        %5783 = vmatpush1.msra.mxu0 %v3323
        %5784 = vmatprep.subr.mxu0 %v3328
        %5785 = vmatpush1.msra.mxu0 %v3327
        %5786 = vmatprep.subr.mxu0 %v3332
        %5787 = vmatpush1.msra.mxu0 %v3331
        %5788 = vmatprep.subr.mxu0 %v3336
        %5789 = vmatpush1.msra.mxu0 %v3335
        %5790 = vmatprep.subr.mxu0 %v3340
        %5791 = vmatpush1.msra.mxu0 %v3339
        %5792 = vmatprep.subr.mxu0 %v3344
        %5793 = vmatpush1.msra.mxu0 %v3343
        %5794 = vmatprep.subr.mxu0 %v3348
        %5795 = vmatpush1.msra.mxu0 %v3347
        %5796 = vmatprep.subr.mxu0 %v3352
        %5797 = vmatpush1.msra.mxu0 %v3351
        %5798 = vmatprep.subr.mxu0 %v3356
        %5799 = vmatpush1.msra.mxu0 %v3355
        %5800 = vmatprep.subr.mxu0 %v3360
        %5801 = vmatpush1.msra.mxu0 %v3359
        %5802 = vmatprep.mubr.f32.mxu0 %v3504
        %5803 = vmatmul.mubr.f32.gmra.mrb[0].mxu0 %v3502
        %v5804 = vpop.f32.mrb[0].mxu0
        %v5805 = vadd.f32 %v5734, %v5804
        %v5806 = vpop.f32.mrb[0].mxu0
        %v5807 = vadd.f32 %v5736, %v5806
        %5808 = vdwg.mxu0
        %p5809 = scmp.eq.s32.totalorder %s23, 0
        // Predicated region
        $region45: #{animal_network_forward.3} parent=39 // pred_check
          %p5810 = pneg %p5809
        $region46: #{animal_network_forward.3} parent=39 // pred_check_branch
          %5812 = sbr.rel (%p5810) target = $region48
        $region47: #{animal_network_forward.3} parent=39 // pred_region
          %v5813 = vld [vmem:[%s2] sm:$0xf]
          %v5815 = vlaneseq
          %v5816 = vshrl.u32 %v5815, 7
          %v5817 = vsub.s32 0, %v5816
          %v5818 = vrot.slane %v5813, %v5817
          %v5819 = vlaneseq
          %v5820 = vshrl.u32 %v5819, 7
          %v5821 = vsub.s32 1, %v5820
          %v5822 = vrot.slane %v5813, %v5821
          %v5823 = vlaneseq
          %v5824 = vshrl.u32 %v5823, 7
          %v5825 = vsub.s32 2, %v5824
          %v5826 = vrot.slane %v5813, %v5825
          %v5827 = vlaneseq
          %v5828 = vshrl.u32 %v5827, 7
          %v5829 = vsub.s32 3, %v5828
          %v5830 = vrot.slane %v5813, %v5829
          %v5835 = vadd.f32 %v4669, %v5818
          %v5836 = vadd.f32 %v4671, %v5822
          %v5837 = vadd.f32 %v5805, %v5826
          %v5838 = vadd.f32 %v5807, %v5830
          %v5843 = vcombine.low %v5835, %v5836
          %v5844 = vcombine.low %v5837, %v5838
          %v5846 = vunpack.c.l.s4 1983009808
          %v5847 = vunpack.c.0.s8 %v5846
          %v5848 = vlaneseq
          %v5849 = vshrl.u32 %v5848, 7
          %v5850 = vsub.s32 %v5847, %v5849
          %v5851 = vrot.slane %v5843, %v5850
          %v5853 = vunpack.c.l.s4 1983009808
          %v5854 = vunpack.c.0.s8 %v5853
          %v5855 = vlaneseq
          %v5856 = vshrl.u32 %v5855, 7
          %v5857 = vsub.s32 %v5854, %v5856
          %v5858 = vrot.slane %v5844, %v5857
          %v5859 = vcombine.low %v5851, %v5858
          %5861 = vst [vmem:[#allocation2] sm:$0xff] %v5859
        $region48: #{animal_network_forward.3} parent=39 // pred_fallthru
          _
        %p5862 = scmp.gt.s32.totalorder %s23, 0
        // Predicated region
        $region49: #{animal_network_forward.3} parent=39 // pred_check
          %p5863 = pneg %p5862
        $region50: #{animal_network_forward.3} parent=39 // pred_check_branch
          %5865 = sbr.rel (%p5863) target = $region52
        $region51: #{animal_network_forward.3} parent=39 // pred_region
          %v5866 = vld [vmem:[#allocation2] sm:$0xff]
          %v5871 = vcombine.low %v4669, %v4671
          %v5872 = vcombine.low %v5805, %v5807
          %v5874 = vunpack.c.l.s4 1983009808
          %v5875 = vunpack.c.0.s8 %v5874
          %v5876 = vlaneseq
          %v5877 = vshrl.u32 %v5876, 7
          %v5878 = vsub.s32 %v5875, %v5877
          %v5879 = vrot.slane %v5871, %v5878
          %v5881 = vunpack.c.l.s4 1983009808
          %v5882 = vunpack.c.0.s8 %v5881
          %v5883 = vlaneseq
          %v5884 = vshrl.u32 %v5883, 7
          %v5885 = vsub.s32 %v5882, %v5884
          %v5886 = vrot.slane %v5872, %v5885
          %v5887 = vcombine.low %v5879, %v5886
          %v5889 = vadd.f32 %v5866, %v5887
          %5890 = vst [vmem:[#allocation2] sm:$0xff] %v5889
        $region52: #{animal_network_forward.3} parent=39 // pred_fallthru
          _
        %p5891 = scmp.eq.s32.totalorder %s23, 3
        // Predicated region
        $region53: #{animal_network_forward.3} parent=39 // pred_check
          %p5892 = pneg %p5891
        $region54: #{animal_network_forward.3} parent=39 // pred_check_branch
          %5894 = sbr.rel (%p5892) target = $region56
        $region55: #{animal_network_forward.3} parent=39 // pred_region
          %v5895 = vld [vmem:[#allocation2] sm:$0xff]
          %v5896 = vmax.f32 %v5895, 0.0
          %v5897 = vld [vmem:[%s3] sm:$0xf]
          %v5898 = vld [vmem:[%s3 + $0x4] sm:$0xf]
          %v5899 = vld [vmem:[%s3 + $0x8] sm:$0xf]
          %v5900 = vld [vmem:[%s3 + $0xc] sm:$0xf]
          %v5901 = vld [vmem:[%s3 + $0x10] sm:$0xf]
          %v5902 = vld [vmem:[%s3 + $0x14] sm:$0xf]
          %v5903 = vld [vmem:[%s3 + $0x18] sm:$0xf]
          %v5904 = vld [vmem:[%s3 + $0x1c] sm:$0xf]
          %v5905 = vld [vmem:[%s3 + $0x20] sm:$0xf]
          %v5906 = vld [vmem:[%s3 + $0x24] sm:$0xf]
          %v5907 = vld [vmem:[%s3 + $0x28] sm:$0xf]
          %v5908 = vld [vmem:[%s3 + $0x2c] sm:$0xf]
          %v5909 = vld [vmem:[%s3 + $0x30] sm:$0xf]
          %v5910 = vld [vmem:[%s3 + $0x34] sm:$0xf]
          %v5911 = vld [vmem:[%s3 + $0x38] sm:$0xf]
          %v5912 = vld [vmem:[%s3 + $0x3c] sm:$0xf]
          %v5913 = vld [vmem:[%s3 + $0x40] sm:$0xf]
          %v5914 = vld [vmem:[%s3 + $0x44] sm:$0xf]
          %v5915 = vld [vmem:[%s3 + $0x48] sm:$0xf]
          %v5916 = vld [vmem:[%s3 + $0x4c] sm:$0xf]
          %v5917 = vld [vmem:[%s3 + $0x50] sm:$0xf]
          %v5918 = vld [vmem:[%s3 + $0x54] sm:$0xf]
          %v5919 = vld [vmem:[%s3 + $0x58] sm:$0xf]
          %v5920 = vld [vmem:[%s3 + $0x5c] sm:$0xf]
          %v5921 = vld [vmem:[%s3 + $0x60] sm:$0xf]
          %v5922 = vld [vmem:[%s3 + $0x64] sm:$0xf]
          %v5923 = vld [vmem:[%s3 + $0x68] sm:$0xf]
          %v5924 = vld [vmem:[%s3 + $0x6c] sm:$0xf]
          %v5925 = vld [vmem:[%s3 + $0x70] sm:$0xf]
          %v5926 = vld [vmem:[%s3 + $0x74] sm:$0xf]
          %v5927 = vld [vmem:[%s3 + $0x78] sm:$0xf]
          %v5928 = vld [vmem:[%s3 + $0x7c] sm:$0xf]
          %v5929 = vld [vmem:[%s3 + $0x80] sm:$0xf]
          %v5930 = vld [vmem:[%s3 + $0x84] sm:$0xf]
          %v5931 = vld [vmem:[%s3 + $0x88] sm:$0xf]
          %v5932 = vld [vmem:[%s3 + $0x8c] sm:$0xf]
          %v5933 = vld [vmem:[%s3 + $0x90] sm:$0xf]
          %v5934 = vld [vmem:[%s3 + $0x94] sm:$0xf]
          %v5935 = vld [vmem:[%s3 + $0x98] sm:$0xf]
          %v5936 = vld [vmem:[%s3 + $0x9c] sm:$0xf]
          %v5937 = vld [vmem:[%s3 + $0xa0] sm:$0xf]
          %v5938 = vld [vmem:[%s3 + $0xa4] sm:$0xf]
          %v5939 = vld [vmem:[%s3 + $0xa8] sm:$0xf]
          %v5940 = vld [vmem:[%s3 + $0xac] sm:$0xf]
          %v5941 = vld [vmem:[%s3 + $0xb0] sm:$0xf]
          %v5942 = vld [vmem:[%s3 + $0xb4] sm:$0xf]
          %v5943 = vld [vmem:[%s3 + $0xb8] sm:$0xf]
          %v5944 = vld [vmem:[%s3 + $0xbc] sm:$0xf]
          %v5945 = vld [vmem:[%s3 + $0xc0] sm:$0xf]
          %v5946 = vld [vmem:[%s3 + $0xc4] sm:$0xf]
          %v5947 = vld [vmem:[%s3 + $0xc8] sm:$0xf]
          %v5948 = vld [vmem:[%s3 + $0xcc] sm:$0xf]
          %v5949 = vld [vmem:[%s3 + $0xd0] sm:$0xf]
          %v5950 = vld [vmem:[%s3 + $0xd4] sm:$0xf]
          %v5951 = vld [vmem:[%s3 + $0xd8] sm:$0xf]
          %v5952 = vld [vmem:[%s3 + $0xdc] sm:$0xf]
          %v5953 = vld [vmem:[%s3 + $0xe0] sm:$0xf]
          %v5954 = vld [vmem:[%s3 + $0xe4] sm:$0xf]
          %v5955 = vld [vmem:[%s3 + $0xe8] sm:$0xf]
          %v5956 = vld [vmem:[%s3 + $0xec] sm:$0xf]
          %v5957 = vld [vmem:[%s3 + $0xf0] sm:$0xf]
          %v5958 = vld [vmem:[%s3 + $0xf4] sm:$0xf]
          %v5959 = vld [vmem:[%s3 + $0xf8] sm:$0xf]
          %v5960 = vld [vmem:[%s3 + $0xfc] sm:$0xf]
          %v5961 = vunpack.c.l.bf16 %v5897
          %v5962 = vunpack.c.l.bf16 %v5898
          %v5963 = vunpack.c.l.bf16 %v5899
          %v5964 = vunpack.c.l.bf16 %v5900
          %v5965 = vunpack.c.l.bf16 %v5901
          %v5966 = vunpack.c.l.bf16 %v5902
          %v5967 = vunpack.c.l.bf16 %v5903
          %v5968 = vunpack.c.l.bf16 %v5904
          %v5969 = vunpack.c.l.bf16 %v5905
          %v5970 = vunpack.c.l.bf16 %v5906
          %v5971 = vunpack.c.l.bf16 %v5907
          %v5972 = vunpack.c.l.bf16 %v5908
          %v5973 = vunpack.c.l.bf16 %v5909
          %v5974 = vunpack.c.l.bf16 %v5910
          %v5975 = vunpack.c.l.bf16 %v5911
          %v5976 = vunpack.c.l.bf16 %v5912
          %v5977 = vunpack.c.l.bf16 %v5913
          %v5978 = vunpack.c.l.bf16 %v5914
          %v5979 = vunpack.c.l.bf16 %v5915
          %v5980 = vunpack.c.l.bf16 %v5916
          %v5981 = vunpack.c.l.bf16 %v5917
          %v5982 = vunpack.c.l.bf16 %v5918
          %v5983 = vunpack.c.l.bf16 %v5919
          %v5984 = vunpack.c.l.bf16 %v5920
          %v5985 = vunpack.c.l.bf16 %v5921
          %v5986 = vunpack.c.l.bf16 %v5922
          %v5987 = vunpack.c.l.bf16 %v5923
          %v5988 = vunpack.c.l.bf16 %v5924
          %v5989 = vunpack.c.l.bf16 %v5925
          %v5990 = vunpack.c.l.bf16 %v5926
          %v5991 = vunpack.c.l.bf16 %v5927
          %v5992 = vunpack.c.l.bf16 %v5928
          %v5993 = vunpack.c.l.bf16 %v5929
          %v5994 = vunpack.c.l.bf16 %v5930
          %v5995 = vunpack.c.l.bf16 %v5931
          %v5996 = vunpack.c.l.bf16 %v5932
          %v5997 = vunpack.c.l.bf16 %v5933
          %v5998 = vunpack.c.l.bf16 %v5934
          %v5999 = vunpack.c.l.bf16 %v5935
          %v6000 = vunpack.c.l.bf16 %v5936
          %v6001 = vunpack.c.l.bf16 %v5937
          %v6002 = vunpack.c.l.bf16 %v5938
          %v6003 = vunpack.c.l.bf16 %v5939
          %v6004 = vunpack.c.l.bf16 %v5940
          %v6005 = vunpack.c.l.bf16 %v5941
          %v6006 = vunpack.c.l.bf16 %v5942
          %v6007 = vunpack.c.l.bf16 %v5943
          %v6008 = vunpack.c.l.bf16 %v5944
          %v6009 = vunpack.c.l.bf16 %v5945
          %v6010 = vunpack.c.l.bf16 %v5946
          %v6011 = vunpack.c.l.bf16 %v5947
          %v6012 = vunpack.c.l.bf16 %v5948
          %v6013 = vunpack.c.l.bf16 %v5949
          %v6014 = vunpack.c.l.bf16 %v5950
          %v6015 = vunpack.c.l.bf16 %v5951
          %v6016 = vunpack.c.l.bf16 %v5952
          %v6017 = vunpack.c.l.bf16 %v5953
          %v6018 = vunpack.c.l.bf16 %v5954
          %v6019 = vunpack.c.l.bf16 %v5955
          %v6020 = vunpack.c.l.bf16 %v5956
          %v6021 = vunpack.c.l.bf16 %v5957
          %v6022 = vunpack.c.l.bf16 %v5958
          %v6023 = vunpack.c.l.bf16 %v5959
          %v6024 = vunpack.c.l.bf16 %v5960
          %v6025 = vld [vmem:[%s4] sm:$0x1]
          %v6027 = vlaneseq
          %v6028 = vshrl.u32 %v6027, 7
          %v6029 = vsub.s32 0, %v6028
          %v6030 = vrot.slane %v6025, %v6029
          %v6033 = vcombine.high %v5896, %v5896
          %v6035 = vunpack.c.l.s4 1983009808
          %v6036 = vunpack.c.0.s8 %v6035
          %v6037 = vlaneseq
          %v6038 = vshrl.u32 %v6037, 7
          %v6039 = vsub.s32 %v6036, %v6038
          %v6040 = vrot.slane %v5896, %v6039
          %v6042 = vunpack.c.l.s4 1983009808
          %v6043 = vunpack.c.0.s8 %v6042
          %v6044 = vlaneseq
          %v6045 = vshrl.u32 %v6044, 7
          %v6046 = vsub.s32 %v6043, %v6045
          %v6047 = vrot.slane %v6033, %v6046
          %v6048 = vcombine.high %v6040, %v6040
          %v6049 = vcombine.high %v6047, %v6047
          %6054 = vmatprep.subr.mxu0 0.0
          %6055 = vmatpush1.msra.mxu0 %v5961
          %6056 = vmatprep.subr.mxu0 0.0
          %6057 = vmatpush1.msra.mxu0 %v5962
          %6058 = vmatprep.subr.mxu0 0.0
          %6059 = vmatpush1.msra.mxu0 %v5963
          %6060 = vmatprep.subr.mxu0 0.0
          %6061 = vmatpush1.msra.mxu0 %v5964
          %6062 = vmatprep.subr.mxu0 0.0
          %6063 = vmatpush1.msra.mxu0 %v5965
          %6064 = vmatprep.subr.mxu0 0.0
          %6065 = vmatpush1.msra.mxu0 %v5966
          %6066 = vmatprep.subr.mxu0 0.0
          %6067 = vmatpush1.msra.mxu0 %v5967
          %6068 = vmatprep.subr.mxu0 0.0
          %6069 = vmatpush1.msra.mxu0 %v5968
          %6070 = vmatprep.subr.mxu0 0.0
          %6071 = vmatpush1.msra.mxu0 %v5969
          %6072 = vmatprep.subr.mxu0 0.0
          %6073 = vmatpush1.msra.mxu0 %v5970
          %6074 = vmatprep.subr.mxu0 0.0
          %6075 = vmatpush1.msra.mxu0 %v5971
          %6076 = vmatprep.subr.mxu0 0.0
          %6077 = vmatpush1.msra.mxu0 %v5972
          %6078 = vmatprep.subr.mxu0 0.0
          %6079 = vmatpush1.msra.mxu0 %v5973
          %6080 = vmatprep.subr.mxu0 0.0
          %6081 = vmatpush1.msra.mxu0 %v5974
          %6082 = vmatprep.subr.mxu0 0.0
          %6083 = vmatpush1.msra.mxu0 %v5975
          %6084 = vmatprep.subr.mxu0 0.0
          %6085 = vmatpush1.msra.mxu0 %v5976
          %6086 = vmatprep.subr.mxu0 0.0
          %6087 = vmatpush1.msra.mxu0 %v5977
          %6088 = vmatprep.subr.mxu0 0.0
          %6089 = vmatpush1.msra.mxu0 %v5978
          %6090 = vmatprep.subr.mxu0 0.0
          %6091 = vmatpush1.msra.mxu0 %v5979
          %6092 = vmatprep.subr.mxu0 0.0
          %6093 = vmatpush1.msra.mxu0 %v5980
          %6094 = vmatprep.subr.mxu0 0.0
          %6095 = vmatpush1.msra.mxu0 %v5981
          %6096 = vmatprep.subr.mxu0 0.0
          %6097 = vmatpush1.msra.mxu0 %v5982
          %6098 = vmatprep.subr.mxu0 0.0
          %6099 = vmatpush1.msra.mxu0 %v5983
          %6100 = vmatprep.subr.mxu0 0.0
          %6101 = vmatpush1.msra.mxu0 %v5984
          %6102 = vmatprep.subr.mxu0 0.0
          %6103 = vmatpush1.msra.mxu0 %v5985
          %6104 = vmatprep.subr.mxu0 0.0
          %6105 = vmatpush1.msra.mxu0 %v5986
          %6106 = vmatprep.subr.mxu0 0.0
          %6107 = vmatpush1.msra.mxu0 %v5987
          %6108 = vmatprep.subr.mxu0 0.0
          %6109 = vmatpush1.msra.mxu0 %v5988
          %6110 = vmatprep.subr.mxu0 0.0
          %6111 = vmatpush1.msra.mxu0 %v5989
          %6112 = vmatprep.subr.mxu0 0.0
          %6113 = vmatpush1.msra.mxu0 %v5990
          %6114 = vmatprep.subr.mxu0 0.0
          %6115 = vmatpush1.msra.mxu0 %v5991
          %6116 = vmatprep.subr.mxu0 0.0
          %6117 = vmatpush1.msra.mxu0 %v5992
          %6118 = vmatprep.mubr.f32.mxu0 %v6048
          %6119 = vmatmul.mubr.f32.gmra.mrb[0].mxu0 %v6040
          %v6120 = vpop.f32.mrb[0].mxu0
          %v6121 = vadd.f32 %v6030, %v6120
          %v6122 = vpop.f32.mrb[0].mxu0
          %6123 = vdwg.mxu0
          %6124 = vmatprep.subr.mxu0 0.0
          %6125 = vmatpush1.msra.mxu0 %v5993
          %6126 = vmatprep.subr.mxu0 0.0
          %6127 = vmatpush1.msra.mxu0 %v5994
          %6128 = vmatprep.subr.mxu0 0.0
          %6129 = vmatpush1.msra.mxu0 %v5995
          %6130 = vmatprep.subr.mxu0 0.0
          %6131 = vmatpush1.msra.mxu0 %v5996
          %6132 = vmatprep.subr.mxu0 0.0
          %6133 = vmatpush1.msra.mxu0 %v5997
          %6134 = vmatprep.subr.mxu0 0.0
          %6135 = vmatpush1.msra.mxu0 %v5998
          %6136 = vmatprep.subr.mxu0 0.0
          %6137 = vmatpush1.msra.mxu0 %v5999
          %6138 = vmatprep.subr.mxu0 0.0
          %6139 = vmatpush1.msra.mxu0 %v6000
          %6140 = vmatprep.subr.mxu0 0.0
          %6141 = vmatpush1.msra.mxu0 %v6001
          %6142 = vmatprep.subr.mxu0 0.0
          %6143 = vmatpush1.msra.mxu0 %v6002
          %6144 = vmatprep.subr.mxu0 0.0
          %6145 = vmatpush1.msra.mxu0 %v6003
          %6146 = vmatprep.subr.mxu0 0.0
          %6147 = vmatpush1.msra.mxu0 %v6004
          %6148 = vmatprep.subr.mxu0 0.0
          %6149 = vmatpush1.msra.mxu0 %v6005
          %6150 = vmatprep.subr.mxu0 0.0
          %6151 = vmatpush1.msra.mxu0 %v6006
          %6152 = vmatprep.subr.mxu0 0.0
          %6153 = vmatpush1.msra.mxu0 %v6007
          %6154 = vmatprep.subr.mxu0 0.0
          %6155 = vmatpush1.msra.mxu0 %v6008
          %6156 = vmatprep.subr.mxu0 0.0
          %6157 = vmatpush1.msra.mxu0 %v6009
          %6158 = vmatprep.subr.mxu0 0.0
          %6159 = vmatpush1.msra.mxu0 %v6010
          %6160 = vmatprep.subr.mxu0 0.0
          %6161 = vmatpush1.msra.mxu0 %v6011
          %6162 = vmatprep.subr.mxu0 0.0
          %6163 = vmatpush1.msra.mxu0 %v6012
          %6164 = vmatprep.subr.mxu0 0.0
          %6165 = vmatpush1.msra.mxu0 %v6013
          %6166 = vmatprep.subr.mxu0 0.0
          %6167 = vmatpush1.msra.mxu0 %v6014
          %6168 = vmatprep.subr.mxu0 0.0
          %6169 = vmatpush1.msra.mxu0 %v6015
          %6170 = vmatprep.subr.mxu0 0.0
          %6171 = vmatpush1.msra.mxu0 %v6016
          %6172 = vmatprep.subr.mxu0 0.0
          %6173 = vmatpush1.msra.mxu0 %v6017
          %6174 = vmatprep.subr.mxu0 0.0
          %6175 = vmatpush1.msra.mxu0 %v6018
          %6176 = vmatprep.subr.mxu0 0.0
          %6177 = vmatpush1.msra.mxu0 %v6019
          %6178 = vmatprep.subr.mxu0 0.0
          %6179 = vmatpush1.msra.mxu0 %v6020
          %6180 = vmatprep.subr.mxu0 0.0
          %6181 = vmatpush1.msra.mxu0 %v6021
          %6182 = vmatprep.subr.mxu0 0.0
          %6183 = vmatpush1.msra.mxu0 %v6022
          %6184 = vmatprep.subr.mxu0 0.0
          %6185 = vmatpush1.msra.mxu0 %v6023
          %6186 = vmatprep.subr.mxu0 0.0
          %6187 = vmatpush1.msra.mxu0 %v6024
          %6188 = vmatprep.mubr.f32.mxu0 %v6049
          %6189 = vmatmul.mubr.f32.gmra.mrb[0].mxu0 %v6047
          %v6190 = vpop.f32.mrb[0].mxu0
          %v6191 = vadd.f32 %v6121, %v6190
          %v6192 = vpop.f32.mrb[0].mxu0
          %6193 = vdwg.mxu0
          %vm6194 = vcmask 74752
          %6195 = vst.msk [vmem:[#allocation6] sm:$0x3] %vm6194, %v6191
          %v6196 = vsel %vm6194, %v6191, -inf
          %6197 = vmax.xlane.f32.xlu0 %v6196
          %v6198 = vpop.xlane.xlu0 %6197
          %v6199 = vsub.f32 %v6191, %v6198
          %v6200 = vmul.f32 %v6199, 1.442695
          %v6201 = vpow.pop %v6200
          %v6202 = vsel %vm6194, %v6201, 0.0
          %6203 = vadd.xlane.f32.xlu0 %v6202
          %v6204 = vpop.xlane.xlu0 %6203
          %v6205 = vrcp.pop %v6204
          %v6206 = vmul.f32 %v6201, %v6205
          %6207 = vst.msk [vmem:[#allocation7] sm:$0x3] %vm6194, %v6206
        $region56: #{animal_network_forward.3} parent=39 // pred_fallthru
          _
        // Predicated region
        $region57: #{animal_network_forward.3} parent=39 // pred_check
          %p6208 = pneg %p151
        $region58: #{animal_network_forward.3} parent=39 // pred_check_branch
          %6210 = sbr.rel (%p6208) target = $region60
        $region59: #{animal_network_forward.3} parent=39 // pred_region
          %s6212 = ssub.s32 32, 32
          %6213 = vsyncadd [#allocation5], %s6212
          %s6215 = sshll.u32 [#allocation6], 4
          %s6216 = int_to_ptr.vmem [resolvable:$true] %s6215
          %6218 = dma.vmem_to_hbm [thread:$0]  %s6216, 32, %s5, [#allocation5]
        $region60: #{animal_network_forward.3} parent=39 // pred_fallthru
          _
        // Predicated region
        $region61: #{animal_network_forward.3} parent=39 // pred_check
          %p6219 = pneg %p172
        $region62: #{animal_network_forward.3} parent=39 // pred_check_branch
          %6221 = sbr.rel (%p6219) target = $region64
        $region63: #{animal_network_forward.3} parent=39 // pred_region
          %s6223 = ssub.s32 32, 32
          %6224 = vsyncadd [#allocation8], %s6223
          %s6226 = sshll.u32 [#allocation7], 4
          %s6227 = int_to_ptr.vmem [resolvable:$true] %s6226
          %6229 = dma.vmem_to_hbm [thread:$0]  %s6227, 32, %s6, [#allocation8]
        $region64: #{animal_network_forward.3} parent=39 // pred_fallthru
          _
        // Predicated region
        $region65: #{animal_network_forward.3} parent=39 // pred_check
          %p6230 = pneg %p151
        $region66: #{animal_network_forward.3} parent=39 // pred_check_branch
          %6232 = sbr.rel (%p6230) target = $region68
        $region67: #{animal_network_forward.3} parent=39 // pred_region
          %6233 = dma.done [#allocation5], 32
        $region68: #{animal_network_forward.3} parent=39 // pred_fallthru
          _
        // Predicated region
        $region69: #{animal_network_forward.3} parent=39 // pred_check
          %p6234 = pneg %p172
        $region70: #{animal_network_forward.3} parent=39 // pred_check_branch
          %6236 = sbr.rel (%p6234) target = $region72
        $region71: #{animal_network_forward.3} parent=39 // pred_region
          %6237 = dma.done [#allocation8], 32
        $region72: #{animal_network_forward.3} parent=39 // pred_fallthru
          _
      $region40: #{animal_network_forward.3} parent=5 // pred_fallthru
        _
      %p6238 = scmp.le.s32.totalorder 2, %s18
      // Predicated region
      $region73: #{animal_network_forward.3} parent=5 // pred_check
        %p6239 = pneg %p6238
      $region74: #{animal_network_forward.3} parent=5 // pred_check_branch
        %6241 = sbr.rel (%p6239) target = $region76
      $region75: #{animal_network_forward.3} parent=5 // pred_region
        %s6242 = ssub.s32 %s18, 2
      $region76: #{animal_network_forward.3} parent=5 // pred_fallthru
        _
    $region6: #{animal_network_forward.3} parent=1 // loop_footer
      %s22 = sadd.s32 1, %s18
    $region7: #{animal_network_forward.3} parent=1 // loop_footer_branch
      %17 = sbr.rel target = $region3
    $region8: #{animal_network_forward.3} parent=1 // loop_exit
      _
    %6243 = vsyncpa [#allocation4], 1
    %s6244 = scalar_lea.sflag [#allocation4], 1
    %6245 = vsyncpa %s6244, 1
    %6246 = vsyncpa [#allocation5], 1
    %s6247 = scalar_lea.sflag [#allocation5], 1
    %6248 = vsyncpa %s6247, 1
    %6249 = vsyncpa [#allocation8], 1

</llo_original>
